<compile_context>
chip_gen: v5e
topology: v5e:2x2
jax: 0.10.0
libtpu: 0.0.40
codegen_flags: <defaults>
</compile_context>

<pallas_src>
import numpy as np

import jax
import jax.numpy as jnp
from jax.experimental import pallas as pl
from jax.experimental.pallas import tpu as pltpu


_BT = 32      # max batch rows per grid step
_WPAD = 32    # input width padded 28 -> 32 lanes (full-dim block, cheap DMA)


# ----------------------------------------------------------------------------
# Fused kernel
# ----------------------------------------------------------------------------
def _net_fused_kernel(x_ref, t1_ref, b1_ref, t2_ref, b2_ref,
                      wf1_ref, bf1_ref, wf2_ref, bf2_ref,
                      out_ref, zw_ref, z1p_ref, y2_ref):
    bt = x_ref.shape[0]
    f32 = jnp.float32
    bf16 = jnp.bfloat16

    # ---- conv1 + ReLU: 5 banded matmuls over the (lane-padded) input-W axis --
    acc1 = jnp.zeros((bt * 24, 512), f32)
    for kh in range(5):
        lhs = x_ref[:, pl.ds(kh, 24), :].reshape(bt * 24, _WPAD).astype(bf16)
        acc1 = acc1 + jnp.dot(lhs, t1_ref[kh], preferred_element_type=f32)
    z1 = jnp.maximum(acc1 + b1_ref[...], 0.0)
    # 2x2 max-pool, W direction: the two aligned 256-lane halves hold even/odd wo
    zw_ref[...] = jnp.maximum(z1[:, 0:256], z1[:, 256:512]).reshape(bt, 24, 256)
    # 2x2 max-pool, H direction: 12 row-pair maxes (static single-row accesses)
    for r in range(12):
        z1p_ref[:, r, :] = jnp.maximum(zw_ref[:, 2 * r, :], zw_ref[:, 2 * r + 1, :])

    # ---- conv2 + ReLU: 5 banded matmuls over contiguous pooled-row windows ---
    acc2 = jnp.zeros((bt * 8, 512), f32)
    for kh in range(5):
        lhs = z1p_ref[:, pl.ds(kh, 8), :].reshape(bt * 8, 256).astype(bf16)
        acc2 = acc2 + jnp.dot(lhs, t2_ref[kh], preferred_element_type=f32)
    z2 = jnp.maximum(acc2 + b2_ref[...], 0.0)
    # W-direction pool of conv2 output
    y2_ref[...] = jnp.maximum(z2[:, 0:256], z2[:, 256:512]).reshape(bt, 8, 256)

    # ---- fc1 + ReLU: H-pool of conv2 fused; 4 accumulated matmuls ------------
    accf = jnp.zeros((bt, 512), f32)
    for h in range(4):
        v = jnp.maximum(y2_ref[:, 2 * h, :], y2_ref[:, 2 * h + 1, :])
        accf = accf + jnp.dot(v.astype(bf16), wf1_ref[h],
                              preferred_element_type=f32)
    f1 = jnp.maximum(accf + bf1_ref[...], 0.0)

    # ---- fc2 + log_softmax (padded class lanes carry a -1e9 bias) ------------
    logits = jnp.dot(f1.astype(bf16), wf2_ref[...],
                     preferred_element_type=f32) + bf2_ref[...]
    m = jnp.max(logits, axis=-1, keepdims=True)
    lse = m + jnp.log(jnp.sum(jnp.exp(logits - m), axis=-1, keepdims=True))
    out_ref[...] = logits - lse


# ----------------------------------------------------------------------------
# Wrapper around pallas_call
# ----------------------------------------------------------------------------
def net_forward(x_nchw, packed):
    """x_nchw: [B, 1, 28, 28] float32 -> log-probs [B, 10] float32."""
    B = x_nchw.shape[0]
    bt = B if B < _BT else _BT
    nt = (B + bt - 1) // bt
    Bp = nt * bt

    x = x_nchw.reshape(B, 28, 28).astype(jnp.float32)
    # pad batch to a tile multiple and W up to _WPAD lanes
    x = jnp.pad(x, ((0, Bp - B), (0, 0), (0, _WPAD - 28)))

    grid_spec = pltpu.PrefetchScalarGridSpec(
        num_scalar_prefetch=0,
        grid=(nt,),
        in_specs=[
            pl.BlockSpec((bt, 28, _WPAD), lambda i: (i, 0, 0)),  # x tile
            pl.BlockSpec((5, _WPAD, 512), lambda i: (0, 0, 0)),  # conv1 banded W
            pl.BlockSpec((1, 512), lambda i: (0, 0)),            # conv1 bias
            pl.BlockSpec((5, 256, 512), lambda i: (0, 0, 0)),    # conv2 banded W
            pl.BlockSpec((1, 512), lambda i: (0, 0)),            # conv2 bias
            pl.BlockSpec((4, 256, 512), lambda i: (0, 0, 0)),    # fc1 (per pooled row)
            pl.BlockSpec((1, 512), lambda i: (0, 0)),            # fc1 bias
            pl.BlockSpec((512, 128), lambda i: (0, 0)),          # fc2
            pl.BlockSpec((1, 128), lambda i: (0, 0)),            # fc2 bias (+ -1e9 pad)
        ],
        out_specs=pl.BlockSpec((bt, 128), lambda i: (i, 0)),
        scratch_shapes=[
            pltpu.VMEM((bt, 24, 256), jnp.float32),   # conv1 act, W-pooled
            pltpu.VMEM((bt, 12, 256), jnp.float32),   # conv1 act, fully pooled
            pltpu.VMEM((bt, 8, 256), jnp.float32),    # conv2 act, W-pooled
        ],
    )
    out = pl.pallas_call(
        _net_fused_kernel,
        out_shape=jax.ShapeDtypeStruct((Bp, 128), jnp.float32),
        grid_spec=grid_spec,
        compiler_params=pltpu.CompilerParams(
            dimension_semantics=("parallel",),
            vmem_limit_bytes=32 * 1024 * 1024,
        ),
    )(x, packed["t1"], packed["b1"], packed["t2"], packed["b2"],
      packed["wf1"], packed["bf1"], packed["wf2"], packed["bf2"])
    return out[:B, :10]


# ----------------------------------------------------------------------------
# Parameters: torch-layout init + offline repacking into kernel layouts
# ----------------------------------------------------------------------------
def init_params(key):
    ks = jax.random.split(key, 8)
    return dict(
        conv1_w=jax.random.normal(ks[0], (20, 1, 5, 5), jnp.float32) * 0.1,
        conv1_b=jax.random.normal(ks[1], (20,), jnp.float32) * 0.1,
        conv2_w=jax.random.normal(ks[2], (50, 20, 5, 5), jnp.float32) * 0.05,
        conv2_b=jax.random.normal(ks[3], (50,), jnp.float32) * 0.05,
        fc1_w=jax.random.normal(ks[4], (500, 800), jnp.float32) * 0.02,
        fc1_b=jax.random.normal(ks[5], (500,), jnp.float32) * 0.02,
        fc2_w=jax.random.normal(ks[6], (10, 500), jnp.float32) * 0.02,
        fc2_b=jax.random.normal(ks[7], (10,), jnp.float32) * 0.02,
    )


def pack_params(raw):
    """Repack torch-layout weights into the banded / lane-packed matrices the
    fused kernel consumes.  Runs once, offline, in numpy."""
    c1w = np.asarray(raw["conv1_w"], np.float32)
    c1b = np.asarray(raw["conv1_b"], np.float32)
    c2w = np.asarray(raw["conv2_w"], np.float32)
    c2b = np.asarray(raw["conv2_b"], np.float32)
    f1w = np.asarray(raw["fc1_w"], np.float32)
    f1b = np.asarray(raw["fc1_b"], np.float32)
    f2w = np.asarray(raw["fc2_w"], np.float32)
    f2b = np.asarray(raw["fc2_b"], np.float32)

    # conv1: output lane col = pw*256 + wv*20 + c  (output wo = 2*wv + pw)
    t1 = np.zeros((5, _WPAD, 512), np.float32)
    b1 = np.zeros((512,), np.float32)
    for pw in range(2):
        for wv in range(12):
            wo = 2 * wv + pw
            base = pw * 256 + wv * 20
            b1[base:base + 20] = c1b
            for kh in range(5):
                for kw in range(5):
                    t1[kh, wo + kw, base:base + 20] = c1w[:, 0, kh, kw]

    # conv2: input lane col = wv*20 + c ; output lane col = qw*256 + w2*50 + o
    t2 = np.zeros((5, 256, 512), np.float32)
    b2 = np.zeros((512,), np.float32)
    for qw in range(2):
        for w2 in range(4):
            wo = 2 * w2 + qw
            base = qw * 256 + w2 * 50
            b2[base:base + 50] = c2b
            for kh in range(5):
                for kw in range(5):
                    row = (wo + kw) * 20
                    t2[kh, row:row + 20, base:base + 50] = c2w[:, :, kh, kw].T

    # fc1: accumulated over the 4 pooled rows h; input lane col = w*50 + o,
    # matching torch's (C, H, W) flatten of the [B, 50, 4, 4] activation.
    wf1 = np.zeros((4, 256, 512), np.float32)
    bf1 = np.zeros((512,), np.float32)
    bf1[:500] = f1b
    for h in range(4):
        for w in range(4):
            for o in range(50):
                wf1[h, w * 50 + o, :500] = f1w[:, o * 16 + h * 4 + w]

    # fc2 (+ log_softmax padding): pad classes get a -1e9 bias.
    wf2 = np.zeros((512, 128), np.float32)
    wf2[:500, :10] = f2w.T
    bf2 = np.full((128,), -1e9, np.float32)
    bf2[:10] = f2b

    as_bf16 = lambda a: jnp.asarray(a, jnp.bfloat16)
    as_row = lambda a: jnp.asarray(a.reshape(1, -1), jnp.float32)
    return dict(
        t1=as_bf16(t1), b1=as_row(b1),
        t2=as_bf16(t2), b2=as_row(b2),
        wf1=as_bf16(wf1), bf1=as_row(bf1),
        wf2=as_bf16(wf2), bf2=as_row(bf2),
    )


# ----------------------------------------------------------------------------
# Pure-JAX reference (exact semantics of the torch module, f32)
# ----------------------------------------------------------------------------
def net_reference(x_nchw, raw):
    dn = ("NCHW", "OIHW", "NCHW")
    y = jax.lax.conv_general_dilated(x_nchw, raw["conv1_w"], (1, 1), "VALID",
                                     dimension_numbers=dn)
    y = jax.nn.relu(y + raw["conv1_b"][None, :, None, None])
    b, c, h, w = y.shape
    y = y.reshape(b, c, h // 2, 2, w // 2, 2).max(axis=(3, 5))
    y = jax.lax.conv_general_dilated(y, raw["conv2_w"], (1, 1), "VALID",
                                     dimension_numbers=dn)
    y = jax.nn.relu(y + raw["conv2_b"][None, :, None, None])
    b, c, h, w = y.shape
    y = y.reshape(b, c, h // 2, 2, w // 2, 2).max(axis=(3, 5))
    y = y.reshape(b, 4 * 4 * 50)
    y = jax.nn.relu(y @ raw["fc1_w"].T + raw["fc1_b"])
    y = y @ raw["fc2_w"].T + raw["fc2_b"]
    return jax.nn.log_softmax(y, axis=-1)


# ----------------------------------------------------------------------------
if __name__ == "__main__":
    key = jax.random.PRNGKey(0)
    k_x, k_p = jax.random.split(key)
    B = 8  # small deterministic test batch (single grid step)
    x = jax.random.normal(k_x, (B, 1, 28, 28), jnp.float32)
    raw = init_params(k_p)
    packed = pack_params(raw)

    fwd = jax.jit(net_forward)
    out = fwd(x, packed)
    jax.block_until_ready(out)

    assert out.shape == (B, 10)
    # exp(log_softmax) rows must sum to 1
    assert bool(jnp.allclose(jnp.sum(jnp.exp(out), axis=1), 1.0, atol=1e-3))
    # match the f32 XLA reference (kernel uses bf16 matmuls with f32 accumulation)
    ref = jax.jit(net_reference)(x, raw)
    assert bool(jnp.allclose(out, ref, atol=1e-1))

    print("KERNEL_OK")
</pallas_src>

<mosaic_0001>
module attributes {stable_mosaic.version = 11 : i64} {
  func.func @_net_fused_kernel(%arg0: i32, %arg1: memref<8x28x32xf32, #tpu.memory_space<vmem>>, %arg2: memref<5x32x512xbf16, #tpu.memory_space<vmem>>, %arg3: memref<1x512xf32, #tpu.memory_space<vmem>>, %arg4: memref<5x256x512xbf16, #tpu.memory_space<vmem>>, %arg5: memref<1x512xf32, #tpu.memory_space<vmem>>, %arg6: memref<4x256x512xbf16, #tpu.memory_space<vmem>>, %arg7: memref<1x512xf32, #tpu.memory_space<vmem>>, %arg8: memref<512x128xbf16, #tpu.memory_space<vmem>>, %arg9: memref<1x128xf32, #tpu.memory_space<vmem>>, %arg10: memref<8x128xf32, #tpu.memory_space<vmem>>, %arg11: memref<8x24x256xf32, #tpu.memory_space<vmem>>, %arg12: memref<8x12x256xf32, #tpu.memory_space<vmem>>, %arg13: memref<8x8x256xf32, #tpu.memory_space<vmem>>) attributes {dimension_semantics = [#tpu.dimension_semantics<parallel>], iteration_bounds = array<i64: 1>, scalar_prefetch = 0 : i64, scratch_operands = 3 : i64, tpu.core_type = #tpu.core_type<tc>, window_params = [{transform_indices = @transform_0, window_bounds = array<i64: 8, 28, 32>}, {pipeline_mode = #tpu.pipeline_mode<synchronous>, transform_indices = @transform_1, window_bounds = array<i64: 5, 32, 512>}, {pipeline_mode = #tpu.pipeline_mode<synchronous>, transform_indices = @transform_2, window_bounds = array<i64: 1, 512>}, {pipeline_mode = #tpu.pipeline_mode<synchronous>, transform_indices = @transform_3, window_bounds = array<i64: 5, 256, 512>}, {pipeline_mode = #tpu.pipeline_mode<synchronous>, transform_indices = @transform_4, window_bounds = array<i64: 1, 512>}, {pipeline_mode = #tpu.pipeline_mode<synchronous>, transform_indices = @transform_5, window_bounds = array<i64: 4, 256, 512>}, {pipeline_mode = #tpu.pipeline_mode<synchronous>, transform_indices = @transform_6, window_bounds = array<i64: 1, 512>}, {pipeline_mode = #tpu.pipeline_mode<synchronous>, transform_indices = @transform_7, window_bounds = array<i64: 512, 128>}, {pipeline_mode = #tpu.pipeline_mode<synchronous>, transform_indices = @transform_8, window_bounds = array<i64: 1, 128>}, {transform_indices = @transform_9, window_bounds = array<i64: 8, 128>}]} {
    %cst = arith.constant 0.000000e+00 : f32
    %0 = vector.broadcast %cst : f32 to vector<192x512xf32>
    %c0 = arith.constant 0 : index
    %c0_0 = arith.constant 0 : index
    %c0_1 = arith.constant 0 : index
    %1 = vector.load %arg1[%c0, %c0_0, %c0_1] : memref<8x28x32xf32, #tpu.memory_space<vmem>>, vector<8x24x32xf32>
    %2 = vector.shape_cast %1 : vector<8x24x32xf32> to vector<192x32xf32>
    %3 = arith.truncf %2 : vector<192x32xf32> to vector<192x32xbf16>
    %c0_2 = arith.constant 0 : index
    %c0_3 = arith.constant 0 : index
    %c0_4 = arith.constant 0 : index
    %4 = vector.load %arg2[%c0_2, %c0_3, %c0_4] : memref<5x32x512xbf16, #tpu.memory_space<vmem>>, vector<1x32x512xbf16>
    %5 = vector.shape_cast %4 : vector<1x32x512xbf16> to vector<32x512xbf16>
    %cst_5 = arith.constant dense<0.000000e+00> : vector<192x512xf32>
    %6 = tpu.matmul %3, %5, %cst_5 {dimension_numbers = #tpu.dot_dimension_numbers<[1], [0], [0], [1], [0, 0, 1, 1], [], []>} : vector<192x32xbf16>, vector<32x512xbf16>, vector<192x512xf32> -> vector<192x512xf32>
    %7 = arith.addf %0, %6 : vector<192x512xf32>
    %c0_6 = arith.constant 0 : index
    %c1 = arith.constant 1 : index
    %c0_7 = arith.constant 0 : index
    %8 = vector.load %arg1[%c0_6, %c1, %c0_7] : memref<8x28x32xf32, #tpu.memory_space<vmem>>, vector<8x24x32xf32>
    %9 = vector.shape_cast %8 : vector<8x24x32xf32> to vector<192x32xf32>
    %10 = arith.truncf %9 : vector<192x32xf32> to vector<192x32xbf16>
    %c1_8 = arith.constant 1 : index
    %c0_9 = arith.constant 0 : index
    %c0_10 = arith.constant 0 : index
    %11 = vector.load %arg2[%c1_8, %c0_9, %c0_10] : memref<5x32x512xbf16, #tpu.memory_space<vmem>>, vector<1x32x512xbf16>
    %12 = vector.shape_cast %11 : vector<1x32x512xbf16> to vector<32x512xbf16>
    %cst_11 = arith.constant dense<0.000000e+00> : vector<192x512xf32>
    %13 = tpu.matmul %10, %12, %cst_11 {dimension_numbers = #tpu.dot_dimension_numbers<[1], [0], [0], [1], [0, 0, 1, 1], [], []>} : vector<192x32xbf16>, vector<32x512xbf16>, vector<192x512xf32> -> vector<192x512xf32>
    %14 = arith.addf %7, %13 : vector<192x512xf32>
    %c0_12 = arith.constant 0 : index
    %c2 = arith.constant 2 : index
    %c0_13 = arith.constant 0 : index
    %15 = vector.load %arg1[%c0_12, %c2, %c0_13] : memref<8x28x32xf32, #tpu.memory_space<vmem>>, vector<8x24x32xf32>
    %16 = vector.shape_cast %15 : vector<8x24x32xf32> to vector<192x32xf32>
    %17 = arith.truncf %16 : vector<192x32xf32> to vector<192x32xbf16>
    %c2_14 = arith.constant 2 : index
    %c0_15 = arith.constant 0 : index
    %c0_16 = arith.constant 0 : index
    %18 = vector.load %arg2[%c2_14, %c0_15, %c0_16] : memref<5x32x512xbf16, #tpu.memory_space<vmem>>, vector<1x32x512xbf16>
    %19 = vector.shape_cast %18 : vector<1x32x512xbf16> to vector<32x512xbf16>
    %cst_17 = arith.constant dense<0.000000e+00> : vector<192x512xf32>
    %20 = tpu.matmul %17, %19, %cst_17 {dimension_numbers = #tpu.dot_dimension_numbers<[1], [0], [0], [1], [0, 0, 1, 1], [], []>} : vector<192x32xbf16>, vector<32x512xbf16>, vector<192x512xf32> -> vector<192x512xf32>
    %21 = arith.addf %14, %20 : vector<192x512xf32>
    %c0_18 = arith.constant 0 : index
    %c3 = arith.constant 3 : index
    %c0_19 = arith.constant 0 : index
    %22 = vector.load %arg1[%c0_18, %c3, %c0_19] : memref<8x28x32xf32, #tpu.memory_space<vmem>>, vector<8x24x32xf32>
    %23 = vector.shape_cast %22 : vector<8x24x32xf32> to vector<192x32xf32>
    %24 = arith.truncf %23 : vector<192x32xf32> to vector<192x32xbf16>
    %c3_20 = arith.constant 3 : index
    %c0_21 = arith.constant 0 : index
    %c0_22 = arith.constant 0 : index
    %25 = vector.load %arg2[%c3_20, %c0_21, %c0_22] : memref<5x32x512xbf16, #tpu.memory_space<vmem>>, vector<1x32x512xbf16>
    %26 = vector.shape_cast %25 : vector<1x32x512xbf16> to vector<32x512xbf16>
    %cst_23 = arith.constant dense<0.000000e+00> : vector<192x512xf32>
    %27 = tpu.matmul %24, %26, %cst_23 {dimension_numbers = #tpu.dot_dimension_numbers<[1], [0], [0], [1], [0, 0, 1, 1], [], []>} : vector<192x32xbf16>, vector<32x512xbf16>, vector<192x512xf32> -> vector<192x512xf32>
    %28 = arith.addf %21, %27 : vector<192x512xf32>
    %c0_24 = arith.constant 0 : index
    %c4 = arith.constant 4 : index
    %c0_25 = arith.constant 0 : index
    %29 = vector.load %arg1[%c0_24, %c4, %c0_25] : memref<8x28x32xf32, #tpu.memory_space<vmem>>, vector<8x24x32xf32>
    %30 = vector.shape_cast %29 : vector<8x24x32xf32> to vector<192x32xf32>
    %31 = arith.truncf %30 : vector<192x32xf32> to vector<192x32xbf16>
    %c4_26 = arith.constant 4 : index
    %c0_27 = arith.constant 0 : index
    %c0_28 = arith.constant 0 : index
    %32 = vector.load %arg2[%c4_26, %c0_27, %c0_28] : memref<5x32x512xbf16, #tpu.memory_space<vmem>>, vector<1x32x512xbf16>
    %33 = vector.shape_cast %32 : vector<1x32x512xbf16> to vector<32x512xbf16>
    %cst_29 = arith.constant dense<0.000000e+00> : vector<192x512xf32>
    %34 = tpu.matmul %31, %33, %cst_29 {dimension_numbers = #tpu.dot_dimension_numbers<[1], [0], [0], [1], [0, 0, 1, 1], [], []>} : vector<192x32xbf16>, vector<32x512xbf16>, vector<192x512xf32> -> vector<192x512xf32>
    %35 = arith.addf %28, %34 : vector<192x512xf32>
    %c0_30 = arith.constant 0 : index
    %c0_31 = arith.constant 0 : index
    %36 = vector.load %arg3[%c0_30, %c0_31] : memref<1x512xf32, #tpu.memory_space<vmem>>, vector<1x512xf32>
    %37 = vector.broadcast %36 : vector<1x512xf32> to vector<192x512xf32>
    %38 = arith.addf %35, %37 : vector<192x512xf32>
    %cst_32 = arith.constant 0.000000e+00 : f32
    %39 = vector.broadcast %cst_32 : f32 to vector<192x512xf32>
    %40 = arith.maximumf %38, %39 : vector<192x512xf32>
    %41 = vector.extract_strided_slice %40 {offsets = [0, 0], sizes = [192, 256], strides = [1, 1]} : vector<192x512xf32> to vector<192x256xf32>
    %42 = vector.extract_strided_slice %40 {offsets = [0, 256], sizes = [192, 256], strides = [1, 1]} : vector<192x512xf32> to vector<192x256xf32>
    %43 = arith.maximumf %41, %42 : vector<192x256xf32>
    %44 = vector.shape_cast %43 : vector<192x256xf32> to vector<8x24x256xf32>
    %c0_33 = arith.constant 0 : index
    %c0_34 = arith.constant 0 : index
    %c0_35 = arith.constant 0 : index
    %45 = vector.load %arg11[%c0_33, %c0_34, %c0_35] : memref<8x24x256xf32, #tpu.memory_space<vmem>>, vector<8x24x256xf32>
    tpu.vector_store %arg11[%c0_33, %c0_34, %c0_35], %44 {strides = array<i32>} : memref<8x24x256xf32, #tpu.memory_space<vmem>>, vector<8x24x256xf32>,
    %c0_36 = arith.constant 0 : index
    %c0_37 = arith.constant 0 : index
    %c0_38 = arith.constant 0 : index
    %46 = vector.load %arg11[%c0_36, %c0_37, %c0_38] : memref<8x24x256xf32, #tpu.memory_space<vmem>>, vector<8x1x256xf32>
    %47 = vector.shape_cast %46 : vector<8x1x256xf32> to vector<8x256xf32>
    %c0_39 = arith.constant 0 : index
    %c1_40 = arith.constant 1 : index
    %c0_41 = arith.constant 0 : index
    %48 = vector.load %arg11[%c0_39, %c1_40, %c0_41] : memref<8x24x256xf32, #tpu.memory_space<vmem>>, vector<8x1x256xf32>
    %49 = vector.shape_cast %48 : vector<8x1x256xf32> to vector<8x256xf32>
    %50 = arith.maximumf %47, %49 : vector<8x256xf32>
    %c0_42 = arith.constant 0 : index
    %c0_43 = arith.constant 0 : index
    %c0_44 = arith.constant 0 : index
    %51 = vector.load %arg12[%c0_42, %c0_43, %c0_44] : memref<8x12x256xf32, #tpu.memory_space<vmem>>, vector<8x1x256xf32>
    %52 = vector.shape_cast %51 : vector<8x1x256xf32> to vector<8x256xf32>
    %53 = vector.shape_cast %50 : vector<8x256xf32> to vector<8x1x256xf32>
    tpu.vector_store %arg12[%c0_42, %c0_43, %c0_44], %53 {strides = array<i32>} : memref<8x12x256xf32, #tpu.memory_space<vmem>>, vector<8x1x256xf32>,
    %c0_45 = arith.constant 0 : index
    %c2_46 = arith.constant 2 : index
    %c0_47 = arith.constant 0 : index
    %54 = vector.load %arg11[%c0_45, %c2_46, %c0_47] : memref<8x24x256xf32, #tpu.memory_space<vmem>>, vector<8x1x256xf32>
    %55 = vector.shape_cast %54 : vector<8x1x256xf32> to vector<8x256xf32>
    %c0_48 = arith.constant 0 : index
    %c3_49 = arith.constant 3 : index
    %c0_50 = arith.constant 0 : index
    %56 = vector.load %arg11[%c0_48, %c3_49, %c0_50] : memref<8x24x256xf32, #tpu.memory_space<vmem>>, vector<8x1x256xf32>
    %57 = vector.shape_cast %56 : vector<8x1x256xf32> to vector<8x256xf32>
    %58 = arith.maximumf %55, %57 : vector<8x256xf32>
    %c0_51 = arith.constant 0 : index
    %c1_52 = arith.constant 1 : index
    %c0_53 = arith.constant 0 : index
    %59 = vector.load %arg12[%c0_51, %c1_52, %c0_53] : memref<8x12x256xf32, #tpu.memory_space<vmem>>, vector<8x1x256xf32>
    %60 = vector.shape_cast %59 : vector<8x1x256xf32> to vector<8x256xf32>
    %61 = vector.shape_cast %58 : vector<8x256xf32> to vector<8x1x256xf32>
    tpu.vector_store %arg12[%c0_51, %c1_52, %c0_53], %61 {strides = array<i32>} : memref<8x12x256xf32, #tpu.memory_space<vmem>>, vector<8x1x256xf32>,
    %c0_54 = arith.constant 0 : index
    %c4_55 = arith.constant 4 : index
    %c0_56 = arith.constant 0 : index
    %62 = vector.load %arg11[%c0_54, %c4_55, %c0_56] : memref<8x24x256xf32, #tpu.memory_space<vmem>>, vector<8x1x256xf32>
    %63 = vector.shape_cast %62 : vector<8x1x256xf32> to vector<8x256xf32>
    %c0_57 = arith.constant 0 : index
    %c5 = arith.constant 5 : index
    %c0_58 = arith.constant 0 : index
    %64 = vector.load %arg11[%c0_57, %c5, %c0_58] : memref<8x24x256xf32, #tpu.memory_space<vmem>>, vector<8x1x256xf32>
    %65 = vector.shape_cast %64 : vector<8x1x256xf32> to vector<8x256xf32>
    %66 = arith.maximumf %63, %65 : vector<8x256xf32>
    %c0_59 = arith.constant 0 : index
    %c2_60 = arith.constant 2 : index
    %c0_61 = arith.constant 0 : index
    %67 = vector.load %arg12[%c0_59, %c2_60, %c0_61] : memref<8x12x256xf32, #tpu.memory_space<vmem>>, vector<8x1x256xf32>
    %68 = vector.shape_cast %67 : vector<8x1x256xf32> to vector<8x256xf32>
    %69 = vector.shape_cast %66 : vector<8x256xf32> to vector<8x1x256xf32>
    tpu.vector_store %arg12[%c0_59, %c2_60, %c0_61], %69 {strides = array<i32>} : memref<8x12x256xf32, #tpu.memory_space<vmem>>, vector<8x1x256xf32>,
    %c0_62 = arith.constant 0 : index
    %c6 = arith.constant 6 : index
    %c0_63 = arith.constant 0 : index
    %70 = vector.load %arg11[%c0_62, %c6, %c0_63] : memref<8x24x256xf32, #tpu.memory_space<vmem>>, vector<8x1x256xf32>
    %71 = vector.shape_cast %70 : vector<8x1x256xf32> to vector<8x256xf32>
    %c0_64 = arith.constant 0 : index
    %c7 = arith.constant 7 : index
    %c0_65 = arith.constant 0 : index
    %72 = vector.load %arg11[%c0_64, %c7, %c0_65] : memref<8x24x256xf32, #tpu.memory_space<vmem>>, vector<8x1x256xf32>
    %73 = vector.shape_cast %72 : vector<8x1x256xf32> to vector<8x256xf32>
    %74 = arith.maximumf %71, %73 : vector<8x256xf32>
    %c0_66 = arith.constant 0 : index
    %c3_67 = arith.constant 3 : index
    %c0_68 = arith.constant 0 : index
    %75 = vector.load %arg12[%c0_66, %c3_67, %c0_68] : memref<8x12x256xf32, #tpu.memory_space<vmem>>, vector<8x1x256xf32>
    %76 = vector.shape_cast %75 : vector<8x1x256xf32> to vector<8x256xf32>
    %77 = vector.shape_cast %74 : vector<8x256xf32> to vector<8x1x256xf32>
    tpu.vector_store %arg12[%c0_66, %c3_67, %c0_68], %77 {strides = array<i32>} : memref<8x12x256xf32, #tpu.memory_space<vmem>>, vector<8x1x256xf32>,
    %c0_69 = arith.constant 0 : index
    %c8 = arith.constant 8 : index
    %c0_70 = arith.constant 0 : index
    %78 = vector.load %arg11[%c0_69, %c8, %c0_70] : memref<8x24x256xf32, #tpu.memory_space<vmem>>, vector<8x1x256xf32>
    %79 = vector.shape_cast %78 : vector<8x1x256xf32> to vector<8x256xf32>
    %c0_71 = arith.constant 0 : index
    %c9 = arith.constant 9 : index
    %c0_72 = arith.constant 0 : index
    %80 = vector.load %arg11[%c0_71, %c9, %c0_72] : memref<8x24x256xf32, #tpu.memory_space<vmem>>, vector<8x1x256xf32>
    %81 = vector.shape_cast %80 : vector<8x1x256xf32> to vector<8x256xf32>
    %82 = arith.maximumf %79, %81 : vector<8x256xf32>
    %c0_73 = arith.constant 0 : index
    %c4_74 = arith.constant 4 : index
    %c0_75 = arith.constant 0 : index
    %83 = vector.load %arg12[%c0_73, %c4_74, %c0_75] : memref<8x12x256xf32, #tpu.memory_space<vmem>>, vector<8x1x256xf32>
    %84 = vector.shape_cast %83 : vector<8x1x256xf32> to vector<8x256xf32>
    %85 = vector.shape_cast %82 : vector<8x256xf32> to vector<8x1x256xf32>
    tpu.vector_store %arg12[%c0_73, %c4_74, %c0_75], %85 {strides = array<i32>} : memref<8x12x256xf32, #tpu.memory_space<vmem>>, vector<8x1x256xf32>,
    %c0_76 = arith.constant 0 : index
    %c10 = arith.constant 10 : index
    %c0_77 = arith.constant 0 : index
    %86 = vector.load %arg11[%c0_76, %c10, %c0_77] : memref<8x24x256xf32, #tpu.memory_space<vmem>>, vector<8x1x256xf32>
    %87 = vector.shape_cast %86 : vector<8x1x256xf32> to vector<8x256xf32>
    %c0_78 = arith.constant 0 : index
    %c11 = arith.constant 11 : index
    %c0_79 = arith.constant 0 : index
    %88 = vector.load %arg11[%c0_78, %c11, %c0_79] : memref<8x24x256xf32, #tpu.memory_space<vmem>>, vector<8x1x256xf32>
    %89 = vector.shape_cast %88 : vector<8x1x256xf32> to vector<8x256xf32>
    %90 = arith.maximumf %87, %89 : vector<8x256xf32>
    %c0_80 = arith.constant 0 : index
    %c5_81 = arith.constant 5 : index
    %c0_82 = arith.constant 0 : index
    %91 = vector.load %arg12[%c0_80, %c5_81, %c0_82] : memref<8x12x256xf32, #tpu.memory_space<vmem>>, vector<8x1x256xf32>
    %92 = vector.shape_cast %91 : vector<8x1x256xf32> to vector<8x256xf32>
    %93 = vector.shape_cast %90 : vector<8x256xf32> to vector<8x1x256xf32>
    tpu.vector_store %arg12[%c0_80, %c5_81, %c0_82], %93 {strides = array<i32>} : memref<8x12x256xf32, #tpu.memory_space<vmem>>, vector<8x1x256xf32>,
    %c0_83 = arith.constant 0 : index
    %c12 = arith.constant 12 : index
    %c0_84 = arith.constant 0 : index
    %94 = vector.load %arg11[%c0_83, %c12, %c0_84] : memref<8x24x256xf32, #tpu.memory_space<vmem>>, vector<8x1x256xf32>
    %95 = vector.shape_cast %94 : vector<8x1x256xf32> to vector<8x256xf32>
    %c0_85 = arith.constant 0 : index
    %c13 = arith.constant 13 : index
    %c0_86 = arith.constant 0 : index
    %96 = vector.load %arg11[%c0_85, %c13, %c0_86] : memref<8x24x256xf32, #tpu.memory_space<vmem>>, vector<8x1x256xf32>
    %97 = vector.shape_cast %96 : vector<8x1x256xf32> to vector<8x256xf32>
    %98 = arith.maximumf %95, %97 : vector<8x256xf32>
    %c0_87 = arith.constant 0 : index
    %c6_88 = arith.constant 6 : index
    %c0_89 = arith.constant 0 : index
    %99 = vector.load %arg12[%c0_87, %c6_88, %c0_89] : memref<8x12x256xf32, #tpu.memory_space<vmem>>, vector<8x1x256xf32>
    %100 = vector.shape_cast %99 : vector<8x1x256xf32> to vector<8x256xf32>
    %101 = vector.shape_cast %98 : vector<8x256xf32> to vector<8x1x256xf32>
    tpu.vector_store %arg12[%c0_87, %c6_88, %c0_89], %101 {strides = array<i32>} : memref<8x12x256xf32, #tpu.memory_space<vmem>>, vector<8x1x256xf32>,
    %c0_90 = arith.constant 0 : index
    %c14 = arith.constant 14 : index
    %c0_91 = arith.constant 0 : index
    %102 = vector.load %arg11[%c0_90, %c14, %c0_91] : memref<8x24x256xf32, #tpu.memory_space<vmem>>, vector<8x1x256xf32>
    %103 = vector.shape_cast %102 : vector<8x1x256xf32> to vector<8x256xf32>
    %c0_92 = arith.constant 0 : index
    %c15 = arith.constant 15 : index
    %c0_93 = arith.constant 0 : index
    %104 = vector.load %arg11[%c0_92, %c15, %c0_93] : memref<8x24x256xf32, #tpu.memory_space<vmem>>, vector<8x1x256xf32>
    %105 = vector.shape_cast %104 : vector<8x1x256xf32> to vector<8x256xf32>
    %106 = arith.maximumf %103, %105 : vector<8x256xf32>
    %c0_94 = arith.constant 0 : index
    %c7_95 = arith.constant 7 : index
    %c0_96 = arith.constant 0 : index
    %107 = vector.load %arg12[%c0_94, %c7_95, %c0_96] : memref<8x12x256xf32, #tpu.memory_space<vmem>>, vector<8x1x256xf32>
    %108 = vector.shape_cast %107 : vector<8x1x256xf32> to vector<8x256xf32>
    %109 = vector.shape_cast %106 : vector<8x256xf32> to vector<8x1x256xf32>
    tpu.vector_store %arg12[%c0_94, %c7_95, %c0_96], %109 {strides = array<i32>} : memref<8x12x256xf32, #tpu.memory_space<vmem>>, vector<8x1x256xf32>,
    %c0_97 = arith.constant 0 : index
    %c16 = arith.constant 16 : index
    %c0_98 = arith.constant 0 : index
    %110 = vector.load %arg11[%c0_97, %c16, %c0_98] : memref<8x24x256xf32, #tpu.memory_space<vmem>>, vector<8x1x256xf32>
    %111 = vector.shape_cast %110 : vector<8x1x256xf32> to vector<8x256xf32>
    %c0_99 = arith.constant 0 : index
    %c17 = arith.constant 17 : index
    %c0_100 = arith.constant 0 : index
    %112 = vector.load %arg11[%c0_99, %c17, %c0_100] : memref<8x24x256xf32, #tpu.memory_space<vmem>>, vector<8x1x256xf32>
    %113 = vector.shape_cast %112 : vector<8x1x256xf32> to vector<8x256xf32>
    %114 = arith.maximumf %111, %113 : vector<8x256xf32>
    %c0_101 = arith.constant 0 : index
    %c8_102 = arith.constant 8 : index
    %c0_103 = arith.constant 0 : index
    %115 = vector.load %arg12[%c0_101, %c8_102, %c0_103] : memref<8x12x256xf32, #tpu.memory_space<vmem>>, vector<8x1x256xf32>
    %116 = vector.shape_cast %115 : vector<8x1x256xf32> to vector<8x256xf32>
    %117 = vector.shape_cast %114 : vector<8x256xf32> to vector<8x1x256xf32>
    tpu.vector_store %arg12[%c0_101, %c8_102, %c0_103], %117 {strides = array<i32>} : memref<8x12x256xf32, #tpu.memory_space<vmem>>, vector<8x1x256xf32>,
    %c0_104 = arith.constant 0 : index
    %c18 = arith.constant 18 : index
    %c0_105 = arith.constant 0 : index
    %118 = vector.load %arg11[%c0_104, %c18, %c0_105] : memref<8x24x256xf32, #tpu.memory_space<vmem>>, vector<8x1x256xf32>
    %119 = vector.shape_cast %118 : vector<8x1x256xf32> to vector<8x256xf32>
    %c0_106 = arith.constant 0 : index
    %c19 = arith.constant 19 : index
    %c0_107 = arith.constant 0 : index
    %120 = vector.load %arg11[%c0_106, %c19, %c0_107] : memref<8x24x256xf32, #tpu.memory_space<vmem>>, vector<8x1x256xf32>
    %121 = vector.shape_cast %120 : vector<8x1x256xf32> to vector<8x256xf32>
    %122 = arith.maximumf %119, %121 : vector<8x256xf32>
    %c0_108 = arith.constant 0 : index
    %c9_109 = arith.constant 9 : index
    %c0_110 = arith.constant 0 : index
    %123 = vector.load %arg12[%c0_108, %c9_109, %c0_110] : memref<8x12x256xf32, #tpu.memory_space<vmem>>, vector<8x1x256xf32>
    %124 = vector.shape_cast %123 : vector<8x1x256xf32> to vector<8x256xf32>
    %125 = vector.shape_cast %122 : vector<8x256xf32> to vector<8x1x256xf32>
    tpu.vector_store %arg12[%c0_108, %c9_109, %c0_110], %125 {strides = array<i32>} : memref<8x12x256xf32, #tpu.memory_space<vmem>>, vector<8x1x256xf32>,
    %c0_111 = arith.constant 0 : index
    %c20 = arith.constant 20 : index
    %c0_112 = arith.constant 0 : index
    %126 = vector.load %arg11[%c0_111, %c20, %c0_112] : memref<8x24x256xf32, #tpu.memory_space<vmem>>, vector<8x1x256xf32>
    %127 = vector.shape_cast %126 : vector<8x1x256xf32> to vector<8x256xf32>
    %c0_113 = arith.constant 0 : index
    %c21 = arith.constant 21 : index
    %c0_114 = arith.constant 0 : index
    %128 = vector.load %arg11[%c0_113, %c21, %c0_114] : memref<8x24x256xf32, #tpu.memory_space<vmem>>, vector<8x1x256xf32>
    %129 = vector.shape_cast %128 : vector<8x1x256xf32> to vector<8x256xf32>
    %130 = arith.maximumf %127, %129 : vector<8x256xf32>
    %c0_115 = arith.constant 0 : index
    %c10_116 = arith.constant 10 : index
    %c0_117 = arith.constant 0 : index
    %131 = vector.load %arg12[%c0_115, %c10_116, %c0_117] : memref<8x12x256xf32, #tpu.memory_space<vmem>>, vector<8x1x256xf32>
    %132 = vector.shape_cast %131 : vector<8x1x256xf32> to vector<8x256xf32>
    %133 = vector.shape_cast %130 : vector<8x256xf32> to vector<8x1x256xf32>
    tpu.vector_store %arg12[%c0_115, %c10_116, %c0_117], %133 {strides = array<i32>} : memref<8x12x256xf32, #tpu.memory_space<vmem>>, vector<8x1x256xf32>,
    %c0_118 = arith.constant 0 : index
    %c22 = arith.constant 22 : index
    %c0_119 = arith.constant 0 : index
    %134 = vector.load %arg11[%c0_118, %c22, %c0_119] : memref<8x24x256xf32, #tpu.memory_space<vmem>>, vector<8x1x256xf32>
    %135 = vector.shape_cast %134 : vector<8x1x256xf32> to vector<8x256xf32>
    %c0_120 = arith.constant 0 : index
    %c23 = arith.constant 23 : index
    %c0_121 = arith.constant 0 : index
    %136 = vector.load %arg11[%c0_120, %c23, %c0_121] : memref<8x24x256xf32, #tpu.memory_space<vmem>>, vector<8x1x256xf32>
    %137 = vector.shape_cast %136 : vector<8x1x256xf32> to vector<8x256xf32>
    %138 = arith.maximumf %135, %137 : vector<8x256xf32>
    %c0_122 = arith.constant 0 : index
    %c11_123 = arith.constant 11 : index
    %c0_124 = arith.constant 0 : index
    %139 = vector.load %arg12[%c0_122, %c11_123, %c0_124] : memref<8x12x256xf32, #tpu.memory_space<vmem>>, vector<8x1x256xf32>
    %140 = vector.shape_cast %139 : vector<8x1x256xf32> to vector<8x256xf32>
    %141 = vector.shape_cast %138 : vector<8x256xf32> to vector<8x1x256xf32>
    tpu.vector_store %arg12[%c0_122, %c11_123, %c0_124], %141 {strides = array<i32>} : memref<8x12x256xf32, #tpu.memory_space<vmem>>, vector<8x1x256xf32>,
    %cst_125 = arith.constant 0.000000e+00 : f32
    %142 = vector.broadcast %cst_125 : f32 to vector<64x512xf32>
    %c0_126 = arith.constant 0 : index
    %c0_127 = arith.constant 0 : index
    %c0_128 = arith.constant 0 : index
    %143 = vector.load %arg12[%c0_126, %c0_127, %c0_128] : memref<8x12x256xf32, #tpu.memory_space<vmem>>, vector<8x8x256xf32>
    %144 = vector.shape_cast %143 : vector<8x8x256xf32> to vector<64x256xf32>
    %145 = arith.truncf %144 : vector<64x256xf32> to vector<64x256xbf16>
    %c0_129 = arith.constant 0 : index
    %c0_130 = arith.constant 0 : index
    %c0_131 = arith.constant 0 : index
    %146 = vector.load %arg4[%c0_129, %c0_130, %c0_131] : memref<5x256x512xbf16, #tpu.memory_space<vmem>>, vector<1x256x512xbf16>
    %147 = vector.shape_cast %146 : vector<1x256x512xbf16> to vector<256x512xbf16>
    %cst_132 = arith.constant dense<0.000000e+00> : vector<64x512xf32>
    %148 = tpu.matmul %145, %147, %cst_132 {dimension_numbers = #tpu.dot_dimension_numbers<[1], [0], [0], [1], [0, 0, 1, 1], [], []>} : vector<64x256xbf16>, vector<256x512xbf16>, vector<64x512xf32> -> vector<64x512xf32>
    %149 = arith.addf %142, %148 : vector<64x512xf32>
    %c0_133 = arith.constant 0 : index
    %c1_134 = arith.constant 1 : index
    %c0_135 = arith.constant 0 : index
    %150 = vector.load %arg12[%c0_133, %c1_134, %c0_135] : memref<8x12x256xf32, #tpu.memory_space<vmem>>, vector<8x8x256xf32>
    %151 = vector.shape_cast %150 : vector<8x8x256xf32> to vector<64x256xf32>
    %152 = arith.truncf %151 : vector<64x256xf32> to vector<64x256xbf16>
    %c1_136 = arith.constant 1 : index
    %c0_137 = arith.constant 0 : index
    %c0_138 = arith.constant 0 : index
    %153 = vector.load %arg4[%c1_136, %c0_137, %c0_138] : memref<5x256x512xbf16, #tpu.memory_space<vmem>>, vector<1x256x512xbf16>
    %154 = vector.shape_cast %153 : vector<1x256x512xbf16> to vector<256x512xbf16>
    %cst_139 = arith.constant dense<0.000000e+00> : vector<64x512xf32>
    %155 = tpu.matmul %152, %154, %cst_139 {dimension_numbers = #tpu.dot_dimension_numbers<[1], [0], [0], [1], [0, 0, 1, 1], [], []>} : vector<64x256xbf16>, vector<256x512xbf16>, vector<64x512xf32> -> vector<64x512xf32>
    %156 = arith.addf %149, %155 : vector<64x512xf32>
    %c0_140 = arith.constant 0 : index
    %c2_141 = arith.constant 2 : index
    %c0_142 = arith.constant 0 : index
    %157 = vector.load %arg12[%c0_140, %c2_141, %c0_142] : memref<8x12x256xf32, #tpu.memory_space<vmem>>, vector<8x8x256xf32>
    %158 = vector.shape_cast %157 : vector<8x8x256xf32> to vector<64x256xf32>
    %159 = arith.truncf %158 : vector<64x256xf32> to vector<64x256xbf16>
    %c2_143 = arith.constant 2 : index
    %c0_144 = arith.constant 0 : index
    %c0_145 = arith.constant 0 : index
    %160 = vector.load %arg4[%c2_143, %c0_144, %c0_145] : memref<5x256x512xbf16, #tpu.memory_space<vmem>>, vector<1x256x512xbf16>
    %161 = vector.shape_cast %160 : vector<1x256x512xbf16> to vector<256x512xbf16>
    %cst_146 = arith.constant dense<0.000000e+00> : vector<64x512xf32>
    %162 = tpu.matmul %159, %161, %cst_146 {dimension_numbers = #tpu.dot_dimension_numbers<[1], [0], [0], [1], [0, 0, 1, 1], [], []>} : vector<64x256xbf16>, vector<256x512xbf16>, vector<64x512xf32> -> vector<64x512xf32>
    %163 = arith.addf %156, %162 : vector<64x512xf32>
    %c0_147 = arith.constant 0 : index
    %c3_148 = arith.constant 3 : index
    %c0_149 = arith.constant 0 : index
    %164 = vector.load %arg12[%c0_147, %c3_148, %c0_149] : memref<8x12x256xf32, #tpu.memory_space<vmem>>, vector<8x8x256xf32>
    %165 = vector.shape_cast %164 : vector<8x8x256xf32> to vector<64x256xf32>
    %166 = arith.truncf %165 : vector<64x256xf32> to vector<64x256xbf16>
    %c3_150 = arith.constant 3 : index
    %c0_151 = arith.constant 0 : index
    %c0_152 = arith.constant 0 : index
    %167 = vector.load %arg4[%c3_150, %c0_151, %c0_152] : memref<5x256x512xbf16, #tpu.memory_space<vmem>>, vector<1x256x512xbf16>
    %168 = vector.shape_cast %167 : vector<1x256x512xbf16> to vector<256x512xbf16>
    %cst_153 = arith.constant dense<0.000000e+00> : vector<64x512xf32>
    %169 = tpu.matmul %166, %168, %cst_153 {dimension_numbers = #tpu.dot_dimension_numbers<[1], [0], [0], [1], [0, 0, 1, 1], [], []>} : vector<64x256xbf16>, vector<256x512xbf16>, vector<64x512xf32> -> vector<64x512xf32>
    %170 = arith.addf %163, %169 : vector<64x512xf32>
    %c0_154 = arith.constant 0 : index
    %c4_155 = arith.constant 4 : index
    %c0_156 = arith.constant 0 : index
    %171 = vector.load %arg12[%c0_154, %c4_155, %c0_156] : memref<8x12x256xf32, #tpu.memory_space<vmem>>, vector<8x8x256xf32>
    %172 = vector.shape_cast %171 : vector<8x8x256xf32> to vector<64x256xf32>
    %173 = arith.truncf %172 : vector<64x256xf32> to vector<64x256xbf16>
    %c4_157 = arith.constant 4 : index
    %c0_158 = arith.constant 0 : index
    %c0_159 = arith.constant 0 : index
    %174 = vector.load %arg4[%c4_157, %c0_158, %c0_159] : memref<5x256x512xbf16, #tpu.memory_space<vmem>>, vector<1x256x512xbf16>
    %175 = vector.shape_cast %174 : vector<1x256x512xbf16> to vector<256x512xbf16>
    %cst_160 = arith.constant dense<0.000000e+00> : vector<64x512xf32>
    %176 = tpu.matmul %173, %175, %cst_160 {dimension_numbers = #tpu.dot_dimension_numbers<[1], [0], [0], [1], [0, 0, 1, 1], [], []>} : vector<64x256xbf16>, vector<256x512xbf16>, vector<64x512xf32> -> vector<64x512xf32>
    %177 = arith.addf %170, %176 : vector<64x512xf32>
    %c0_161 = arith.constant 0 : index
    %c0_162 = arith.constant 0 : index
    %178 = vector.load %arg5[%c0_161, %c0_162] : memref<1x512xf32, #tpu.memory_space<vmem>>, vector<1x512xf32>
    %179 = vector.broadcast %178 : vector<1x512xf32> to vector<64x512xf32>
    %180 = arith.addf %177, %179 : vector<64x512xf32>
    %cst_163 = arith.constant 0.000000e+00 : f32
    %181 = vector.broadcast %cst_163 : f32 to vector<64x512xf32>
    %182 = arith.maximumf %180, %181 : vector<64x512xf32>
    %183 = vector.extract_strided_slice %182 {offsets = [0, 0], sizes = [64, 256], strides = [1, 1]} : vector<64x512xf32> to vector<64x256xf32>
    %184 = vector.extract_strided_slice %182 {offsets = [0, 256], sizes = [64, 256], strides = [1, 1]} : vector<64x512xf32> to vector<64x256xf32>
    %185 = arith.maximumf %183, %184 : vector<64x256xf32>
    %186 = vector.shape_cast %185 : vector<64x256xf32> to vector<8x8x256xf32>
    %c0_164 = arith.constant 0 : index
    %c0_165 = arith.constant 0 : index
    %c0_166 = arith.constant 0 : index
    %187 = vector.load %arg13[%c0_164, %c0_165, %c0_166] : memref<8x8x256xf32, #tpu.memory_space<vmem>>, vector<8x8x256xf32>
    tpu.vector_store %arg13[%c0_164, %c0_165, %c0_166], %186 {strides = array<i32>} : memref<8x8x256xf32, #tpu.memory_space<vmem>>, vector<8x8x256xf32>,
    %cst_167 = arith.constant 0.000000e+00 : f32
    %188 = vector.broadcast %cst_167 : f32 to vector<8x512xf32>
    %c0_168 = arith.constant 0 : index
    %c0_169 = arith.constant 0 : index
    %c0_170 = arith.constant 0 : index
    %189 = vector.load %arg13[%c0_168, %c0_169, %c0_170] : memref<8x8x256xf32, #tpu.memory_space<vmem>>, vector<8x1x256xf32>
    %190 = vector.shape_cast %189 : vector<8x1x256xf32> to vector<8x256xf32>
    %c0_171 = arith.constant 0 : index
    %c1_172 = arith.constant 1 : index
    %c0_173 = arith.constant 0 : index
    %191 = vector.load %arg13[%c0_171, %c1_172, %c0_173] : memref<8x8x256xf32, #tpu.memory_space<vmem>>, vector<8x1x256xf32>
    %192 = vector.shape_cast %191 : vector<8x1x256xf32> to vector<8x256xf32>
    %193 = arith.maximumf %190, %192 : vector<8x256xf32>
    %194 = arith.truncf %193 : vector<8x256xf32> to vector<8x256xbf16>
    %c0_174 = arith.constant 0 : index
    %c0_175 = arith.constant 0 : index
    %c0_176 = arith.constant 0 : index
    %195 = vector.load %arg6[%c0_174, %c0_175, %c0_176] : memref<4x256x512xbf16, #tpu.memory_space<vmem>>, vector<1x256x512xbf16>
    %196 = vector.shape_cast %195 : vector<1x256x512xbf16> to vector<256x512xbf16>
    %cst_177 = arith.constant dense<0.000000e+00> : vector<8x512xf32>
    %197 = tpu.matmul %194, %196, %cst_177 {dimension_numbers = #tpu.dot_dimension_numbers<[1], [0], [0], [1], [0, 0, 1, 1], [], []>} : vector<8x256xbf16>, vector<256x512xbf16>, vector<8x512xf32> -> vector<8x512xf32>
    %198 = arith.addf %188, %197 : vector<8x512xf32>
    %c0_178 = arith.constant 0 : index
    %c2_179 = arith.constant 2 : index
    %c0_180 = arith.constant 0 : index
    %199 = vector.load %arg13[%c0_178, %c2_179, %c0_180] : memref<8x8x256xf32, #tpu.memory_space<vmem>>, vector<8x1x256xf32>
    %200 = vector.shape_cast %199 : vector<8x1x256xf32> to vector<8x256xf32>
    %c0_181 = arith.constant 0 : index
    %c3_182 = arith.constant 3 : index
    %c0_183 = arith.constant 0 : index
    %201 = vector.load %arg13[%c0_181, %c3_182, %c0_183] : memref<8x8x256xf32, #tpu.memory_space<vmem>>, vector<8x1x256xf32>
    %202 = vector.shape_cast %201 : vector<8x1x256xf32> to vector<8x256xf32>
    %203 = arith.maximumf %200, %202 : vector<8x256xf32>
    %204 = arith.truncf %203 : vector<8x256xf32> to vector<8x256xbf16>
    %c1_184 = arith.constant 1 : index
    %c0_185 = arith.constant 0 : index
    %c0_186 = arith.constant 0 : index
    %205 = vector.load %arg6[%c1_184, %c0_185, %c0_186] : memref<4x256x512xbf16, #tpu.memory_space<vmem>>, vector<1x256x512xbf16>
    %206 = vector.shape_cast %205 : vector<1x256x512xbf16> to vector<256x512xbf16>
    %cst_187 = arith.constant dense<0.000000e+00> : vector<8x512xf32>
    %207 = tpu.matmul %204, %206, %cst_187 {dimension_numbers = #tpu.dot_dimension_numbers<[1], [0], [0], [1], [0, 0, 1, 1], [], []>} : vector<8x256xbf16>, vector<256x512xbf16>, vector<8x512xf32> -> vector<8x512xf32>
    %208 = arith.addf %198, %207 : vector<8x512xf32>
    %c0_188 = arith.constant 0 : index
    %c4_189 = arith.constant 4 : index
    %c0_190 = arith.constant 0 : index
    %209 = vector.load %arg13[%c0_188, %c4_189, %c0_190] : memref<8x8x256xf32, #tpu.memory_space<vmem>>, vector<8x1x256xf32>
    %210 = vector.shape_cast %209 : vector<8x1x256xf32> to vector<8x256xf32>
    %c0_191 = arith.constant 0 : index
    %c5_192 = arith.constant 5 : index
    %c0_193 = arith.constant 0 : index
    %211 = vector.load %arg13[%c0_191, %c5_192, %c0_193] : memref<8x8x256xf32, #tpu.memory_space<vmem>>, vector<8x1x256xf32>
    %212 = vector.shape_cast %211 : vector<8x1x256xf32> to vector<8x256xf32>
    %213 = arith.maximumf %210, %212 : vector<8x256xf32>
    %214 = arith.truncf %213 : vector<8x256xf32> to vector<8x256xbf16>
    %c2_194 = arith.constant 2 : index
    %c0_195 = arith.constant 0 : index
    %c0_196 = arith.constant 0 : index
    %215 = vector.load %arg6[%c2_194, %c0_195, %c0_196] : memref<4x256x512xbf16, #tpu.memory_space<vmem>>, vector<1x256x512xbf16>
    %216 = vector.shape_cast %215 : vector<1x256x512xbf16> to vector<256x512xbf16>
    %cst_197 = arith.constant dense<0.000000e+00> : vector<8x512xf32>
    %217 = tpu.matmul %214, %216, %cst_197 {dimension_numbers = #tpu.dot_dimension_numbers<[1], [0], [0], [1], [0, 0, 1, 1], [], []>} : vector<8x256xbf16>, vector<256x512xbf16>, vector<8x512xf32> -> vector<8x512xf32>
    %218 = arith.addf %208, %217 : vector<8x512xf32>
    %c0_198 = arith.constant 0 : index
    %c6_199 = arith.constant 6 : index
    %c0_200 = arith.constant 0 : index
    %219 = vector.load %arg13[%c0_198, %c6_199, %c0_200] : memref<8x8x256xf32, #tpu.memory_space<vmem>>, vector<8x1x256xf32>
    %220 = vector.shape_cast %219 : vector<8x1x256xf32> to vector<8x256xf32>
    %c0_201 = arith.constant 0 : index
    %c7_202 = arith.constant 7 : index
    %c0_203 = arith.constant 0 : index
    %221 = vector.load %arg13[%c0_201, %c7_202, %c0_203] : memref<8x8x256xf32, #tpu.memory_space<vmem>>, vector<8x1x256xf32>
    %222 = vector.shape_cast %221 : vector<8x1x256xf32> to vector<8x256xf32>
    %223 = arith.maximumf %220, %222 : vector<8x256xf32>
    %224 = arith.truncf %223 : vector<8x256xf32> to vector<8x256xbf16>
    %c3_204 = arith.constant 3 : index
    %c0_205 = arith.constant 0 : index
    %c0_206 = arith.constant 0 : index
    %225 = vector.load %arg6[%c3_204, %c0_205, %c0_206] : memref<4x256x512xbf16, #tpu.memory_space<vmem>>, vector<1x256x512xbf16>
    %226 = vector.shape_cast %225 : vector<1x256x512xbf16> to vector<256x512xbf16>
    %cst_207 = arith.constant dense<0.000000e+00> : vector<8x512xf32>
    %227 = tpu.matmul %224, %226, %cst_207 {dimension_numbers = #tpu.dot_dimension_numbers<[1], [0], [0], [1], [0, 0, 1, 1], [], []>} : vector<8x256xbf16>, vector<256x512xbf16>, vector<8x512xf32> -> vector<8x512xf32>
    %228 = arith.addf %218, %227 : vector<8x512xf32>
    %c0_208 = arith.constant 0 : index
    %c0_209 = arith.constant 0 : index
    %229 = vector.load %arg7[%c0_208, %c0_209] : memref<1x512xf32, #tpu.memory_space<vmem>>, vector<1x512xf32>
    %230 = vector.broadcast %229 : vector<1x512xf32> to vector<8x512xf32>
    %231 = arith.addf %228, %230 : vector<8x512xf32>
    %cst_210 = arith.constant 0.000000e+00 : f32
    %232 = vector.broadcast %cst_210 : f32 to vector<8x512xf32>
    %233 = arith.maximumf %231, %232 : vector<8x512xf32>
    %234 = arith.truncf %233 : vector<8x512xf32> to vector<8x512xbf16>
    %c0_211 = arith.constant 0 : index
    %c0_212 = arith.constant 0 : index
    %235 = vector.load %arg8[%c0_211, %c0_212] : memref<512x128xbf16, #tpu.memory_space<vmem>>, vector<512x128xbf16>
    %cst_213 = arith.constant dense<0.000000e+00> : vector<8x128xf32>
    %236 = tpu.matmul %234, %235, %cst_213 {dimension_numbers = #tpu.dot_dimension_numbers<[1], [0], [0], [1], [0, 0, 1, 1], [], []>} : vector<8x512xbf16>, vector<512x128xbf16>, vector<8x128xf32> -> vector<8x128xf32>
    %c0_214 = arith.constant 0 : index
    %c0_215 = arith.constant 0 : index
    %237 = vector.load %arg9[%c0_214, %c0_215] : memref<1x128xf32, #tpu.memory_space<vmem>>, vector<1x128xf32>
    %238 = vector.broadcast %237 : vector<1x128xf32> to vector<8x128xf32>
    %239 = arith.addf %236, %238 : vector<8x128xf32>
    %cst_216 = arith.constant dense<0xFF800000> : vector<8xf32>
    %240 = vector.multi_reduction <maximumf>, %239, %cst_216 [1] : vector<8x128xf32> to vector<8xf32>
    %241 = vector.shape_cast %240 : vector<8xf32> to vector<8x1xf32>
    %242 = vector.broadcast %241 : vector<8x1xf32> to vector<8x128xf32>
    %243 = arith.subf %239, %242 : vector<8x128xf32>
    %244 = math.exp %243 : vector<8x128xf32>
    %cst_217 = arith.constant dense<0.000000e+00> : vector<8xf32>
    %245 = vector.multi_reduction <add>, %244, %cst_217 [1] : vector<8x128xf32> to vector<8xf32>
    %246 = vector.shape_cast %245 : vector<8xf32> to vector<8x1xf32>
    %247 = math.log %246 : vector<8x1xf32>
    %248 = arith.addf %241, %247 : vector<8x1xf32>
    %249 = vector.broadcast %248 : vector<8x1xf32> to vector<8x128xf32>
    %250 = arith.subf %239, %249 : vector<8x128xf32>
    %c0_218 = arith.constant 0 : index
    %c0_219 = arith.constant 0 : index
    %251 = vector.load %arg10[%c0_218, %c0_219] : memref<8x128xf32, #tpu.memory_space<vmem>>, vector<8x128xf32>
    tpu.vector_store %arg10[%c0_218, %c0_219], %250 {strides = array<i32>} : memref<8x128xf32, #tpu.memory_space<vmem>>, vector<8x128xf32>,
    return
  }
  func.func @transform_0(%arg0: i32) -> (i32, i32, i32) {
    %c0_i32 = arith.constant 0 : i32
    %c0_i32_0 = arith.constant 0 : i32
    %c0_i32_1 = arith.constant 0 : i32
    return %arg0, %c0_i32, %c0_i32_0 : i32, i32, i32
  }
  func.func @transform_1(%arg0: i32) -> (i32, i32, i32) {
    %c0_i32 = arith.constant 0 : i32
    %c0_i32_0 = arith.constant 0 : i32
    %c0_i32_1 = arith.constant 0 : i32
    %c0_i32_2 = arith.constant 0 : i32
    return %c0_i32, %c0_i32_0, %c0_i32_1 : i32, i32, i32
  }
  func.func @transform_2(%arg0: i32) -> (i32, i32) {
    %c0_i32 = arith.constant 0 : i32
    %c0_i32_0 = arith.constant 0 : i32
    %c0_i32_1 = arith.constant 0 : i32
    return %c0_i32, %c0_i32_0 : i32, i32
  }
  func.func @transform_3(%arg0: i32) -> (i32, i32, i32) {
    %c0_i32 = arith.constant 0 : i32
    %c0_i32_0 = arith.constant 0 : i32
    %c0_i32_1 = arith.constant 0 : i32
    %c0_i32_2 = arith.constant 0 : i32
    return %c0_i32, %c0_i32_0, %c0_i32_1 : i32, i32, i32
  }
  func.func @transform_4(%arg0: i32) -> (i32, i32) {
    %c0_i32 = arith.constant 0 : i32
    %c0_i32_0 = arith.constant 0 : i32
    %c0_i32_1 = arith.constant 0 : i32
    return %c0_i32, %c0_i32_0 : i32, i32
  }
  func.func @transform_5(%arg0: i32) -> (i32, i32, i32) {
    %c0_i32 = arith.constant 0 : i32
    %c0_i32_0 = arith.constant 0 : i32
    %c0_i32_1 = arith.constant 0 : i32
    %c0_i32_2 = arith.constant 0 : i32
    return %c0_i32, %c0_i32_0, %c0_i32_1 : i32, i32, i32
  }
  func.func @transform_6(%arg0: i32) -> (i32, i32) {
    %c0_i32 = arith.constant 0 : i32
    %c0_i32_0 = arith.constant 0 : i32
    %c0_i32_1 = arith.constant 0 : i32
    return %c0_i32, %c0_i32_0 : i32, i32
  }
  func.func @transform_7(%arg0: i32) -> (i32, i32) {
    %c0_i32 = arith.constant 0 : i32
    %c0_i32_0 = arith.constant 0 : i32
    %c0_i32_1 = arith.constant 0 : i32
    return %c0_i32, %c0_i32_0 : i32, i32
  }
  func.func @transform_8(%arg0: i32) -> (i32, i32) {
    %c0_i32 = arith.constant 0 : i32
    %c0_i32_0 = arith.constant 0 : i32
    %c0_i32_1 = arith.constant 0 : i32
    return %c0_i32, %c0_i32_0 : i32, i32
  }
  func.func @transform_9(%arg0: i32) -> (i32, i32) {
    %c0_i32 = arith.constant 0 : i32
    %c0_i32_0 = arith.constant 0 : i32
    return %arg0, %c0_i32 : i32, i32
  }
}

</mosaic_0001>

<llo_original>
// kernel: net_forward.1
$region0: #{net_forward.1}
  #allocation0 [shape = 'u32[]', space=smem, size = 0x4, offset = 0x4, fixed_abs, tag = 'smem constant byte address 0x4 - core index']
  #allocation1 [shape = 'u32[72,128]{1,0:T(1,128)}', space=vmem, size = 0x9000, scoped, tag = 'internal scratch']
  #allocation2 [shape = 'f32[8,24,256]{2,1,0:T(8,128)}', space=vmem, size = 0x30000, scoped, tag = 'scratch operand']
  #allocation3 [shape = 'f32[8,12,256]{2,1,0:T(8,128)}', space=vmem, size = 0x20000, scoped, tag = 'scratch operand']
  #allocation4 [shape = 'f32[8,8,256]{2,1,0:T(8,128)}', space=vmem, size = 0x10000, scoped, tag = 'scratch operand']
  %s0 = inlined_call_operand.vmem [shape: f32[8,28,32], index: 0, kind: input, shape index: {}]
  %s1 = inlined_call_operand.hbm [shape: bf16[5,32,512], index: 1, kind: input, shape index: {}]
  %s2 = inlined_call_operand.hbm [shape: f32[1,512], index: 2, kind: input, shape index: {}]
  %s3 = inlined_call_operand.hbm [shape: bf16[5,256,512], index: 3, kind: input, shape index: {}]
  %s4 = inlined_call_operand.hbm [shape: f32[1,512], index: 4, kind: input, shape index: {}]
  %s5 = inlined_call_operand.hbm [shape: bf16[4,256,512], index: 5, kind: input, shape index: {}]
  %s6 = inlined_call_operand.hbm [shape: f32[1,512], index: 6, kind: input, shape index: {}]
  %s7 = inlined_call_operand.hbm [shape: bf16[512,128], index: 7, kind: input, shape index: {}]
  %s8 = inlined_call_operand.hbm [shape: f32[1,128], index: 8, kind: input, shape index: {}]
  %s9 = inlined_call_operand.hbm [shape: f32[8,128], index: 9, kind: output, shape index: {}]
  %s10 = sld [smem:[#allocation0]]
  $region78: #{net_forward.1} parent=0
    _
  %s12 = ssub.s32 1, %s10
  %s13 = scalar_select 0, %s12, %s10
  $region1: #{net_forward.1} parent=0
    #allocation5 [shape = 'u8[163840]{0}', space=vmem, size = 0x28000, scoped, tag = 'input window, operand 1, single buffered']
    #allocation6 [shape = 's32[1]{0}', space=sflag, size = 0x4, scoped, tag = 'scoped memory for net_forward.1']
    #allocation7 [shape = 's32[1]{0}', space=sflag, size = 0x4, scoped, tag = 'scoped memory for net_forward.1']
    #allocation8 [shape = 'u8[2048]{0}', space=vmem, size = 0x800, scoped, tag = 'input window, operand 2, single buffered']
    #allocation9 [shape = 's32[1]{0}', space=sflag, size = 0x4, scoped, tag = 'scoped memory for net_forward.1']
    #allocation10 [shape = 'u8[1310720]{0}', space=vmem, size = 0x140000, scoped, tag = 'input window, operand 3, single buffered']
    #allocation11 [shape = 'u8[2048]{0}', space=vmem, size = 0x800, scoped, tag = 'input window, operand 4, single buffered']
    #allocation12 [shape = 's32[1]{0}', space=sflag, size = 0x4, scoped, tag = 'scoped memory for net_forward.1']
    #allocation13 [shape = 'u8[1048576]{0}', space=vmem, size = 0x100000, scoped, tag = 'input window, operand 5, single buffered']
    #allocation14 [shape = 'u8[2048]{0}', space=vmem, size = 0x800, scoped, tag = 'input window, operand 6, single buffered']
    #allocation15 [shape = 's32[1]{0}', space=sflag, size = 0x4, scoped, tag = 'scoped memory for net_forward.1']
    #allocation16 [shape = 'u8[131072]{0}', space=vmem, size = 0x20000, scoped, tag = 'input window, operand 7, single buffered']
    #allocation17 [shape = 'u8[512]{0}', space=vmem, size = 0x400, scoped, tag = 'input window, operand 8, single buffered']
    #allocation18 [shape = 's32[1]{0}', space=sflag, size = 0x4, scoped, tag = 'scoped memory for net_forward.1']
    #allocation19 [shape = 'u8[4096]{0}', space=vmem, size = 0x1000, scoped, tag = 'output window, operand 0, single buffered']
    %14 = vsyncpa [#allocation6], 0
    %15 = vsyncpa [#allocation9], 0
    %16 = vsyncpa [#allocation12], 0
    %17 = vsyncpa [#allocation15], 0
    %18 = vsyncpa [#allocation18], 0
    %19 = vsyncpa [#allocation7], 0
    // Predicated region
    $region2: #{net_forward.1} parent=1 // pred_check
      _
    $region3: #{net_forward.1} parent=1 // pred_check_branch
      %21 = sbr.rel (0) target = $region5
    $region4: #{net_forward.1} parent=1 // pred_region
      _
    $region5: #{net_forward.1} parent=1 // pred_fallthru
      _
    // Predicated region
    $region6: #{net_forward.1} parent=1 // pred_check
      _
    $region7: #{net_forward.1} parent=1 // pred_check_branch
      %23 = sbr.rel (0) target = $region9
    $region8: #{net_forward.1} parent=1 // pred_region
      %25 = vsyncadd [#allocation6], 0
      %s26 = sshll.u32 %s1, 4
      %s27 = int_to_ptr.hbm [resolvable:$true] %s26
      %s28 = sshll.u32 [#allocation5], 4
      %s29 = int_to_ptr.vmem [resolvable:$true] %s28
      %34 = dma.hbm_to_vmem [thread:$0]  %s27, 5120, %s29, [#allocation6], 256, 256, 16
    $region9: #{net_forward.1} parent=1 // pred_fallthru
      _
    // Predicated region
    $region10: #{net_forward.1} parent=1 // pred_check
      _
    $region11: #{net_forward.1} parent=1 // pred_check_branch
      %36 = sbr.rel (0) target = $region13
    $region12: #{net_forward.1} parent=1 // pred_region
      %38 = vsyncadd [#allocation9], 0
      %s40 = sshll.u32 %s2, 4
      %s41 = int_to_ptr.hbm [resolvable:$true] %s40
      %s42 = sshll.u32 [#allocation8], 4
      %s43 = int_to_ptr.vmem [resolvable:$true] %s42
      %45 = dma.hbm_to_vmem [thread:$0]  %s41, 64, %s43, [#allocation9]
    $region13: #{net_forward.1} parent=1 // pred_fallthru
      _
    // Predicated region
    $region14: #{net_forward.1} parent=1 // pred_check
      _
    $region15: #{net_forward.1} parent=1 // pred_check_branch
      %47 = sbr.rel (0) target = $region17
    $region16: #{net_forward.1} parent=1 // pred_region
      %49 = vsyncadd [#allocation9], 0
      %s50 = sshll.u32 %s3, 4
      %s51 = int_to_ptr.hbm [resolvable:$true] %s50
      %s52 = sshll.u32 [#allocation10], 4
      %s53 = int_to_ptr.vmem [resolvable:$true] %s52
      %58 = dma.hbm_to_vmem [thread:$0]  %s51, 40960, %s53, [#allocation9], 256, 256, 16
    $region17: #{net_forward.1} parent=1 // pred_fallthru
      _
    // Predicated region
    $region18: #{net_forward.1} parent=1 // pred_check
      _
    $region19: #{net_forward.1} parent=1 // pred_check_branch
      %60 = sbr.rel (0) target = $region21
    $region20: #{net_forward.1} parent=1 // pred_region
      %62 = vsyncadd [#allocation12], 0
      %s64 = sshll.u32 %s4, 4
      %s65 = int_to_ptr.hbm [resolvable:$true] %s64
      %s66 = sshll.u32 [#allocation11], 4
      %s67 = int_to_ptr.vmem [resolvable:$true] %s66
      %69 = dma.hbm_to_vmem [thread:$0]  %s65, 64, %s67, [#allocation12]
    $region21: #{net_forward.1} parent=1 // pred_fallthru
      _
    // Predicated region
    $region22: #{net_forward.1} parent=1 // pred_check
      _
    $region23: #{net_forward.1} parent=1 // pred_check_branch
      %71 = sbr.rel (0) target = $region25
    $region24: #{net_forward.1} parent=1 // pred_region
      %73 = vsyncadd [#allocation12], 0
      %s74 = sshll.u32 %s5, 4
      %s75 = int_to_ptr.hbm [resolvable:$true] %s74
      %s76 = sshll.u32 [#allocation13], 4
      %s77 = int_to_ptr.vmem [resolvable:$true] %s76
      %82 = dma.hbm_to_vmem [thread:$0]  %s75, 32768, %s77, [#allocation12], 256, 256, 16
    $region25: #{net_forward.1} parent=1 // pred_fallthru
      _
    // Predicated region
    $region26: #{net_forward.1} parent=1 // pred_check
      _
    $region27: #{net_forward.1} parent=1 // pred_check_branch
      %84 = sbr.rel (0) target = $region29
    $region28: #{net_forward.1} parent=1 // pred_region
      %86 = vsyncadd [#allocation15], 0
      %s88 = sshll.u32 %s6, 4
      %s89 = int_to_ptr.hbm [resolvable:$true] %s88
      %s90 = sshll.u32 [#allocation14], 4
      %s91 = int_to_ptr.vmem [resolvable:$true] %s90
      %93 = dma.hbm_to_vmem [thread:$0]  %s89, 64, %s91, [#allocation15]
    $region29: #{net_forward.1} parent=1 // pred_fallthru
      _
    // Predicated region
    $region30: #{net_forward.1} parent=1 // pred_check
      _
    $region31: #{net_forward.1} parent=1 // pred_check_branch
      %95 = sbr.rel (0) target = $region33
    $region32: #{net_forward.1} parent=1 // pred_region
      %97 = vsyncadd [#allocation15], 0
      %s98 = sshll.u32 %s7, 4
      %s99 = int_to_ptr.hbm [resolvable:$true] %s98
      %s100 = sshll.u32 [#allocation16], 4
      %s101 = int_to_ptr.vmem [resolvable:$true] %s100
      %106 = dma.hbm_to_vmem [thread:$0]  %s99, 4096, %s101, [#allocation15], 64, 64, 4
    $region33: #{net_forward.1} parent=1 // pred_fallthru
      _
    // Predicated region
    $region34: #{net_forward.1} parent=1 // pred_check
      _
    $region35: #{net_forward.1} parent=1 // pred_check_branch
      %108 = sbr.rel (0) target = $region37
    $region36: #{net_forward.1} parent=1 // pred_region
      %110 = vsyncadd [#allocation18], 0
      %s112 = sshll.u32 %s8, 4
      %s113 = int_to_ptr.hbm [resolvable:$true] %s112
      %s114 = sshll.u32 [#allocation17], 4
      %s115 = int_to_ptr.vmem [resolvable:$true] %s114
      %117 = dma.hbm_to_vmem [thread:$0]  %s113, 16, %s115, [#allocation18]
    $region37: #{net_forward.1} parent=1 // pred_fallthru
      _
    // Predicated region
    $region38: #{net_forward.1} parent=1 // pred_check
      _
    $region39: #{net_forward.1} parent=1 // pred_check_branch
      %119 = sbr.rel (0) target = $region41
    $region40: #{net_forward.1} parent=1 // pred_region
      %121 = dma.done [#allocation6], 5120
    $region41: #{net_forward.1} parent=1 // pred_fallthru
      _
    // Predicated region
    $region42: #{net_forward.1} parent=1 // pred_check
      _
    $region43: #{net_forward.1} parent=1 // pred_check_branch
      %123 = sbr.rel (0) target = $region45
    $region44: #{net_forward.1} parent=1 // pred_region
      %125 = dma.done [#allocation9], 64
    $region45: #{net_forward.1} parent=1 // pred_fallthru
      _
    // Predicated region
    $region46: #{net_forward.1} parent=1 // pred_check
      _
    $region47: #{net_forward.1} parent=1 // pred_check_branch
      %127 = sbr.rel (0) target = $region49
    $region48: #{net_forward.1} parent=1 // pred_region
      %129 = dma.done [#allocation9], 40960
    $region49: #{net_forward.1} parent=1 // pred_fallthru
      _
    // Predicated region
    $region50: #{net_forward.1} parent=1 // pred_check
      _
    $region51: #{net_forward.1} parent=1 // pred_check_branch
      %131 = sbr.rel (0) target = $region53
    $region52: #{net_forward.1} parent=1 // pred_region
      %133 = dma.done [#allocation12], 64
    $region53: #{net_forward.1} parent=1 // pred_fallthru
      _
    // Predicated region
    $region54: #{net_forward.1} parent=1 // pred_check
      _
    $region55: #{net_forward.1} parent=1 // pred_check_branch
      %135 = sbr.rel (0) target = $region57
    $region56: #{net_forward.1} parent=1 // pred_region
      %137 = dma.done [#allocation12], 32768
    $region57: #{net_forward.1} parent=1 // pred_fallthru
      _
    // Predicated region
    $region58: #{net_forward.1} parent=1 // pred_check
      _
    $region59: #{net_forward.1} parent=1 // pred_check_branch
      %139 = sbr.rel (0) target = $region61
    $region60: #{net_forward.1} parent=1 // pred_region
      %141 = dma.done [#allocation15], 64
    $region61: #{net_forward.1} parent=1 // pred_fallthru
      _
    // Predicated region
    $region62: #{net_forward.1} parent=1 // pred_check
      _
    $region63: #{net_forward.1} parent=1 // pred_check_branch
      %143 = sbr.rel (0) target = $region65
    $region64: #{net_forward.1} parent=1 // pred_region
      %145 = dma.done [#allocation15], 4096
    $region65: #{net_forward.1} parent=1 // pred_fallthru
      _
    // Predicated region
    $region66: #{net_forward.1} parent=1 // pred_check
      _
    $region67: #{net_forward.1} parent=1 // pred_check_branch
      %147 = sbr.rel (0) target = $region69
    $region68: #{net_forward.1} parent=1 // pred_region
      %149 = dma.done [#allocation18], 16
    $region69: #{net_forward.1} parent=1 // pred_fallthru
      _
    %v151 = vld [vmem:[%s0] sm:$0xff]
    %v152 = vld [vmem:[%s0 + $0x8] sm:$0xff]
    %v153 = vld [vmem:[%s0 + $0x10] sm:$0xff]
    %v154 = vld [vmem:[%s0 + $0x20] sm:$0xff]
    %v155 = vld [vmem:[%s0 + $0x28] sm:$0xff]
    %v156 = vld [vmem:[%s0 + $0x30] sm:$0xff]
    %v157 = vld [vmem:[%s0 + $0x40] sm:$0xff]
    %v158 = vld [vmem:[%s0 + $0x48] sm:$0xff]
    %v159 = vld [vmem:[%s0 + $0x50] sm:$0xff]
    %v160 = vld [vmem:[%s0 + $0x60] sm:$0xff]
    %v161 = vld [vmem:[%s0 + $0x68] sm:$0xff]
    %v162 = vld [vmem:[%s0 + $0x70] sm:$0xff]
    %v163 = vld [vmem:[%s0 + $0x80] sm:$0xff]
    %v164 = vld [vmem:[%s0 + $0x88] sm:$0xff]
    %v165 = vld [vmem:[%s0 + $0x90] sm:$0xff]
    %v166 = vld [vmem:[%s0 + $0xa0] sm:$0xff]
    %v167 = vld [vmem:[%s0 + $0xa8] sm:$0xff]
    %v168 = vld [vmem:[%s0 + $0xb0] sm:$0xff]
    %v169 = vld [vmem:[%s0 + $0xc0] sm:$0xff]
    %v170 = vld [vmem:[%s0 + $0xc8] sm:$0xff]
    %v171 = vld [vmem:[%s0 + $0xd0] sm:$0xff]
    %v172 = vld [vmem:[%s0 + $0xe0] sm:$0xff]
    %v173 = vld [vmem:[%s0 + $0xe8] sm:$0xff]
    %v174 = vld [vmem:[%s0 + $0xf0] sm:$0xff]
    %v175 = vpack.c.bf16 %v152, %v151
    %v176 = vpack.c.bf16 %v154, %v153
    %v177 = vpack.c.bf16 %v156, %v155
    %v178 = vpack.c.bf16 %v158, %v157
    %v179 = vpack.c.bf16 %v160, %v159
    %v180 = vpack.c.bf16 %v162, %v161
    %v181 = vpack.c.bf16 %v164, %v163
    %v182 = vpack.c.bf16 %v166, %v165
    %v183 = vpack.c.bf16 %v168, %v167
    %v184 = vpack.c.bf16 %v170, %v169
    %v185 = vpack.c.bf16 %v172, %v171
    %v186 = vpack.c.bf16 %v174, %v173
    %v187 = vld [vmem:[#allocation5] sm:$0xff]
    %v188 = vld [vmem:[#allocation5 + $0x8] sm:$0xff]
    %v189 = vld [vmem:[#allocation5 + $0x10] sm:$0xff]
    %v190 = vld [vmem:[#allocation5 + $0x18] sm:$0xff]
    %v191 = vld [vmem:[#allocation5 + $0x20] sm:$0xff]
    %v192 = vld [vmem:[#allocation5 + $0x28] sm:$0xff]
    %v193 = vld [vmem:[#allocation5 + $0x30] sm:$0xff]
    %v194 = vld [vmem:[#allocation5 + $0x38] sm:$0xff]
    %v195 = vld [vmem:[%s0 + $0x1] sm:$0xff]
    %v196 = vld [vmem:[%s0 + $0x9] sm:$0xff]
    %v197 = vld [vmem:[%s0 + $0x11] sm:$0xff]
    %v198 = vld [vmem:[%s0 + $0x21] sm:$0xff]
    %v199 = vld [vmem:[%s0 + $0x29] sm:$0xff]
    %v200 = vld [vmem:[%s0 + $0x31] sm:$0xff]
    %v201 = vld [vmem:[%s0 + $0x41] sm:$0xff]
    %v202 = vld [vmem:[%s0 + $0x49] sm:$0xff]
    %v203 = vld [vmem:[%s0 + $0x51] sm:$0xff]
    %v204 = vld [vmem:[%s0 + $0x61] sm:$0xff]
    %v205 = vld [vmem:[%s0 + $0x69] sm:$0xff]
    %v206 = vld [vmem:[%s0 + $0x71] sm:$0xff]
    %v207 = vld [vmem:[%s0 + $0x81] sm:$0xff]
    %v208 = vld [vmem:[%s0 + $0x89] sm:$0xff]
    %v209 = vld [vmem:[%s0 + $0x91] sm:$0xff]
    %v210 = vld [vmem:[%s0 + $0xa1] sm:$0xff]
    %v211 = vld [vmem:[%s0 + $0xa9] sm:$0xff]
    %v212 = vld [vmem:[%s0 + $0xb1] sm:$0xff]
    %v213 = vld [vmem:[%s0 + $0xc1] sm:$0xff]
    %v214 = vld [vmem:[%s0 + $0xc9] sm:$0xff]
    %v215 = vld [vmem:[%s0 + $0xd1] sm:$0xff]
    %v216 = vld [vmem:[%s0 + $0xe1] sm:$0xff]
    %v217 = vld [vmem:[%s0 + $0xe9] sm:$0xff]
    %v218 = vld [vmem:[%s0 + $0xf1] sm:$0xff]
    %v219 = vpack.c.bf16 %v196, %v195
    %v220 = vpack.c.bf16 %v198, %v197
    %v221 = vpack.c.bf16 %v200, %v199
    %v222 = vpack.c.bf16 %v202, %v201
    %v223 = vpack.c.bf16 %v204, %v203
    %v224 = vpack.c.bf16 %v206, %v205
    %v225 = vpack.c.bf16 %v208, %v207
    %v226 = vpack.c.bf16 %v210, %v209
    %v227 = vpack.c.bf16 %v212, %v211
    %v228 = vpack.c.bf16 %v214, %v213
    %v229 = vpack.c.bf16 %v216, %v215
    %v230 = vpack.c.bf16 %v218, %v217
    %s231 = scalar_lea.vmem [#allocation5], 64
    %v232 = vld [vmem:[%s231] sm:$0xff]
    %v233 = vld [vmem:[%s231 + $0x8] sm:$0xff]
    %v234 = vld [vmem:[%s231 + $0x10] sm:$0xff]
    %v235 = vld [vmem:[%s231 + $0x18] sm:$0xff]
    %v236 = vld [vmem:[%s231 + $0x20] sm:$0xff]
    %v237 = vld [vmem:[%s231 + $0x28] sm:$0xff]
    %v238 = vld [vmem:[%s231 + $0x30] sm:$0xff]
    %v239 = vld [vmem:[%s231 + $0x38] sm:$0xff]
    %v248 = vunpack.c.l.b16 %v232
    %v249 = vunpack.c.h.b16 %v232
    %v250 = vunpack.c.l.b16 %v233
    %v251 = vunpack.c.h.b16 %v233
    %v252 = vunpack.c.l.b16 %v234
    %v253 = vunpack.c.h.b16 %v234
    %v254 = vunpack.c.l.b16 %v235
    %v255 = vunpack.c.h.b16 %v235
    %v256 = vunpack.c.l.b16 %v236
    %v257 = vunpack.c.h.b16 %v236
    %v258 = vunpack.c.l.b16 %v237
    %v259 = vunpack.c.h.b16 %v237
    %v260 = vunpack.c.l.b16 %v238
    %v261 = vunpack.c.h.b16 %v238
    %v262 = vunpack.c.l.b16 %v239
    %v263 = vunpack.c.h.b16 %v239
    %v264 = vpack.c.b16 %v252, %v248
    %v265 = vpack.c.b16 %v253, %v249
    %v266 = vpack.c.b16 %v254, %v250
    %v267 = vpack.c.b16 %v255, %v251
    %v268 = vpack.c.b16 %v260, %v256
    %v269 = vpack.c.b16 %v261, %v257
    %v270 = vpack.c.b16 %v262, %v258
    %v271 = vpack.c.b16 %v263, %v259
    %vm280 = vcmask 261120
    %v282 = vsel %vm280, %v219, 0
    %v285 = vsel %vm280, %v220, 0
    %v288 = vsel %vm280, %v221, 0
    %v291 = vsel %vm280, %v222, 0
    %v294 = vsel %vm280, %v223, 0
    %v297 = vsel %vm280, %v224, 0
    %v300 = vsel %vm280, %v225, 0
    %v303 = vsel %vm280, %v226, 0
    %v306 = vsel %vm280, %v227, 0
    %v309 = vsel %vm280, %v228, 0
    %v312 = vsel %vm280, %v229, 0
    %v315 = vsel %vm280, %v230, 0
    %317 = vmatpush.bf16.msra.mxu0 0
    %318 = vmatpush.bf16.msra.mxu0 0
    %319 = vmatpush.bf16.msra.mxu0 0
    %320 = vmatpush.bf16.msra.mxu0 0
    %321 = vmatpush.bf16.msra.mxu0 0
    %322 = vmatpush.bf16.msra.mxu0 0
    %323 = vmatpush.bf16.msra.mxu0 %v268
    %324 = vmatpush.bf16.msra.mxu0 %v264
    %325 = vmatmul.bf16.gmra.mxu0 %v282
    %v326 = vpop.f32.mrf.mxu0
    %v327 = vadd.f32 0.0, %v326
    %v328 = vpop.f32.mrf.mxu0
    %v329 = vadd.f32 0.0, %v328
    %330 = vmatmul.bf16.gmra.mxu0 %v285
    %v331 = vpop.f32.mrf.mxu0
    %v332 = vadd.f32 0.0, %v331
    %v333 = vpop.f32.mrf.mxu0
    %v334 = vadd.f32 0.0, %v333
    %335 = vmatmul.bf16.gmra.mxu0 %v288
    %v336 = vpop.f32.mrf.mxu0
    %v337 = vadd.f32 0.0, %v336
    %v338 = vpop.f32.mrf.mxu0
    %v339 = vadd.f32 0.0, %v338
    %340 = vmatmul.bf16.gmra.mxu0 %v291
    %v341 = vpop.f32.mrf.mxu0
    %v342 = vadd.f32 0.0, %v341
    %v343 = vpop.f32.mrf.mxu0
    %v344 = vadd.f32 0.0, %v343
    %345 = vmatmul.bf16.gmra.mxu0 %v294
    %v346 = vpop.f32.mrf.mxu0
    %v347 = vadd.f32 0.0, %v346
    %v348 = vpop.f32.mrf.mxu0
    %v349 = vadd.f32 0.0, %v348
    %350 = vmatmul.bf16.gmra.mxu0 %v297
    %v351 = vpop.f32.mrf.mxu0
    %v352 = vadd.f32 0.0, %v351
    %v353 = vpop.f32.mrf.mxu0
    %v354 = vadd.f32 0.0, %v353
    %355 = vmatmul.bf16.gmra.mxu0 %v300
    %v356 = vpop.f32.mrf.mxu0
    %v357 = vadd.f32 0.0, %v356
    %v358 = vpop.f32.mrf.mxu0
    %v359 = vadd.f32 0.0, %v358
    %360 = vmatmul.bf16.gmra.mxu0 %v303
    %v361 = vpop.f32.mrf.mxu0
    %v362 = vadd.f32 0.0, %v361
    %v363 = vpop.f32.mrf.mxu0
    %v364 = vadd.f32 0.0, %v363
    %365 = vmatmul.bf16.gmra.mxu0 %v306
    %v366 = vpop.f32.mrf.mxu0
    %v367 = vadd.f32 0.0, %v366
    %v368 = vpop.f32.mrf.mxu0
    %v369 = vadd.f32 0.0, %v368
    %370 = vmatmul.bf16.gmra.mxu0 %v309
    %v371 = vpop.f32.mrf.mxu0
    %v372 = vadd.f32 0.0, %v371
    %v373 = vpop.f32.mrf.mxu0
    %v374 = vadd.f32 0.0, %v373
    %375 = vmatmul.bf16.gmra.mxu0 %v312
    %v376 = vpop.f32.mrf.mxu0
    %v377 = vadd.f32 0.0, %v376
    %v378 = vpop.f32.mrf.mxu0
    %v379 = vadd.f32 0.0, %v378
    %380 = vmatmul.bf16.gmra.mxu0 %v315
    %v381 = vpop.f32.mrf.mxu0
    %v382 = vadd.f32 0.0, %v381
    %v383 = vpop.f32.mrf.mxu0
    %v384 = vadd.f32 0.0, %v383
    %385 = vdwg.mxu0
    %386 = vmatpush.bf16.msra.mxu0 0
    %387 = vmatpush.bf16.msra.mxu0 0
    %388 = vmatpush.bf16.msra.mxu0 0
    %389 = vmatpush.bf16.msra.mxu0 0
    %390 = vmatpush.bf16.msra.mxu0 0
    %391 = vmatpush.bf16.msra.mxu0 0
    %392 = vmatpush.bf16.msra.mxu0 %v269
    %393 = vmatpush.bf16.msra.mxu0 %v265
    %394 = vmatmul.bf16.gmra.mxu0 %v282
    %v395 = vpop.f32.mrf.mxu0
    %v396 = vadd.f32 0.0, %v395
    %v397 = vpop.f32.mrf.mxu0
    %v398 = vadd.f32 0.0, %v397
    %399 = vmatmul.bf16.gmra.mxu0 %v285
    %v400 = vpop.f32.mrf.mxu0
    %v401 = vadd.f32 0.0, %v400
    %v402 = vpop.f32.mrf.mxu0
    %v403 = vadd.f32 0.0, %v402
    %404 = vmatmul.bf16.gmra.mxu0 %v288
    %v405 = vpop.f32.mrf.mxu0
    %v406 = vadd.f32 0.0, %v405
    %v407 = vpop.f32.mrf.mxu0
    %v408 = vadd.f32 0.0, %v407
    %409 = vmatmul.bf16.gmra.mxu0 %v291
    %v410 = vpop.f32.mrf.mxu0
    %v411 = vadd.f32 0.0, %v410
    %v412 = vpop.f32.mrf.mxu0
    %v413 = vadd.f32 0.0, %v412
    %414 = vmatmul.bf16.gmra.mxu0 %v294
    %v415 = vpop.f32.mrf.mxu0
    %v416 = vadd.f32 0.0, %v415
    %v417 = vpop.f32.mrf.mxu0
    %v418 = vadd.f32 0.0, %v417
    %419 = vmatmul.bf16.gmra.mxu0 %v297
    %v420 = vpop.f32.mrf.mxu0
    %v421 = vadd.f32 0.0, %v420
    %v422 = vpop.f32.mrf.mxu0
    %v423 = vadd.f32 0.0, %v422
    %424 = vmatmul.bf16.gmra.mxu0 %v300
    %v425 = vpop.f32.mrf.mxu0
    %v426 = vadd.f32 0.0, %v425
    %v427 = vpop.f32.mrf.mxu0
    %v428 = vadd.f32 0.0, %v427
    %429 = vmatmul.bf16.gmra.mxu0 %v303
    %v430 = vpop.f32.mrf.mxu0
    %v431 = vadd.f32 0.0, %v430
    %v432 = vpop.f32.mrf.mxu0
    %v433 = vadd.f32 0.0, %v432
    %434 = vmatmul.bf16.gmra.mxu0 %v306
    %v435 = vpop.f32.mrf.mxu0
    %v436 = vadd.f32 0.0, %v435
    %v437 = vpop.f32.mrf.mxu0
    %v438 = vadd.f32 0.0, %v437
    %439 = vmatmul.bf16.gmra.mxu0 %v309
    %v440 = vpop.f32.mrf.mxu0
    %v441 = vadd.f32 0.0, %v440
    %v442 = vpop.f32.mrf.mxu0
    %v443 = vadd.f32 0.0, %v442
    %444 = vmatmul.bf16.gmra.mxu0 %v312
    %v445 = vpop.f32.mrf.mxu0
    %v446 = vadd.f32 0.0, %v445
    %v447 = vpop.f32.mrf.mxu0
    %v448 = vadd.f32 0.0, %v447
    %449 = vmatmul.bf16.gmra.mxu0 %v315
    %v450 = vpop.f32.mrf.mxu0
    %v451 = vadd.f32 0.0, %v450
    %v452 = vpop.f32.mrf.mxu0
    %v453 = vadd.f32 0.0, %v452
    %454 = vdwg.mxu0
    %455 = vmatpush.bf16.msra.mxu0 0
    %456 = vmatpush.bf16.msra.mxu0 0
    %457 = vmatpush.bf16.msra.mxu0 0
    %458 = vmatpush.bf16.msra.mxu0 0
    %459 = vmatpush.bf16.msra.mxu0 0
    %460 = vmatpush.bf16.msra.mxu0 0
    %461 = vmatpush.bf16.msra.mxu0 %v270
    %462 = vmatpush.bf16.msra.mxu0 %v266
    %463 = vmatmul.bf16.gmra.mxu0 %v282
    %v464 = vpop.f32.mrf.mxu0
    %v465 = vadd.f32 0.0, %v464
    %v466 = vpop.f32.mrf.mxu0
    %v467 = vadd.f32 0.0, %v466
    %468 = vmatmul.bf16.gmra.mxu0 %v285
    %v469 = vpop.f32.mrf.mxu0
    %v470 = vadd.f32 0.0, %v469
    %v471 = vpop.f32.mrf.mxu0
    %v472 = vadd.f32 0.0, %v471
    %473 = vmatmul.bf16.gmra.mxu0 %v288
    %v474 = vpop.f32.mrf.mxu0
    %v475 = vadd.f32 0.0, %v474
    %v476 = vpop.f32.mrf.mxu0
    %v477 = vadd.f32 0.0, %v476
    %478 = vmatmul.bf16.gmra.mxu0 %v291
    %v479 = vpop.f32.mrf.mxu0
    %v480 = vadd.f32 0.0, %v479
    %v481 = vpop.f32.mrf.mxu0
    %v482 = vadd.f32 0.0, %v481
    %483 = vmatmul.bf16.gmra.mxu0 %v294
    %v484 = vpop.f32.mrf.mxu0
    %v485 = vadd.f32 0.0, %v484
    %v486 = vpop.f32.mrf.mxu0
    %v487 = vadd.f32 0.0, %v486
    %488 = vmatmul.bf16.gmra.mxu0 %v297
    %v489 = vpop.f32.mrf.mxu0
    %v490 = vadd.f32 0.0, %v489
    %v491 = vpop.f32.mrf.mxu0
    %v492 = vadd.f32 0.0, %v491
    %493 = vmatmul.bf16.gmra.mxu0 %v300
    %v494 = vpop.f32.mrf.mxu0
    %v495 = vadd.f32 0.0, %v494
    %v496 = vpop.f32.mrf.mxu0
    %v497 = vadd.f32 0.0, %v496
    %498 = vmatmul.bf16.gmra.mxu0 %v303
    %v499 = vpop.f32.mrf.mxu0
    %v500 = vadd.f32 0.0, %v499
    %v501 = vpop.f32.mrf.mxu0
    %v502 = vadd.f32 0.0, %v501
    %503 = vmatmul.bf16.gmra.mxu0 %v306
    %v504 = vpop.f32.mrf.mxu0
    %v505 = vadd.f32 0.0, %v504
    %v506 = vpop.f32.mrf.mxu0
    %v507 = vadd.f32 0.0, %v506
    %508 = vmatmul.bf16.gmra.mxu0 %v309
    %v509 = vpop.f32.mrf.mxu0
    %v510 = vadd.f32 0.0, %v509
    %v511 = vpop.f32.mrf.mxu0
    %v512 = vadd.f32 0.0, %v511
    %513 = vmatmul.bf16.gmra.mxu0 %v312
    %v514 = vpop.f32.mrf.mxu0
    %v515 = vadd.f32 0.0, %v514
    %v516 = vpop.f32.mrf.mxu0
    %v517 = vadd.f32 0.0, %v516
    %518 = vmatmul.bf16.gmra.mxu0 %v315
    %v519 = vpop.f32.mrf.mxu0
    %v520 = vadd.f32 0.0, %v519
    %v521 = vpop.f32.mrf.mxu0
    %v522 = vadd.f32 0.0, %v521
    %523 = vdwg.mxu0
    %524 = vmatpush.bf16.msra.mxu0 0
    %525 = vmatpush.bf16.msra.mxu0 0
    %526 = vmatpush.bf16.msra.mxu0 0
    %527 = vmatpush.bf16.msra.mxu0 0
    %528 = vmatpush.bf16.msra.mxu0 0
    %529 = vmatpush.bf16.msra.mxu0 0
    %530 = vmatpush.bf16.msra.mxu0 %v271
    %531 = vmatpush.bf16.msra.mxu0 %v267
    %532 = vmatmul.bf16.gmra.mxu0 %v282
    %v533 = vpop.f32.mrf.mxu0
    %v534 = vadd.f32 0.0, %v533
    %v535 = vpop.f32.mrf.mxu0
    %v536 = vadd.f32 0.0, %v535
    %537 = vmatmul.bf16.gmra.mxu0 %v285
    %v538 = vpop.f32.mrf.mxu0
    %v539 = vadd.f32 0.0, %v538
    %v540 = vpop.f32.mrf.mxu0
    %v541 = vadd.f32 0.0, %v540
    %542 = vmatmul.bf16.gmra.mxu0 %v288
    %v543 = vpop.f32.mrf.mxu0
    %v544 = vadd.f32 0.0, %v543
    %v545 = vpop.f32.mrf.mxu0
    %v546 = vadd.f32 0.0, %v545
    %547 = vmatmul.bf16.gmra.mxu0 %v291
    %v548 = vpop.f32.mrf.mxu0
    %v549 = vadd.f32 0.0, %v548
    %v550 = vpop.f32.mrf.mxu0
    %v551 = vadd.f32 0.0, %v550
    %552 = vmatmul.bf16.gmra.mxu0 %v294
    %v553 = vpop.f32.mrf.mxu0
    %v554 = vadd.f32 0.0, %v553
    %v555 = vpop.f32.mrf.mxu0
    %v556 = vadd.f32 0.0, %v555
    %557 = vmatmul.bf16.gmra.mxu0 %v297
    %v558 = vpop.f32.mrf.mxu0
    %v559 = vadd.f32 0.0, %v558
    %v560 = vpop.f32.mrf.mxu0
    %v561 = vadd.f32 0.0, %v560
    %562 = vmatmul.bf16.gmra.mxu0 %v300
    %v563 = vpop.f32.mrf.mxu0
    %v564 = vadd.f32 0.0, %v563
    %v565 = vpop.f32.mrf.mxu0
    %v566 = vadd.f32 0.0, %v565
    %567 = vmatmul.bf16.gmra.mxu0 %v303
    %v568 = vpop.f32.mrf.mxu0
    %v569 = vadd.f32 0.0, %v568
    %v570 = vpop.f32.mrf.mxu0
    %v571 = vadd.f32 0.0, %v570
    %572 = vmatmul.bf16.gmra.mxu0 %v306
    %v573 = vpop.f32.mrf.mxu0
    %v574 = vadd.f32 0.0, %v573
    %v575 = vpop.f32.mrf.mxu0
    %v576 = vadd.f32 0.0, %v575
    %577 = vmatmul.bf16.gmra.mxu0 %v309
    %v578 = vpop.f32.mrf.mxu0
    %v579 = vadd.f32 0.0, %v578
    %v580 = vpop.f32.mrf.mxu0
    %v581 = vadd.f32 0.0, %v580
    %582 = vmatmul.bf16.gmra.mxu0 %v312
    %v583 = vpop.f32.mrf.mxu0
    %v584 = vadd.f32 0.0, %v583
    %v585 = vpop.f32.mrf.mxu0
    %v586 = vadd.f32 0.0, %v585
    %587 = vmatmul.bf16.gmra.mxu0 %v315
    %v588 = vpop.f32.mrf.mxu0
    %v589 = vadd.f32 0.0, %v588
    %v590 = vpop.f32.mrf.mxu0
    %v591 = vadd.f32 0.0, %v590
    %592 = vdwg.mxu0
    %v601 = vunpack.c.l.b16 %v187
    %v602 = vunpack.c.h.b16 %v187
    %v603 = vunpack.c.l.b16 %v188
    %v604 = vunpack.c.h.b16 %v188
    %v605 = vunpack.c.l.b16 %v189
    %v606 = vunpack.c.h.b16 %v189
    %v607 = vunpack.c.l.b16 %v190
    %v608 = vunpack.c.h.b16 %v190
    %v609 = vunpack.c.l.b16 %v191
    %v610 = vunpack.c.h.b16 %v191
    %v611 = vunpack.c.l.b16 %v192
    %v612 = vunpack.c.h.b16 %v192
    %v613 = vunpack.c.l.b16 %v193
    %v614 = vunpack.c.h.b16 %v193
    %v615 = vunpack.c.l.b16 %v194
    %v616 = vunpack.c.h.b16 %v194
    %v617 = vpack.c.b16 %v605, %v601
    %v618 = vpack.c.b16 %v606, %v602
    %v619 = vpack.c.b16 %v607, %v603
    %v620 = vpack.c.b16 %v608, %v604
    %v621 = vpack.c.b16 %v613, %v609
    %v622 = vpack.c.b16 %v614, %v610
    %v623 = vpack.c.b16 %v615, %v611
    %v624 = vpack.c.b16 %v616, %v612
    %v634 = vsel %vm280, %v175, 0
    %v637 = vsel %vm280, %v176, 0
    %v640 = vsel %vm280, %v177, 0
    %v643 = vsel %vm280, %v178, 0
    %v646 = vsel %vm280, %v179, 0
    %v649 = vsel %vm280, %v180, 0
    %v652 = vsel %vm280, %v181, 0
    %v655 = vsel %vm280, %v182, 0
    %v658 = vsel %vm280, %v183, 0
    %v661 = vsel %vm280, %v184, 0
    %v664 = vsel %vm280, %v185, 0
    %v667 = vsel %vm280, %v186, 0
    %669 = vmatpush.bf16.msra.mxu0 0
    %670 = vmatpush.bf16.msra.mxu0 0
    %671 = vmatpush.bf16.msra.mxu0 0
    %672 = vmatpush.bf16.msra.mxu0 0
    %673 = vmatpush.bf16.msra.mxu0 0
    %674 = vmatpush.bf16.msra.mxu0 0
    %675 = vmatpush.bf16.msra.mxu0 %v621
    %676 = vmatpush.bf16.msra.mxu0 %v617
    %677 = vmatmul.bf16.gmra.mxu0 %v634
    %v678 = vpop.f32.mrf.mxu0
    %v679 = vadd.f32 %v327, %v678
    %v680 = vpop.f32.mrf.mxu0
    %v681 = vadd.f32 %v329, %v680
    %682 = vmatmul.bf16.gmra.mxu0 %v637
    %v683 = vpop.f32.mrf.mxu0
    %v684 = vadd.f32 %v332, %v683
    %v685 = vpop.f32.mrf.mxu0
    %v686 = vadd.f32 %v334, %v685
    %687 = vmatmul.bf16.gmra.mxu0 %v640
    %v688 = vpop.f32.mrf.mxu0
    %v689 = vadd.f32 %v337, %v688
    %v690 = vpop.f32.mrf.mxu0
    %v691 = vadd.f32 %v339, %v690
    %692 = vmatmul.bf16.gmra.mxu0 %v643
    %v693 = vpop.f32.mrf.mxu0
    %v694 = vadd.f32 %v342, %v693
    %v695 = vpop.f32.mrf.mxu0
    %v696 = vadd.f32 %v344, %v695
    %697 = vmatmul.bf16.gmra.mxu0 %v646
    %v698 = vpop.f32.mrf.mxu0
    %v699 = vadd.f32 %v347, %v698
    %v700 = vpop.f32.mrf.mxu0
    %v701 = vadd.f32 %v349, %v700
    %702 = vmatmul.bf16.gmra.mxu0 %v649
    %v703 = vpop.f32.mrf.mxu0
    %v704 = vadd.f32 %v352, %v703
    %v705 = vpop.f32.mrf.mxu0
    %v706 = vadd.f32 %v354, %v705
    %707 = vmatmul.bf16.gmra.mxu0 %v652
    %v708 = vpop.f32.mrf.mxu0
    %v709 = vadd.f32 %v357, %v708
    %v710 = vpop.f32.mrf.mxu0
    %v711 = vadd.f32 %v359, %v710
    %712 = vmatmul.bf16.gmra.mxu0 %v655
    %v713 = vpop.f32.mrf.mxu0
    %v714 = vadd.f32 %v362, %v713
    %v715 = vpop.f32.mrf.mxu0
    %v716 = vadd.f32 %v364, %v715
    %717 = vmatmul.bf16.gmra.mxu0 %v658
    %v718 = vpop.f32.mrf.mxu0
    %v719 = vadd.f32 %v367, %v718
    %v720 = vpop.f32.mrf.mxu0
    %v721 = vadd.f32 %v369, %v720
    %722 = vmatmul.bf16.gmra.mxu0 %v661
    %v723 = vpop.f32.mrf.mxu0
    %v724 = vadd.f32 %v372, %v723
    %v725 = vpop.f32.mrf.mxu0
    %v726 = vadd.f32 %v374, %v725
    %727 = vmatmul.bf16.gmra.mxu0 %v664
    %v728 = vpop.f32.mrf.mxu0
    %v729 = vadd.f32 %v377, %v728
    %v730 = vpop.f32.mrf.mxu0
    %v731 = vadd.f32 %v379, %v730
    %732 = vmatmul.bf16.gmra.mxu0 %v667
    %v733 = vpop.f32.mrf.mxu0
    %v734 = vadd.f32 %v382, %v733
    %v735 = vpop.f32.mrf.mxu0
    %v736 = vadd.f32 %v384, %v735
    %737 = vdwg.mxu0
    %738 = vmatpush.bf16.msra.mxu0 0
    %739 = vmatpush.bf16.msra.mxu0 0
    %740 = vmatpush.bf16.msra.mxu0 0
    %741 = vmatpush.bf16.msra.mxu0 0
    %742 = vmatpush.bf16.msra.mxu0 0
    %743 = vmatpush.bf16.msra.mxu0 0
    %744 = vmatpush.bf16.msra.mxu0 %v622
    %745 = vmatpush.bf16.msra.mxu0 %v618
    %746 = vmatmul.bf16.gmra.mxu0 %v634
    %v747 = vpop.f32.mrf.mxu0
    %v748 = vadd.f32 %v396, %v747
    %v749 = vpop.f32.mrf.mxu0
    %v750 = vadd.f32 %v398, %v749
    %751 = vmatmul.bf16.gmra.mxu0 %v637
    %v752 = vpop.f32.mrf.mxu0
    %v753 = vadd.f32 %v401, %v752
    %v754 = vpop.f32.mrf.mxu0
    %v755 = vadd.f32 %v403, %v754
    %756 = vmatmul.bf16.gmra.mxu0 %v640
    %v757 = vpop.f32.mrf.mxu0
    %v758 = vadd.f32 %v406, %v757
    %v759 = vpop.f32.mrf.mxu0
    %v760 = vadd.f32 %v408, %v759
    %761 = vmatmul.bf16.gmra.mxu0 %v643
    %v762 = vpop.f32.mrf.mxu0
    %v763 = vadd.f32 %v411, %v762
    %v764 = vpop.f32.mrf.mxu0
    %v765 = vadd.f32 %v413, %v764
    %766 = vmatmul.bf16.gmra.mxu0 %v646
    %v767 = vpop.f32.mrf.mxu0
    %v768 = vadd.f32 %v416, %v767
    %v769 = vpop.f32.mrf.mxu0
    %v770 = vadd.f32 %v418, %v769
    %771 = vmatmul.bf16.gmra.mxu0 %v649
    %v772 = vpop.f32.mrf.mxu0
    %v773 = vadd.f32 %v421, %v772
    %v774 = vpop.f32.mrf.mxu0
    %v775 = vadd.f32 %v423, %v774
    %776 = vmatmul.bf16.gmra.mxu0 %v652
    %v777 = vpop.f32.mrf.mxu0
    %v778 = vadd.f32 %v426, %v777
    %v779 = vpop.f32.mrf.mxu0
    %v780 = vadd.f32 %v428, %v779
    %781 = vmatmul.bf16.gmra.mxu0 %v655
    %v782 = vpop.f32.mrf.mxu0
    %v783 = vadd.f32 %v431, %v782
    %v784 = vpop.f32.mrf.mxu0
    %v785 = vadd.f32 %v433, %v784
    %786 = vmatmul.bf16.gmra.mxu0 %v658
    %v787 = vpop.f32.mrf.mxu0
    %v788 = vadd.f32 %v436, %v787
    %v789 = vpop.f32.mrf.mxu0
    %v790 = vadd.f32 %v438, %v789
    %791 = vmatmul.bf16.gmra.mxu0 %v661
    %v792 = vpop.f32.mrf.mxu0
    %v793 = vadd.f32 %v441, %v792
    %v794 = vpop.f32.mrf.mxu0
    %v795 = vadd.f32 %v443, %v794
    %796 = vmatmul.bf16.gmra.mxu0 %v664
    %v797 = vpop.f32.mrf.mxu0
    %v798 = vadd.f32 %v446, %v797
    %v799 = vpop.f32.mrf.mxu0
    %v800 = vadd.f32 %v448, %v799
    %801 = vmatmul.bf16.gmra.mxu0 %v667
    %v802 = vpop.f32.mrf.mxu0
    %v803 = vadd.f32 %v451, %v802
    %v804 = vpop.f32.mrf.mxu0
    %v805 = vadd.f32 %v453, %v804
    %806 = vdwg.mxu0
    %807 = vmatpush.bf16.msra.mxu0 0
    %808 = vmatpush.bf16.msra.mxu0 0
    %809 = vmatpush.bf16.msra.mxu0 0
    %810 = vmatpush.bf16.msra.mxu0 0
    %811 = vmatpush.bf16.msra.mxu0 0
    %812 = vmatpush.bf16.msra.mxu0 0
    %813 = vmatpush.bf16.msra.mxu0 %v623
    %814 = vmatpush.bf16.msra.mxu0 %v619
    %815 = vmatmul.bf16.gmra.mxu0 %v634
    %v816 = vpop.f32.mrf.mxu0
    %v817 = vadd.f32 %v465, %v816
    %v818 = vpop.f32.mrf.mxu0
    %v819 = vadd.f32 %v467, %v818
    %820 = vmatmul.bf16.gmra.mxu0 %v637
    %v821 = vpop.f32.mrf.mxu0
    %v822 = vadd.f32 %v470, %v821
    %v823 = vpop.f32.mrf.mxu0
    %v824 = vadd.f32 %v472, %v823
    %825 = vmatmul.bf16.gmra.mxu0 %v640
    %v826 = vpop.f32.mrf.mxu0
    %v827 = vadd.f32 %v475, %v826
    %v828 = vpop.f32.mrf.mxu0
    %v829 = vadd.f32 %v477, %v828
    %830 = vmatmul.bf16.gmra.mxu0 %v643
    %v831 = vpop.f32.mrf.mxu0
    %v832 = vadd.f32 %v480, %v831
    %v833 = vpop.f32.mrf.mxu0
    %v834 = vadd.f32 %v482, %v833
    %835 = vmatmul.bf16.gmra.mxu0 %v646
    %v836 = vpop.f32.mrf.mxu0
    %v837 = vadd.f32 %v485, %v836
    %v838 = vpop.f32.mrf.mxu0
    %v839 = vadd.f32 %v487, %v838
    %840 = vmatmul.bf16.gmra.mxu0 %v649
    %v841 = vpop.f32.mrf.mxu0
    %v842 = vadd.f32 %v490, %v841
    %v843 = vpop.f32.mrf.mxu0
    %v844 = vadd.f32 %v492, %v843
    %845 = vmatmul.bf16.gmra.mxu0 %v652
    %v846 = vpop.f32.mrf.mxu0
    %v847 = vadd.f32 %v495, %v846
    %v848 = vpop.f32.mrf.mxu0
    %v849 = vadd.f32 %v497, %v848
    %850 = vmatmul.bf16.gmra.mxu0 %v655
    %v851 = vpop.f32.mrf.mxu0
    %v852 = vadd.f32 %v500, %v851
    %v853 = vpop.f32.mrf.mxu0
    %v854 = vadd.f32 %v502, %v853
    %855 = vmatmul.bf16.gmra.mxu0 %v658
    %v856 = vpop.f32.mrf.mxu0
    %v857 = vadd.f32 %v505, %v856
    %v858 = vpop.f32.mrf.mxu0
    %v859 = vadd.f32 %v507, %v858
    %860 = vmatmul.bf16.gmra.mxu0 %v661
    %v861 = vpop.f32.mrf.mxu0
    %v862 = vadd.f32 %v510, %v861
    %v863 = vpop.f32.mrf.mxu0
    %v864 = vadd.f32 %v512, %v863
    %865 = vmatmul.bf16.gmra.mxu0 %v664
    %v866 = vpop.f32.mrf.mxu0
    %v867 = vadd.f32 %v515, %v866
    %v868 = vpop.f32.mrf.mxu0
    %v869 = vadd.f32 %v517, %v868
    %870 = vmatmul.bf16.gmra.mxu0 %v667
    %v871 = vpop.f32.mrf.mxu0
    %v872 = vadd.f32 %v520, %v871
    %v873 = vpop.f32.mrf.mxu0
    %v874 = vadd.f32 %v522, %v873
    %875 = vdwg.mxu0
    %876 = vmatpush.bf16.msra.mxu0 0
    %877 = vmatpush.bf16.msra.mxu0 0
    %878 = vmatpush.bf16.msra.mxu0 0
    %879 = vmatpush.bf16.msra.mxu0 0
    %880 = vmatpush.bf16.msra.mxu0 0
    %881 = vmatpush.bf16.msra.mxu0 0
    %882 = vmatpush.bf16.msra.mxu0 %v624
    %883 = vmatpush.bf16.msra.mxu0 %v620
    %884 = vmatmul.bf16.gmra.mxu0 %v634
    %v885 = vpop.f32.mrf.mxu0
    %v886 = vadd.f32 %v534, %v885
    %v887 = vpop.f32.mrf.mxu0
    %v888 = vadd.f32 %v536, %v887
    %889 = vmatmul.bf16.gmra.mxu0 %v637
    %v890 = vpop.f32.mrf.mxu0
    %v891 = vadd.f32 %v539, %v890
    %v892 = vpop.f32.mrf.mxu0
    %v893 = vadd.f32 %v541, %v892
    %894 = vmatmul.bf16.gmra.mxu0 %v640
    %v895 = vpop.f32.mrf.mxu0
    %v896 = vadd.f32 %v544, %v895
    %v897 = vpop.f32.mrf.mxu0
    %v898 = vadd.f32 %v546, %v897
    %899 = vmatmul.bf16.gmra.mxu0 %v643
    %v900 = vpop.f32.mrf.mxu0
    %v901 = vadd.f32 %v549, %v900
    %v902 = vpop.f32.mrf.mxu0
    %v903 = vadd.f32 %v551, %v902
    %904 = vmatmul.bf16.gmra.mxu0 %v646
    %v905 = vpop.f32.mrf.mxu0
    %v906 = vadd.f32 %v554, %v905
    %v907 = vpop.f32.mrf.mxu0
    %v908 = vadd.f32 %v556, %v907
    %909 = vmatmul.bf16.gmra.mxu0 %v649
    %v910 = vpop.f32.mrf.mxu0
    %v911 = vadd.f32 %v559, %v910
    %v912 = vpop.f32.mrf.mxu0
    %v913 = vadd.f32 %v561, %v912
    %914 = vmatmul.bf16.gmra.mxu0 %v652
    %v915 = vpop.f32.mrf.mxu0
    %v916 = vadd.f32 %v564, %v915
    %v917 = vpop.f32.mrf.mxu0
    %v918 = vadd.f32 %v566, %v917
    %919 = vmatmul.bf16.gmra.mxu0 %v655
    %v920 = vpop.f32.mrf.mxu0
    %v921 = vadd.f32 %v569, %v920
    %v922 = vpop.f32.mrf.mxu0
    %v923 = vadd.f32 %v571, %v922
    %924 = vmatmul.bf16.gmra.mxu0 %v658
    %v925 = vpop.f32.mrf.mxu0
    %v926 = vadd.f32 %v574, %v925
    %v927 = vpop.f32.mrf.mxu0
    %v928 = vadd.f32 %v576, %v927
    %929 = vmatmul.bf16.gmra.mxu0 %v661
    %v930 = vpop.f32.mrf.mxu0
    %v931 = vadd.f32 %v579, %v930
    %v932 = vpop.f32.mrf.mxu0
    %v933 = vadd.f32 %v581, %v932
    %934 = vmatmul.bf16.gmra.mxu0 %v664
    %v935 = vpop.f32.mrf.mxu0
    %v936 = vadd.f32 %v584, %v935
    %v937 = vpop.f32.mrf.mxu0
    %v938 = vadd.f32 %v586, %v937
    %939 = vmatmul.bf16.gmra.mxu0 %v667
    %v940 = vpop.f32.mrf.mxu0
    %v941 = vadd.f32 %v589, %v940
    %v942 = vpop.f32.mrf.mxu0
    %v943 = vadd.f32 %v591, %v942
    %944 = vdwg.mxu0
    %v945 = vld [vmem:[%s0 + $0x2] sm:$0xff]
    %v946 = vld [vmem:[%s0 + $0xa] sm:$0xff]
    %v947 = vld [vmem:[%s0 + $0x12] sm:$0xff]
    %v948 = vld [vmem:[%s0 + $0x22] sm:$0xff]
    %v949 = vld [vmem:[%s0 + $0x2a] sm:$0xff]
    %v950 = vld [vmem:[%s0 + $0x32] sm:$0xff]
    %v951 = vld [vmem:[%s0 + $0x42] sm:$0xff]
    %v952 = vld [vmem:[%s0 + $0x4a] sm:$0xff]
    %v953 = vld [vmem:[%s0 + $0x52] sm:$0xff]
    %v954 = vld [vmem:[%s0 + $0x62] sm:$0xff]
    %v955 = vld [vmem:[%s0 + $0x6a] sm:$0xff]
    %v956 = vld [vmem:[%s0 + $0x72] sm:$0xff]
    %v957 = vld [vmem:[%s0 + $0x82] sm:$0xff]
    %v958 = vld [vmem:[%s0 + $0x8a] sm:$0xff]
    %v959 = vld [vmem:[%s0 + $0x92] sm:$0xff]
    %v960 = vld [vmem:[%s0 + $0xa2] sm:$0xff]
    %v961 = vld [vmem:[%s0 + $0xaa] sm:$0xff]
    %v962 = vld [vmem:[%s0 + $0xb2] sm:$0xff]
    %v963 = vld [vmem:[%s0 + $0xc2] sm:$0xff]
    %v964 = vld [vmem:[%s0 + $0xca] sm:$0xff]
    %v965 = vld [vmem:[%s0 + $0xd2] sm:$0xff]
    %v966 = vld [vmem:[%s0 + $0xe2] sm:$0xff]
    %v967 = vld [vmem:[%s0 + $0xea] sm:$0xff]
    %v968 = vld [vmem:[%s0 + $0xf2] sm:$0xff]
    %v969 = vpack.c.bf16 %v946, %v945
    %v970 = vpack.c.bf16 %v948, %v947
    %v971 = vpack.c.bf16 %v950, %v949
    %v972 = vpack.c.bf16 %v952, %v951
    %v973 = vpack.c.bf16 %v954, %v953
    %v974 = vpack.c.bf16 %v956, %v955
    %v975 = vpack.c.bf16 %v958, %v957
    %v976 = vpack.c.bf16 %v960, %v959
    %v977 = vpack.c.bf16 %v962, %v961
    %v978 = vpack.c.bf16 %v964, %v963
    %v979 = vpack.c.bf16 %v966, %v965
    %v980 = vpack.c.bf16 %v968, %v967
    %s981 = scalar_lea.vmem [#allocation5], 128
    %v982 = vld [vmem:[%s981] sm:$0xff]
    %v983 = vld [vmem:[%s981 + $0x8] sm:$0xff]
    %v984 = vld [vmem:[%s981 + $0x10] sm:$0xff]
    %v985 = vld [vmem:[%s981 + $0x18] sm:$0xff]
    %v986 = vld [vmem:[%s981 + $0x20] sm:$0xff]
    %v987 = vld [vmem:[%s981 + $0x28] sm:$0xff]
    %v988 = vld [vmem:[%s981 + $0x30] sm:$0xff]
    %v989 = vld [vmem:[%s981 + $0x38] sm:$0xff]
    %v998 = vunpack.c.l.b16 %v982
    %v999 = vunpack.c.h.b16 %v982
    %v1000 = vunpack.c.l.b16 %v983
    %v1001 = vunpack.c.h.b16 %v983
    %v1002 = vunpack.c.l.b16 %v984
    %v1003 = vunpack.c.h.b16 %v984
    %v1004 = vunpack.c.l.b16 %v985
    %v1005 = vunpack.c.h.b16 %v985
    %v1006 = vunpack.c.l.b16 %v986
    %v1007 = vunpack.c.h.b16 %v986
    %v1008 = vunpack.c.l.b16 %v987
    %v1009 = vunpack.c.h.b16 %v987
    %v1010 = vunpack.c.l.b16 %v988
    %v1011 = vunpack.c.h.b16 %v988
    %v1012 = vunpack.c.l.b16 %v989
    %v1013 = vunpack.c.h.b16 %v989
    %v1014 = vpack.c.b16 %v1002, %v998
    %v1015 = vpack.c.b16 %v1003, %v999
    %v1016 = vpack.c.b16 %v1004, %v1000
    %v1017 = vpack.c.b16 %v1005, %v1001
    %v1018 = vpack.c.b16 %v1010, %v1006
    %v1019 = vpack.c.b16 %v1011, %v1007
    %v1020 = vpack.c.b16 %v1012, %v1008
    %v1021 = vpack.c.b16 %v1013, %v1009
    %v1031 = vsel %vm280, %v969, 0
    %v1034 = vsel %vm280, %v970, 0
    %v1037 = vsel %vm280, %v971, 0
    %v1040 = vsel %vm280, %v972, 0
    %v1043 = vsel %vm280, %v973, 0
    %v1046 = vsel %vm280, %v974, 0
    %v1049 = vsel %vm280, %v975, 0
    %v1052 = vsel %vm280, %v976, 0
    %v1055 = vsel %vm280, %v977, 0
    %v1058 = vsel %vm280, %v978, 0
    %v1061 = vsel %vm280, %v979, 0
    %v1064 = vsel %vm280, %v980, 0
    %1066 = vmatpush.bf16.msra.mxu0 0
    %1067 = vmatpush.bf16.msra.mxu0 0
    %1068 = vmatpush.bf16.msra.mxu0 0
    %1069 = vmatpush.bf16.msra.mxu0 0
    %1070 = vmatpush.bf16.msra.mxu0 0
    %1071 = vmatpush.bf16.msra.mxu0 0
    %1072 = vmatpush.bf16.msra.mxu0 %v1018
    %1073 = vmatpush.bf16.msra.mxu0 %v1014
    %1074 = vmatmul.bf16.gmra.mxu0 %v1031
    %v1075 = vpop.f32.mrf.mxu0
    %v1076 = vadd.f32 0.0, %v1075
    %v1077 = vpop.f32.mrf.mxu0
    %v1078 = vadd.f32 0.0, %v1077
    %1079 = vmatmul.bf16.gmra.mxu0 %v1034
    %v1080 = vpop.f32.mrf.mxu0
    %v1081 = vadd.f32 0.0, %v1080
    %v1082 = vpop.f32.mrf.mxu0
    %v1083 = vadd.f32 0.0, %v1082
    %1084 = vmatmul.bf16.gmra.mxu0 %v1037
    %v1085 = vpop.f32.mrf.mxu0
    %v1086 = vadd.f32 0.0, %v1085
    %v1087 = vpop.f32.mrf.mxu0
    %v1088 = vadd.f32 0.0, %v1087
    %1089 = vmatmul.bf16.gmra.mxu0 %v1040
    %v1090 = vpop.f32.mrf.mxu0
    %v1091 = vadd.f32 0.0, %v1090
    %v1092 = vpop.f32.mrf.mxu0
    %v1093 = vadd.f32 0.0, %v1092
    %1094 = vmatmul.bf16.gmra.mxu0 %v1043
    %v1095 = vpop.f32.mrf.mxu0
    %v1096 = vadd.f32 0.0, %v1095
    %v1097 = vpop.f32.mrf.mxu0
    %v1098 = vadd.f32 0.0, %v1097
    %1099 = vmatmul.bf16.gmra.mxu0 %v1046
    %v1100 = vpop.f32.mrf.mxu0
    %v1101 = vadd.f32 0.0, %v1100
    %v1102 = vpop.f32.mrf.mxu0
    %v1103 = vadd.f32 0.0, %v1102
    %1104 = vmatmul.bf16.gmra.mxu0 %v1049
    %v1105 = vpop.f32.mrf.mxu0
    %v1106 = vadd.f32 0.0, %v1105
    %v1107 = vpop.f32.mrf.mxu0
    %v1108 = vadd.f32 0.0, %v1107
    %1109 = vmatmul.bf16.gmra.mxu0 %v1052
    %v1110 = vpop.f32.mrf.mxu0
    %v1111 = vadd.f32 0.0, %v1110
    %v1112 = vpop.f32.mrf.mxu0
    %v1113 = vadd.f32 0.0, %v1112
    %1114 = vmatmul.bf16.gmra.mxu0 %v1055
    %v1115 = vpop.f32.mrf.mxu0
    %v1116 = vadd.f32 0.0, %v1115
    %v1117 = vpop.f32.mrf.mxu0
    %v1118 = vadd.f32 0.0, %v1117
    %1119 = vmatmul.bf16.gmra.mxu0 %v1058
    %v1120 = vpop.f32.mrf.mxu0
    %v1121 = vadd.f32 0.0, %v1120
    %v1122 = vpop.f32.mrf.mxu0
    %v1123 = vadd.f32 0.0, %v1122
    %1124 = vmatmul.bf16.gmra.mxu0 %v1061
    %v1125 = vpop.f32.mrf.mxu0
    %v1126 = vadd.f32 0.0, %v1125
    %v1127 = vpop.f32.mrf.mxu0
    %v1128 = vadd.f32 0.0, %v1127
    %1129 = vmatmul.bf16.gmra.mxu0 %v1064
    %v1130 = vpop.f32.mrf.mxu0
    %v1131 = vadd.f32 0.0, %v1130
    %v1132 = vpop.f32.mrf.mxu0
    %v1133 = vadd.f32 0.0, %v1132
    %1134 = vdwg.mxu0
    %1135 = vmatpush.bf16.msra.mxu0 0
    %1136 = vmatpush.bf16.msra.mxu0 0
    %1137 = vmatpush.bf16.msra.mxu0 0
    %1138 = vmatpush.bf16.msra.mxu0 0
    %1139 = vmatpush.bf16.msra.mxu0 0
    %1140 = vmatpush.bf16.msra.mxu0 0
    %1141 = vmatpush.bf16.msra.mxu0 %v1019
    %1142 = vmatpush.bf16.msra.mxu0 %v1015
    %1143 = vmatmul.bf16.gmra.mxu0 %v1031
    %v1144 = vpop.f32.mrf.mxu0
    %v1145 = vadd.f32 0.0, %v1144
    %v1146 = vpop.f32.mrf.mxu0
    %v1147 = vadd.f32 0.0, %v1146
    %1148 = vmatmul.bf16.gmra.mxu0 %v1034
    %v1149 = vpop.f32.mrf.mxu0
    %v1150 = vadd.f32 0.0, %v1149
    %v1151 = vpop.f32.mrf.mxu0
    %v1152 = vadd.f32 0.0, %v1151
    %1153 = vmatmul.bf16.gmra.mxu0 %v1037
    %v1154 = vpop.f32.mrf.mxu0
    %v1155 = vadd.f32 0.0, %v1154
    %v1156 = vpop.f32.mrf.mxu0
    %v1157 = vadd.f32 0.0, %v1156
    %1158 = vmatmul.bf16.gmra.mxu0 %v1040
    %v1159 = vpop.f32.mrf.mxu0
    %v1160 = vadd.f32 0.0, %v1159
    %v1161 = vpop.f32.mrf.mxu0
    %v1162 = vadd.f32 0.0, %v1161
    %1163 = vmatmul.bf16.gmra.mxu0 %v1043
    %v1164 = vpop.f32.mrf.mxu0
    %v1165 = vadd.f32 0.0, %v1164
    %v1166 = vpop.f32.mrf.mxu0
    %v1167 = vadd.f32 0.0, %v1166
    %1168 = vmatmul.bf16.gmra.mxu0 %v1046
    %v1169 = vpop.f32.mrf.mxu0
    %v1170 = vadd.f32 0.0, %v1169
    %v1171 = vpop.f32.mrf.mxu0
    %v1172 = vadd.f32 0.0, %v1171
    %1173 = vmatmul.bf16.gmra.mxu0 %v1049
    %v1174 = vpop.f32.mrf.mxu0
    %v1175 = vadd.f32 0.0, %v1174
    %v1176 = vpop.f32.mrf.mxu0
    %v1177 = vadd.f32 0.0, %v1176
    %1178 = vmatmul.bf16.gmra.mxu0 %v1052
    %v1179 = vpop.f32.mrf.mxu0
    %v1180 = vadd.f32 0.0, %v1179
    %v1181 = vpop.f32.mrf.mxu0
    %v1182 = vadd.f32 0.0, %v1181
    %1183 = vmatmul.bf16.gmra.mxu0 %v1055
    %v1184 = vpop.f32.mrf.mxu0
    %v1185 = vadd.f32 0.0, %v1184
    %v1186 = vpop.f32.mrf.mxu0
    %v1187 = vadd.f32 0.0, %v1186
    %1188 = vmatmul.bf16.gmra.mxu0 %v1058
    %v1189 = vpop.f32.mrf.mxu0
    %v1190 = vadd.f32 0.0, %v1189
    %v1191 = vpop.f32.mrf.mxu0
    %v1192 = vadd.f32 0.0, %v1191
    %1193 = vmatmul.bf16.gmra.mxu0 %v1061
    %v1194 = vpop.f32.mrf.mxu0
    %v1195 = vadd.f32 0.0, %v1194
    %v1196 = vpop.f32.mrf.mxu0
    %v1197 = vadd.f32 0.0, %v1196
    %1198 = vmatmul.bf16.gmra.mxu0 %v1064
    %v1199 = vpop.f32.mrf.mxu0
    %v1200 = vadd.f32 0.0, %v1199
    %v1201 = vpop.f32.mrf.mxu0
    %v1202 = vadd.f32 0.0, %v1201
    %1203 = vdwg.mxu0
    %1204 = vmatpush.bf16.msra.mxu0 0
    %1205 = vmatpush.bf16.msra.mxu0 0
    %1206 = vmatpush.bf16.msra.mxu0 0
    %1207 = vmatpush.bf16.msra.mxu0 0
    %1208 = vmatpush.bf16.msra.mxu0 0
    %1209 = vmatpush.bf16.msra.mxu0 0
    %1210 = vmatpush.bf16.msra.mxu0 %v1020
    %1211 = vmatpush.bf16.msra.mxu0 %v1016
    %1212 = vmatmul.bf16.gmra.mxu0 %v1031
    %v1213 = vpop.f32.mrf.mxu0
    %v1214 = vadd.f32 0.0, %v1213
    %v1215 = vpop.f32.mrf.mxu0
    %v1216 = vadd.f32 0.0, %v1215
    %1217 = vmatmul.bf16.gmra.mxu0 %v1034
    %v1218 = vpop.f32.mrf.mxu0
    %v1219 = vadd.f32 0.0, %v1218
    %v1220 = vpop.f32.mrf.mxu0
    %v1221 = vadd.f32 0.0, %v1220
    %1222 = vmatmul.bf16.gmra.mxu0 %v1037
    %v1223 = vpop.f32.mrf.mxu0
    %v1224 = vadd.f32 0.0, %v1223
    %v1225 = vpop.f32.mrf.mxu0
    %v1226 = vadd.f32 0.0, %v1225
    %1227 = vmatmul.bf16.gmra.mxu0 %v1040
    %v1228 = vpop.f32.mrf.mxu0
    %v1229 = vadd.f32 0.0, %v1228
    %v1230 = vpop.f32.mrf.mxu0
    %v1231 = vadd.f32 0.0, %v1230
    %1232 = vmatmul.bf16.gmra.mxu0 %v1043
    %v1233 = vpop.f32.mrf.mxu0
    %v1234 = vadd.f32 0.0, %v1233
    %v1235 = vpop.f32.mrf.mxu0
    %v1236 = vadd.f32 0.0, %v1235
    %1237 = vmatmul.bf16.gmra.mxu0 %v1046
    %v1238 = vpop.f32.mrf.mxu0
    %v1239 = vadd.f32 0.0, %v1238
    %v1240 = vpop.f32.mrf.mxu0
    %v1241 = vadd.f32 0.0, %v1240
    %1242 = vmatmul.bf16.gmra.mxu0 %v1049
    %v1243 = vpop.f32.mrf.mxu0
    %v1244 = vadd.f32 0.0, %v1243
    %v1245 = vpop.f32.mrf.mxu0
    %v1246 = vadd.f32 0.0, %v1245
    %1247 = vmatmul.bf16.gmra.mxu0 %v1052
    %v1248 = vpop.f32.mrf.mxu0
    %v1249 = vadd.f32 0.0, %v1248
    %v1250 = vpop.f32.mrf.mxu0
    %v1251 = vadd.f32 0.0, %v1250
    %1252 = vmatmul.bf16.gmra.mxu0 %v1055
    %v1253 = vpop.f32.mrf.mxu0
    %v1254 = vadd.f32 0.0, %v1253
    %v1255 = vpop.f32.mrf.mxu0
    %v1256 = vadd.f32 0.0, %v1255
    %1257 = vmatmul.bf16.gmra.mxu0 %v1058
    %v1258 = vpop.f32.mrf.mxu0
    %v1259 = vadd.f32 0.0, %v1258
    %v1260 = vpop.f32.mrf.mxu0
    %v1261 = vadd.f32 0.0, %v1260
    %1262 = vmatmul.bf16.gmra.mxu0 %v1061
    %v1263 = vpop.f32.mrf.mxu0
    %v1264 = vadd.f32 0.0, %v1263
    %v1265 = vpop.f32.mrf.mxu0
    %v1266 = vadd.f32 0.0, %v1265
    %1267 = vmatmul.bf16.gmra.mxu0 %v1064
    %v1268 = vpop.f32.mrf.mxu0
    %v1269 = vadd.f32 0.0, %v1268
    %v1270 = vpop.f32.mrf.mxu0
    %v1271 = vadd.f32 0.0, %v1270
    %1272 = vdwg.mxu0
    %1273 = vmatpush.bf16.msra.mxu0 0
    %1274 = vmatpush.bf16.msra.mxu0 0
    %1275 = vmatpush.bf16.msra.mxu0 0
    %1276 = vmatpush.bf16.msra.mxu0 0
    %1277 = vmatpush.bf16.msra.mxu0 0
    %1278 = vmatpush.bf16.msra.mxu0 0
    %1279 = vmatpush.bf16.msra.mxu0 %v1021
    %1280 = vmatpush.bf16.msra.mxu0 %v1017
    %1281 = vmatmul.bf16.gmra.mxu0 %v1031
    %v1282 = vpop.f32.mrf.mxu0
    %v1283 = vadd.f32 0.0, %v1282
    %v1284 = vpop.f32.mrf.mxu0
    %v1285 = vadd.f32 0.0, %v1284
    %1286 = vmatmul.bf16.gmra.mxu0 %v1034
    %v1287 = vpop.f32.mrf.mxu0
    %v1288 = vadd.f32 0.0, %v1287
    %v1289 = vpop.f32.mrf.mxu0
    %v1290 = vadd.f32 0.0, %v1289
    %1291 = vmatmul.bf16.gmra.mxu0 %v1037
    %v1292 = vpop.f32.mrf.mxu0
    %v1293 = vadd.f32 0.0, %v1292
    %v1294 = vpop.f32.mrf.mxu0
    %v1295 = vadd.f32 0.0, %v1294
    %1296 = vmatmul.bf16.gmra.mxu0 %v1040
    %v1297 = vpop.f32.mrf.mxu0
    %v1298 = vadd.f32 0.0, %v1297
    %v1299 = vpop.f32.mrf.mxu0
    %v1300 = vadd.f32 0.0, %v1299
    %1301 = vmatmul.bf16.gmra.mxu0 %v1043
    %v1302 = vpop.f32.mrf.mxu0
    %v1303 = vadd.f32 0.0, %v1302
    %v1304 = vpop.f32.mrf.mxu0
    %v1305 = vadd.f32 0.0, %v1304
    %1306 = vmatmul.bf16.gmra.mxu0 %v1046
    %v1307 = vpop.f32.mrf.mxu0
    %v1308 = vadd.f32 0.0, %v1307
    %v1309 = vpop.f32.mrf.mxu0
    %v1310 = vadd.f32 0.0, %v1309
    %1311 = vmatmul.bf16.gmra.mxu0 %v1049
    %v1312 = vpop.f32.mrf.mxu0
    %v1313 = vadd.f32 0.0, %v1312
    %v1314 = vpop.f32.mrf.mxu0
    %v1315 = vadd.f32 0.0, %v1314
    %1316 = vmatmul.bf16.gmra.mxu0 %v1052
    %v1317 = vpop.f32.mrf.mxu0
    %v1318 = vadd.f32 0.0, %v1317
    %v1319 = vpop.f32.mrf.mxu0
    %v1320 = vadd.f32 0.0, %v1319
    %1321 = vmatmul.bf16.gmra.mxu0 %v1055
    %v1322 = vpop.f32.mrf.mxu0
    %v1323 = vadd.f32 0.0, %v1322
    %v1324 = vpop.f32.mrf.mxu0
    %v1325 = vadd.f32 0.0, %v1324
    %1326 = vmatmul.bf16.gmra.mxu0 %v1058
    %v1327 = vpop.f32.mrf.mxu0
    %v1328 = vadd.f32 0.0, %v1327
    %v1329 = vpop.f32.mrf.mxu0
    %v1330 = vadd.f32 0.0, %v1329
    %1331 = vmatmul.bf16.gmra.mxu0 %v1061
    %v1332 = vpop.f32.mrf.mxu0
    %v1333 = vadd.f32 0.0, %v1332
    %v1334 = vpop.f32.mrf.mxu0
    %v1335 = vadd.f32 0.0, %v1334
    %1336 = vmatmul.bf16.gmra.mxu0 %v1064
    %v1337 = vpop.f32.mrf.mxu0
    %v1338 = vadd.f32 0.0, %v1337
    %v1339 = vpop.f32.mrf.mxu0
    %v1340 = vadd.f32 0.0, %v1339
    %1341 = vdwg.mxu0
    %v1342 = vadd.f32 %v679, %v1076
    %v1343 = vadd.f32 %v748, %v1145
    %v1344 = vadd.f32 %v817, %v1214
    %v1345 = vadd.f32 %v886, %v1283
    %v1346 = vadd.f32 %v681, %v1078
    %v1347 = vadd.f32 %v750, %v1147
    %v1348 = vadd.f32 %v819, %v1216
    %v1349 = vadd.f32 %v888, %v1285
    %v1350 = vadd.f32 %v684, %v1081
    %v1351 = vadd.f32 %v753, %v1150
    %v1352 = vadd.f32 %v822, %v1219
    %v1353 = vadd.f32 %v891, %v1288
    %v1354 = vadd.f32 %v686, %v1083
    %v1355 = vadd.f32 %v755, %v1152
    %v1356 = vadd.f32 %v824, %v1221
    %v1357 = vadd.f32 %v893, %v1290
    %v1358 = vadd.f32 %v689, %v1086
    %v1359 = vadd.f32 %v758, %v1155
    %v1360 = vadd.f32 %v827, %v1224
    %v1361 = vadd.f32 %v896, %v1293
    %v1362 = vadd.f32 %v691, %v1088
    %v1363 = vadd.f32 %v760, %v1157
    %v1364 = vadd.f32 %v829, %v1226
    %v1365 = vadd.f32 %v898, %v1295
    %v1366 = vadd.f32 %v694, %v1091
    %v1367 = vadd.f32 %v763, %v1160
    %v1368 = vadd.f32 %v832, %v1229
    %v1369 = vadd.f32 %v901, %v1298
    %v1370 = vadd.f32 %v696, %v1093
    %v1371 = vadd.f32 %v765, %v1162
    %v1372 = vadd.f32 %v834, %v1231
    %v1373 = vadd.f32 %v903, %v1300
    %v1374 = vadd.f32 %v699, %v1096
    %v1375 = vadd.f32 %v768, %v1165
    %v1376 = vadd.f32 %v837, %v1234
    %v1377 = vadd.f32 %v906, %v1303
    %v1378 = vadd.f32 %v701, %v1098
    %v1379 = vadd.f32 %v770, %v1167
    %v1380 = vadd.f32 %v839, %v1236
    %v1381 = vadd.f32 %v908, %v1305
    %v1382 = vadd.f32 %v704, %v1101
    %v1383 = vadd.f32 %v773, %v1170
    %v1384 = vadd.f32 %v842, %v1239
    %v1385 = vadd.f32 %v911, %v1308
    %v1386 = vadd.f32 %v706, %v1103
    %v1387 = vadd.f32 %v775, %v1172
    %v1388 = vadd.f32 %v844, %v1241
    %v1389 = vadd.f32 %v913, %v1310
    %v1390 = vadd.f32 %v709, %v1106
    %v1391 = vadd.f32 %v778, %v1175
    %v1392 = vadd.f32 %v847, %v1244
    %v1393 = vadd.f32 %v916, %v1313
    %v1394 = vadd.f32 %v711, %v1108
    %v1395 = vadd.f32 %v780, %v1177
    %v1396 = vadd.f32 %v849, %v1246
    %v1397 = vadd.f32 %v918, %v1315
    %v1398 = vadd.f32 %v714, %v1111
    %v1399 = vadd.f32 %v783, %v1180
    %v1400 = vadd.f32 %v852, %v1249
    %v1401 = vadd.f32 %v921, %v1318
    %v1402 = vadd.f32 %v716, %v1113
    %v1403 = vadd.f32 %v785, %v1182
    %v1404 = vadd.f32 %v854, %v1251
    %v1405 = vadd.f32 %v923, %v1320
    %v1406 = vadd.f32 %v719, %v1116
    %v1407 = vadd.f32 %v788, %v1185
    %v1408 = vadd.f32 %v857, %v1254
    %v1409 = vadd.f32 %v926, %v1323
    %v1410 = vadd.f32 %v721, %v1118
    %v1411 = vadd.f32 %v790, %v1187
    %v1412 = vadd.f32 %v859, %v1256
    %v1413 = vadd.f32 %v928, %v1325
    %v1414 = vadd.f32 %v724, %v1121
    %v1415 = vadd.f32 %v793, %v1190
    %v1416 = vadd.f32 %v862, %v1259
    %v1417 = vadd.f32 %v931, %v1328
    %v1418 = vadd.f32 %v726, %v1123
    %v1419 = vadd.f32 %v795, %v1192
    %v1420 = vadd.f32 %v864, %v1261
    %v1421 = vadd.f32 %v933, %v1330
    %v1422 = vadd.f32 %v729, %v1126
    %v1423 = vadd.f32 %v798, %v1195
    %v1424 = vadd.f32 %v867, %v1264
    %v1425 = vadd.f32 %v936, %v1333
    %v1426 = vadd.f32 %v731, %v1128
    %v1427 = vadd.f32 %v800, %v1197
    %v1428 = vadd.f32 %v869, %v1266
    %v1429 = vadd.f32 %v938, %v1335
    %v1430 = vadd.f32 %v734, %v1131
    %v1431 = vadd.f32 %v803, %v1200
    %v1432 = vadd.f32 %v872, %v1269
    %v1433 = vadd.f32 %v941, %v1338
    %v1434 = vadd.f32 %v736, %v1133
    %v1435 = vadd.f32 %v805, %v1202
    %v1436 = vadd.f32 %v874, %v1271
    %v1437 = vadd.f32 %v943, %v1340
    %v1438 = vld [vmem:[%s0 + $0x3] sm:$0xff]
    %v1439 = vld [vmem:[%s0 + $0xb] sm:$0xff]
    %v1440 = vld [vmem:[%s0 + $0x13] sm:$0xff]
    %v1441 = vld [vmem:[%s0 + $0x23] sm:$0xff]
    %v1442 = vld [vmem:[%s0 + $0x2b] sm:$0xff]
    %v1443 = vld [vmem:[%s0 + $0x33] sm:$0xff]
    %v1444 = vld [vmem:[%s0 + $0x43] sm:$0xff]
    %v1445 = vld [vmem:[%s0 + $0x4b] sm:$0xff]
    %v1446 = vld [vmem:[%s0 + $0x53] sm:$0xff]
    %v1447 = vld [vmem:[%s0 + $0x63] sm:$0xff]
    %v1448 = vld [vmem:[%s0 + $0x6b] sm:$0xff]
    %v1449 = vld [vmem:[%s0 + $0x73] sm:$0xff]
    %v1450 = vld [vmem:[%s0 + $0x83] sm:$0xff]
    %v1451 = vld [vmem:[%s0 + $0x8b] sm:$0xff]
    %v1452 = vld [vmem:[%s0 + $0x93] sm:$0xff]
    %v1453 = vld [vmem:[%s0 + $0xa3] sm:$0xff]
    %v1454 = vld [vmem:[%s0 + $0xab] sm:$0xff]
    %v1455 = vld [vmem:[%s0 + $0xb3] sm:$0xff]
    %v1456 = vld [vmem:[%s0 + $0xc3] sm:$0xff]
    %v1457 = vld [vmem:[%s0 + $0xcb] sm:$0xff]
    %v1458 = vld [vmem:[%s0 + $0xd3] sm:$0xff]
    %v1459 = vld [vmem:[%s0 + $0xe3] sm:$0xff]
    %v1460 = vld [vmem:[%s0 + $0xeb] sm:$0xff]
    %v1461 = vld [vmem:[%s0 + $0xf3] sm:$0xff]
    %v1462 = vpack.c.bf16 %v1439, %v1438
    %v1463 = vpack.c.bf16 %v1441, %v1440
    %v1464 = vpack.c.bf16 %v1443, %v1442
    %v1465 = vpack.c.bf16 %v1445, %v1444
    %v1466 = vpack.c.bf16 %v1447, %v1446
    %v1467 = vpack.c.bf16 %v1449, %v1448
    %v1468 = vpack.c.bf16 %v1451, %v1450
    %v1469 = vpack.c.bf16 %v1453, %v1452
    %v1470 = vpack.c.bf16 %v1455, %v1454
    %v1471 = vpack.c.bf16 %v1457, %v1456
    %v1472 = vpack.c.bf16 %v1459, %v1458
    %v1473 = vpack.c.bf16 %v1461, %v1460
    %s1474 = scalar_lea.vmem [#allocation5], 192
    %v1475 = vld [vmem:[%s1474] sm:$0xff]
    %v1476 = vld [vmem:[%s1474 + $0x8] sm:$0xff]
    %v1477 = vld [vmem:[%s1474 + $0x10] sm:$0xff]
    %v1478 = vld [vmem:[%s1474 + $0x18] sm:$0xff]
    %v1479 = vld [vmem:[%s1474 + $0x20] sm:$0xff]
    %v1480 = vld [vmem:[%s1474 + $0x28] sm:$0xff]
    %v1481 = vld [vmem:[%s1474 + $0x30] sm:$0xff]
    %v1482 = vld [vmem:[%s1474 + $0x38] sm:$0xff]
    %v1491 = vunpack.c.l.b16 %v1475
    %v1492 = vunpack.c.h.b16 %v1475
    %v1493 = vunpack.c.l.b16 %v1476
    %v1494 = vunpack.c.h.b16 %v1476
    %v1495 = vunpack.c.l.b16 %v1477
    %v1496 = vunpack.c.h.b16 %v1477
    %v1497 = vunpack.c.l.b16 %v1478
    %v1498 = vunpack.c.h.b16 %v1478
    %v1499 = vunpack.c.l.b16 %v1479
    %v1500 = vunpack.c.h.b16 %v1479
    %v1501 = vunpack.c.l.b16 %v1480
    %v1502 = vunpack.c.h.b16 %v1480
    %v1503 = vunpack.c.l.b16 %v1481
    %v1504 = vunpack.c.h.b16 %v1481
    %v1505 = vunpack.c.l.b16 %v1482
    %v1506 = vunpack.c.h.b16 %v1482
    %v1507 = vpack.c.b16 %v1495, %v1491
    %v1508 = vpack.c.b16 %v1496, %v1492
    %v1509 = vpack.c.b16 %v1497, %v1493
    %v1510 = vpack.c.b16 %v1498, %v1494
    %v1511 = vpack.c.b16 %v1503, %v1499
    %v1512 = vpack.c.b16 %v1504, %v1500
    %v1513 = vpack.c.b16 %v1505, %v1501
    %v1514 = vpack.c.b16 %v1506, %v1502
    %v1524 = vsel %vm280, %v1462, 0
    %v1527 = vsel %vm280, %v1463, 0
    %v1530 = vsel %vm280, %v1464, 0
    %v1533 = vsel %vm280, %v1465, 0
    %v1536 = vsel %vm280, %v1466, 0
    %v1539 = vsel %vm280, %v1467, 0
    %v1542 = vsel %vm280, %v1468, 0
    %v1545 = vsel %vm280, %v1469, 0
    %v1548 = vsel %vm280, %v1470, 0
    %v1551 = vsel %vm280, %v1471, 0
    %v1554 = vsel %vm280, %v1472, 0
    %v1557 = vsel %vm280, %v1473, 0
    %1559 = vmatpush.bf16.msra.mxu0 0
    %1560 = vmatpush.bf16.msra.mxu0 0
    %1561 = vmatpush.bf16.msra.mxu0 0
    %1562 = vmatpush.bf16.msra.mxu0 0
    %1563 = vmatpush.bf16.msra.mxu0 0
    %1564 = vmatpush.bf16.msra.mxu0 0
    %1565 = vmatpush.bf16.msra.mxu0 %v1511
    %1566 = vmatpush.bf16.msra.mxu0 %v1507
    %1567 = vmatmul.bf16.gmra.mxu0 %v1524
    %v1568 = vpop.f32.mrf.mxu0
    %v1569 = vadd.f32 0.0, %v1568
    %v1570 = vpop.f32.mrf.mxu0
    %v1571 = vadd.f32 0.0, %v1570
    %1572 = vmatmul.bf16.gmra.mxu0 %v1527
    %v1573 = vpop.f32.mrf.mxu0
    %v1574 = vadd.f32 0.0, %v1573
    %v1575 = vpop.f32.mrf.mxu0
    %v1576 = vadd.f32 0.0, %v1575
    %1577 = vmatmul.bf16.gmra.mxu0 %v1530
    %v1578 = vpop.f32.mrf.mxu0
    %v1579 = vadd.f32 0.0, %v1578
    %v1580 = vpop.f32.mrf.mxu0
    %v1581 = vadd.f32 0.0, %v1580
    %1582 = vmatmul.bf16.gmra.mxu0 %v1533
    %v1583 = vpop.f32.mrf.mxu0
    %v1584 = vadd.f32 0.0, %v1583
    %v1585 = vpop.f32.mrf.mxu0
    %v1586 = vadd.f32 0.0, %v1585
    %1587 = vmatmul.bf16.gmra.mxu0 %v1536
    %v1588 = vpop.f32.mrf.mxu0
    %v1589 = vadd.f32 0.0, %v1588
    %v1590 = vpop.f32.mrf.mxu0
    %v1591 = vadd.f32 0.0, %v1590
    %1592 = vmatmul.bf16.gmra.mxu0 %v1539
    %v1593 = vpop.f32.mrf.mxu0
    %v1594 = vadd.f32 0.0, %v1593
    %v1595 = vpop.f32.mrf.mxu0
    %v1596 = vadd.f32 0.0, %v1595
    %1597 = vmatmul.bf16.gmra.mxu0 %v1542
    %v1598 = vpop.f32.mrf.mxu0
    %v1599 = vadd.f32 0.0, %v1598
    %v1600 = vpop.f32.mrf.mxu0
    %v1601 = vadd.f32 0.0, %v1600
    %1602 = vmatmul.bf16.gmra.mxu0 %v1545
    %v1603 = vpop.f32.mrf.mxu0
    %v1604 = vadd.f32 0.0, %v1603
    %v1605 = vpop.f32.mrf.mxu0
    %v1606 = vadd.f32 0.0, %v1605
    %1607 = vmatmul.bf16.gmra.mxu0 %v1548
    %v1608 = vpop.f32.mrf.mxu0
    %v1609 = vadd.f32 0.0, %v1608
    %v1610 = vpop.f32.mrf.mxu0
    %v1611 = vadd.f32 0.0, %v1610
    %1612 = vmatmul.bf16.gmra.mxu0 %v1551
    %v1613 = vpop.f32.mrf.mxu0
    %v1614 = vadd.f32 0.0, %v1613
    %v1615 = vpop.f32.mrf.mxu0
    %v1616 = vadd.f32 0.0, %v1615
    %1617 = vmatmul.bf16.gmra.mxu0 %v1554
    %v1618 = vpop.f32.mrf.mxu0
    %v1619 = vadd.f32 0.0, %v1618
    %v1620 = vpop.f32.mrf.mxu0
    %v1621 = vadd.f32 0.0, %v1620
    %1622 = vmatmul.bf16.gmra.mxu0 %v1557
    %v1623 = vpop.f32.mrf.mxu0
    %v1624 = vadd.f32 0.0, %v1623
    %v1625 = vpop.f32.mrf.mxu0
    %v1626 = vadd.f32 0.0, %v1625
    %1627 = vdwg.mxu0
    %1628 = vmatpush.bf16.msra.mxu0 0
    %1629 = vmatpush.bf16.msra.mxu0 0
    %1630 = vmatpush.bf16.msra.mxu0 0
    %1631 = vmatpush.bf16.msra.mxu0 0
    %1632 = vmatpush.bf16.msra.mxu0 0
    %1633 = vmatpush.bf16.msra.mxu0 0
    %1634 = vmatpush.bf16.msra.mxu0 %v1512
    %1635 = vmatpush.bf16.msra.mxu0 %v1508
    %1636 = vmatmul.bf16.gmra.mxu0 %v1524
    %v1637 = vpop.f32.mrf.mxu0
    %v1638 = vadd.f32 0.0, %v1637
    %v1639 = vpop.f32.mrf.mxu0
    %v1640 = vadd.f32 0.0, %v1639
    %1641 = vmatmul.bf16.gmra.mxu0 %v1527
    %v1642 = vpop.f32.mrf.mxu0
    %v1643 = vadd.f32 0.0, %v1642
    %v1644 = vpop.f32.mrf.mxu0
    %v1645 = vadd.f32 0.0, %v1644
    %1646 = vmatmul.bf16.gmra.mxu0 %v1530
    %v1647 = vpop.f32.mrf.mxu0
    %v1648 = vadd.f32 0.0, %v1647
    %v1649 = vpop.f32.mrf.mxu0
    %v1650 = vadd.f32 0.0, %v1649
    %1651 = vmatmul.bf16.gmra.mxu0 %v1533
    %v1652 = vpop.f32.mrf.mxu0
    %v1653 = vadd.f32 0.0, %v1652
    %v1654 = vpop.f32.mrf.mxu0
    %v1655 = vadd.f32 0.0, %v1654
    %1656 = vmatmul.bf16.gmra.mxu0 %v1536
    %v1657 = vpop.f32.mrf.mxu0
    %v1658 = vadd.f32 0.0, %v1657
    %v1659 = vpop.f32.mrf.mxu0
    %v1660 = vadd.f32 0.0, %v1659
    %1661 = vmatmul.bf16.gmra.mxu0 %v1539
    %v1662 = vpop.f32.mrf.mxu0
    %v1663 = vadd.f32 0.0, %v1662
    %v1664 = vpop.f32.mrf.mxu0
    %v1665 = vadd.f32 0.0, %v1664
    %1666 = vmatmul.bf16.gmra.mxu0 %v1542
    %v1667 = vpop.f32.mrf.mxu0
    %v1668 = vadd.f32 0.0, %v1667
    %v1669 = vpop.f32.mrf.mxu0
    %v1670 = vadd.f32 0.0, %v1669
    %1671 = vmatmul.bf16.gmra.mxu0 %v1545
    %v1672 = vpop.f32.mrf.mxu0
    %v1673 = vadd.f32 0.0, %v1672
    %v1674 = vpop.f32.mrf.mxu0
    %v1675 = vadd.f32 0.0, %v1674
    %1676 = vmatmul.bf16.gmra.mxu0 %v1548
    %v1677 = vpop.f32.mrf.mxu0
    %v1678 = vadd.f32 0.0, %v1677
    %v1679 = vpop.f32.mrf.mxu0
    %v1680 = vadd.f32 0.0, %v1679
    %1681 = vmatmul.bf16.gmra.mxu0 %v1551
    %v1682 = vpop.f32.mrf.mxu0
    %v1683 = vadd.f32 0.0, %v1682
    %v1684 = vpop.f32.mrf.mxu0
    %v1685 = vadd.f32 0.0, %v1684
    %1686 = vmatmul.bf16.gmra.mxu0 %v1554
    %v1687 = vpop.f32.mrf.mxu0
    %v1688 = vadd.f32 0.0, %v1687
    %v1689 = vpop.f32.mrf.mxu0
    %v1690 = vadd.f32 0.0, %v1689
    %1691 = vmatmul.bf16.gmra.mxu0 %v1557
    %v1692 = vpop.f32.mrf.mxu0
    %v1693 = vadd.f32 0.0, %v1692
    %v1694 = vpop.f32.mrf.mxu0
    %v1695 = vadd.f32 0.0, %v1694
    %1696 = vdwg.mxu0
    %1697 = vmatpush.bf16.msra.mxu0 0
    %1698 = vmatpush.bf16.msra.mxu0 0
    %1699 = vmatpush.bf16.msra.mxu0 0
    %1700 = vmatpush.bf16.msra.mxu0 0
    %1701 = vmatpush.bf16.msra.mxu0 0
    %1702 = vmatpush.bf16.msra.mxu0 0
    %1703 = vmatpush.bf16.msra.mxu0 %v1513
    %1704 = vmatpush.bf16.msra.mxu0 %v1509
    %1705 = vmatmul.bf16.gmra.mxu0 %v1524
    %v1706 = vpop.f32.mrf.mxu0
    %v1707 = vadd.f32 0.0, %v1706
    %v1708 = vpop.f32.mrf.mxu0
    %v1709 = vadd.f32 0.0, %v1708
    %1710 = vmatmul.bf16.gmra.mxu0 %v1527
    %v1711 = vpop.f32.mrf.mxu0
    %v1712 = vadd.f32 0.0, %v1711
    %v1713 = vpop.f32.mrf.mxu0
    %v1714 = vadd.f32 0.0, %v1713
    %1715 = vmatmul.bf16.gmra.mxu0 %v1530
    %v1716 = vpop.f32.mrf.mxu0
    %v1717 = vadd.f32 0.0, %v1716
    %v1718 = vpop.f32.mrf.mxu0
    %v1719 = vadd.f32 0.0, %v1718
    %1720 = vmatmul.bf16.gmra.mxu0 %v1533
    %v1721 = vpop.f32.mrf.mxu0
    %v1722 = vadd.f32 0.0, %v1721
    %v1723 = vpop.f32.mrf.mxu0
    %v1724 = vadd.f32 0.0, %v1723
    %1725 = vmatmul.bf16.gmra.mxu0 %v1536
    %v1726 = vpop.f32.mrf.mxu0
    %v1727 = vadd.f32 0.0, %v1726
    %v1728 = vpop.f32.mrf.mxu0
    %v1729 = vadd.f32 0.0, %v1728
    %1730 = vmatmul.bf16.gmra.mxu0 %v1539
    %v1731 = vpop.f32.mrf.mxu0
    %v1732 = vadd.f32 0.0, %v1731
    %v1733 = vpop.f32.mrf.mxu0
    %v1734 = vadd.f32 0.0, %v1733
    %1735 = vmatmul.bf16.gmra.mxu0 %v1542
    %v1736 = vpop.f32.mrf.mxu0
    %v1737 = vadd.f32 0.0, %v1736
    %v1738 = vpop.f32.mrf.mxu0
    %v1739 = vadd.f32 0.0, %v1738
    %1740 = vmatmul.bf16.gmra.mxu0 %v1545
    %v1741 = vpop.f32.mrf.mxu0
    %v1742 = vadd.f32 0.0, %v1741
    %v1743 = vpop.f32.mrf.mxu0
    %v1744 = vadd.f32 0.0, %v1743
    %1745 = vmatmul.bf16.gmra.mxu0 %v1548
    %v1746 = vpop.f32.mrf.mxu0
    %v1747 = vadd.f32 0.0, %v1746
    %v1748 = vpop.f32.mrf.mxu0
    %v1749 = vadd.f32 0.0, %v1748
    %1750 = vmatmul.bf16.gmra.mxu0 %v1551
    %v1751 = vpop.f32.mrf.mxu0
    %v1752 = vadd.f32 0.0, %v1751
    %v1753 = vpop.f32.mrf.mxu0
    %v1754 = vadd.f32 0.0, %v1753
    %1755 = vmatmul.bf16.gmra.mxu0 %v1554
    %v1756 = vpop.f32.mrf.mxu0
    %v1757 = vadd.f32 0.0, %v1756
    %v1758 = vpop.f32.mrf.mxu0
    %v1759 = vadd.f32 0.0, %v1758
    %1760 = vmatmul.bf16.gmra.mxu0 %v1557
    %v1761 = vpop.f32.mrf.mxu0
    %v1762 = vadd.f32 0.0, %v1761
    %v1763 = vpop.f32.mrf.mxu0
    %v1764 = vadd.f32 0.0, %v1763
    %1765 = vdwg.mxu0
    %1766 = vmatpush.bf16.msra.mxu0 0
    %1767 = vmatpush.bf16.msra.mxu0 0
    %1768 = vmatpush.bf16.msra.mxu0 0
    %1769 = vmatpush.bf16.msra.mxu0 0
    %1770 = vmatpush.bf16.msra.mxu0 0
    %1771 = vmatpush.bf16.msra.mxu0 0
    %1772 = vmatpush.bf16.msra.mxu0 %v1514
    %1773 = vmatpush.bf16.msra.mxu0 %v1510
    %1774 = vmatmul.bf16.gmra.mxu0 %v1524
    %v1775 = vpop.f32.mrf.mxu0
    %v1776 = vadd.f32 0.0, %v1775
    %v1777 = vpop.f32.mrf.mxu0
    %v1778 = vadd.f32 0.0, %v1777
    %1779 = vmatmul.bf16.gmra.mxu0 %v1527
    %v1780 = vpop.f32.mrf.mxu0
    %v1781 = vadd.f32 0.0, %v1780
    %v1782 = vpop.f32.mrf.mxu0
    %v1783 = vadd.f32 0.0, %v1782
    %1784 = vmatmul.bf16.gmra.mxu0 %v1530
    %v1785 = vpop.f32.mrf.mxu0
    %v1786 = vadd.f32 0.0, %v1785
    %v1787 = vpop.f32.mrf.mxu0
    %v1788 = vadd.f32 0.0, %v1787
    %1789 = vmatmul.bf16.gmra.mxu0 %v1533
    %v1790 = vpop.f32.mrf.mxu0
    %v1791 = vadd.f32 0.0, %v1790
    %v1792 = vpop.f32.mrf.mxu0
    %v1793 = vadd.f32 0.0, %v1792
    %1794 = vmatmul.bf16.gmra.mxu0 %v1536
    %v1795 = vpop.f32.mrf.mxu0
    %v1796 = vadd.f32 0.0, %v1795
    %v1797 = vpop.f32.mrf.mxu0
    %v1798 = vadd.f32 0.0, %v1797
    %1799 = vmatmul.bf16.gmra.mxu0 %v1539
    %v1800 = vpop.f32.mrf.mxu0
    %v1801 = vadd.f32 0.0, %v1800
    %v1802 = vpop.f32.mrf.mxu0
    %v1803 = vadd.f32 0.0, %v1802
    %1804 = vmatmul.bf16.gmra.mxu0 %v1542
    %v1805 = vpop.f32.mrf.mxu0
    %v1806 = vadd.f32 0.0, %v1805
    %v1807 = vpop.f32.mrf.mxu0
    %v1808 = vadd.f32 0.0, %v1807
    %1809 = vmatmul.bf16.gmra.mxu0 %v1545
    %v1810 = vpop.f32.mrf.mxu0
    %v1811 = vadd.f32 0.0, %v1810
    %v1812 = vpop.f32.mrf.mxu0
    %v1813 = vadd.f32 0.0, %v1812
    %1814 = vmatmul.bf16.gmra.mxu0 %v1548
    %v1815 = vpop.f32.mrf.mxu0
    %v1816 = vadd.f32 0.0, %v1815
    %v1817 = vpop.f32.mrf.mxu0
    %v1818 = vadd.f32 0.0, %v1817
    %1819 = vmatmul.bf16.gmra.mxu0 %v1551
    %v1820 = vpop.f32.mrf.mxu0
    %v1821 = vadd.f32 0.0, %v1820
    %v1822 = vpop.f32.mrf.mxu0
    %v1823 = vadd.f32 0.0, %v1822
    %1824 = vmatmul.bf16.gmra.mxu0 %v1554
    %v1825 = vpop.f32.mrf.mxu0
    %v1826 = vadd.f32 0.0, %v1825
    %v1827 = vpop.f32.mrf.mxu0
    %v1828 = vadd.f32 0.0, %v1827
    %1829 = vmatmul.bf16.gmra.mxu0 %v1557
    %v1830 = vpop.f32.mrf.mxu0
    %v1831 = vadd.f32 0.0, %v1830
    %v1832 = vpop.f32.mrf.mxu0
    %v1833 = vadd.f32 0.0, %v1832
    %1834 = vdwg.mxu0
    %v1835 = vadd.f32 %v1342, %v1569
    %v1836 = vadd.f32 %v1343, %v1638
    %v1837 = vadd.f32 %v1344, %v1707
    %v1838 = vadd.f32 %v1345, %v1776
    %v1839 = vadd.f32 %v1346, %v1571
    %v1840 = vadd.f32 %v1347, %v1640
    %v1841 = vadd.f32 %v1348, %v1709
    %v1842 = vadd.f32 %v1349, %v1778
    %v1843 = vadd.f32 %v1350, %v1574
    %v1844 = vadd.f32 %v1351, %v1643
    %v1845 = vadd.f32 %v1352, %v1712
    %v1846 = vadd.f32 %v1353, %v1781
    %v1847 = vadd.f32 %v1354, %v1576
    %v1848 = vadd.f32 %v1355, %v1645
    %v1849 = vadd.f32 %v1356, %v1714
    %v1850 = vadd.f32 %v1357, %v1783
    %v1851 = vadd.f32 %v1358, %v1579
    %v1852 = vadd.f32 %v1359, %v1648
    %v1853 = vadd.f32 %v1360, %v1717
    %v1854 = vadd.f32 %v1361, %v1786
    %v1855 = vadd.f32 %v1362, %v1581
    %v1856 = vadd.f32 %v1363, %v1650
    %v1857 = vadd.f32 %v1364, %v1719
    %v1858 = vadd.f32 %v1365, %v1788
    %v1859 = vadd.f32 %v1366, %v1584
    %v1860 = vadd.f32 %v1367, %v1653
    %v1861 = vadd.f32 %v1368, %v1722
    %v1862 = vadd.f32 %v1369, %v1791
    %v1863 = vadd.f32 %v1370, %v1586
    %v1864 = vadd.f32 %v1371, %v1655
    %v1865 = vadd.f32 %v1372, %v1724
    %v1866 = vadd.f32 %v1373, %v1793
    %v1867 = vadd.f32 %v1374, %v1589
    %v1868 = vadd.f32 %v1375, %v1658
    %v1869 = vadd.f32 %v1376, %v1727
    %v1870 = vadd.f32 %v1377, %v1796
    %v1871 = vadd.f32 %v1378, %v1591
    %v1872 = vadd.f32 %v1379, %v1660
    %v1873 = vadd.f32 %v1380, %v1729
    %v1874 = vadd.f32 %v1381, %v1798
    %v1875 = vadd.f32 %v1382, %v1594
    %v1876 = vadd.f32 %v1383, %v1663
    %v1877 = vadd.f32 %v1384, %v1732
    %v1878 = vadd.f32 %v1385, %v1801
    %v1879 = vadd.f32 %v1386, %v1596
    %v1880 = vadd.f32 %v1387, %v1665
    %v1881 = vadd.f32 %v1388, %v1734
    %v1882 = vadd.f32 %v1389, %v1803
    %v1883 = vadd.f32 %v1390, %v1599
    %v1884 = vadd.f32 %v1391, %v1668
    %v1885 = vadd.f32 %v1392, %v1737
    %v1886 = vadd.f32 %v1393, %v1806
    %v1887 = vadd.f32 %v1394, %v1601
    %v1888 = vadd.f32 %v1395, %v1670
    %v1889 = vadd.f32 %v1396, %v1739
    %v1890 = vadd.f32 %v1397, %v1808
    %v1891 = vadd.f32 %v1398, %v1604
    %v1892 = vadd.f32 %v1399, %v1673
    %v1893 = vadd.f32 %v1400, %v1742
    %v1894 = vadd.f32 %v1401, %v1811
    %v1895 = vadd.f32 %v1402, %v1606
    %v1896 = vadd.f32 %v1403, %v1675
    %v1897 = vadd.f32 %v1404, %v1744
    %v1898 = vadd.f32 %v1405, %v1813
    %v1899 = vadd.f32 %v1406, %v1609
    %v1900 = vadd.f32 %v1407, %v1678
    %v1901 = vadd.f32 %v1408, %v1747
    %v1902 = vadd.f32 %v1409, %v1816
    %v1903 = vadd.f32 %v1410, %v1611
    %v1904 = vadd.f32 %v1411, %v1680
    %v1905 = vadd.f32 %v1412, %v1749
    %v1906 = vadd.f32 %v1413, %v1818
    %v1907 = vadd.f32 %v1414, %v1614
    %v1908 = vadd.f32 %v1415, %v1683
    %v1909 = vadd.f32 %v1416, %v1752
    %v1910 = vadd.f32 %v1417, %v1821
    %v1911 = vadd.f32 %v1418, %v1616
    %v1912 = vadd.f32 %v1419, %v1685
    %v1913 = vadd.f32 %v1420, %v1754
    %v1914 = vadd.f32 %v1421, %v1823
    %v1915 = vadd.f32 %v1422, %v1619
    %v1916 = vadd.f32 %v1423, %v1688
    %v1917 = vadd.f32 %v1424, %v1757
    %v1918 = vadd.f32 %v1425, %v1826
    %v1919 = vadd.f32 %v1426, %v1621
    %v1920 = vadd.f32 %v1427, %v1690
    %v1921 = vadd.f32 %v1428, %v1759
    %v1922 = vadd.f32 %v1429, %v1828
    %v1923 = vadd.f32 %v1430, %v1624
    %v1924 = vadd.f32 %v1431, %v1693
    %v1925 = vadd.f32 %v1432, %v1762
    %v1926 = vadd.f32 %v1433, %v1831
    %v1927 = vadd.f32 %v1434, %v1626
    %v1928 = vadd.f32 %v1435, %v1695
    %v1929 = vadd.f32 %v1436, %v1764
    %v1930 = vadd.f32 %v1437, %v1833
    %v1931 = vld [vmem:[%s0 + $0x4] sm:$0xff]
    %v1932 = vld [vmem:[%s0 + $0xc] sm:$0xff]
    %v1933 = vld [vmem:[%s0 + $0x14] sm:$0xff]
    %v1934 = vld [vmem:[%s0 + $0x24] sm:$0xff]
    %v1935 = vld [vmem:[%s0 + $0x2c] sm:$0xff]
    %v1936 = vld [vmem:[%s0 + $0x34] sm:$0xff]
    %v1937 = vld [vmem:[%s0 + $0x44] sm:$0xff]
    %v1938 = vld [vmem:[%s0 + $0x4c] sm:$0xff]
    %v1939 = vld [vmem:[%s0 + $0x54] sm:$0xff]
    %v1940 = vld [vmem:[%s0 + $0x64] sm:$0xff]
    %v1941 = vld [vmem:[%s0 + $0x6c] sm:$0xff]
    %v1942 = vld [vmem:[%s0 + $0x74] sm:$0xff]
    %v1943 = vld [vmem:[%s0 + $0x84] sm:$0xff]
    %v1944 = vld [vmem:[%s0 + $0x8c] sm:$0xff]
    %v1945 = vld [vmem:[%s0 + $0x94] sm:$0xff]
    %v1946 = vld [vmem:[%s0 + $0xa4] sm:$0xff]
    %v1947 = vld [vmem:[%s0 + $0xac] sm:$0xff]
    %v1948 = vld [vmem:[%s0 + $0xb4] sm:$0xff]
    %v1949 = vld [vmem:[%s0 + $0xc4] sm:$0xff]
    %v1950 = vld [vmem:[%s0 + $0xcc] sm:$0xff]
    %v1951 = vld [vmem:[%s0 + $0xd4] sm:$0xff]
    %v1952 = vld [vmem:[%s0 + $0xe4] sm:$0xff]
    %v1953 = vld [vmem:[%s0 + $0xec] sm:$0xff]
    %v1954 = vld [vmem:[%s0 + $0xf4] sm:$0xff]
    %v1955 = vpack.c.bf16 %v1932, %v1931
    %v1956 = vpack.c.bf16 %v1934, %v1933
    %v1957 = vpack.c.bf16 %v1936, %v1935
    %v1958 = vpack.c.bf16 %v1938, %v1937
    %v1959 = vpack.c.bf16 %v1940, %v1939
    %v1960 = vpack.c.bf16 %v1942, %v1941
    %v1961 = vpack.c.bf16 %v1944, %v1943
    %v1962 = vpack.c.bf16 %v1946, %v1945
    %v1963 = vpack.c.bf16 %v1948, %v1947
    %v1964 = vpack.c.bf16 %v1950, %v1949
    %v1965 = vpack.c.bf16 %v1952, %v1951
    %v1966 = vpack.c.bf16 %v1954, %v1953
    %s1967 = scalar_lea.vmem [#allocation5], 256
    %v1968 = vld [vmem:[%s1967] sm:$0xff]
    %v1969 = vld [vmem:[%s1967 + $0x8] sm:$0xff]
    %v1970 = vld [vmem:[%s1967 + $0x10] sm:$0xff]
    %v1971 = vld [vmem:[%s1967 + $0x18] sm:$0xff]
    %v1972 = vld [vmem:[%s1967 + $0x20] sm:$0xff]
    %v1973 = vld [vmem:[%s1967 + $0x28] sm:$0xff]
    %v1974 = vld [vmem:[%s1967 + $0x30] sm:$0xff]
    %v1975 = vld [vmem:[%s1967 + $0x38] sm:$0xff]
    %v1984 = vunpack.c.l.b16 %v1968
    %v1985 = vunpack.c.h.b16 %v1968
    %v1986 = vunpack.c.l.b16 %v1969
    %v1987 = vunpack.c.h.b16 %v1969
    %v1988 = vunpack.c.l.b16 %v1970
    %v1989 = vunpack.c.h.b16 %v1970
    %v1990 = vunpack.c.l.b16 %v1971
    %v1991 = vunpack.c.h.b16 %v1971
    %v1992 = vunpack.c.l.b16 %v1972
    %v1993 = vunpack.c.h.b16 %v1972
    %v1994 = vunpack.c.l.b16 %v1973
    %v1995 = vunpack.c.h.b16 %v1973
    %v1996 = vunpack.c.l.b16 %v1974
    %v1997 = vunpack.c.h.b16 %v1974
    %v1998 = vunpack.c.l.b16 %v1975
    %v1999 = vunpack.c.h.b16 %v1975
    %v2000 = vpack.c.b16 %v1988, %v1984
    %v2001 = vpack.c.b16 %v1989, %v1985
    %v2002 = vpack.c.b16 %v1990, %v1986
    %v2003 = vpack.c.b16 %v1991, %v1987
    %v2004 = vpack.c.b16 %v1996, %v1992
    %v2005 = vpack.c.b16 %v1997, %v1993
    %v2006 = vpack.c.b16 %v1998, %v1994
    %v2007 = vpack.c.b16 %v1999, %v1995
    %v2017 = vsel %vm280, %v1955, 0
    %v2020 = vsel %vm280, %v1956, 0
    %v2023 = vsel %vm280, %v1957, 0
    %v2026 = vsel %vm280, %v1958, 0
    %v2029 = vsel %vm280, %v1959, 0
    %v2032 = vsel %vm280, %v1960, 0
    %v2035 = vsel %vm280, %v1961, 0
    %v2038 = vsel %vm280, %v1962, 0
    %v2041 = vsel %vm280, %v1963, 0
    %v2044 = vsel %vm280, %v1964, 0
    %v2047 = vsel %vm280, %v1965, 0
    %v2050 = vsel %vm280, %v1966, 0
    %2052 = vmatpush.bf16.msra.mxu0 0
    %2053 = vmatpush.bf16.msra.mxu0 0
    %2054 = vmatpush.bf16.msra.mxu0 0
    %2055 = vmatpush.bf16.msra.mxu0 0
    %2056 = vmatpush.bf16.msra.mxu0 0
    %2057 = vmatpush.bf16.msra.mxu0 0
    %2058 = vmatpush.bf16.msra.mxu0 %v2004
    %2059 = vmatpush.bf16.msra.mxu0 %v2000
    %2060 = vmatmul.bf16.gmra.mxu0 %v2017
    %v2061 = vpop.f32.mrf.mxu0
    %v2062 = vadd.f32 0.0, %v2061
    %v2063 = vpop.f32.mrf.mxu0
    %v2064 = vadd.f32 0.0, %v2063
    %2065 = vmatmul.bf16.gmra.mxu0 %v2020
    %v2066 = vpop.f32.mrf.mxu0
    %v2067 = vadd.f32 0.0, %v2066
    %v2068 = vpop.f32.mrf.mxu0
    %v2069 = vadd.f32 0.0, %v2068
    %2070 = vmatmul.bf16.gmra.mxu0 %v2023
    %v2071 = vpop.f32.mrf.mxu0
    %v2072 = vadd.f32 0.0, %v2071
    %v2073 = vpop.f32.mrf.mxu0
    %v2074 = vadd.f32 0.0, %v2073
    %2075 = vmatmul.bf16.gmra.mxu0 %v2026
    %v2076 = vpop.f32.mrf.mxu0
    %v2077 = vadd.f32 0.0, %v2076
    %v2078 = vpop.f32.mrf.mxu0
    %v2079 = vadd.f32 0.0, %v2078
    %2080 = vmatmul.bf16.gmra.mxu0 %v2029
    %v2081 = vpop.f32.mrf.mxu0
    %v2082 = vadd.f32 0.0, %v2081
    %v2083 = vpop.f32.mrf.mxu0
    %v2084 = vadd.f32 0.0, %v2083
    %2085 = vmatmul.bf16.gmra.mxu0 %v2032
    %v2086 = vpop.f32.mrf.mxu0
    %v2087 = vadd.f32 0.0, %v2086
    %v2088 = vpop.f32.mrf.mxu0
    %v2089 = vadd.f32 0.0, %v2088
    %2090 = vmatmul.bf16.gmra.mxu0 %v2035
    %v2091 = vpop.f32.mrf.mxu0
    %v2092 = vadd.f32 0.0, %v2091
    %v2093 = vpop.f32.mrf.mxu0
    %v2094 = vadd.f32 0.0, %v2093
    %2095 = vmatmul.bf16.gmra.mxu0 %v2038
    %v2096 = vpop.f32.mrf.mxu0
    %v2097 = vadd.f32 0.0, %v2096
    %v2098 = vpop.f32.mrf.mxu0
    %v2099 = vadd.f32 0.0, %v2098
    %2100 = vmatmul.bf16.gmra.mxu0 %v2041
    %v2101 = vpop.f32.mrf.mxu0
    %v2102 = vadd.f32 0.0, %v2101
    %v2103 = vpop.f32.mrf.mxu0
    %v2104 = vadd.f32 0.0, %v2103
    %2105 = vmatmul.bf16.gmra.mxu0 %v2044
    %v2106 = vpop.f32.mrf.mxu0
    %v2107 = vadd.f32 0.0, %v2106
    %v2108 = vpop.f32.mrf.mxu0
    %v2109 = vadd.f32 0.0, %v2108
    %2110 = vmatmul.bf16.gmra.mxu0 %v2047
    %v2111 = vpop.f32.mrf.mxu0
    %v2112 = vadd.f32 0.0, %v2111
    %v2113 = vpop.f32.mrf.mxu0
    %v2114 = vadd.f32 0.0, %v2113
    %2115 = vmatmul.bf16.gmra.mxu0 %v2050
    %v2116 = vpop.f32.mrf.mxu0
    %v2117 = vadd.f32 0.0, %v2116
    %v2118 = vpop.f32.mrf.mxu0
    %v2119 = vadd.f32 0.0, %v2118
    %2120 = vdwg.mxu0
    %2121 = vmatpush.bf16.msra.mxu0 0
    %2122 = vmatpush.bf16.msra.mxu0 0
    %2123 = vmatpush.bf16.msra.mxu0 0
    %2124 = vmatpush.bf16.msra.mxu0 0
    %2125 = vmatpush.bf16.msra.mxu0 0
    %2126 = vmatpush.bf16.msra.mxu0 0
    %2127 = vmatpush.bf16.msra.mxu0 %v2005
    %2128 = vmatpush.bf16.msra.mxu0 %v2001
    %2129 = vmatmul.bf16.gmra.mxu0 %v2017
    %v2130 = vpop.f32.mrf.mxu0
    %v2131 = vadd.f32 0.0, %v2130
    %v2132 = vpop.f32.mrf.mxu0
    %v2133 = vadd.f32 0.0, %v2132
    %2134 = vmatmul.bf16.gmra.mxu0 %v2020
    %v2135 = vpop.f32.mrf.mxu0
    %v2136 = vadd.f32 0.0, %v2135
    %v2137 = vpop.f32.mrf.mxu0
    %v2138 = vadd.f32 0.0, %v2137
    %2139 = vmatmul.bf16.gmra.mxu0 %v2023
    %v2140 = vpop.f32.mrf.mxu0
    %v2141 = vadd.f32 0.0, %v2140
    %v2142 = vpop.f32.mrf.mxu0
    %v2143 = vadd.f32 0.0, %v2142
    %2144 = vmatmul.bf16.gmra.mxu0 %v2026
    %v2145 = vpop.f32.mrf.mxu0
    %v2146 = vadd.f32 0.0, %v2145
    %v2147 = vpop.f32.mrf.mxu0
    %v2148 = vadd.f32 0.0, %v2147
    %2149 = vmatmul.bf16.gmra.mxu0 %v2029
    %v2150 = vpop.f32.mrf.mxu0
    %v2151 = vadd.f32 0.0, %v2150
    %v2152 = vpop.f32.mrf.mxu0
    %v2153 = vadd.f32 0.0, %v2152
    %2154 = vmatmul.bf16.gmra.mxu0 %v2032
    %v2155 = vpop.f32.mrf.mxu0
    %v2156 = vadd.f32 0.0, %v2155
    %v2157 = vpop.f32.mrf.mxu0
    %v2158 = vadd.f32 0.0, %v2157
    %2159 = vmatmul.bf16.gmra.mxu0 %v2035
    %v2160 = vpop.f32.mrf.mxu0
    %v2161 = vadd.f32 0.0, %v2160
    %v2162 = vpop.f32.mrf.mxu0
    %v2163 = vadd.f32 0.0, %v2162
    %2164 = vmatmul.bf16.gmra.mxu0 %v2038
    %v2165 = vpop.f32.mrf.mxu0
    %v2166 = vadd.f32 0.0, %v2165
    %v2167 = vpop.f32.mrf.mxu0
    %v2168 = vadd.f32 0.0, %v2167
    %2169 = vmatmul.bf16.gmra.mxu0 %v2041
    %v2170 = vpop.f32.mrf.mxu0
    %v2171 = vadd.f32 0.0, %v2170
    %v2172 = vpop.f32.mrf.mxu0
    %v2173 = vadd.f32 0.0, %v2172
    %2174 = vmatmul.bf16.gmra.mxu0 %v2044
    %v2175 = vpop.f32.mrf.mxu0
    %v2176 = vadd.f32 0.0, %v2175
    %v2177 = vpop.f32.mrf.mxu0
    %v2178 = vadd.f32 0.0, %v2177
    %2179 = vmatmul.bf16.gmra.mxu0 %v2047
    %v2180 = vpop.f32.mrf.mxu0
    %v2181 = vadd.f32 0.0, %v2180
    %v2182 = vpop.f32.mrf.mxu0
    %v2183 = vadd.f32 0.0, %v2182
    %2184 = vmatmul.bf16.gmra.mxu0 %v2050
    %v2185 = vpop.f32.mrf.mxu0
    %v2186 = vadd.f32 0.0, %v2185
    %v2187 = vpop.f32.mrf.mxu0
    %v2188 = vadd.f32 0.0, %v2187
    %2189 = vdwg.mxu0
    %2190 = vmatpush.bf16.msra.mxu0 0
    %2191 = vmatpush.bf16.msra.mxu0 0
    %2192 = vmatpush.bf16.msra.mxu0 0
    %2193 = vmatpush.bf16.msra.mxu0 0
    %2194 = vmatpush.bf16.msra.mxu0 0
    %2195 = vmatpush.bf16.msra.mxu0 0
    %2196 = vmatpush.bf16.msra.mxu0 %v2006
    %2197 = vmatpush.bf16.msra.mxu0 %v2002
    %2198 = vmatmul.bf16.gmra.mxu0 %v2017
    %v2199 = vpop.f32.mrf.mxu0
    %v2200 = vadd.f32 0.0, %v2199
    %v2201 = vpop.f32.mrf.mxu0
    %v2202 = vadd.f32 0.0, %v2201
    %2203 = vmatmul.bf16.gmra.mxu0 %v2020
    %v2204 = vpop.f32.mrf.mxu0
    %v2205 = vadd.f32 0.0, %v2204
    %v2206 = vpop.f32.mrf.mxu0
    %v2207 = vadd.f32 0.0, %v2206
    %2208 = vmatmul.bf16.gmra.mxu0 %v2023
    %v2209 = vpop.f32.mrf.mxu0
    %v2210 = vadd.f32 0.0, %v2209
    %v2211 = vpop.f32.mrf.mxu0
    %v2212 = vadd.f32 0.0, %v2211
    %2213 = vmatmul.bf16.gmra.mxu0 %v2026
    %v2214 = vpop.f32.mrf.mxu0
    %v2215 = vadd.f32 0.0, %v2214
    %v2216 = vpop.f32.mrf.mxu0
    %v2217 = vadd.f32 0.0, %v2216
    %2218 = vmatmul.bf16.gmra.mxu0 %v2029
    %v2219 = vpop.f32.mrf.mxu0
    %v2220 = vadd.f32 0.0, %v2219
    %v2221 = vpop.f32.mrf.mxu0
    %v2222 = vadd.f32 0.0, %v2221
    %2223 = vmatmul.bf16.gmra.mxu0 %v2032
    %v2224 = vpop.f32.mrf.mxu0
    %v2225 = vadd.f32 0.0, %v2224
    %v2226 = vpop.f32.mrf.mxu0
    %v2227 = vadd.f32 0.0, %v2226
    %2228 = vmatmul.bf16.gmra.mxu0 %v2035
    %v2229 = vpop.f32.mrf.mxu0
    %v2230 = vadd.f32 0.0, %v2229
    %v2231 = vpop.f32.mrf.mxu0
    %v2232 = vadd.f32 0.0, %v2231
    %2233 = vmatmul.bf16.gmra.mxu0 %v2038
    %v2234 = vpop.f32.mrf.mxu0
    %v2235 = vadd.f32 0.0, %v2234
    %v2236 = vpop.f32.mrf.mxu0
    %v2237 = vadd.f32 0.0, %v2236
    %2238 = vmatmul.bf16.gmra.mxu0 %v2041
    %v2239 = vpop.f32.mrf.mxu0
    %v2240 = vadd.f32 0.0, %v2239
    %v2241 = vpop.f32.mrf.mxu0
    %v2242 = vadd.f32 0.0, %v2241
    %2243 = vmatmul.bf16.gmra.mxu0 %v2044
    %v2244 = vpop.f32.mrf.mxu0
    %v2245 = vadd.f32 0.0, %v2244
    %v2246 = vpop.f32.mrf.mxu0
    %v2247 = vadd.f32 0.0, %v2246
    %2248 = vmatmul.bf16.gmra.mxu0 %v2047
    %v2249 = vpop.f32.mrf.mxu0
    %v2250 = vadd.f32 0.0, %v2249
    %v2251 = vpop.f32.mrf.mxu0
    %v2252 = vadd.f32 0.0, %v2251
    %2253 = vmatmul.bf16.gmra.mxu0 %v2050
    %v2254 = vpop.f32.mrf.mxu0
    %v2255 = vadd.f32 0.0, %v2254
    %v2256 = vpop.f32.mrf.mxu0
    %v2257 = vadd.f32 0.0, %v2256
    %2258 = vdwg.mxu0
    %2259 = vmatpush.bf16.msra.mxu0 0
    %2260 = vmatpush.bf16.msra.mxu0 0
    %2261 = vmatpush.bf16.msra.mxu0 0
    %2262 = vmatpush.bf16.msra.mxu0 0
    %2263 = vmatpush.bf16.msra.mxu0 0
    %2264 = vmatpush.bf16.msra.mxu0 0
    %2265 = vmatpush.bf16.msra.mxu0 %v2007
    %2266 = vmatpush.bf16.msra.mxu0 %v2003
    %2267 = vmatmul.bf16.gmra.mxu0 %v2017
    %v2268 = vpop.f32.mrf.mxu0
    %v2269 = vadd.f32 0.0, %v2268
    %v2270 = vpop.f32.mrf.mxu0
    %v2271 = vadd.f32 0.0, %v2270
    %2272 = vmatmul.bf16.gmra.mxu0 %v2020
    %v2273 = vpop.f32.mrf.mxu0
    %v2274 = vadd.f32 0.0, %v2273
    %v2275 = vpop.f32.mrf.mxu0
    %v2276 = vadd.f32 0.0, %v2275
    %2277 = vmatmul.bf16.gmra.mxu0 %v2023
    %v2278 = vpop.f32.mrf.mxu0
    %v2279 = vadd.f32 0.0, %v2278
    %v2280 = vpop.f32.mrf.mxu0
    %v2281 = vadd.f32 0.0, %v2280
    %2282 = vmatmul.bf16.gmra.mxu0 %v2026
    %v2283 = vpop.f32.mrf.mxu0
    %v2284 = vadd.f32 0.0, %v2283
    %v2285 = vpop.f32.mrf.mxu0
    %v2286 = vadd.f32 0.0, %v2285
    %2287 = vmatmul.bf16.gmra.mxu0 %v2029
    %v2288 = vpop.f32.mrf.mxu0
    %v2289 = vadd.f32 0.0, %v2288
    %v2290 = vpop.f32.mrf.mxu0
    %v2291 = vadd.f32 0.0, %v2290
    %2292 = vmatmul.bf16.gmra.mxu0 %v2032
    %v2293 = vpop.f32.mrf.mxu0
    %v2294 = vadd.f32 0.0, %v2293
    %v2295 = vpop.f32.mrf.mxu0
    %v2296 = vadd.f32 0.0, %v2295
    %2297 = vmatmul.bf16.gmra.mxu0 %v2035
    %v2298 = vpop.f32.mrf.mxu0
    %v2299 = vadd.f32 0.0, %v2298
    %v2300 = vpop.f32.mrf.mxu0
    %v2301 = vadd.f32 0.0, %v2300
    %2302 = vmatmul.bf16.gmra.mxu0 %v2038
    %v2303 = vpop.f32.mrf.mxu0
    %v2304 = vadd.f32 0.0, %v2303
    %v2305 = vpop.f32.mrf.mxu0
    %v2306 = vadd.f32 0.0, %v2305
    %2307 = vmatmul.bf16.gmra.mxu0 %v2041
    %v2308 = vpop.f32.mrf.mxu0
    %v2309 = vadd.f32 0.0, %v2308
    %v2310 = vpop.f32.mrf.mxu0
    %v2311 = vadd.f32 0.0, %v2310
    %2312 = vmatmul.bf16.gmra.mxu0 %v2044
    %v2313 = vpop.f32.mrf.mxu0
    %v2314 = vadd.f32 0.0, %v2313
    %v2315 = vpop.f32.mrf.mxu0
    %v2316 = vadd.f32 0.0, %v2315
    %2317 = vmatmul.bf16.gmra.mxu0 %v2047
    %v2318 = vpop.f32.mrf.mxu0
    %v2319 = vadd.f32 0.0, %v2318
    %v2320 = vpop.f32.mrf.mxu0
    %v2321 = vadd.f32 0.0, %v2320
    %2322 = vmatmul.bf16.gmra.mxu0 %v2050
    %v2323 = vpop.f32.mrf.mxu0
    %v2324 = vadd.f32 0.0, %v2323
    %v2325 = vpop.f32.mrf.mxu0
    %v2326 = vadd.f32 0.0, %v2325
    %2327 = vdwg.mxu0
    %v2328 = vadd.f32 %v1835, %v2062
    %v2329 = vadd.f32 %v1836, %v2131
    %v2330 = vadd.f32 %v1837, %v2200
    %v2331 = vadd.f32 %v1838, %v2269
    %v2332 = vadd.f32 %v1839, %v2064
    %v2333 = vadd.f32 %v1840, %v2133
    %v2334 = vadd.f32 %v1841, %v2202
    %v2335 = vadd.f32 %v1842, %v2271
    %v2336 = vadd.f32 %v1843, %v2067
    %v2337 = vadd.f32 %v1844, %v2136
    %v2338 = vadd.f32 %v1845, %v2205
    %v2339 = vadd.f32 %v1846, %v2274
    %v2340 = vadd.f32 %v1847, %v2069
    %v2341 = vadd.f32 %v1848, %v2138
    %v2342 = vadd.f32 %v1849, %v2207
    %v2343 = vadd.f32 %v1850, %v2276
    %v2344 = vadd.f32 %v1851, %v2072
    %v2345 = vadd.f32 %v1852, %v2141
    %v2346 = vadd.f32 %v1853, %v2210
    %v2347 = vadd.f32 %v1854, %v2279
    %v2348 = vadd.f32 %v1855, %v2074
    %v2349 = vadd.f32 %v1856, %v2143
    %v2350 = vadd.f32 %v1857, %v2212
    %v2351 = vadd.f32 %v1858, %v2281
    %v2352 = vadd.f32 %v1859, %v2077
    %v2353 = vadd.f32 %v1860, %v2146
    %v2354 = vadd.f32 %v1861, %v2215
    %v2355 = vadd.f32 %v1862, %v2284
    %v2356 = vadd.f32 %v1863, %v2079
    %v2357 = vadd.f32 %v1864, %v2148
    %v2358 = vadd.f32 %v1865, %v2217
    %v2359 = vadd.f32 %v1866, %v2286
    %v2360 = vadd.f32 %v1867, %v2082
    %v2361 = vadd.f32 %v1868, %v2151
    %v2362 = vadd.f32 %v1869, %v2220
    %v2363 = vadd.f32 %v1870, %v2289
    %v2364 = vadd.f32 %v1871, %v2084
    %v2365 = vadd.f32 %v1872, %v2153
    %v2366 = vadd.f32 %v1873, %v2222
    %v2367 = vadd.f32 %v1874, %v2291
    %v2368 = vadd.f32 %v1875, %v2087
    %v2369 = vadd.f32 %v1876, %v2156
    %v2370 = vadd.f32 %v1877, %v2225
    %v2371 = vadd.f32 %v1878, %v2294
    %v2372 = vadd.f32 %v1879, %v2089
    %v2373 = vadd.f32 %v1880, %v2158
    %v2374 = vadd.f32 %v1881, %v2227
    %v2375 = vadd.f32 %v1882, %v2296
    %v2376 = vadd.f32 %v1883, %v2092
    %v2377 = vadd.f32 %v1884, %v2161
    %v2378 = vadd.f32 %v1885, %v2230
    %v2379 = vadd.f32 %v1886, %v2299
    %v2380 = vadd.f32 %v1887, %v2094
    %v2381 = vadd.f32 %v1888, %v2163
    %v2382 = vadd.f32 %v1889, %v2232
    %v2383 = vadd.f32 %v1890, %v2301
    %v2384 = vadd.f32 %v1891, %v2097
    %v2385 = vadd.f32 %v1892, %v2166
    %v2386 = vadd.f32 %v1893, %v2235
    %v2387 = vadd.f32 %v1894, %v2304
    %v2388 = vadd.f32 %v1895, %v2099
    %v2389 = vadd.f32 %v1896, %v2168
    %v2390 = vadd.f32 %v1897, %v2237
    %v2391 = vadd.f32 %v1898, %v2306
    %v2392 = vadd.f32 %v1899, %v2102
    %v2393 = vadd.f32 %v1900, %v2171
    %v2394 = vadd.f32 %v1901, %v2240
    %v2395 = vadd.f32 %v1902, %v2309
    %v2396 = vadd.f32 %v1903, %v2104
    %v2397 = vadd.f32 %v1904, %v2173
    %v2398 = vadd.f32 %v1905, %v2242
    %v2399 = vadd.f32 %v1906, %v2311
    %v2400 = vadd.f32 %v1907, %v2107
    %v2401 = vadd.f32 %v1908, %v2176
    %v2402 = vadd.f32 %v1909, %v2245
    %v2403 = vadd.f32 %v1910, %v2314
    %v2404 = vadd.f32 %v1911, %v2109
    %v2405 = vadd.f32 %v1912, %v2178
    %v2406 = vadd.f32 %v1913, %v2247
    %v2407 = vadd.f32 %v1914, %v2316
    %v2408 = vadd.f32 %v1915, %v2112
    %v2409 = vadd.f32 %v1916, %v2181
    %v2410 = vadd.f32 %v1917, %v2250
    %v2411 = vadd.f32 %v1918, %v2319
    %v2412 = vadd.f32 %v1919, %v2114
    %v2413 = vadd.f32 %v1920, %v2183
    %v2414 = vadd.f32 %v1921, %v2252
    %v2415 = vadd.f32 %v1922, %v2321
    %v2416 = vadd.f32 %v1923, %v2117
    %v2417 = vadd.f32 %v1924, %v2186
    %v2418 = vadd.f32 %v1925, %v2255
    %v2419 = vadd.f32 %v1926, %v2324
    %v2420 = vadd.f32 %v1927, %v2119
    %v2421 = vadd.f32 %v1928, %v2188
    %v2422 = vadd.f32 %v1929, %v2257
    %v2423 = vadd.f32 %v1930, %v2326
    %v2424 = vld [vmem:[#allocation8] sm:$0xf]
    %v2426 = vperm.slane %v2424, 0
    %v2427 = vperm.slane %v2424, 1
    %v2428 = vperm.slane %v2424, 2
    %v2429 = vperm.slane %v2424, 3
    %v2434 = vadd.f32 %v2328, %v2426
    %v2435 = vadd.f32 %v2329, %v2427
    %v2436 = vadd.f32 %v2330, %v2428
    %v2437 = vadd.f32 %v2331, %v2429
    %v2438 = vadd.f32 %v2332, %v2426
    %v2439 = vadd.f32 %v2333, %v2427
    %v2440 = vadd.f32 %v2334, %v2428
    %v2441 = vadd.f32 %v2335, %v2429
    %v2442 = vadd.f32 %v2336, %v2426
    %v2443 = vadd.f32 %v2337, %v2427
    %v2444 = vadd.f32 %v2338, %v2428
    %v2445 = vadd.f32 %v2339, %v2429
    %v2446 = vadd.f32 %v2340, %v2426
    %v2447 = vadd.f32 %v2341, %v2427
    %v2448 = vadd.f32 %v2342, %v2428
    %v2449 = vadd.f32 %v2343, %v2429
    %v2450 = vadd.f32 %v2344, %v2426
    %v2451 = vadd.f32 %v2345, %v2427
    %v2452 = vadd.f32 %v2346, %v2428
    %v2453 = vadd.f32 %v2347, %v2429
    %v2454 = vadd.f32 %v2348, %v2426
    %v2455 = vadd.f32 %v2349, %v2427
    %v2456 = vadd.f32 %v2350, %v2428
    %v2457 = vadd.f32 %v2351, %v2429
    %v2458 = vadd.f32 %v2352, %v2426
    %v2459 = vadd.f32 %v2353, %v2427
    %v2460 = vadd.f32 %v2354, %v2428
    %v2461 = vadd.f32 %v2355, %v2429
    %v2462 = vadd.f32 %v2356, %v2426
    %v2463 = vadd.f32 %v2357, %v2427
    %v2464 = vadd.f32 %v2358, %v2428
    %v2465 = vadd.f32 %v2359, %v2429
    %v2466 = vadd.f32 %v2360, %v2426
    %v2467 = vadd.f32 %v2361, %v2427
    %v2468 = vadd.f32 %v2362, %v2428
    %v2469 = vadd.f32 %v2363, %v2429
    %v2470 = vadd.f32 %v2364, %v2426
    %v2471 = vadd.f32 %v2365, %v2427
    %v2472 = vadd.f32 %v2366, %v2428
    %v2473 = vadd.f32 %v2367, %v2429
    %v2474 = vadd.f32 %v2368, %v2426
    %v2475 = vadd.f32 %v2369, %v2427
    %v2476 = vadd.f32 %v2370, %v2428
    %v2477 = vadd.f32 %v2371, %v2429
    %v2478 = vadd.f32 %v2372, %v2426
    %v2479 = vadd.f32 %v2373, %v2427
    %v2480 = vadd.f32 %v2374, %v2428
    %v2481 = vadd.f32 %v2375, %v2429
    %v2482 = vadd.f32 %v2376, %v2426
    %v2483 = vadd.f32 %v2377, %v2427
    %v2484 = vadd.f32 %v2378, %v2428
    %v2485 = vadd.f32 %v2379, %v2429
    %v2486 = vadd.f32 %v2380, %v2426
    %v2487 = vadd.f32 %v2381, %v2427
    %v2488 = vadd.f32 %v2382, %v2428
    %v2489 = vadd.f32 %v2383, %v2429
    %v2490 = vadd.f32 %v2384, %v2426
    %v2491 = vadd.f32 %v2385, %v2427
    %v2492 = vadd.f32 %v2386, %v2428
    %v2493 = vadd.f32 %v2387, %v2429
    %v2494 = vadd.f32 %v2388, %v2426
    %v2495 = vadd.f32 %v2389, %v2427
    %v2496 = vadd.f32 %v2390, %v2428
    %v2497 = vadd.f32 %v2391, %v2429
    %v2498 = vadd.f32 %v2392, %v2426
    %v2499 = vadd.f32 %v2393, %v2427
    %v2500 = vadd.f32 %v2394, %v2428
    %v2501 = vadd.f32 %v2395, %v2429
    %v2502 = vadd.f32 %v2396, %v2426
    %v2503 = vadd.f32 %v2397, %v2427
    %v2504 = vadd.f32 %v2398, %v2428
    %v2505 = vadd.f32 %v2399, %v2429
    %v2506 = vadd.f32 %v2400, %v2426
    %v2507 = vadd.f32 %v2401, %v2427
    %v2508 = vadd.f32 %v2402, %v2428
    %v2509 = vadd.f32 %v2403, %v2429
    %v2510 = vadd.f32 %v2404, %v2426
    %v2511 = vadd.f32 %v2405, %v2427
    %v2512 = vadd.f32 %v2406, %v2428
    %v2513 = vadd.f32 %v2407, %v2429
    %v2514 = vadd.f32 %v2408, %v2426
    %v2515 = vadd.f32 %v2409, %v2427
    %v2516 = vadd.f32 %v2410, %v2428
    %v2517 = vadd.f32 %v2411, %v2429
    %v2518 = vadd.f32 %v2412, %v2426
    %v2519 = vadd.f32 %v2413, %v2427
    %v2520 = vadd.f32 %v2414, %v2428
    %v2521 = vadd.f32 %v2415, %v2429
    %v2522 = vadd.f32 %v2416, %v2426
    %v2523 = vadd.f32 %v2417, %v2427
    %v2524 = vadd.f32 %v2418, %v2428
    %v2525 = vadd.f32 %v2419, %v2429
    %v2526 = vadd.f32 %v2420, %v2426
    %v2527 = vadd.f32 %v2421, %v2427
    %v2528 = vadd.f32 %v2422, %v2428
    %v2529 = vadd.f32 %v2423, %v2429
    %v2530 = vmax.f32 %v2434, 0.0
    %v2531 = vmax.f32 %v2435, 0.0
    %v2532 = vmax.f32 %v2436, 0.0
    %v2533 = vmax.f32 %v2437, 0.0
    %v2534 = vmax.f32 %v2438, 0.0
    %v2535 = vmax.f32 %v2439, 0.0
    %v2536 = vmax.f32 %v2440, 0.0
    %v2537 = vmax.f32 %v2441, 0.0
    %v2538 = vmax.f32 %v2442, 0.0
    %v2539 = vmax.f32 %v2443, 0.0
    %v2540 = vmax.f32 %v2444, 0.0
    %v2541 = vmax.f32 %v2445, 0.0
    %v2542 = vmax.f32 %v2446, 0.0
    %v2543 = vmax.f32 %v2447, 0.0
    %v2544 = vmax.f32 %v2448, 0.0
    %v2545 = vmax.f32 %v2449, 0.0
    %v2546 = vmax.f32 %v2450, 0.0
    %v2547 = vmax.f32 %v2451, 0.0
    %v2548 = vmax.f32 %v2452, 0.0
    %v2549 = vmax.f32 %v2453, 0.0
    %v2550 = vmax.f32 %v2454, 0.0
    %v2551 = vmax.f32 %v2455, 0.0
    %v2552 = vmax.f32 %v2456, 0.0
    %v2553 = vmax.f32 %v2457, 0.0
    %v2554 = vmax.f32 %v2458, 0.0
    %v2555 = vmax.f32 %v2459, 0.0
    %v2556 = vmax.f32 %v2460, 0.0
    %v2557 = vmax.f32 %v2461, 0.0
    %v2558 = vmax.f32 %v2462, 0.0
    %v2559 = vmax.f32 %v2463, 0.0
    %v2560 = vmax.f32 %v2464, 0.0
    %v2561 = vmax.f32 %v2465, 0.0
    %v2562 = vmax.f32 %v2466, 0.0
    %v2563 = vmax.f32 %v2467, 0.0
    %v2564 = vmax.f32 %v2468, 0.0
    %v2565 = vmax.f32 %v2469, 0.0
    %v2566 = vmax.f32 %v2470, 0.0
    %v2567 = vmax.f32 %v2471, 0.0
    %v2568 = vmax.f32 %v2472, 0.0
    %v2569 = vmax.f32 %v2473, 0.0
    %v2570 = vmax.f32 %v2474, 0.0
    %v2571 = vmax.f32 %v2475, 0.0
    %v2572 = vmax.f32 %v2476, 0.0
    %v2573 = vmax.f32 %v2477, 0.0
    %v2574 = vmax.f32 %v2478, 0.0
    %v2575 = vmax.f32 %v2479, 0.0
    %v2576 = vmax.f32 %v2480, 0.0
    %v2577 = vmax.f32 %v2481, 0.0
    %v2578 = vmax.f32 %v2482, 0.0
    %v2579 = vmax.f32 %v2483, 0.0
    %v2580 = vmax.f32 %v2484, 0.0
    %v2581 = vmax.f32 %v2485, 0.0
    %v2582 = vmax.f32 %v2486, 0.0
    %v2583 = vmax.f32 %v2487, 0.0
    %v2584 = vmax.f32 %v2488, 0.0
    %v2585 = vmax.f32 %v2489, 0.0
    %v2586 = vmax.f32 %v2490, 0.0
    %v2587 = vmax.f32 %v2491, 0.0
    %v2588 = vmax.f32 %v2492, 0.0
    %v2589 = vmax.f32 %v2493, 0.0
    %v2590 = vmax.f32 %v2494, 0.0
    %v2591 = vmax.f32 %v2495, 0.0
    %v2592 = vmax.f32 %v2496, 0.0
    %v2593 = vmax.f32 %v2497, 0.0
    %v2594 = vmax.f32 %v2498, 0.0
    %v2595 = vmax.f32 %v2499, 0.0
    %v2596 = vmax.f32 %v2500, 0.0
    %v2597 = vmax.f32 %v2501, 0.0
    %v2598 = vmax.f32 %v2502, 0.0
    %v2599 = vmax.f32 %v2503, 0.0
    %v2600 = vmax.f32 %v2504, 0.0
    %v2601 = vmax.f32 %v2505, 0.0
    %v2602 = vmax.f32 %v2506, 0.0
    %v2603 = vmax.f32 %v2507, 0.0
    %v2604 = vmax.f32 %v2508, 0.0
    %v2605 = vmax.f32 %v2509, 0.0
    %v2606 = vmax.f32 %v2510, 0.0
    %v2607 = vmax.f32 %v2511, 0.0
    %v2608 = vmax.f32 %v2512, 0.0
    %v2609 = vmax.f32 %v2513, 0.0
    %v2610 = vmax.f32 %v2514, 0.0
    %v2611 = vmax.f32 %v2515, 0.0
    %v2612 = vmax.f32 %v2516, 0.0
    %v2613 = vmax.f32 %v2517, 0.0
    %v2614 = vmax.f32 %v2518, 0.0
    %v2615 = vmax.f32 %v2519, 0.0
    %v2616 = vmax.f32 %v2520, 0.0
    %v2617 = vmax.f32 %v2521, 0.0
    %v2618 = vmax.f32 %v2522, 0.0
    %v2619 = vmax.f32 %v2523, 0.0
    %v2620 = vmax.f32 %v2524, 0.0
    %v2621 = vmax.f32 %v2525, 0.0
    %v2622 = vmax.f32 %v2526, 0.0
    %v2623 = vmax.f32 %v2527, 0.0
    %v2624 = vmax.f32 %v2528, 0.0
    %v2625 = vmax.f32 %v2529, 0.0
    %v2626 = vmax.f32 %v2530, %v2532
    %v2627 = vmax.f32 %v2531, %v2533
    %v2628 = vmax.f32 %v2534, %v2536
    %v2629 = vmax.f32 %v2535, %v2537
    %v2630 = vmax.f32 %v2538, %v2540
    %v2631 = vmax.f32 %v2539, %v2541
    %v2632 = vmax.f32 %v2542, %v2544
    %v2633 = vmax.f32 %v2543, %v2545
    %v2634 = vmax.f32 %v2546, %v2548
    %v2635 = vmax.f32 %v2547, %v2549
    %v2636 = vmax.f32 %v2550, %v2552
    %v2637 = vmax.f32 %v2551, %v2553
    %v2638 = vmax.f32 %v2554, %v2556
    %v2639 = vmax.f32 %v2555, %v2557
    %v2640 = vmax.f32 %v2558, %v2560
    %v2641 = vmax.f32 %v2559, %v2561
    %v2642 = vmax.f32 %v2562, %v2564
    %v2643 = vmax.f32 %v2563, %v2565
    %v2644 = vmax.f32 %v2566, %v2568
    %v2645 = vmax.f32 %v2567, %v2569
    %v2646 = vmax.f32 %v2570, %v2572
    %v2647 = vmax.f32 %v2571, %v2573
    %v2648 = vmax.f32 %v2574, %v2576
    %v2649 = vmax.f32 %v2575, %v2577
    %v2650 = vmax.f32 %v2578, %v2580
    %v2651 = vmax.f32 %v2579, %v2581
    %v2652 = vmax.f32 %v2582, %v2584
    %v2653 = vmax.f32 %v2583, %v2585
    %v2654 = vmax.f32 %v2586, %v2588
    %v2655 = vmax.f32 %v2587, %v2589
    %v2656 = vmax.f32 %v2590, %v2592
    %v2657 = vmax.f32 %v2591, %v2593
    %v2658 = vmax.f32 %v2594, %v2596
    %v2659 = vmax.f32 %v2595, %v2597
    %v2660 = vmax.f32 %v2598, %v2600
    %v2661 = vmax.f32 %v2599, %v2601
    %v2662 = vmax.f32 %v2602, %v2604
    %v2663 = vmax.f32 %v2603, %v2605
    %v2664 = vmax.f32 %v2606, %v2608
    %v2665 = vmax.f32 %v2607, %v2609
    %v2666 = vmax.f32 %v2610, %v2612
    %v2667 = vmax.f32 %v2611, %v2613
    %v2668 = vmax.f32 %v2614, %v2616
    %v2669 = vmax.f32 %v2615, %v2617
    %v2670 = vmax.f32 %v2618, %v2620
    %v2671 = vmax.f32 %v2619, %v2621
    %v2672 = vmax.f32 %v2622, %v2624
    %v2673 = vmax.f32 %v2623, %v2625
    %2674 = vst [vmem:[#allocation2] sm:$0xff] %v2626
    %2675 = vst [vmem:[#allocation2 + $0x8] sm:$0xff] %v2627
    %2676 = vst [vmem:[#allocation2 + $0x10] sm:$0xff] %v2628
    %2677 = vst [vmem:[#allocation2 + $0x18] sm:$0xff] %v2629
    %2678 = vst [vmem:[#allocation2 + $0x20] sm:$0xff] %v2630
    %2679 = vst [vmem:[#allocation2 + $0x28] sm:$0xff] %v2631
    %2680 = vst [vmem:[#allocation2 + $0x30] sm:$0xff] %v2632
    %2681 = vst [vmem:[#allocation2 + $0x38] sm:$0xff] %v2633
    %2682 = vst [vmem:[#allocation2 + $0x40] sm:$0xff] %v2634
    %2683 = vst [vmem:[#allocation2 + $0x48] sm:$0xff] %v2635
    %2684 = vst [vmem:[#allocation2 + $0x50] sm:$0xff] %v2636
    %2685 = vst [vmem:[#allocation2 + $0x58] sm:$0xff] %v2637
    %2686 = vst [vmem:[#allocation2 + $0x60] sm:$0xff] %v2638
    %2687 = vst [vmem:[#allocation2 + $0x68] sm:$0xff] %v2639
    %2688 = vst [vmem:[#allocation2 + $0x70] sm:$0xff] %v2640
    %2689 = vst [vmem:[#allocation2 + $0x78] sm:$0xff] %v2641
    %2690 = vst [vmem:[#allocation2 + $0x80] sm:$0xff] %v2642
    %2691 = vst [vmem:[#allocation2 + $0x88] sm:$0xff] %v2643
    %2692 = vst [vmem:[#allocation2 + $0x90] sm:$0xff] %v2644
    %2693 = vst [vmem:[#allocation2 + $0x98] sm:$0xff] %v2645
    %2694 = vst [vmem:[#allocation2 + $0xa0] sm:$0xff] %v2646
    %2695 = vst [vmem:[#allocation2 + $0xa8] sm:$0xff] %v2647
    %2696 = vst [vmem:[#allocation2 + $0xb0] sm:$0xff] %v2648
    %2697 = vst [vmem:[#allocation2 + $0xb8] sm:$0xff] %v2649
    %2698 = vst [vmem:[#allocation2 + $0xc0] sm:$0xff] %v2650
    %2699 = vst [vmem:[#allocation2 + $0xc8] sm:$0xff] %v2651
    %2700 = vst [vmem:[#allocation2 + $0xd0] sm:$0xff] %v2652
    %2701 = vst [vmem:[#allocation2 + $0xd8] sm:$0xff] %v2653
    %2702 = vst [vmem:[#allocation2 + $0xe0] sm:$0xff] %v2654
    %2703 = vst [vmem:[#allocation2 + $0xe8] sm:$0xff] %v2655
    %2704 = vst [vmem:[#allocation2 + $0xf0] sm:$0xff] %v2656
    %2705 = vst [vmem:[#allocation2 + $0xf8] sm:$0xff] %v2657
    %2706 = vst [vmem:[#allocation2 + $0x100] sm:$0xff] %v2658
    %2707 = vst [vmem:[#allocation2 + $0x108] sm:$0xff] %v2659
    %2708 = vst [vmem:[#allocation2 + $0x110] sm:$0xff] %v2660
    %2709 = vst [vmem:[#allocation2 + $0x118] sm:$0xff] %v2661
    %2710 = vst [vmem:[#allocation2 + $0x120] sm:$0xff] %v2662
    %2711 = vst [vmem:[#allocation2 + $0x128] sm:$0xff] %v2663
    %2712 = vst [vmem:[#allocation2 + $0x130] sm:$0xff] %v2664
    %2713 = vst [vmem:[#allocation2 + $0x138] sm:$0xff] %v2665
    %2714 = vst [vmem:[#allocation2 + $0x140] sm:$0xff] %v2666
    %2715 = vst [vmem:[#allocation2 + $0x148] sm:$0xff] %v2667
    %2716 = vst [vmem:[#allocation2 + $0x150] sm:$0xff] %v2668
    %2717 = vst [vmem:[#allocation2 + $0x158] sm:$0xff] %v2669
    %2718 = vst [vmem:[#allocation2 + $0x160] sm:$0xff] %v2670
    %2719 = vst [vmem:[#allocation2 + $0x168] sm:$0xff] %v2671
    %2720 = vst [vmem:[#allocation2 + $0x170] sm:$0xff] %v2672
    %2721 = vst [vmem:[#allocation2 + $0x178] sm:$0xff] %v2673
    %v2722 = vld [vmem:[#allocation2] ss:$8 sm:$0x3]
    %s2723 = scalar_lea.vmem [#allocation2], 48
    %v2724 = vld [vmem:[%s2723] ss:$8 sm:$0x3]
    %s2725 = scalar_lea.vmem [#allocation2], 96
    %v2726 = vld [vmem:[%s2725] ss:$8 sm:$0x3]
    %s2727 = scalar_lea.vmem [#allocation2], 144
    %v2728 = vld [vmem:[%s2727] ss:$8 sm:$0x3]
    %s2729 = scalar_lea.vmem [#allocation2], 192
    %v2730 = vld [vmem:[%s2729] ss:$8 sm:$0x3]
    %s2731 = scalar_lea.vmem [#allocation2], 240
    %v2732 = vld [vmem:[%s2731] ss:$8 sm:$0x3]
    %s2733 = scalar_lea.vmem [#allocation2], 288
    %v2734 = vld [vmem:[%s2733] ss:$8 sm:$0x3]
    %s2735 = scalar_lea.vmem [#allocation2], 336
    %v2736 = vld [vmem:[%s2735] ss:$8 sm:$0x3]
    %s2737 = scalar_lea.vmem [#allocation2], 1
    %v2738 = vld [vmem:[%s2737] ss:$8 sm:$0x3]
    %s2739 = scalar_lea.vmem [#allocation2], 49
    %v2740 = vld [vmem:[%s2739] ss:$8 sm:$0x3]
    %s2741 = scalar_lea.vmem [#allocation2], 97
    %v2742 = vld [vmem:[%s2741] ss:$8 sm:$0x3]
    %s2743 = scalar_lea.vmem [#allocation2], 145
    %v2744 = vld [vmem:[%s2743] ss:$8 sm:$0x3]
    %s2745 = scalar_lea.vmem [#allocation2], 193
    %v2746 = vld [vmem:[%s2745] ss:$8 sm:$0x3]
    %s2747 = scalar_lea.vmem [#allocation2], 241
    %v2748 = vld [vmem:[%s2747] ss:$8 sm:$0x3]
    %s2749 = scalar_lea.vmem [#allocation2], 289
    %v2750 = vld [vmem:[%s2749] ss:$8 sm:$0x3]
    %s2751 = scalar_lea.vmem [#allocation2], 337
    %v2752 = vld [vmem:[%s2751] ss:$8 sm:$0x3]
    %v2753 = vmax.f32 %v2722, %v2738
    %v2754 = vmax.f32 %v2724, %v2740
    %v2755 = vmax.f32 %v2726, %v2742
    %v2756 = vmax.f32 %v2728, %v2744
    %v2757 = vmax.f32 %v2730, %v2746
    %v2758 = vmax.f32 %v2732, %v2748
    %v2759 = vmax.f32 %v2734, %v2750
    %v2760 = vmax.f32 %v2736, %v2752
    %v2761 = vlaneseq
    %vm2762 = vcmp.ge.s32.totalorder %v2761, 0
    %vm2763 = vcmp.lt.s32.totalorder %v2761, 256
    %vm2764 = vmand %vm2762, %vm2763
    %2765 = vst.msk [vmem:[#allocation3] ss:$8 sm:$0x3] %vm2764, %v2753
    %2766 = vst.msk [vmem:[#allocation3] ss:$8 sm:$0x0] %vm2764, %v2753
    %s2767 = scalar_lea.vmem [#allocation3], 32
    %2768 = vst.msk [vmem:[%s2767] ss:$8 sm:$0x3] %vm2764, %v2754
    %2769 = vst.msk [vmem:[%s2767] ss:$8 sm:$0x0] %vm2764, %v2754
    %s2770 = scalar_lea.vmem [#allocation3], 64
    %2771 = vst.msk [vmem:[%s2770] ss:$8 sm:$0x3] %vm2764, %v2755
    %2772 = vst.msk [vmem:[%s2770] ss:$8 sm:$0x0] %vm2764, %v2755
    %s2773 = scalar_lea.vmem [#allocation3], 96
    %2774 = vst.msk [vmem:[%s2773] ss:$8 sm:$0x3] %vm2764, %v2756
    %2775 = vst.msk [vmem:[%s2773] ss:$8 sm:$0x0] %vm2764, %v2756
    %s2776 = scalar_lea.vmem [#allocation3], 128
    %2777 = vst.msk [vmem:[%s2776] ss:$8 sm:$0x3] %vm2764, %v2757
    %2778 = vst.msk [vmem:[%s2776] ss:$8 sm:$0x0] %vm2764, %v2757
    %s2779 = scalar_lea.vmem [#allocation3], 160
    %2780 = vst.msk [vmem:[%s2779] ss:$8 sm:$0x3] %vm2764, %v2758
    %2781 = vst.msk [vmem:[%s2779] ss:$8 sm:$0x0] %vm2764, %v2758
    %s2782 = scalar_lea.vmem [#allocation3], 192
    %2783 = vst.msk [vmem:[%s2782] ss:$8 sm:$0x3] %vm2764, %v2759
    %2784 = vst.msk [vmem:[%s2782] ss:$8 sm:$0x0] %vm2764, %v2759
    %s2785 = scalar_lea.vmem [#allocation3], 224
    %2786 = vst.msk [vmem:[%s2785] ss:$8 sm:$0x3] %vm2764, %v2760
    %2787 = vst.msk [vmem:[%s2785] ss:$8 sm:$0x0] %vm2764, %v2760
    %s2788 = scalar_lea.vmem [#allocation2], 2
    %v2789 = vld [vmem:[%s2788] ss:$8 sm:$0x3]
    %s2790 = scalar_lea.vmem [#allocation2], 50
    %v2791 = vld [vmem:[%s2790] ss:$8 sm:$0x3]
    %s2792 = scalar_lea.vmem [#allocation2], 98
    %v2793 = vld [vmem:[%s2792] ss:$8 sm:$0x3]
    %s2794 = scalar_lea.vmem [#allocation2], 146
    %v2795 = vld [vmem:[%s2794] ss:$8 sm:$0x3]
    %s2796 = scalar_lea.vmem [#allocation2], 194
    %v2797 = vld [vmem:[%s2796] ss:$8 sm:$0x3]
    %s2798 = scalar_lea.vmem [#allocation2], 242
    %v2799 = vld [vmem:[%s2798] ss:$8 sm:$0x3]
    %s2800 = scalar_lea.vmem [#allocation2], 290
    %v2801 = vld [vmem:[%s2800] ss:$8 sm:$0x3]
    %s2802 = scalar_lea.vmem [#allocation2], 338
    %v2803 = vld [vmem:[%s2802] ss:$8 sm:$0x3]
    %s2804 = scalar_lea.vmem [#allocation2], 3
    %v2805 = vld [vmem:[%s2804] ss:$8 sm:$0x3]
    %s2806 = scalar_lea.vmem [#allocation2], 51
    %v2807 = vld [vmem:[%s2806] ss:$8 sm:$0x3]
    %s2808 = scalar_lea.vmem [#allocation2], 99
    %v2809 = vld [vmem:[%s2808] ss:$8 sm:$0x3]
    %s2810 = scalar_lea.vmem [#allocation2], 147
    %v2811 = vld [vmem:[%s2810] ss:$8 sm:$0x3]
    %s2812 = scalar_lea.vmem [#allocation2], 195
    %v2813 = vld [vmem:[%s2812] ss:$8 sm:$0x3]
    %s2814 = scalar_lea.vmem [#allocation2], 243
    %v2815 = vld [vmem:[%s2814] ss:$8 sm:$0x3]
    %s2816 = scalar_lea.vmem [#allocation2], 291
    %v2817 = vld [vmem:[%s2816] ss:$8 sm:$0x3]
    %s2818 = scalar_lea.vmem [#allocation2], 339
    %v2819 = vld [vmem:[%s2818] ss:$8 sm:$0x3]
    %v2820 = vmax.f32 %v2789, %v2805
    %v2821 = vmax.f32 %v2791, %v2807
    %v2822 = vmax.f32 %v2793, %v2809
    %v2823 = vmax.f32 %v2795, %v2811
    %v2824 = vmax.f32 %v2797, %v2813
    %v2825 = vmax.f32 %v2799, %v2815
    %v2826 = vmax.f32 %v2801, %v2817
    %v2827 = vmax.f32 %v2803, %v2819
    %s2828 = scalar_lea.vmem [#allocation3], 1
    %2829 = vst.msk [vmem:[%s2828] ss:$8 sm:$0x3] %vm2764, %v2820
    %2830 = vst.msk [vmem:[%s2828] ss:$8 sm:$0x0] %vm2764, %v2820
    %s2831 = scalar_lea.vmem [#allocation3], 33
    %2832 = vst.msk [vmem:[%s2831] ss:$8 sm:$0x3] %vm2764, %v2821
    %2833 = vst.msk [vmem:[%s2831] ss:$8 sm:$0x0] %vm2764, %v2821
    %s2834 = scalar_lea.vmem [#allocation3], 65
    %2835 = vst.msk [vmem:[%s2834] ss:$8 sm:$0x3] %vm2764, %v2822
    %2836 = vst.msk [vmem:[%s2834] ss:$8 sm:$0x0] %vm2764, %v2822
    %s2837 = scalar_lea.vmem [#allocation3], 97
    %2838 = vst.msk [vmem:[%s2837] ss:$8 sm:$0x3] %vm2764, %v2823
    %2839 = vst.msk [vmem:[%s2837] ss:$8 sm:$0x0] %vm2764, %v2823
    %s2840 = scalar_lea.vmem [#allocation3], 129
    %2841 = vst.msk [vmem:[%s2840] ss:$8 sm:$0x3] %vm2764, %v2824
    %2842 = vst.msk [vmem:[%s2840] ss:$8 sm:$0x0] %vm2764, %v2824
    %s2843 = scalar_lea.vmem [#allocation3], 161
    %2844 = vst.msk [vmem:[%s2843] ss:$8 sm:$0x3] %vm2764, %v2825
    %2845 = vst.msk [vmem:[%s2843] ss:$8 sm:$0x0] %vm2764, %v2825
    %s2846 = scalar_lea.vmem [#allocation3], 193
    %2847 = vst.msk [vmem:[%s2846] ss:$8 sm:$0x3] %vm2764, %v2826
    %2848 = vst.msk [vmem:[%s2846] ss:$8 sm:$0x0] %vm2764, %v2826
    %s2849 = scalar_lea.vmem [#allocation3], 225
    %2850 = vst.msk [vmem:[%s2849] ss:$8 sm:$0x3] %vm2764, %v2827
    %2851 = vst.msk [vmem:[%s2849] ss:$8 sm:$0x0] %vm2764, %v2827
    %s2852 = scalar_lea.vmem [#allocation2], 4
    %v2853 = vld [vmem:[%s2852] ss:$8 sm:$0x3]
    %s2854 = scalar_lea.vmem [#allocation2], 52
    %v2855 = vld [vmem:[%s2854] ss:$8 sm:$0x3]
    %s2856 = scalar_lea.vmem [#allocation2], 100
    %v2857 = vld [vmem:[%s2856] ss:$8 sm:$0x3]
    %s2858 = scalar_lea.vmem [#allocation2], 148
    %v2859 = vld [vmem:[%s2858] ss:$8 sm:$0x3]
    %s2860 = scalar_lea.vmem [#allocation2], 196
    %v2861 = vld [vmem:[%s2860] ss:$8 sm:$0x3]
    %s2862 = scalar_lea.vmem [#allocation2], 244
    %v2863 = vld [vmem:[%s2862] ss:$8 sm:$0x3]
    %s2864 = scalar_lea.vmem [#allocation2], 292
    %v2865 = vld [vmem:[%s2864] ss:$8 sm:$0x3]
    %s2866 = scalar_lea.vmem [#allocation2], 340
    %v2867 = vld [vmem:[%s2866] ss:$8 sm:$0x3]
    %s2868 = scalar_lea.vmem [#allocation2], 5
    %v2869 = vld [vmem:[%s2868] ss:$8 sm:$0x3]
    %s2870 = scalar_lea.vmem [#allocation2], 53
    %v2871 = vld [vmem:[%s2870] ss:$8 sm:$0x3]
    %s2872 = scalar_lea.vmem [#allocation2], 101
    %v2873 = vld [vmem:[%s2872] ss:$8 sm:$0x3]
    %s2874 = scalar_lea.vmem [#allocation2], 149
    %v2875 = vld [vmem:[%s2874] ss:$8 sm:$0x3]
    %s2876 = scalar_lea.vmem [#allocation2], 197
    %v2877 = vld [vmem:[%s2876] ss:$8 sm:$0x3]
    %s2878 = scalar_lea.vmem [#allocation2], 245
    %v2879 = vld [vmem:[%s2878] ss:$8 sm:$0x3]
    %s2880 = scalar_lea.vmem [#allocation2], 293
    %v2881 = vld [vmem:[%s2880] ss:$8 sm:$0x3]
    %s2882 = scalar_lea.vmem [#allocation2], 341
    %v2883 = vld [vmem:[%s2882] ss:$8 sm:$0x3]
    %v2884 = vmax.f32 %v2853, %v2869
    %v2885 = vmax.f32 %v2855, %v2871
    %v2886 = vmax.f32 %v2857, %v2873
    %v2887 = vmax.f32 %v2859, %v2875
    %v2888 = vmax.f32 %v2861, %v2877
    %v2889 = vmax.f32 %v2863, %v2879
    %v2890 = vmax.f32 %v2865, %v2881
    %v2891 = vmax.f32 %v2867, %v2883
    %s2892 = scalar_lea.vmem [#allocation3], 2
    %2893 = vst.msk [vmem:[%s2892] ss:$8 sm:$0x3] %vm2764, %v2884
    %2894 = vst.msk [vmem:[%s2892] ss:$8 sm:$0x0] %vm2764, %v2884
    %s2895 = scalar_lea.vmem [#allocation3], 34
    %2896 = vst.msk [vmem:[%s2895] ss:$8 sm:$0x3] %vm2764, %v2885
    %2897 = vst.msk [vmem:[%s2895] ss:$8 sm:$0x0] %vm2764, %v2885
    %s2898 = scalar_lea.vmem [#allocation3], 66
    %2899 = vst.msk [vmem:[%s2898] ss:$8 sm:$0x3] %vm2764, %v2886
    %2900 = vst.msk [vmem:[%s2898] ss:$8 sm:$0x0] %vm2764, %v2886
    %s2901 = scalar_lea.vmem [#allocation3], 98
    %2902 = vst.msk [vmem:[%s2901] ss:$8 sm:$0x3] %vm2764, %v2887
    %2903 = vst.msk [vmem:[%s2901] ss:$8 sm:$0x0] %vm2764, %v2887
    %s2904 = scalar_lea.vmem [#allocation3], 130
    %2905 = vst.msk [vmem:[%s2904] ss:$8 sm:$0x3] %vm2764, %v2888
    %2906 = vst.msk [vmem:[%s2904] ss:$8 sm:$0x0] %vm2764, %v2888
    %s2907 = scalar_lea.vmem [#allocation3], 162
    %2908 = vst.msk [vmem:[%s2907] ss:$8 sm:$0x3] %vm2764, %v2889
    %2909 = vst.msk [vmem:[%s2907] ss:$8 sm:$0x0] %vm2764, %v2889
    %s2910 = scalar_lea.vmem [#allocation3], 194
    %2911 = vst.msk [vmem:[%s2910] ss:$8 sm:$0x3] %vm2764, %v2890
    %2912 = vst.msk [vmem:[%s2910] ss:$8 sm:$0x0] %vm2764, %v2890
    %s2913 = scalar_lea.vmem [#allocation3], 226
    %2914 = vst.msk [vmem:[%s2913] ss:$8 sm:$0x3] %vm2764, %v2891
    %2915 = vst.msk [vmem:[%s2913] ss:$8 sm:$0x0] %vm2764, %v2891
    %s2916 = scalar_lea.vmem [#allocation2], 6
    %v2917 = vld [vmem:[%s2916] ss:$8 sm:$0x3]
    %s2918 = scalar_lea.vmem [#allocation2], 54
    %v2919 = vld [vmem:[%s2918] ss:$8 sm:$0x3]
    %s2920 = scalar_lea.vmem [#allocation2], 102
    %v2921 = vld [vmem:[%s2920] ss:$8 sm:$0x3]
    %s2922 = scalar_lea.vmem [#allocation2], 150
    %v2923 = vld [vmem:[%s2922] ss:$8 sm:$0x3]
    %s2924 = scalar_lea.vmem [#allocation2], 198
    %v2925 = vld [vmem:[%s2924] ss:$8 sm:$0x3]
    %s2926 = scalar_lea.vmem [#allocation2], 246
    %v2927 = vld [vmem:[%s2926] ss:$8 sm:$0x3]
    %s2928 = scalar_lea.vmem [#allocation2], 294
    %v2929 = vld [vmem:[%s2928] ss:$8 sm:$0x3]
    %s2930 = scalar_lea.vmem [#allocation2], 342
    %v2931 = vld [vmem:[%s2930] ss:$8 sm:$0x3]
    %s2932 = scalar_lea.vmem [#allocation2], 7
    %v2933 = vld [vmem:[%s2932] ss:$8 sm:$0x3]
    %s2934 = scalar_lea.vmem [#allocation2], 55
    %v2935 = vld [vmem:[%s2934] ss:$8 sm:$0x3]
    %s2936 = scalar_lea.vmem [#allocation2], 103
    %v2937 = vld [vmem:[%s2936] ss:$8 sm:$0x3]
    %s2938 = scalar_lea.vmem [#allocation2], 151
    %v2939 = vld [vmem:[%s2938] ss:$8 sm:$0x3]
    %s2940 = scalar_lea.vmem [#allocation2], 199
    %v2941 = vld [vmem:[%s2940] ss:$8 sm:$0x3]
    %s2942 = scalar_lea.vmem [#allocation2], 247
    %v2943 = vld [vmem:[%s2942] ss:$8 sm:$0x3]
    %s2944 = scalar_lea.vmem [#allocation2], 295
    %v2945 = vld [vmem:[%s2944] ss:$8 sm:$0x3]
    %s2946 = scalar_lea.vmem [#allocation2], 343
    %v2947 = vld [vmem:[%s2946] ss:$8 sm:$0x3]
    %v2948 = vmax.f32 %v2917, %v2933
    %v2949 = vmax.f32 %v2919, %v2935
    %v2950 = vmax.f32 %v2921, %v2937
    %v2951 = vmax.f32 %v2923, %v2939
    %v2952 = vmax.f32 %v2925, %v2941
    %v2953 = vmax.f32 %v2927, %v2943
    %v2954 = vmax.f32 %v2929, %v2945
    %v2955 = vmax.f32 %v2931, %v2947
    %s2956 = scalar_lea.vmem [#allocation3], 3
    %2957 = vst.msk [vmem:[%s2956] ss:$8 sm:$0x3] %vm2764, %v2948
    %2958 = vst.msk [vmem:[%s2956] ss:$8 sm:$0x0] %vm2764, %v2948
    %s2959 = scalar_lea.vmem [#allocation3], 35
    %2960 = vst.msk [vmem:[%s2959] ss:$8 sm:$0x3] %vm2764, %v2949
    %2961 = vst.msk [vmem:[%s2959] ss:$8 sm:$0x0] %vm2764, %v2949
    %s2962 = scalar_lea.vmem [#allocation3], 67
    %2963 = vst.msk [vmem:[%s2962] ss:$8 sm:$0x3] %vm2764, %v2950
    %2964 = vst.msk [vmem:[%s2962] ss:$8 sm:$0x0] %vm2764, %v2950
    %s2965 = scalar_lea.vmem [#allocation3], 99
    %2966 = vst.msk [vmem:[%s2965] ss:$8 sm:$0x3] %vm2764, %v2951
    %2967 = vst.msk [vmem:[%s2965] ss:$8 sm:$0x0] %vm2764, %v2951
    %s2968 = scalar_lea.vmem [#allocation3], 131
    %2969 = vst.msk [vmem:[%s2968] ss:$8 sm:$0x3] %vm2764, %v2952
    %2970 = vst.msk [vmem:[%s2968] ss:$8 sm:$0x0] %vm2764, %v2952
    %s2971 = scalar_lea.vmem [#allocation3], 163
    %2972 = vst.msk [vmem:[%s2971] ss:$8 sm:$0x3] %vm2764, %v2953
    %2973 = vst.msk [vmem:[%s2971] ss:$8 sm:$0x0] %vm2764, %v2953
    %s2974 = scalar_lea.vmem [#allocation3], 195
    %2975 = vst.msk [vmem:[%s2974] ss:$8 sm:$0x3] %vm2764, %v2954
    %2976 = vst.msk [vmem:[%s2974] ss:$8 sm:$0x0] %vm2764, %v2954
    %s2977 = scalar_lea.vmem [#allocation3], 227
    %2978 = vst.msk [vmem:[%s2977] ss:$8 sm:$0x3] %vm2764, %v2955
    %2979 = vst.msk [vmem:[%s2977] ss:$8 sm:$0x0] %vm2764, %v2955
    %s2980 = scalar_lea.vmem [#allocation2], 16
    %v2981 = vld [vmem:[%s2980] ss:$8 sm:$0x3]
    %s2982 = scalar_lea.vmem [#allocation2], 64
    %v2983 = vld [vmem:[%s2982] ss:$8 sm:$0x3]
    %s2984 = scalar_lea.vmem [#allocation2], 112
    %v2985 = vld [vmem:[%s2984] ss:$8 sm:$0x3]
    %s2986 = scalar_lea.vmem [#allocation2], 160
    %v2987 = vld [vmem:[%s2986] ss:$8 sm:$0x3]
    %s2988 = scalar_lea.vmem [#allocation2], 208
    %v2989 = vld [vmem:[%s2988] ss:$8 sm:$0x3]
    %s2990 = scalar_lea.vmem [#allocation2], 256
    %v2991 = vld [vmem:[%s2990] ss:$8 sm:$0x3]
    %s2992 = scalar_lea.vmem [#allocation2], 304
    %v2993 = vld [vmem:[%s2992] ss:$8 sm:$0x3]
    %s2994 = scalar_lea.vmem [#allocation2], 352
    %v2995 = vld [vmem:[%s2994] ss:$8 sm:$0x3]
    %s2996 = scalar_lea.vmem [#allocation2], 17
    %v2997 = vld [vmem:[%s2996] ss:$8 sm:$0x3]
    %s2998 = scalar_lea.vmem [#allocation2], 65
    %v2999 = vld [vmem:[%s2998] ss:$8 sm:$0x3]
    %s3000 = scalar_lea.vmem [#allocation2], 113
    %v3001 = vld [vmem:[%s3000] ss:$8 sm:$0x3]
    %s3002 = scalar_lea.vmem [#allocation2], 161
    %v3003 = vld [vmem:[%s3002] ss:$8 sm:$0x3]
    %s3004 = scalar_lea.vmem [#allocation2], 209
    %v3005 = vld [vmem:[%s3004] ss:$8 sm:$0x3]
    %s3006 = scalar_lea.vmem [#allocation2], 257
    %v3007 = vld [vmem:[%s3006] ss:$8 sm:$0x3]
    %s3008 = scalar_lea.vmem [#allocation2], 305
    %v3009 = vld [vmem:[%s3008] ss:$8 sm:$0x3]
    %s3010 = scalar_lea.vmem [#allocation2], 353
    %v3011 = vld [vmem:[%s3010] ss:$8 sm:$0x3]
    %v3012 = vmax.f32 %v2981, %v2997
    %v3013 = vmax.f32 %v2983, %v2999
    %v3014 = vmax.f32 %v2985, %v3001
    %v3015 = vmax.f32 %v2987, %v3003
    %v3016 = vmax.f32 %v2989, %v3005
    %v3017 = vmax.f32 %v2991, %v3007
    %v3018 = vmax.f32 %v2993, %v3009
    %v3019 = vmax.f32 %v2995, %v3011
    %s3020 = scalar_lea.vmem [#allocation3], 4
    %3021 = vst.msk [vmem:[%s3020] ss:$8 sm:$0x3] %vm2764, %v3012
    %3022 = vst.msk [vmem:[%s3020] ss:$8 sm:$0x0] %vm2764, %v3012
    %s3023 = scalar_lea.vmem [#allocation3], 36
    %3024 = vst.msk [vmem:[%s3023] ss:$8 sm:$0x3] %vm2764, %v3013
    %3025 = vst.msk [vmem:[%s3023] ss:$8 sm:$0x0] %vm2764, %v3013
    %s3026 = scalar_lea.vmem [#allocation3], 68
    %3027 = vst.msk [vmem:[%s3026] ss:$8 sm:$0x3] %vm2764, %v3014
    %3028 = vst.msk [vmem:[%s3026] ss:$8 sm:$0x0] %vm2764, %v3014
    %s3029 = scalar_lea.vmem [#allocation3], 100
    %3030 = vst.msk [vmem:[%s3029] ss:$8 sm:$0x3] %vm2764, %v3015
    %3031 = vst.msk [vmem:[%s3029] ss:$8 sm:$0x0] %vm2764, %v3015
    %s3032 = scalar_lea.vmem [#allocation3], 132
    %3033 = vst.msk [vmem:[%s3032] ss:$8 sm:$0x3] %vm2764, %v3016
    %3034 = vst.msk [vmem:[%s3032] ss:$8 sm:$0x0] %vm2764, %v3016
    %s3035 = scalar_lea.vmem [#allocation3], 164
    %3036 = vst.msk [vmem:[%s3035] ss:$8 sm:$0x3] %vm2764, %v3017
    %3037 = vst.msk [vmem:[%s3035] ss:$8 sm:$0x0] %vm2764, %v3017
    %s3038 = scalar_lea.vmem [#allocation3], 196
    %3039 = vst.msk [vmem:[%s3038] ss:$8 sm:$0x3] %vm2764, %v3018
    %3040 = vst.msk [vmem:[%s3038] ss:$8 sm:$0x0] %vm2764, %v3018
    %s3041 = scalar_lea.vmem [#allocation3], 228
    %3042 = vst.msk [vmem:[%s3041] ss:$8 sm:$0x3] %vm2764, %v3019
    %3043 = vst.msk [vmem:[%s3041] ss:$8 sm:$0x0] %vm2764, %v3019
    %s3044 = scalar_lea.vmem [#allocation2], 18
    %v3045 = vld [vmem:[%s3044] ss:$8 sm:$0x3]
    %s3046 = scalar_lea.vmem [#allocation2], 66
    %v3047 = vld [vmem:[%s3046] ss:$8 sm:$0x3]
    %s3048 = scalar_lea.vmem [#allocation2], 114
    %v3049 = vld [vmem:[%s3048] ss:$8 sm:$0x3]
    %s3050 = scalar_lea.vmem [#allocation2], 162
    %v3051 = vld [vmem:[%s3050] ss:$8 sm:$0x3]
    %s3052 = scalar_lea.vmem [#allocation2], 210
    %v3053 = vld [vmem:[%s3052] ss:$8 sm:$0x3]
    %s3054 = scalar_lea.vmem [#allocation2], 258
    %v3055 = vld [vmem:[%s3054] ss:$8 sm:$0x3]
    %s3056 = scalar_lea.vmem [#allocation2], 306
    %v3057 = vld [vmem:[%s3056] ss:$8 sm:$0x3]
    %s3058 = scalar_lea.vmem [#allocation2], 354
    %v3059 = vld [vmem:[%s3058] ss:$8 sm:$0x3]
    %s3060 = scalar_lea.vmem [#allocation2], 19
    %v3061 = vld [vmem:[%s3060] ss:$8 sm:$0x3]
    %s3062 = scalar_lea.vmem [#allocation2], 67
    %v3063 = vld [vmem:[%s3062] ss:$8 sm:$0x3]
    %s3064 = scalar_lea.vmem [#allocation2], 115
    %v3065 = vld [vmem:[%s3064] ss:$8 sm:$0x3]
    %s3066 = scalar_lea.vmem [#allocation2], 163
    %v3067 = vld [vmem:[%s3066] ss:$8 sm:$0x3]
    %s3068 = scalar_lea.vmem [#allocation2], 211
    %v3069 = vld [vmem:[%s3068] ss:$8 sm:$0x3]
    %s3070 = scalar_lea.vmem [#allocation2], 259
    %v3071 = vld [vmem:[%s3070] ss:$8 sm:$0x3]
    %s3072 = scalar_lea.vmem [#allocation2], 307
    %v3073 = vld [vmem:[%s3072] ss:$8 sm:$0x3]
    %s3074 = scalar_lea.vmem [#allocation2], 355
    %v3075 = vld [vmem:[%s3074] ss:$8 sm:$0x3]
    %v3076 = vmax.f32 %v3045, %v3061
    %v3077 = vmax.f32 %v3047, %v3063
    %v3078 = vmax.f32 %v3049, %v3065
    %v3079 = vmax.f32 %v3051, %v3067
    %v3080 = vmax.f32 %v3053, %v3069
    %v3081 = vmax.f32 %v3055, %v3071
    %v3082 = vmax.f32 %v3057, %v3073
    %v3083 = vmax.f32 %v3059, %v3075
    %s3084 = scalar_lea.vmem [#allocation3], 5
    %3085 = vst.msk [vmem:[%s3084] ss:$8 sm:$0x3] %vm2764, %v3076
    %3086 = vst.msk [vmem:[%s3084] ss:$8 sm:$0x0] %vm2764, %v3076
    %s3087 = scalar_lea.vmem [#allocation3], 37
    %3088 = vst.msk [vmem:[%s3087] ss:$8 sm:$0x3] %vm2764, %v3077
    %3089 = vst.msk [vmem:[%s3087] ss:$8 sm:$0x0] %vm2764, %v3077
    %s3090 = scalar_lea.vmem [#allocation3], 69
    %3091 = vst.msk [vmem:[%s3090] ss:$8 sm:$0x3] %vm2764, %v3078
    %3092 = vst.msk [vmem:[%s3090] ss:$8 sm:$0x0] %vm2764, %v3078
    %s3093 = scalar_lea.vmem [#allocation3], 101
    %3094 = vst.msk [vmem:[%s3093] ss:$8 sm:$0x3] %vm2764, %v3079
    %3095 = vst.msk [vmem:[%s3093] ss:$8 sm:$0x0] %vm2764, %v3079
    %s3096 = scalar_lea.vmem [#allocation3], 133
    %3097 = vst.msk [vmem:[%s3096] ss:$8 sm:$0x3] %vm2764, %v3080
    %3098 = vst.msk [vmem:[%s3096] ss:$8 sm:$0x0] %vm2764, %v3080
    %s3099 = scalar_lea.vmem [#allocation3], 165
    %3100 = vst.msk [vmem:[%s3099] ss:$8 sm:$0x3] %vm2764, %v3081
    %3101 = vst.msk [vmem:[%s3099] ss:$8 sm:$0x0] %vm2764, %v3081
    %s3102 = scalar_lea.vmem [#allocation3], 197
    %3103 = vst.msk [vmem:[%s3102] ss:$8 sm:$0x3] %vm2764, %v3082
    %3104 = vst.msk [vmem:[%s3102] ss:$8 sm:$0x0] %vm2764, %v3082
    %s3105 = scalar_lea.vmem [#allocation3], 229
    %3106 = vst.msk [vmem:[%s3105] ss:$8 sm:$0x3] %vm2764, %v3083
    %3107 = vst.msk [vmem:[%s3105] ss:$8 sm:$0x0] %vm2764, %v3083
    %s3108 = scalar_lea.vmem [#allocation2], 20
    %v3109 = vld [vmem:[%s3108] ss:$8 sm:$0x3]
    %s3110 = scalar_lea.vmem [#allocation2], 68
    %v3111 = vld [vmem:[%s3110] ss:$8 sm:$0x3]
    %s3112 = scalar_lea.vmem [#allocation2], 116
    %v3113 = vld [vmem:[%s3112] ss:$8 sm:$0x3]
    %s3114 = scalar_lea.vmem [#allocation2], 164
    %v3115 = vld [vmem:[%s3114] ss:$8 sm:$0x3]
    %s3116 = scalar_lea.vmem [#allocation2], 212
    %v3117 = vld [vmem:[%s3116] ss:$8 sm:$0x3]
    %s3118 = scalar_lea.vmem [#allocation2], 260
    %v3119 = vld [vmem:[%s3118] ss:$8 sm:$0x3]
    %s3120 = scalar_lea.vmem [#allocation2], 308
    %v3121 = vld [vmem:[%s3120] ss:$8 sm:$0x3]
    %s3122 = scalar_lea.vmem [#allocation2], 356
    %v3123 = vld [vmem:[%s3122] ss:$8 sm:$0x3]
    %s3124 = scalar_lea.vmem [#allocation2], 21
    %v3125 = vld [vmem:[%s3124] ss:$8 sm:$0x3]
    %s3126 = scalar_lea.vmem [#allocation2], 69
    %v3127 = vld [vmem:[%s3126] ss:$8 sm:$0x3]
    %s3128 = scalar_lea.vmem [#allocation2], 117
    %v3129 = vld [vmem:[%s3128] ss:$8 sm:$0x3]
    %s3130 = scalar_lea.vmem [#allocation2], 165
    %v3131 = vld [vmem:[%s3130] ss:$8 sm:$0x3]
    %s3132 = scalar_lea.vmem [#allocation2], 213
    %v3133 = vld [vmem:[%s3132] ss:$8 sm:$0x3]
    %s3134 = scalar_lea.vmem [#allocation2], 261
    %v3135 = vld [vmem:[%s3134] ss:$8 sm:$0x3]
    %s3136 = scalar_lea.vmem [#allocation2], 309
    %v3137 = vld [vmem:[%s3136] ss:$8 sm:$0x3]
    %s3138 = scalar_lea.vmem [#allocation2], 357
    %v3139 = vld [vmem:[%s3138] ss:$8 sm:$0x3]
    %v3140 = vmax.f32 %v3109, %v3125
    %v3141 = vmax.f32 %v3111, %v3127
    %v3142 = vmax.f32 %v3113, %v3129
    %v3143 = vmax.f32 %v3115, %v3131
    %v3144 = vmax.f32 %v3117, %v3133
    %v3145 = vmax.f32 %v3119, %v3135
    %v3146 = vmax.f32 %v3121, %v3137
    %v3147 = vmax.f32 %v3123, %v3139
    %s3148 = scalar_lea.vmem [#allocation3], 6
    %3149 = vst.msk [vmem:[%s3148] ss:$8 sm:$0x3] %vm2764, %v3140
    %3150 = vst.msk [vmem:[%s3148] ss:$8 sm:$0x0] %vm2764, %v3140
    %s3151 = scalar_lea.vmem [#allocation3], 38
    %3152 = vst.msk [vmem:[%s3151] ss:$8 sm:$0x3] %vm2764, %v3141
    %3153 = vst.msk [vmem:[%s3151] ss:$8 sm:$0x0] %vm2764, %v3141
    %s3154 = scalar_lea.vmem [#allocation3], 70
    %3155 = vst.msk [vmem:[%s3154] ss:$8 sm:$0x3] %vm2764, %v3142
    %3156 = vst.msk [vmem:[%s3154] ss:$8 sm:$0x0] %vm2764, %v3142
    %s3157 = scalar_lea.vmem [#allocation3], 102
    %3158 = vst.msk [vmem:[%s3157] ss:$8 sm:$0x3] %vm2764, %v3143
    %3159 = vst.msk [vmem:[%s3157] ss:$8 sm:$0x0] %vm2764, %v3143
    %s3160 = scalar_lea.vmem [#allocation3], 134
    %3161 = vst.msk [vmem:[%s3160] ss:$8 sm:$0x3] %vm2764, %v3144
    %3162 = vst.msk [vmem:[%s3160] ss:$8 sm:$0x0] %vm2764, %v3144
    %s3163 = scalar_lea.vmem [#allocation3], 166
    %3164 = vst.msk [vmem:[%s3163] ss:$8 sm:$0x3] %vm2764, %v3145
    %3165 = vst.msk [vmem:[%s3163] ss:$8 sm:$0x0] %vm2764, %v3145
    %s3166 = scalar_lea.vmem [#allocation3], 198
    %3167 = vst.msk [vmem:[%s3166] ss:$8 sm:$0x3] %vm2764, %v3146
    %3168 = vst.msk [vmem:[%s3166] ss:$8 sm:$0x0] %vm2764, %v3146
    %s3169 = scalar_lea.vmem [#allocation3], 230
    %3170 = vst.msk [vmem:[%s3169] ss:$8 sm:$0x3] %vm2764, %v3147
    %3171 = vst.msk [vmem:[%s3169] ss:$8 sm:$0x0] %vm2764, %v3147
    %s3172 = scalar_lea.vmem [#allocation2], 22
    %v3173 = vld [vmem:[%s3172] ss:$8 sm:$0x3]
    %s3174 = scalar_lea.vmem [#allocation2], 70
    %v3175 = vld [vmem:[%s3174] ss:$8 sm:$0x3]
    %s3176 = scalar_lea.vmem [#allocation2], 118
    %v3177 = vld [vmem:[%s3176] ss:$8 sm:$0x3]
    %s3178 = scalar_lea.vmem [#allocation2], 166
    %v3179 = vld [vmem:[%s3178] ss:$8 sm:$0x3]
    %s3180 = scalar_lea.vmem [#allocation2], 214
    %v3181 = vld [vmem:[%s3180] ss:$8 sm:$0x3]
    %s3182 = scalar_lea.vmem [#allocation2], 262
    %v3183 = vld [vmem:[%s3182] ss:$8 sm:$0x3]
    %s3184 = scalar_lea.vmem [#allocation2], 310
    %v3185 = vld [vmem:[%s3184] ss:$8 sm:$0x3]
    %s3186 = scalar_lea.vmem [#allocation2], 358
    %v3187 = vld [vmem:[%s3186] ss:$8 sm:$0x3]
    %s3188 = scalar_lea.vmem [#allocation2], 23
    %v3189 = vld [vmem:[%s3188] ss:$8 sm:$0x3]
    %s3190 = scalar_lea.vmem [#allocation2], 71
    %v3191 = vld [vmem:[%s3190] ss:$8 sm:$0x3]
    %s3192 = scalar_lea.vmem [#allocation2], 119
    %v3193 = vld [vmem:[%s3192] ss:$8 sm:$0x3]
    %s3194 = scalar_lea.vmem [#allocation2], 167
    %v3195 = vld [vmem:[%s3194] ss:$8 sm:$0x3]
    %s3196 = scalar_lea.vmem [#allocation2], 215
    %v3197 = vld [vmem:[%s3196] ss:$8 sm:$0x3]
    %s3198 = scalar_lea.vmem [#allocation2], 263
    %v3199 = vld [vmem:[%s3198] ss:$8 sm:$0x3]
    %s3200 = scalar_lea.vmem [#allocation2], 311
    %v3201 = vld [vmem:[%s3200] ss:$8 sm:$0x3]
    %s3202 = scalar_lea.vmem [#allocation2], 359
    %v3203 = vld [vmem:[%s3202] ss:$8 sm:$0x3]
    %v3204 = vmax.f32 %v3173, %v3189
    %v3205 = vmax.f32 %v3175, %v3191
    %v3206 = vmax.f32 %v3177, %v3193
    %v3207 = vmax.f32 %v3179, %v3195
    %v3208 = vmax.f32 %v3181, %v3197
    %v3209 = vmax.f32 %v3183, %v3199
    %v3210 = vmax.f32 %v3185, %v3201
    %v3211 = vmax.f32 %v3187, %v3203
    %s3212 = scalar_lea.vmem [#allocation3], 7
    %3213 = vst.msk [vmem:[%s3212] ss:$8 sm:$0x3] %vm2764, %v3204
    %3214 = vst.msk [vmem:[%s3212] ss:$8 sm:$0x0] %vm2764, %v3204
    %s3215 = scalar_lea.vmem [#allocation3], 39
    %3216 = vst.msk [vmem:[%s3215] ss:$8 sm:$0x3] %vm2764, %v3205
    %3217 = vst.msk [vmem:[%s3215] ss:$8 sm:$0x0] %vm2764, %v3205
    %s3218 = scalar_lea.vmem [#allocation3], 71
    %3219 = vst.msk [vmem:[%s3218] ss:$8 sm:$0x3] %vm2764, %v3206
    %3220 = vst.msk [vmem:[%s3218] ss:$8 sm:$0x0] %vm2764, %v3206
    %s3221 = scalar_lea.vmem [#allocation3], 103
    %3222 = vst.msk [vmem:[%s3221] ss:$8 sm:$0x3] %vm2764, %v3207
    %3223 = vst.msk [vmem:[%s3221] ss:$8 sm:$0x0] %vm2764, %v3207
    %s3224 = scalar_lea.vmem [#allocation3], 135
    %3225 = vst.msk [vmem:[%s3224] ss:$8 sm:$0x3] %vm2764, %v3208
    %3226 = vst.msk [vmem:[%s3224] ss:$8 sm:$0x0] %vm2764, %v3208
    %s3227 = scalar_lea.vmem [#allocation3], 167
    %3228 = vst.msk [vmem:[%s3227] ss:$8 sm:$0x3] %vm2764, %v3209
    %3229 = vst.msk [vmem:[%s3227] ss:$8 sm:$0x0] %vm2764, %v3209
    %s3230 = scalar_lea.vmem [#allocation3], 199
    %3231 = vst.msk [vmem:[%s3230] ss:$8 sm:$0x3] %vm2764, %v3210
    %3232 = vst.msk [vmem:[%s3230] ss:$8 sm:$0x0] %vm2764, %v3210
    %s3233 = scalar_lea.vmem [#allocation3], 231
    %3234 = vst.msk [vmem:[%s3233] ss:$8 sm:$0x3] %vm2764, %v3211
    %3235 = vst.msk [vmem:[%s3233] ss:$8 sm:$0x0] %vm2764, %v3211
    %s3236 = scalar_lea.vmem [#allocation2], 32
    %v3237 = vld [vmem:[%s3236] ss:$8 sm:$0x3]
    %s3238 = scalar_lea.vmem [#allocation2], 80
    %v3239 = vld [vmem:[%s3238] ss:$8 sm:$0x3]
    %s3240 = scalar_lea.vmem [#allocation2], 128
    %v3241 = vld [vmem:[%s3240] ss:$8 sm:$0x3]
    %s3242 = scalar_lea.vmem [#allocation2], 176
    %v3243 = vld [vmem:[%s3242] ss:$8 sm:$0x3]
    %s3244 = scalar_lea.vmem [#allocation2], 224
    %v3245 = vld [vmem:[%s3244] ss:$8 sm:$0x3]
    %s3246 = scalar_lea.vmem [#allocation2], 272
    %v3247 = vld [vmem:[%s3246] ss:$8 sm:$0x3]
    %s3248 = scalar_lea.vmem [#allocation2], 320
    %v3249 = vld [vmem:[%s3248] ss:$8 sm:$0x3]
    %s3250 = scalar_lea.vmem [#allocation2], 368
    %v3251 = vld [vmem:[%s3250] ss:$8 sm:$0x3]
    %s3252 = scalar_lea.vmem [#allocation2], 33
    %v3253 = vld [vmem:[%s3252] ss:$8 sm:$0x3]
    %s3254 = scalar_lea.vmem [#allocation2], 81
    %v3255 = vld [vmem:[%s3254] ss:$8 sm:$0x3]
    %s3256 = scalar_lea.vmem [#allocation2], 129
    %v3257 = vld [vmem:[%s3256] ss:$8 sm:$0x3]
    %s3258 = scalar_lea.vmem [#allocation2], 177
    %v3259 = vld [vmem:[%s3258] ss:$8 sm:$0x3]
    %s3260 = scalar_lea.vmem [#allocation2], 225
    %v3261 = vld [vmem:[%s3260] ss:$8 sm:$0x3]
    %s3262 = scalar_lea.vmem [#allocation2], 273
    %v3263 = vld [vmem:[%s3262] ss:$8 sm:$0x3]
    %s3264 = scalar_lea.vmem [#allocation2], 321
    %v3265 = vld [vmem:[%s3264] ss:$8 sm:$0x3]
    %s3266 = scalar_lea.vmem [#allocation2], 369
    %v3267 = vld [vmem:[%s3266] ss:$8 sm:$0x3]
    %v3268 = vmax.f32 %v3237, %v3253
    %v3269 = vmax.f32 %v3239, %v3255
    %v3270 = vmax.f32 %v3241, %v3257
    %v3271 = vmax.f32 %v3243, %v3259
    %v3272 = vmax.f32 %v3245, %v3261
    %v3273 = vmax.f32 %v3247, %v3263
    %v3274 = vmax.f32 %v3249, %v3265
    %v3275 = vmax.f32 %v3251, %v3267
    %s3276 = scalar_lea.vmem [#allocation3], 16
    %3277 = vst.msk [vmem:[%s3276] ss:$8 sm:$0x3] %vm2764, %v3268
    %3278 = vst.msk [vmem:[%s3276] ss:$8 sm:$0x0] %vm2764, %v3268
    %s3279 = scalar_lea.vmem [#allocation3], 48
    %3280 = vst.msk [vmem:[%s3279] ss:$8 sm:$0x3] %vm2764, %v3269
    %3281 = vst.msk [vmem:[%s3279] ss:$8 sm:$0x0] %vm2764, %v3269
    %s3282 = scalar_lea.vmem [#allocation3], 80
    %3283 = vst.msk [vmem:[%s3282] ss:$8 sm:$0x3] %vm2764, %v3270
    %3284 = vst.msk [vmem:[%s3282] ss:$8 sm:$0x0] %vm2764, %v3270
    %s3285 = scalar_lea.vmem [#allocation3], 112
    %3286 = vst.msk [vmem:[%s3285] ss:$8 sm:$0x3] %vm2764, %v3271
    %3287 = vst.msk [vmem:[%s3285] ss:$8 sm:$0x0] %vm2764, %v3271
    %s3288 = scalar_lea.vmem [#allocation3], 144
    %3289 = vst.msk [vmem:[%s3288] ss:$8 sm:$0x3] %vm2764, %v3272
    %3290 = vst.msk [vmem:[%s3288] ss:$8 sm:$0x0] %vm2764, %v3272
    %s3291 = scalar_lea.vmem [#allocation3], 176
    %3292 = vst.msk [vmem:[%s3291] ss:$8 sm:$0x3] %vm2764, %v3273
    %3293 = vst.msk [vmem:[%s3291] ss:$8 sm:$0x0] %vm2764, %v3273
    %s3294 = scalar_lea.vmem [#allocation3], 208
    %3295 = vst.msk [vmem:[%s3294] ss:$8 sm:$0x3] %vm2764, %v3274
    %3296 = vst.msk [vmem:[%s3294] ss:$8 sm:$0x0] %vm2764, %v3274
    %s3297 = scalar_lea.vmem [#allocation3], 240
    %3298 = vst.msk [vmem:[%s3297] ss:$8 sm:$0x3] %vm2764, %v3275
    %3299 = vst.msk [vmem:[%s3297] ss:$8 sm:$0x0] %vm2764, %v3275
    %s3300 = scalar_lea.vmem [#allocation2], 34
    %v3301 = vld [vmem:[%s3300] ss:$8 sm:$0x3]
    %s3302 = scalar_lea.vmem [#allocation2], 82
    %v3303 = vld [vmem:[%s3302] ss:$8 sm:$0x3]
    %s3304 = scalar_lea.vmem [#allocation2], 130
    %v3305 = vld [vmem:[%s3304] ss:$8 sm:$0x3]
    %s3306 = scalar_lea.vmem [#allocation2], 178
    %v3307 = vld [vmem:[%s3306] ss:$8 sm:$0x3]
    %s3308 = scalar_lea.vmem [#allocation2], 226
    %v3309 = vld [vmem:[%s3308] ss:$8 sm:$0x3]
    %s3310 = scalar_lea.vmem [#allocation2], 274
    %v3311 = vld [vmem:[%s3310] ss:$8 sm:$0x3]
    %s3312 = scalar_lea.vmem [#allocation2], 322
    %v3313 = vld [vmem:[%s3312] ss:$8 sm:$0x3]
    %s3314 = scalar_lea.vmem [#allocation2], 370
    %v3315 = vld [vmem:[%s3314] ss:$8 sm:$0x3]
    %s3316 = scalar_lea.vmem [#allocation2], 35
    %v3317 = vld [vmem:[%s3316] ss:$8 sm:$0x3]
    %s3318 = scalar_lea.vmem [#allocation2], 83
    %v3319 = vld [vmem:[%s3318] ss:$8 sm:$0x3]
    %s3320 = scalar_lea.vmem [#allocation2], 131
    %v3321 = vld [vmem:[%s3320] ss:$8 sm:$0x3]
    %s3322 = scalar_lea.vmem [#allocation2], 179
    %v3323 = vld [vmem:[%s3322] ss:$8 sm:$0x3]
    %s3324 = scalar_lea.vmem [#allocation2], 227
    %v3325 = vld [vmem:[%s3324] ss:$8 sm:$0x3]
    %s3326 = scalar_lea.vmem [#allocation2], 275
    %v3327 = vld [vmem:[%s3326] ss:$8 sm:$0x3]
    %s3328 = scalar_lea.vmem [#allocation2], 323
    %v3329 = vld [vmem:[%s3328] ss:$8 sm:$0x3]
    %s3330 = scalar_lea.vmem [#allocation2], 371
    %v3331 = vld [vmem:[%s3330] ss:$8 sm:$0x3]
    %v3332 = vmax.f32 %v3301, %v3317
    %v3333 = vmax.f32 %v3303, %v3319
    %v3334 = vmax.f32 %v3305, %v3321
    %v3335 = vmax.f32 %v3307, %v3323
    %v3336 = vmax.f32 %v3309, %v3325
    %v3337 = vmax.f32 %v3311, %v3327
    %v3338 = vmax.f32 %v3313, %v3329
    %v3339 = vmax.f32 %v3315, %v3331
    %s3340 = scalar_lea.vmem [#allocation3], 17
    %3341 = vst.msk [vmem:[%s3340] ss:$8 sm:$0x3] %vm2764, %v3332
    %3342 = vst.msk [vmem:[%s3340] ss:$8 sm:$0x0] %vm2764, %v3332
    %s3343 = scalar_lea.vmem [#allocation3], 49
    %3344 = vst.msk [vmem:[%s3343] ss:$8 sm:$0x3] %vm2764, %v3333
    %3345 = vst.msk [vmem:[%s3343] ss:$8 sm:$0x0] %vm2764, %v3333
    %s3346 = scalar_lea.vmem [#allocation3], 81
    %3347 = vst.msk [vmem:[%s3346] ss:$8 sm:$0x3] %vm2764, %v3334
    %3348 = vst.msk [vmem:[%s3346] ss:$8 sm:$0x0] %vm2764, %v3334
    %s3349 = scalar_lea.vmem [#allocation3], 113
    %3350 = vst.msk [vmem:[%s3349] ss:$8 sm:$0x3] %vm2764, %v3335
    %3351 = vst.msk [vmem:[%s3349] ss:$8 sm:$0x0] %vm2764, %v3335
    %s3352 = scalar_lea.vmem [#allocation3], 145
    %3353 = vst.msk [vmem:[%s3352] ss:$8 sm:$0x3] %vm2764, %v3336
    %3354 = vst.msk [vmem:[%s3352] ss:$8 sm:$0x0] %vm2764, %v3336
    %s3355 = scalar_lea.vmem [#allocation3], 177
    %3356 = vst.msk [vmem:[%s3355] ss:$8 sm:$0x3] %vm2764, %v3337
    %3357 = vst.msk [vmem:[%s3355] ss:$8 sm:$0x0] %vm2764, %v3337
    %s3358 = scalar_lea.vmem [#allocation3], 209
    %3359 = vst.msk [vmem:[%s3358] ss:$8 sm:$0x3] %vm2764, %v3338
    %3360 = vst.msk [vmem:[%s3358] ss:$8 sm:$0x0] %vm2764, %v3338
    %s3361 = scalar_lea.vmem [#allocation3], 241
    %3362 = vst.msk [vmem:[%s3361] ss:$8 sm:$0x3] %vm2764, %v3339
    %3363 = vst.msk [vmem:[%s3361] ss:$8 sm:$0x0] %vm2764, %v3339
    %s3364 = scalar_lea.vmem [#allocation2], 36
    %v3365 = vld [vmem:[%s3364] ss:$8 sm:$0x3]
    %s3366 = scalar_lea.vmem [#allocation2], 84
    %v3367 = vld [vmem:[%s3366] ss:$8 sm:$0x3]
    %s3368 = scalar_lea.vmem [#allocation2], 132
    %v3369 = vld [vmem:[%s3368] ss:$8 sm:$0x3]
    %s3370 = scalar_lea.vmem [#allocation2], 180
    %v3371 = vld [vmem:[%s3370] ss:$8 sm:$0x3]
    %s3372 = scalar_lea.vmem [#allocation2], 228
    %v3373 = vld [vmem:[%s3372] ss:$8 sm:$0x3]
    %s3374 = scalar_lea.vmem [#allocation2], 276
    %v3375 = vld [vmem:[%s3374] ss:$8 sm:$0x3]
    %s3376 = scalar_lea.vmem [#allocation2], 324
    %v3377 = vld [vmem:[%s3376] ss:$8 sm:$0x3]
    %s3378 = scalar_lea.vmem [#allocation2], 372
    %v3379 = vld [vmem:[%s3378] ss:$8 sm:$0x3]
    %s3380 = scalar_lea.vmem [#allocation2], 37
    %v3381 = vld [vmem:[%s3380] ss:$8 sm:$0x3]
    %s3382 = scalar_lea.vmem [#allocation2], 85
    %v3383 = vld [vmem:[%s3382] ss:$8 sm:$0x3]
    %s3384 = scalar_lea.vmem [#allocation2], 133
    %v3385 = vld [vmem:[%s3384] ss:$8 sm:$0x3]
    %s3386 = scalar_lea.vmem [#allocation2], 181
    %v3387 = vld [vmem:[%s3386] ss:$8 sm:$0x3]
    %s3388 = scalar_lea.vmem [#allocation2], 229
    %v3389 = vld [vmem:[%s3388] ss:$8 sm:$0x3]
    %s3390 = scalar_lea.vmem [#allocation2], 277
    %v3391 = vld [vmem:[%s3390] ss:$8 sm:$0x3]
    %s3392 = scalar_lea.vmem [#allocation2], 325
    %v3393 = vld [vmem:[%s3392] ss:$8 sm:$0x3]
    %s3394 = scalar_lea.vmem [#allocation2], 373
    %v3395 = vld [vmem:[%s3394] ss:$8 sm:$0x3]
    %v3396 = vmax.f32 %v3365, %v3381
    %v3397 = vmax.f32 %v3367, %v3383
    %v3398 = vmax.f32 %v3369, %v3385
    %v3399 = vmax.f32 %v3371, %v3387
    %v3400 = vmax.f32 %v3373, %v3389
    %v3401 = vmax.f32 %v3375, %v3391
    %v3402 = vmax.f32 %v3377, %v3393
    %v3403 = vmax.f32 %v3379, %v3395
    %s3404 = scalar_lea.vmem [#allocation3], 18
    %3405 = vst.msk [vmem:[%s3404] ss:$8 sm:$0x3] %vm2764, %v3396
    %3406 = vst.msk [vmem:[%s3404] ss:$8 sm:$0x0] %vm2764, %v3396
    %s3407 = scalar_lea.vmem [#allocation3], 50
    %3408 = vst.msk [vmem:[%s3407] ss:$8 sm:$0x3] %vm2764, %v3397
    %3409 = vst.msk [vmem:[%s3407] ss:$8 sm:$0x0] %vm2764, %v3397
    %s3410 = scalar_lea.vmem [#allocation3], 82
    %3411 = vst.msk [vmem:[%s3410] ss:$8 sm:$0x3] %vm2764, %v3398
    %3412 = vst.msk [vmem:[%s3410] ss:$8 sm:$0x0] %vm2764, %v3398
    %s3413 = scalar_lea.vmem [#allocation3], 114
    %3414 = vst.msk [vmem:[%s3413] ss:$8 sm:$0x3] %vm2764, %v3399
    %3415 = vst.msk [vmem:[%s3413] ss:$8 sm:$0x0] %vm2764, %v3399
    %s3416 = scalar_lea.vmem [#allocation3], 146
    %3417 = vst.msk [vmem:[%s3416] ss:$8 sm:$0x3] %vm2764, %v3400
    %3418 = vst.msk [vmem:[%s3416] ss:$8 sm:$0x0] %vm2764, %v3400
    %s3419 = scalar_lea.vmem [#allocation3], 178
    %3420 = vst.msk [vmem:[%s3419] ss:$8 sm:$0x3] %vm2764, %v3401
    %3421 = vst.msk [vmem:[%s3419] ss:$8 sm:$0x0] %vm2764, %v3401
    %s3422 = scalar_lea.vmem [#allocation3], 210
    %3423 = vst.msk [vmem:[%s3422] ss:$8 sm:$0x3] %vm2764, %v3402
    %3424 = vst.msk [vmem:[%s3422] ss:$8 sm:$0x0] %vm2764, %v3402
    %s3425 = scalar_lea.vmem [#allocation3], 242
    %3426 = vst.msk [vmem:[%s3425] ss:$8 sm:$0x3] %vm2764, %v3403
    %3427 = vst.msk [vmem:[%s3425] ss:$8 sm:$0x0] %vm2764, %v3403
    %s3428 = scalar_lea.vmem [#allocation2], 38
    %v3429 = vld [vmem:[%s3428] ss:$8 sm:$0x3]
    %s3430 = scalar_lea.vmem [#allocation2], 86
    %v3431 = vld [vmem:[%s3430] ss:$8 sm:$0x3]
    %s3432 = scalar_lea.vmem [#allocation2], 134
    %v3433 = vld [vmem:[%s3432] ss:$8 sm:$0x3]
    %s3434 = scalar_lea.vmem [#allocation2], 182
    %v3435 = vld [vmem:[%s3434] ss:$8 sm:$0x3]
    %s3436 = scalar_lea.vmem [#allocation2], 230
    %v3437 = vld [vmem:[%s3436] ss:$8 sm:$0x3]
    %s3438 = scalar_lea.vmem [#allocation2], 278
    %v3439 = vld [vmem:[%s3438] ss:$8 sm:$0x3]
    %s3440 = scalar_lea.vmem [#allocation2], 326
    %v3441 = vld [vmem:[%s3440] ss:$8 sm:$0x3]
    %s3442 = scalar_lea.vmem [#allocation2], 374
    %v3443 = vld [vmem:[%s3442] ss:$8 sm:$0x3]
    %s3444 = scalar_lea.vmem [#allocation2], 39
    %v3445 = vld [vmem:[%s3444] ss:$8 sm:$0x3]
    %s3446 = scalar_lea.vmem [#allocation2], 87
    %v3447 = vld [vmem:[%s3446] ss:$8 sm:$0x3]
    %s3448 = scalar_lea.vmem [#allocation2], 135
    %v3449 = vld [vmem:[%s3448] ss:$8 sm:$0x3]
    %s3450 = scalar_lea.vmem [#allocation2], 183
    %v3451 = vld [vmem:[%s3450] ss:$8 sm:$0x3]
    %s3452 = scalar_lea.vmem [#allocation2], 231
    %v3453 = vld [vmem:[%s3452] ss:$8 sm:$0x3]
    %s3454 = scalar_lea.vmem [#allocation2], 279
    %v3455 = vld [vmem:[%s3454] ss:$8 sm:$0x3]
    %s3456 = scalar_lea.vmem [#allocation2], 327
    %v3457 = vld [vmem:[%s3456] ss:$8 sm:$0x3]
    %s3458 = scalar_lea.vmem [#allocation2], 375
    %v3459 = vld [vmem:[%s3458] ss:$8 sm:$0x3]
    %v3460 = vmax.f32 %v3429, %v3445
    %v3461 = vmax.f32 %v3431, %v3447
    %v3462 = vmax.f32 %v3433, %v3449
    %v3463 = vmax.f32 %v3435, %v3451
    %v3464 = vmax.f32 %v3437, %v3453
    %v3465 = vmax.f32 %v3439, %v3455
    %v3466 = vmax.f32 %v3441, %v3457
    %v3467 = vmax.f32 %v3443, %v3459
    %s3468 = scalar_lea.vmem [#allocation3], 19
    %3469 = vst.msk [vmem:[%s3468] ss:$8 sm:$0x3] %vm2764, %v3460
    %3470 = vst.msk [vmem:[%s3468] ss:$8 sm:$0x0] %vm2764, %v3460
    %s3471 = scalar_lea.vmem [#allocation3], 51
    %3472 = vst.msk [vmem:[%s3471] ss:$8 sm:$0x3] %vm2764, %v3461
    %3473 = vst.msk [vmem:[%s3471] ss:$8 sm:$0x0] %vm2764, %v3461
    %s3474 = scalar_lea.vmem [#allocation3], 83
    %3475 = vst.msk [vmem:[%s3474] ss:$8 sm:$0x3] %vm2764, %v3462
    %3476 = vst.msk [vmem:[%s3474] ss:$8 sm:$0x0] %vm2764, %v3462
    %s3477 = scalar_lea.vmem [#allocation3], 115
    %3478 = vst.msk [vmem:[%s3477] ss:$8 sm:$0x3] %vm2764, %v3463
    %3479 = vst.msk [vmem:[%s3477] ss:$8 sm:$0x0] %vm2764, %v3463
    %s3480 = scalar_lea.vmem [#allocation3], 147
    %3481 = vst.msk [vmem:[%s3480] ss:$8 sm:$0x3] %vm2764, %v3464
    %3482 = vst.msk [vmem:[%s3480] ss:$8 sm:$0x0] %vm2764, %v3464
    %s3483 = scalar_lea.vmem [#allocation3], 179
    %3484 = vst.msk [vmem:[%s3483] ss:$8 sm:$0x3] %vm2764, %v3465
    %3485 = vst.msk [vmem:[%s3483] ss:$8 sm:$0x0] %vm2764, %v3465
    %s3486 = scalar_lea.vmem [#allocation3], 211
    %3487 = vst.msk [vmem:[%s3486] ss:$8 sm:$0x3] %vm2764, %v3466
    %3488 = vst.msk [vmem:[%s3486] ss:$8 sm:$0x0] %vm2764, %v3466
    %s3489 = scalar_lea.vmem [#allocation3], 243
    %3490 = vst.msk [vmem:[%s3489] ss:$8 sm:$0x3] %vm2764, %v3467
    %3491 = vst.msk [vmem:[%s3489] ss:$8 sm:$0x0] %vm2764, %v3467
    %v3492 = vld [vmem:[#allocation3] sm:$0xff]
    %v3493 = vld [vmem:[#allocation3 + $0x8] sm:$0xff]
    %v3494 = vld [vmem:[#allocation3 + $0x20] sm:$0xff]
    %v3495 = vld [vmem:[#allocation3 + $0x28] sm:$0xff]
    %v3496 = vld [vmem:[#allocation3 + $0x40] sm:$0xff]
    %v3497 = vld [vmem:[#allocation3 + $0x48] sm:$0xff]
    %v3498 = vld [vmem:[#allocation3 + $0x60] sm:$0xff]
    %v3499 = vld [vmem:[#allocation3 + $0x68] sm:$0xff]
    %v3500 = vld [vmem:[#allocation3 + $0x80] sm:$0xff]
    %v3501 = vld [vmem:[#allocation3 + $0x88] sm:$0xff]
    %v3502 = vld [vmem:[#allocation3 + $0xa0] sm:$0xff]
    %v3503 = vld [vmem:[#allocation3 + $0xa8] sm:$0xff]
    %v3504 = vld [vmem:[#allocation3 + $0xc0] sm:$0xff]
    %v3505 = vld [vmem:[#allocation3 + $0xc8] sm:$0xff]
    %v3506 = vld [vmem:[#allocation3 + $0xe0] sm:$0xff]
    %v3507 = vld [vmem:[#allocation3 + $0xe8] sm:$0xff]
    %v3508 = vpack.c.bf16 %v3494, %v3492
    %v3509 = vpack.c.bf16 %v3495, %v3493
    %v3510 = vpack.c.bf16 %v3498, %v3496
    %v3511 = vpack.c.bf16 %v3499, %v3497
    %v3512 = vpack.c.bf16 %v3502, %v3500
    %v3513 = vpack.c.bf16 %v3503, %v3501
    %v3514 = vpack.c.bf16 %v3506, %v3504
    %v3515 = vpack.c.bf16 %v3507, %v3505
    %v3516 = vld [vmem:[#allocation10] sm:$0xff]
    %v3517 = vld [vmem:[#allocation10 + $0x8] sm:$0xff]
    %v3518 = vld [vmem:[#allocation10 + $0x10] sm:$0xff]
    %v3519 = vld [vmem:[#allocation10 + $0x18] sm:$0xff]
    %v3520 = vld [vmem:[#allocation10 + $0x20] sm:$0xff]
    %v3521 = vld [vmem:[#allocation10 + $0x28] sm:$0xff]
    %v3522 = vld [vmem:[#allocation10 + $0x30] sm:$0xff]
    %v3523 = vld [vmem:[#allocation10 + $0x38] sm:$0xff]
    %v3524 = vld [vmem:[#allocation10 + $0x40] sm:$0xff]
    %v3525 = vld [vmem:[#allocation10 + $0x48] sm:$0xff]
    %v3526 = vld [vmem:[#allocation10 + $0x50] sm:$0xff]
    %v3527 = vld [vmem:[#allocation10 + $0x58] sm:$0xff]
    %v3528 = vld [vmem:[#allocation10 + $0x60] sm:$0xff]
    %v3529 = vld [vmem:[#allocation10 + $0x68] sm:$0xff]
    %v3530 = vld [vmem:[#allocation10 + $0x70] sm:$0xff]
    %v3531 = vld [vmem:[#allocation10 + $0x78] sm:$0xff]
    %v3532 = vld [vmem:[#allocation10 + $0x80] sm:$0xff]
    %v3533 = vld [vmem:[#allocation10 + $0x88] sm:$0xff]
    %v3534 = vld [vmem:[#allocation10 + $0x90] sm:$0xff]
    %v3535 = vld [vmem:[#allocation10 + $0x98] sm:$0xff]
    %v3536 = vld [vmem:[#allocation10 + $0xa0] sm:$0xff]
    %v3537 = vld [vmem:[#allocation10 + $0xa8] sm:$0xff]
    %v3538 = vld [vmem:[#allocation10 + $0xb0] sm:$0xff]
    %v3539 = vld [vmem:[#allocation10 + $0xb8] sm:$0xff]
    %v3540 = vld [vmem:[#allocation10 + $0xc0] sm:$0xff]
    %v3541 = vld [vmem:[#allocation10 + $0xc8] sm:$0xff]
    %v3542 = vld [vmem:[#allocation10 + $0xd0] sm:$0xff]
    %v3543 = vld [vmem:[#allocation10 + $0xd8] sm:$0xff]
    %v3544 = vld [vmem:[#allocation10 + $0xe0] sm:$0xff]
    %v3545 = vld [vmem:[#allocation10 + $0xe8] sm:$0xff]
    %v3546 = vld [vmem:[#allocation10 + $0xf0] sm:$0xff]
    %v3547 = vld [vmem:[#allocation10 + $0xf8] sm:$0xff]
    %v3548 = vld [vmem:[#allocation10 + $0x100] sm:$0xff]
    %v3549 = vld [vmem:[#allocation10 + $0x108] sm:$0xff]
    %v3550 = vld [vmem:[#allocation10 + $0x110] sm:$0xff]
    %v3551 = vld [vmem:[#allocation10 + $0x118] sm:$0xff]
    %v3552 = vld [vmem:[#allocation10 + $0x120] sm:$0xff]
    %v3553 = vld [vmem:[#allocation10 + $0x128] sm:$0xff]
    %v3554 = vld [vmem:[#allocation10 + $0x130] sm:$0xff]
    %v3555 = vld [vmem:[#allocation10 + $0x138] sm:$0xff]
    %v3556 = vld [vmem:[#allocation10 + $0x140] sm:$0xff]
    %v3557 = vld [vmem:[#allocation10 + $0x148] sm:$0xff]
    %v3558 = vld [vmem:[#allocation10 + $0x150] sm:$0xff]
    %v3559 = vld [vmem:[#allocation10 + $0x158] sm:$0xff]
    %v3560 = vld [vmem:[#allocation10 + $0x160] sm:$0xff]
    %v3561 = vld [vmem:[#allocation10 + $0x168] sm:$0xff]
    %v3562 = vld [vmem:[#allocation10 + $0x170] sm:$0xff]
    %v3563 = vld [vmem:[#allocation10 + $0x178] sm:$0xff]
    %v3564 = vld [vmem:[#allocation10 + $0x180] sm:$0xff]
    %v3565 = vld [vmem:[#allocation10 + $0x188] sm:$0xff]
    %v3566 = vld [vmem:[#allocation10 + $0x190] sm:$0xff]
    %v3567 = vld [vmem:[#allocation10 + $0x198] sm:$0xff]
    %v3568 = vld [vmem:[#allocation10 + $0x1a0] sm:$0xff]
    %v3569 = vld [vmem:[#allocation10 + $0x1a8] sm:$0xff]
    %v3570 = vld [vmem:[#allocation10 + $0x1b0] sm:$0xff]
    %v3571 = vld [vmem:[#allocation10 + $0x1b8] sm:$0xff]
    %v3572 = vld [vmem:[#allocation10 + $0x1c0] sm:$0xff]
    %v3573 = vld [vmem:[#allocation10 + $0x1c8] sm:$0xff]
    %v3574 = vld [vmem:[#allocation10 + $0x1d0] sm:$0xff]
    %v3575 = vld [vmem:[#allocation10 + $0x1d8] sm:$0xff]
    %v3576 = vld [vmem:[#allocation10 + $0x1e0] sm:$0xff]
    %v3577 = vld [vmem:[#allocation10 + $0x1e8] sm:$0xff]
    %v3578 = vld [vmem:[#allocation10 + $0x1f0] sm:$0xff]
    %v3579 = vld [vmem:[#allocation10 + $0x1f8] sm:$0xff]
    %v3580 = vld [vmem:[#allocation3] sm:$0xfe]
    %v3581 = vld [vmem:[#allocation3 + $0x8] sm:$0xfe]
    %v3582 = vld [vmem:[#allocation3 + $0x10] sm:$0x1]
    %v3583 = vld [vmem:[#allocation3 + $0x18] sm:$0x1]
    %v3584 = vld [vmem:[#allocation3 + $0x20] sm:$0xfe]
    %v3585 = vld [vmem:[#allocation3 + $0x28] sm:$0xfe]
    %v3586 = vld [vmem:[#allocation3 + $0x30] sm:$0x1]
    %v3587 = vld [vmem:[#allocation3 + $0x38] sm:$0x1]
    %v3588 = vld [vmem:[#allocation3 + $0x40] sm:$0xfe]
    %v3589 = vld [vmem:[#allocation3 + $0x48] sm:$0xfe]
    %v3590 = vld [vmem:[#allocation3 + $0x50] sm:$0x1]
    %v3591 = vld [vmem:[#allocation3 + $0x58] sm:$0x1]
    %v3592 = vld [vmem:[#allocation3 + $0x60] sm:$0xfe]
    %v3593 = vld [vmem:[#allocation3 + $0x68] sm:$0xfe]
    %v3594 = vld [vmem:[#allocation3 + $0x70] sm:$0x1]
    %v3595 = vld [vmem:[#allocation3 + $0x78] sm:$0x1]
    %v3596 = vld [vmem:[#allocation3 + $0x80] sm:$0xfe]
    %v3597 = vld [vmem:[#allocation3 + $0x88] sm:$0xfe]
    %v3598 = vld [vmem:[#allocation3 + $0x90] sm:$0x1]
    %v3599 = vld [vmem:[#allocation3 + $0x98] sm:$0x1]
    %v3600 = vld [vmem:[#allocation3 + $0xa0] sm:$0xfe]
    %v3601 = vld [vmem:[#allocation3 + $0xa8] sm:$0xfe]
    %v3602 = vld [vmem:[#allocation3 + $0xb0] sm:$0x1]
    %v3603 = vld [vmem:[#allocation3 + $0xb8] sm:$0x1]
    %v3604 = vld [vmem:[#allocation3 + $0xc0] sm:$0xfe]
    %v3605 = vld [vmem:[#allocation3 + $0xc8] sm:$0xfe]
    %v3606 = vld [vmem:[#allocation3 + $0xd0] sm:$0x1]
    %v3607 = vld [vmem:[#allocation3 + $0xd8] sm:$0x1]
    %v3608 = vld [vmem:[#allocation3 + $0xe0] sm:$0xfe]
    %v3609 = vld [vmem:[#allocation3 + $0xe8] sm:$0xfe]
    %v3610 = vld [vmem:[#allocation3 + $0xf0] sm:$0x1]
    %v3611 = vld [vmem:[#allocation3 + $0xf8] sm:$0x1]
    %vm3644 = vcmask 1046528
    %v3645 = vrot.slane %v3580, 1
    %v3646 = vrot.slane %v3582, 1
    %v3647 = vsel %vm3644, %v3645, %v3646
    %v3648 = vrot.slane %v3581, 1
    %v3649 = vrot.slane %v3583, 1
    %v3650 = vsel %vm3644, %v3648, %v3649
    %v3651 = vrot.slane %v3584, 1
    %v3652 = vrot.slane %v3586, 1
    %v3653 = vsel %vm3644, %v3651, %v3652
    %v3654 = vrot.slane %v3585, 1
    %v3655 = vrot.slane %v3587, 1
    %v3656 = vsel %vm3644, %v3654, %v3655
    %v3657 = vrot.slane %v3588, 1
    %v3658 = vrot.slane %v3590, 1
    %v3659 = vsel %vm3644, %v3657, %v3658
    %v3660 = vrot.slane %v3589, 1
    %v3661 = vrot.slane %v3591, 1
    %v3662 = vsel %vm3644, %v3660, %v3661
    %v3663 = vrot.slane %v3592, 1
    %v3664 = vrot.slane %v3594, 1
    %v3665 = vsel %vm3644, %v3663, %v3664
    %v3666 = vrot.slane %v3593, 1
    %v3667 = vrot.slane %v3595, 1
    %v3668 = vsel %vm3644, %v3666, %v3667
    %v3669 = vrot.slane %v3596, 1
    %v3670 = vrot.slane %v3598, 1
    %v3671 = vsel %vm3644, %v3669, %v3670
    %v3672 = vrot.slane %v3597, 1
    %v3673 = vrot.slane %v3599, 1
    %v3674 = vsel %vm3644, %v3672, %v3673
    %v3675 = vrot.slane %v3600, 1
    %v3676 = vrot.slane %v3602, 1
    %v3677 = vsel %vm3644, %v3675, %v3676
    %v3678 = vrot.slane %v3601, 1
    %v3679 = vrot.slane %v3603, 1
    %v3680 = vsel %vm3644, %v3678, %v3679
    %v3681 = vrot.slane %v3604, 1
    %v3682 = vrot.slane %v3606, 1
    %v3683 = vsel %vm3644, %v3681, %v3682
    %v3684 = vrot.slane %v3605, 1
    %v3685 = vrot.slane %v3607, 1
    %v3686 = vsel %vm3644, %v3684, %v3685
    %v3687 = vrot.slane %v3608, 1
    %v3688 = vrot.slane %v3610, 1
    %v3689 = vsel %vm3644, %v3687, %v3688
    %v3690 = vrot.slane %v3609, 1
    %v3691 = vrot.slane %v3611, 1
    %v3692 = vsel %vm3644, %v3690, %v3691
    %v3709 = vpack.c.bf16 %v3653, %v3647
    %v3710 = vpack.c.bf16 %v3656, %v3650
    %v3711 = vpack.c.bf16 %v3665, %v3659
    %v3712 = vpack.c.bf16 %v3668, %v3662
    %v3713 = vpack.c.bf16 %v3677, %v3671
    %v3714 = vpack.c.bf16 %v3680, %v3674
    %v3715 = vpack.c.bf16 %v3689, %v3683
    %v3716 = vpack.c.bf16 %v3692, %v3686
    %s3717 = scalar_lea.vmem [#allocation10], 512
    %v3718 = vld [vmem:[%s3717] sm:$0xff]
    %v3719 = vld [vmem:[%s3717 + $0x8] sm:$0xff]
    %v3720 = vld [vmem:[%s3717 + $0x10] sm:$0xff]
    %v3721 = vld [vmem:[%s3717 + $0x18] sm:$0xff]
    %v3722 = vld [vmem:[%s3717 + $0x20] sm:$0xff]
    %v3723 = vld [vmem:[%s3717 + $0x28] sm:$0xff]
    %v3724 = vld [vmem:[%s3717 + $0x30] sm:$0xff]
    %v3725 = vld [vmem:[%s3717 + $0x38] sm:$0xff]
    %v3726 = vld [vmem:[%s3717 + $0x40] sm:$0xff]
    %v3727 = vld [vmem:[%s3717 + $0x48] sm:$0xff]
    %v3728 = vld [vmem:[%s3717 + $0x50] sm:$0xff]
    %v3729 = vld [vmem:[%s3717 + $0x58] sm:$0xff]
    %v3730 = vld [vmem:[%s3717 + $0x60] sm:$0xff]
    %v3731 = vld [vmem:[%s3717 + $0x68] sm:$0xff]
    %v3732 = vld [vmem:[%s3717 + $0x70] sm:$0xff]
    %v3733 = vld [vmem:[%s3717 + $0x78] sm:$0xff]
    %v3734 = vld [vmem:[%s3717 + $0x80] sm:$0xff]
    %v3735 = vld [vmem:[%s3717 + $0x88] sm:$0xff]
    %v3736 = vld [vmem:[%s3717 + $0x90] sm:$0xff]
    %v3737 = vld [vmem:[%s3717 + $0x98] sm:$0xff]
    %v3738 = vld [vmem:[%s3717 + $0xa0] sm:$0xff]
    %v3739 = vld [vmem:[%s3717 + $0xa8] sm:$0xff]
    %v3740 = vld [vmem:[%s3717 + $0xb0] sm:$0xff]
    %v3741 = vld [vmem:[%s3717 + $0xb8] sm:$0xff]
    %v3742 = vld [vmem:[%s3717 + $0xc0] sm:$0xff]
    %v3743 = vld [vmem:[%s3717 + $0xc8] sm:$0xff]
    %v3744 = vld [vmem:[%s3717 + $0xd0] sm:$0xff]
    %v3745 = vld [vmem:[%s3717 + $0xd8] sm:$0xff]
    %v3746 = vld [vmem:[%s3717 + $0xe0] sm:$0xff]
    %v3747 = vld [vmem:[%s3717 + $0xe8] sm:$0xff]
    %v3748 = vld [vmem:[%s3717 + $0xf0] sm:$0xff]
    %v3749 = vld [vmem:[%s3717 + $0xf8] sm:$0xff]
    %v3750 = vld [vmem:[%s3717 + $0x100] sm:$0xff]
    %v3751 = vld [vmem:[%s3717 + $0x108] sm:$0xff]
    %v3752 = vld [vmem:[%s3717 + $0x110] sm:$0xff]
    %v3753 = vld [vmem:[%s3717 + $0x118] sm:$0xff]
    %v3754 = vld [vmem:[%s3717 + $0x120] sm:$0xff]
    %v3755 = vld [vmem:[%s3717 + $0x128] sm:$0xff]
    %v3756 = vld [vmem:[%s3717 + $0x130] sm:$0xff]
    %v3757 = vld [vmem:[%s3717 + $0x138] sm:$0xff]
    %v3758 = vld [vmem:[%s3717 + $0x140] sm:$0xff]
    %v3759 = vld [vmem:[%s3717 + $0x148] sm:$0xff]
    %v3760 = vld [vmem:[%s3717 + $0x150] sm:$0xff]
    %v3761 = vld [vmem:[%s3717 + $0x158] sm:$0xff]
    %v3762 = vld [vmem:[%s3717 + $0x160] sm:$0xff]
    %v3763 = vld [vmem:[%s3717 + $0x168] sm:$0xff]
    %v3764 = vld [vmem:[%s3717 + $0x170] sm:$0xff]
    %v3765 = vld [vmem:[%s3717 + $0x178] sm:$0xff]
    %v3766 = vld [vmem:[%s3717 + $0x180] sm:$0xff]
    %v3767 = vld [vmem:[%s3717 + $0x188] sm:$0xff]
    %v3768 = vld [vmem:[%s3717 + $0x190] sm:$0xff]
    %v3769 = vld [vmem:[%s3717 + $0x198] sm:$0xff]
    %v3770 = vld [vmem:[%s3717 + $0x1a0] sm:$0xff]
    %v3771 = vld [vmem:[%s3717 + $0x1a8] sm:$0xff]
    %v3772 = vld [vmem:[%s3717 + $0x1b0] sm:$0xff]
    %v3773 = vld [vmem:[%s3717 + $0x1b8] sm:$0xff]
    %v3774 = vld [vmem:[%s3717 + $0x1c0] sm:$0xff]
    %v3775 = vld [vmem:[%s3717 + $0x1c8] sm:$0xff]
    %v3776 = vld [vmem:[%s3717 + $0x1d0] sm:$0xff]
    %v3777 = vld [vmem:[%s3717 + $0x1d8] sm:$0xff]
    %v3778 = vld [vmem:[%s3717 + $0x1e0] sm:$0xff]
    %v3779 = vld [vmem:[%s3717 + $0x1e8] sm:$0xff]
    %v3780 = vld [vmem:[%s3717 + $0x1f0] sm:$0xff]
    %v3781 = vld [vmem:[%s3717 + $0x1f8] sm:$0xff]
    %v3846 = vunpack.c.l.b16 %v3718
    %v3847 = vunpack.c.h.b16 %v3718
    %v3848 = vunpack.c.l.b16 %v3719
    %v3849 = vunpack.c.h.b16 %v3719
    %v3850 = vunpack.c.l.b16 %v3720
    %v3851 = vunpack.c.h.b16 %v3720
    %v3852 = vunpack.c.l.b16 %v3721
    %v3853 = vunpack.c.h.b16 %v3721
    %v3854 = vunpack.c.l.b16 %v3722
    %v3855 = vunpack.c.h.b16 %v3722
    %v3856 = vunpack.c.l.b16 %v3723
    %v3857 = vunpack.c.h.b16 %v3723
    %v3858 = vunpack.c.l.b16 %v3724
    %v3859 = vunpack.c.h.b16 %v3724
    %v3860 = vunpack.c.l.b16 %v3725
    %v3861 = vunpack.c.h.b16 %v3725
    %v3862 = vunpack.c.l.b16 %v3726
    %v3863 = vunpack.c.h.b16 %v3726
    %v3864 = vunpack.c.l.b16 %v3727
    %v3865 = vunpack.c.h.b16 %v3727
    %v3866 = vunpack.c.l.b16 %v3728
    %v3867 = vunpack.c.h.b16 %v3728
    %v3868 = vunpack.c.l.b16 %v3729
    %v3869 = vunpack.c.h.b16 %v3729
    %v3870 = vunpack.c.l.b16 %v3730
    %v3871 = vunpack.c.h.b16 %v3730
    %v3872 = vunpack.c.l.b16 %v3731
    %v3873 = vunpack.c.h.b16 %v3731
    %v3874 = vunpack.c.l.b16 %v3732
    %v3875 = vunpack.c.h.b16 %v3732
    %v3876 = vunpack.c.l.b16 %v3733
    %v3877 = vunpack.c.h.b16 %v3733
    %v3878 = vunpack.c.l.b16 %v3734
    %v3879 = vunpack.c.h.b16 %v3734
    %v3880 = vunpack.c.l.b16 %v3735
    %v3881 = vunpack.c.h.b16 %v3735
    %v3882 = vunpack.c.l.b16 %v3736
    %v3883 = vunpack.c.h.b16 %v3736
    %v3884 = vunpack.c.l.b16 %v3737
    %v3885 = vunpack.c.h.b16 %v3737
    %v3886 = vunpack.c.l.b16 %v3738
    %v3887 = vunpack.c.h.b16 %v3738
    %v3888 = vunpack.c.l.b16 %v3739
    %v3889 = vunpack.c.h.b16 %v3739
    %v3890 = vunpack.c.l.b16 %v3740
    %v3891 = vunpack.c.h.b16 %v3740
    %v3892 = vunpack.c.l.b16 %v3741
    %v3893 = vunpack.c.h.b16 %v3741
    %v3894 = vunpack.c.l.b16 %v3742
    %v3895 = vunpack.c.h.b16 %v3742
    %v3896 = vunpack.c.l.b16 %v3743
    %v3897 = vunpack.c.h.b16 %v3743
    %v3898 = vunpack.c.l.b16 %v3744
    %v3899 = vunpack.c.h.b16 %v3744
    %v3900 = vunpack.c.l.b16 %v3745
    %v3901 = vunpack.c.h.b16 %v3745
    %v3902 = vunpack.c.l.b16 %v3746
    %v3903 = vunpack.c.h.b16 %v3746
    %v3904 = vunpack.c.l.b16 %v3747
    %v3905 = vunpack.c.h.b16 %v3747
    %v3906 = vunpack.c.l.b16 %v3748
    %v3907 = vunpack.c.h.b16 %v3748
    %v3908 = vunpack.c.l.b16 %v3749
    %v3909 = vunpack.c.h.b16 %v3749
    %v3910 = vunpack.c.l.b16 %v3750
    %v3911 = vunpack.c.h.b16 %v3750
    %v3912 = vunpack.c.l.b16 %v3751
    %v3913 = vunpack.c.h.b16 %v3751
    %v3914 = vunpack.c.l.b16 %v3752
    %v3915 = vunpack.c.h.b16 %v3752
    %v3916 = vunpack.c.l.b16 %v3753
    %v3917 = vunpack.c.h.b16 %v3753
    %v3918 = vunpack.c.l.b16 %v3754
    %v3919 = vunpack.c.h.b16 %v3754
    %v3920 = vunpack.c.l.b16 %v3755
    %v3921 = vunpack.c.h.b16 %v3755
    %v3922 = vunpack.c.l.b16 %v3756
    %v3923 = vunpack.c.h.b16 %v3756
    %v3924 = vunpack.c.l.b16 %v3757
    %v3925 = vunpack.c.h.b16 %v3757
    %v3926 = vunpack.c.l.b16 %v3758
    %v3927 = vunpack.c.h.b16 %v3758
    %v3928 = vunpack.c.l.b16 %v3759
    %v3929 = vunpack.c.h.b16 %v3759
    %v3930 = vunpack.c.l.b16 %v3760
    %v3931 = vunpack.c.h.b16 %v3760
    %v3932 = vunpack.c.l.b16 %v3761
    %v3933 = vunpack.c.h.b16 %v3761
    %v3934 = vunpack.c.l.b16 %v3762
    %v3935 = vunpack.c.h.b16 %v3762
    %v3936 = vunpack.c.l.b16 %v3763
    %v3937 = vunpack.c.h.b16 %v3763
    %v3938 = vunpack.c.l.b16 %v3764
    %v3939 = vunpack.c.h.b16 %v3764
    %v3940 = vunpack.c.l.b16 %v3765
    %v3941 = vunpack.c.h.b16 %v3765
    %v3942 = vunpack.c.l.b16 %v3766
    %v3943 = vunpack.c.h.b16 %v3766
    %v3944 = vunpack.c.l.b16 %v3767
    %v3945 = vunpack.c.h.b16 %v3767
    %v3946 = vunpack.c.l.b16 %v3768
    %v3947 = vunpack.c.h.b16 %v3768
    %v3948 = vunpack.c.l.b16 %v3769
    %v3949 = vunpack.c.h.b16 %v3769
    %v3950 = vunpack.c.l.b16 %v3770
    %v3951 = vunpack.c.h.b16 %v3770
    %v3952 = vunpack.c.l.b16 %v3771
    %v3953 = vunpack.c.h.b16 %v3771
    %v3954 = vunpack.c.l.b16 %v3772
    %v3955 = vunpack.c.h.b16 %v3772
    %v3956 = vunpack.c.l.b16 %v3773
    %v3957 = vunpack.c.h.b16 %v3773
    %v3958 = vunpack.c.l.b16 %v3774
    %v3959 = vunpack.c.h.b16 %v3774
    %v3960 = vunpack.c.l.b16 %v3775
    %v3961 = vunpack.c.h.b16 %v3775
    %v3962 = vunpack.c.l.b16 %v3776
    %v3963 = vunpack.c.h.b16 %v3776
    %v3964 = vunpack.c.l.b16 %v3777
    %v3965 = vunpack.c.h.b16 %v3777
    %v3966 = vunpack.c.l.b16 %v3778
    %v3967 = vunpack.c.h.b16 %v3778
    %v3968 = vunpack.c.l.b16 %v3779
    %v3969 = vunpack.c.h.b16 %v3779
    %v3970 = vunpack.c.l.b16 %v3780
    %v3971 = vunpack.c.h.b16 %v3780
    %v3972 = vunpack.c.l.b16 %v3781
    %v3973 = vunpack.c.h.b16 %v3781
    %v3974 = vpack.c.b16 %v3850, %v3846
    %v3975 = vpack.c.b16 %v3851, %v3847
    %v3976 = vpack.c.b16 %v3852, %v3848
    %v3977 = vpack.c.b16 %v3853, %v3849
    %v3978 = vpack.c.b16 %v3858, %v3854
    %v3979 = vpack.c.b16 %v3859, %v3855
    %v3980 = vpack.c.b16 %v3860, %v3856
    %v3981 = vpack.c.b16 %v3861, %v3857
    %v3982 = vpack.c.b16 %v3866, %v3862
    %v3983 = vpack.c.b16 %v3867, %v3863
    %v3984 = vpack.c.b16 %v3868, %v3864
    %v3985 = vpack.c.b16 %v3869, %v3865
    %v3986 = vpack.c.b16 %v3874, %v3870
    %v3987 = vpack.c.b16 %v3875, %v3871
    %v3988 = vpack.c.b16 %v3876, %v3872
    %v3989 = vpack.c.b16 %v3877, %v3873
    %v3990 = vpack.c.b16 %v3882, %v3878
    %v3991 = vpack.c.b16 %v3883, %v3879
    %v3992 = vpack.c.b16 %v3884, %v3880
    %v3993 = vpack.c.b16 %v3885, %v3881
    %v3994 = vpack.c.b16 %v3890, %v3886
    %v3995 = vpack.c.b16 %v3891, %v3887
    %v3996 = vpack.c.b16 %v3892, %v3888
    %v3997 = vpack.c.b16 %v3893, %v3889
    %v3998 = vpack.c.b16 %v3898, %v3894
    %v3999 = vpack.c.b16 %v3899, %v3895
    %v4000 = vpack.c.b16 %v3900, %v3896
    %v4001 = vpack.c.b16 %v3901, %v3897
    %v4002 = vpack.c.b16 %v3906, %v3902
    %v4003 = vpack.c.b16 %v3907, %v3903
    %v4004 = vpack.c.b16 %v3908, %v3904
    %v4005 = vpack.c.b16 %v3909, %v3905
    %v4006 = vpack.c.b16 %v3914, %v3910
    %v4007 = vpack.c.b16 %v3915, %v3911
    %v4008 = vpack.c.b16 %v3916, %v3912
    %v4009 = vpack.c.b16 %v3917, %v3913
    %v4010 = vpack.c.b16 %v3922, %v3918
    %v4011 = vpack.c.b16 %v3923, %v3919
    %v4012 = vpack.c.b16 %v3924, %v3920
    %v4013 = vpack.c.b16 %v3925, %v3921
    %v4014 = vpack.c.b16 %v3930, %v3926
    %v4015 = vpack.c.b16 %v3931, %v3927
    %v4016 = vpack.c.b16 %v3932, %v3928
    %v4017 = vpack.c.b16 %v3933, %v3929
    %v4018 = vpack.c.b16 %v3938, %v3934
    %v4019 = vpack.c.b16 %v3939, %v3935
    %v4020 = vpack.c.b16 %v3940, %v3936
    %v4021 = vpack.c.b16 %v3941, %v3937
    %v4022 = vpack.c.b16 %v3946, %v3942
    %v4023 = vpack.c.b16 %v3947, %v3943
    %v4024 = vpack.c.b16 %v3948, %v3944
    %v4025 = vpack.c.b16 %v3949, %v3945
    %v4026 = vpack.c.b16 %v3954, %v3950
    %v4027 = vpack.c.b16 %v3955, %v3951
    %v4028 = vpack.c.b16 %v3956, %v3952
    %v4029 = vpack.c.b16 %v3957, %v3953
    %v4030 = vpack.c.b16 %v3962, %v3958
    %v4031 = vpack.c.b16 %v3963, %v3959
    %v4032 = vpack.c.b16 %v3964, %v3960
    %v4033 = vpack.c.b16 %v3965, %v3961
    %v4034 = vpack.c.b16 %v3970, %v3966
    %v4035 = vpack.c.b16 %v3971, %v3967
    %v4036 = vpack.c.b16 %v3972, %v3968
    %v4037 = vpack.c.b16 %v3973, %v3969
    %4102 = vmatpush.bf16.msra.mxu0 %v4002
    %4103 = vmatpush.bf16.msra.mxu0 %v3998
    %4104 = vmatpush.bf16.msra.mxu0 %v3994
    %4105 = vmatpush.bf16.msra.mxu0 %v3990
    %4106 = vmatpush.bf16.msra.mxu0 %v3986
    %4107 = vmatpush.bf16.msra.mxu0 %v3982
    %4108 = vmatpush.bf16.msra.mxu0 %v3978
    %4109 = vmatpush.bf16.msra.mxu0 %v3974
    %4110 = vmatmul.bf16.gmra.mxu0 %v3709
    %v4111 = vpop.f32.mrf.mxu0
    %v4112 = vadd.f32 0.0, %v4111
    %v4113 = vpop.f32.mrf.mxu0
    %v4114 = vadd.f32 0.0, %v4113
    %4115 = vmatmul.bf16.gmra.mxu0 %v3711
    %v4116 = vpop.f32.mrf.mxu0
    %v4117 = vadd.f32 0.0, %v4116
    %v4118 = vpop.f32.mrf.mxu0
    %v4119 = vadd.f32 0.0, %v4118
    %4120 = vmatmul.bf16.gmra.mxu0 %v3713
    %v4121 = vpop.f32.mrf.mxu0
    %v4122 = vadd.f32 0.0, %v4121
    %v4123 = vpop.f32.mrf.mxu0
    %v4124 = vadd.f32 0.0, %v4123
    %4125 = vmatmul.bf16.gmra.mxu0 %v3715
    %v4126 = vpop.f32.mrf.mxu0
    %v4127 = vadd.f32 0.0, %v4126
    %v4128 = vpop.f32.mrf.mxu0
    %v4129 = vadd.f32 0.0, %v4128
    %4130 = vdwg.mxu0
    %4131 = vmatpush.bf16.msra.mxu0 %v4034
    %4132 = vmatpush.bf16.msra.mxu0 %v4030
    %4133 = vmatpush.bf16.msra.mxu0 %v4026
    %4134 = vmatpush.bf16.msra.mxu0 %v4022
    %4135 = vmatpush.bf16.msra.mxu0 %v4018
    %4136 = vmatpush.bf16.msra.mxu0 %v4014
    %4137 = vmatpush.bf16.msra.mxu0 %v4010
    %4138 = vmatpush.bf16.msra.mxu0 %v4006
    %4139 = vmatmul.bf16.gmra.mxu0 %v3710
    %v4140 = vpop.f32.mrf.mxu0
    %v4141 = vadd.f32 %v4112, %v4140
    %v4142 = vpop.f32.mrf.mxu0
    %v4143 = vadd.f32 %v4114, %v4142
    %4144 = vmatmul.bf16.gmra.mxu0 %v3712
    %v4145 = vpop.f32.mrf.mxu0
    %v4146 = vadd.f32 %v4117, %v4145
    %v4147 = vpop.f32.mrf.mxu0
    %v4148 = vadd.f32 %v4119, %v4147
    %4149 = vmatmul.bf16.gmra.mxu0 %v3714
    %v4150 = vpop.f32.mrf.mxu0
    %v4151 = vadd.f32 %v4122, %v4150
    %v4152 = vpop.f32.mrf.mxu0
    %v4153 = vadd.f32 %v4124, %v4152
    %4154 = vmatmul.bf16.gmra.mxu0 %v3716
    %v4155 = vpop.f32.mrf.mxu0
    %v4156 = vadd.f32 %v4127, %v4155
    %v4157 = vpop.f32.mrf.mxu0
    %v4158 = vadd.f32 %v4129, %v4157
    %4159 = vdwg.mxu0
    %4160 = vmatpush.bf16.msra.mxu0 %v4003
    %4161 = vmatpush.bf16.msra.mxu0 %v3999
    %4162 = vmatpush.bf16.msra.mxu0 %v3995
    %4163 = vmatpush.bf16.msra.mxu0 %v3991
    %4164 = vmatpush.bf16.msra.mxu0 %v3987
    %4165 = vmatpush.bf16.msra.mxu0 %v3983
    %4166 = vmatpush.bf16.msra.mxu0 %v3979
    %4167 = vmatpush.bf16.msra.mxu0 %v3975
    %4168 = vmatmul.bf16.gmra.mxu0 %v3709
    %v4169 = vpop.f32.mrf.mxu0
    %v4170 = vadd.f32 0.0, %v4169
    %v4171 = vpop.f32.mrf.mxu0
    %v4172 = vadd.f32 0.0, %v4171
    %4173 = vmatmul.bf16.gmra.mxu0 %v3711
    %v4174 = vpop.f32.mrf.mxu0
    %v4175 = vadd.f32 0.0, %v4174
    %v4176 = vpop.f32.mrf.mxu0
    %v4177 = vadd.f32 0.0, %v4176
    %4178 = vmatmul.bf16.gmra.mxu0 %v3713
    %v4179 = vpop.f32.mrf.mxu0
    %v4180 = vadd.f32 0.0, %v4179
    %v4181 = vpop.f32.mrf.mxu0
    %v4182 = vadd.f32 0.0, %v4181
    %4183 = vmatmul.bf16.gmra.mxu0 %v3715
    %v4184 = vpop.f32.mrf.mxu0
    %v4185 = vadd.f32 0.0, %v4184
    %v4186 = vpop.f32.mrf.mxu0
    %v4187 = vadd.f32 0.0, %v4186
    %4188 = vdwg.mxu0
    %4189 = vmatpush.bf16.msra.mxu0 %v4035
    %4190 = vmatpush.bf16.msra.mxu0 %v4031
    %4191 = vmatpush.bf16.msra.mxu0 %v4027
    %4192 = vmatpush.bf16.msra.mxu0 %v4023
    %4193 = vmatpush.bf16.msra.mxu0 %v4019
    %4194 = vmatpush.bf16.msra.mxu0 %v4015
    %4195 = vmatpush.bf16.msra.mxu0 %v4011
    %4196 = vmatpush.bf16.msra.mxu0 %v4007
    %4197 = vmatmul.bf16.gmra.mxu0 %v3710
    %v4198 = vpop.f32.mrf.mxu0
    %v4199 = vadd.f32 %v4170, %v4198
    %v4200 = vpop.f32.mrf.mxu0
    %v4201 = vadd.f32 %v4172, %v4200
    %4202 = vmatmul.bf16.gmra.mxu0 %v3712
    %v4203 = vpop.f32.mrf.mxu0
    %v4204 = vadd.f32 %v4175, %v4203
    %v4205 = vpop.f32.mrf.mxu0
    %v4206 = vadd.f32 %v4177, %v4205
    %4207 = vmatmul.bf16.gmra.mxu0 %v3714
    %v4208 = vpop.f32.mrf.mxu0
    %v4209 = vadd.f32 %v4180, %v4208
    %v4210 = vpop.f32.mrf.mxu0
    %v4211 = vadd.f32 %v4182, %v4210
    %4212 = vmatmul.bf16.gmra.mxu0 %v3716
    %v4213 = vpop.f32.mrf.mxu0
    %v4214 = vadd.f32 %v4185, %v4213
    %v4215 = vpop.f32.mrf.mxu0
    %v4216 = vadd.f32 %v4187, %v4215
    %4217 = vdwg.mxu0
    %4218 = vmatpush.bf16.msra.mxu0 %v4004
    %4219 = vmatpush.bf16.msra.mxu0 %v4000
    %4220 = vmatpush.bf16.msra.mxu0 %v3996
    %4221 = vmatpush.bf16.msra.mxu0 %v3992
    %4222 = vmatpush.bf16.msra.mxu0 %v3988
    %4223 = vmatpush.bf16.msra.mxu0 %v3984
    %4224 = vmatpush.bf16.msra.mxu0 %v3980
    %4225 = vmatpush.bf16.msra.mxu0 %v3976
    %4226 = vmatmul.bf16.gmra.mxu0 %v3709
    %v4227 = vpop.f32.mrf.mxu0
    %v4228 = vadd.f32 0.0, %v4227
    %v4229 = vpop.f32.mrf.mxu0
    %v4230 = vadd.f32 0.0, %v4229
    %4231 = vmatmul.bf16.gmra.mxu0 %v3711
    %v4232 = vpop.f32.mrf.mxu0
    %v4233 = vadd.f32 0.0, %v4232
    %v4234 = vpop.f32.mrf.mxu0
    %v4235 = vadd.f32 0.0, %v4234
    %4236 = vmatmul.bf16.gmra.mxu0 %v3713
    %v4237 = vpop.f32.mrf.mxu0
    %v4238 = vadd.f32 0.0, %v4237
    %v4239 = vpop.f32.mrf.mxu0
    %v4240 = vadd.f32 0.0, %v4239
    %4241 = vmatmul.bf16.gmra.mxu0 %v3715
    %v4242 = vpop.f32.mrf.mxu0
    %v4243 = vadd.f32 0.0, %v4242
    %v4244 = vpop.f32.mrf.mxu0
    %v4245 = vadd.f32 0.0, %v4244
    %4246 = vdwg.mxu0
    %4247 = vmatpush.bf16.msra.mxu0 %v4036
    %4248 = vmatpush.bf16.msra.mxu0 %v4032
    %4249 = vmatpush.bf16.msra.mxu0 %v4028
    %4250 = vmatpush.bf16.msra.mxu0 %v4024
    %4251 = vmatpush.bf16.msra.mxu0 %v4020
    %4252 = vmatpush.bf16.msra.mxu0 %v4016
    %4253 = vmatpush.bf16.msra.mxu0 %v4012
    %4254 = vmatpush.bf16.msra.mxu0 %v4008
    %4255 = vmatmul.bf16.gmra.mxu0 %v3710
    %v4256 = vpop.f32.mrf.mxu0
    %v4257 = vadd.f32 %v4228, %v4256
    %v4258 = vpop.f32.mrf.mxu0
    %v4259 = vadd.f32 %v4230, %v4258
    %4260 = vmatmul.bf16.gmra.mxu0 %v3712
    %v4261 = vpop.f32.mrf.mxu0
    %v4262 = vadd.f32 %v4233, %v4261
    %v4263 = vpop.f32.mrf.mxu0
    %v4264 = vadd.f32 %v4235, %v4263
    %4265 = vmatmul.bf16.gmra.mxu0 %v3714
    %v4266 = vpop.f32.mrf.mxu0
    %v4267 = vadd.f32 %v4238, %v4266
    %v4268 = vpop.f32.mrf.mxu0
    %v4269 = vadd.f32 %v4240, %v4268
    %4270 = vmatmul.bf16.gmra.mxu0 %v3716
    %v4271 = vpop.f32.mrf.mxu0
    %v4272 = vadd.f32 %v4243, %v4271
    %v4273 = vpop.f32.mrf.mxu0
    %v4274 = vadd.f32 %v4245, %v4273
    %4275 = vdwg.mxu0
    %4276 = vmatpush.bf16.msra.mxu0 %v4005
    %4277 = vmatpush.bf16.msra.mxu0 %v4001
    %4278 = vmatpush.bf16.msra.mxu0 %v3997
    %4279 = vmatpush.bf16.msra.mxu0 %v3993
    %4280 = vmatpush.bf16.msra.mxu0 %v3989
    %4281 = vmatpush.bf16.msra.mxu0 %v3985
    %4282 = vmatpush.bf16.msra.mxu0 %v3981
    %4283 = vmatpush.bf16.msra.mxu0 %v3977
    %4284 = vmatmul.bf16.gmra.mxu0 %v3709
    %v4285 = vpop.f32.mrf.mxu0
    %v4286 = vadd.f32 0.0, %v4285
    %v4287 = vpop.f32.mrf.mxu0
    %v4288 = vadd.f32 0.0, %v4287
    %4289 = vmatmul.bf16.gmra.mxu0 %v3711
    %v4290 = vpop.f32.mrf.mxu0
    %v4291 = vadd.f32 0.0, %v4290
    %v4292 = vpop.f32.mrf.mxu0
    %v4293 = vadd.f32 0.0, %v4292
    %4294 = vmatmul.bf16.gmra.mxu0 %v3713
    %v4295 = vpop.f32.mrf.mxu0
    %v4296 = vadd.f32 0.0, %v4295
    %v4297 = vpop.f32.mrf.mxu0
    %v4298 = vadd.f32 0.0, %v4297
    %4299 = vmatmul.bf16.gmra.mxu0 %v3715
    %v4300 = vpop.f32.mrf.mxu0
    %v4301 = vadd.f32 0.0, %v4300
    %v4302 = vpop.f32.mrf.mxu0
    %v4303 = vadd.f32 0.0, %v4302
    %4304 = vdwg.mxu0
    %4305 = vmatpush.bf16.msra.mxu0 %v4037
    %4306 = vmatpush.bf16.msra.mxu0 %v4033
    %4307 = vmatpush.bf16.msra.mxu0 %v4029
    %4308 = vmatpush.bf16.msra.mxu0 %v4025
    %4309 = vmatpush.bf16.msra.mxu0 %v4021
    %4310 = vmatpush.bf16.msra.mxu0 %v4017
    %4311 = vmatpush.bf16.msra.mxu0 %v4013
    %4312 = vmatpush.bf16.msra.mxu0 %v4009
    %4313 = vmatmul.bf16.gmra.mxu0 %v3710
    %v4314 = vpop.f32.mrf.mxu0
    %v4315 = vadd.f32 %v4286, %v4314
    %v4316 = vpop.f32.mrf.mxu0
    %v4317 = vadd.f32 %v4288, %v4316
    %4318 = vmatmul.bf16.gmra.mxu0 %v3712
    %v4319 = vpop.f32.mrf.mxu0
    %v4320 = vadd.f32 %v4291, %v4319
    %v4321 = vpop.f32.mrf.mxu0
    %v4322 = vadd.f32 %v4293, %v4321
    %4323 = vmatmul.bf16.gmra.mxu0 %v3714
    %v4324 = vpop.f32.mrf.mxu0
    %v4325 = vadd.f32 %v4296, %v4324
    %v4326 = vpop.f32.mrf.mxu0
    %v4327 = vadd.f32 %v4298, %v4326
    %4328 = vmatmul.bf16.gmra.mxu0 %v3716
    %v4329 = vpop.f32.mrf.mxu0
    %v4330 = vadd.f32 %v4301, %v4329
    %v4331 = vpop.f32.mrf.mxu0
    %v4332 = vadd.f32 %v4303, %v4331
    %4333 = vdwg.mxu0
    %v4398 = vunpack.c.l.b16 %v3516
    %v4399 = vunpack.c.h.b16 %v3516
    %v4400 = vunpack.c.l.b16 %v3517
    %v4401 = vunpack.c.h.b16 %v3517
    %v4402 = vunpack.c.l.b16 %v3518
    %v4403 = vunpack.c.h.b16 %v3518
    %v4404 = vunpack.c.l.b16 %v3519
    %v4405 = vunpack.c.h.b16 %v3519
    %v4406 = vunpack.c.l.b16 %v3520
    %v4407 = vunpack.c.h.b16 %v3520
    %v4408 = vunpack.c.l.b16 %v3521
    %v4409 = vunpack.c.h.b16 %v3521
    %v4410 = vunpack.c.l.b16 %v3522
    %v4411 = vunpack.c.h.b16 %v3522
    %v4412 = vunpack.c.l.b16 %v3523
    %v4413 = vunpack.c.h.b16 %v3523
    %v4414 = vunpack.c.l.b16 %v3524
    %v4415 = vunpack.c.h.b16 %v3524
    %v4416 = vunpack.c.l.b16 %v3525
    %v4417 = vunpack.c.h.b16 %v3525
    %v4418 = vunpack.c.l.b16 %v3526
    %v4419 = vunpack.c.h.b16 %v3526
    %v4420 = vunpack.c.l.b16 %v3527
    %v4421 = vunpack.c.h.b16 %v3527
    %v4422 = vunpack.c.l.b16 %v3528
    %v4423 = vunpack.c.h.b16 %v3528
    %v4424 = vunpack.c.l.b16 %v3529
    %v4425 = vunpack.c.h.b16 %v3529
    %v4426 = vunpack.c.l.b16 %v3530
    %v4427 = vunpack.c.h.b16 %v3530
    %v4428 = vunpack.c.l.b16 %v3531
    %v4429 = vunpack.c.h.b16 %v3531
    %v4430 = vunpack.c.l.b16 %v3532
    %v4431 = vunpack.c.h.b16 %v3532
    %v4432 = vunpack.c.l.b16 %v3533
    %v4433 = vunpack.c.h.b16 %v3533
    %v4434 = vunpack.c.l.b16 %v3534
    %v4435 = vunpack.c.h.b16 %v3534
    %v4436 = vunpack.c.l.b16 %v3535
    %v4437 = vunpack.c.h.b16 %v3535
    %v4438 = vunpack.c.l.b16 %v3536
    %v4439 = vunpack.c.h.b16 %v3536
    %v4440 = vunpack.c.l.b16 %v3537
    %v4441 = vunpack.c.h.b16 %v3537
    %v4442 = vunpack.c.l.b16 %v3538
    %v4443 = vunpack.c.h.b16 %v3538
    %v4444 = vunpack.c.l.b16 %v3539
    %v4445 = vunpack.c.h.b16 %v3539
    %v4446 = vunpack.c.l.b16 %v3540
    %v4447 = vunpack.c.h.b16 %v3540
    %v4448 = vunpack.c.l.b16 %v3541
    %v4449 = vunpack.c.h.b16 %v3541
    %v4450 = vunpack.c.l.b16 %v3542
    %v4451 = vunpack.c.h.b16 %v3542
    %v4452 = vunpack.c.l.b16 %v3543
    %v4453 = vunpack.c.h.b16 %v3543
    %v4454 = vunpack.c.l.b16 %v3544
    %v4455 = vunpack.c.h.b16 %v3544
    %v4456 = vunpack.c.l.b16 %v3545
    %v4457 = vunpack.c.h.b16 %v3545
    %v4458 = vunpack.c.l.b16 %v3546
    %v4459 = vunpack.c.h.b16 %v3546
    %v4460 = vunpack.c.l.b16 %v3547
    %v4461 = vunpack.c.h.b16 %v3547
    %v4462 = vunpack.c.l.b16 %v3548
    %v4463 = vunpack.c.h.b16 %v3548
    %v4464 = vunpack.c.l.b16 %v3549
    %v4465 = vunpack.c.h.b16 %v3549
    %v4466 = vunpack.c.l.b16 %v3550
    %v4467 = vunpack.c.h.b16 %v3550
    %v4468 = vunpack.c.l.b16 %v3551
    %v4469 = vunpack.c.h.b16 %v3551
    %v4470 = vunpack.c.l.b16 %v3552
    %v4471 = vunpack.c.h.b16 %v3552
    %v4472 = vunpack.c.l.b16 %v3553
    %v4473 = vunpack.c.h.b16 %v3553
    %v4474 = vunpack.c.l.b16 %v3554
    %v4475 = vunpack.c.h.b16 %v3554
    %v4476 = vunpack.c.l.b16 %v3555
    %v4477 = vunpack.c.h.b16 %v3555
    %v4478 = vunpack.c.l.b16 %v3556
    %v4479 = vunpack.c.h.b16 %v3556
    %v4480 = vunpack.c.l.b16 %v3557
    %v4481 = vunpack.c.h.b16 %v3557
    %v4482 = vunpack.c.l.b16 %v3558
    %v4483 = vunpack.c.h.b16 %v3558
    %v4484 = vunpack.c.l.b16 %v3559
    %v4485 = vunpack.c.h.b16 %v3559
    %v4486 = vunpack.c.l.b16 %v3560
    %v4487 = vunpack.c.h.b16 %v3560
    %v4488 = vunpack.c.l.b16 %v3561
    %v4489 = vunpack.c.h.b16 %v3561
    %v4490 = vunpack.c.l.b16 %v3562
    %v4491 = vunpack.c.h.b16 %v3562
    %v4492 = vunpack.c.l.b16 %v3563
    %v4493 = vunpack.c.h.b16 %v3563
    %v4494 = vunpack.c.l.b16 %v3564
    %v4495 = vunpack.c.h.b16 %v3564
    %v4496 = vunpack.c.l.b16 %v3565
    %v4497 = vunpack.c.h.b16 %v3565
    %v4498 = vunpack.c.l.b16 %v3566
    %v4499 = vunpack.c.h.b16 %v3566
    %v4500 = vunpack.c.l.b16 %v3567
    %v4501 = vunpack.c.h.b16 %v3567
    %v4502 = vunpack.c.l.b16 %v3568
    %v4503 = vunpack.c.h.b16 %v3568
    %v4504 = vunpack.c.l.b16 %v3569
    %v4505 = vunpack.c.h.b16 %v3569
    %v4506 = vunpack.c.l.b16 %v3570
    %v4507 = vunpack.c.h.b16 %v3570
    %v4508 = vunpack.c.l.b16 %v3571
    %v4509 = vunpack.c.h.b16 %v3571
    %v4510 = vunpack.c.l.b16 %v3572
    %v4511 = vunpack.c.h.b16 %v3572
    %v4512 = vunpack.c.l.b16 %v3573
    %v4513 = vunpack.c.h.b16 %v3573
    %v4514 = vunpack.c.l.b16 %v3574
    %v4515 = vunpack.c.h.b16 %v3574
    %v4516 = vunpack.c.l.b16 %v3575
    %v4517 = vunpack.c.h.b16 %v3575
    %v4518 = vunpack.c.l.b16 %v3576
    %v4519 = vunpack.c.h.b16 %v3576
    %v4520 = vunpack.c.l.b16 %v3577
    %v4521 = vunpack.c.h.b16 %v3577
    %v4522 = vunpack.c.l.b16 %v3578
    %v4523 = vunpack.c.h.b16 %v3578
    %v4524 = vunpack.c.l.b16 %v3579
    %v4525 = vunpack.c.h.b16 %v3579
    %v4526 = vpack.c.b16 %v4402, %v4398
    %v4527 = vpack.c.b16 %v4403, %v4399
    %v4528 = vpack.c.b16 %v4404, %v4400
    %v4529 = vpack.c.b16 %v4405, %v4401
    %v4530 = vpack.c.b16 %v4410, %v4406
    %v4531 = vpack.c.b16 %v4411, %v4407
    %v4532 = vpack.c.b16 %v4412, %v4408
    %v4533 = vpack.c.b16 %v4413, %v4409
    %v4534 = vpack.c.b16 %v4418, %v4414
    %v4535 = vpack.c.b16 %v4419, %v4415
    %v4536 = vpack.c.b16 %v4420, %v4416
    %v4537 = vpack.c.b16 %v4421, %v4417
    %v4538 = vpack.c.b16 %v4426, %v4422
    %v4539 = vpack.c.b16 %v4427, %v4423
    %v4540 = vpack.c.b16 %v4428, %v4424
    %v4541 = vpack.c.b16 %v4429, %v4425
    %v4542 = vpack.c.b16 %v4434, %v4430
    %v4543 = vpack.c.b16 %v4435, %v4431
    %v4544 = vpack.c.b16 %v4436, %v4432
    %v4545 = vpack.c.b16 %v4437, %v4433
    %v4546 = vpack.c.b16 %v4442, %v4438
    %v4547 = vpack.c.b16 %v4443, %v4439
    %v4548 = vpack.c.b16 %v4444, %v4440
    %v4549 = vpack.c.b16 %v4445, %v4441
    %v4550 = vpack.c.b16 %v4450, %v4446
    %v4551 = vpack.c.b16 %v4451, %v4447
    %v4552 = vpack.c.b16 %v4452, %v4448
    %v4553 = vpack.c.b16 %v4453, %v4449
    %v4554 = vpack.c.b16 %v4458, %v4454
    %v4555 = vpack.c.b16 %v4459, %v4455
    %v4556 = vpack.c.b16 %v4460, %v4456
    %v4557 = vpack.c.b16 %v4461, %v4457
    %v4558 = vpack.c.b16 %v4466, %v4462
    %v4559 = vpack.c.b16 %v4467, %v4463
    %v4560 = vpack.c.b16 %v4468, %v4464
    %v4561 = vpack.c.b16 %v4469, %v4465
    %v4562 = vpack.c.b16 %v4474, %v4470
    %v4563 = vpack.c.b16 %v4475, %v4471
    %v4564 = vpack.c.b16 %v4476, %v4472
    %v4565 = vpack.c.b16 %v4477, %v4473
    %v4566 = vpack.c.b16 %v4482, %v4478
    %v4567 = vpack.c.b16 %v4483, %v4479
    %v4568 = vpack.c.b16 %v4484, %v4480
    %v4569 = vpack.c.b16 %v4485, %v4481
    %v4570 = vpack.c.b16 %v4490, %v4486
    %v4571 = vpack.c.b16 %v4491, %v4487
    %v4572 = vpack.c.b16 %v4492, %v4488
    %v4573 = vpack.c.b16 %v4493, %v4489
    %v4574 = vpack.c.b16 %v4498, %v4494
    %v4575 = vpack.c.b16 %v4499, %v4495
    %v4576 = vpack.c.b16 %v4500, %v4496
    %v4577 = vpack.c.b16 %v4501, %v4497
    %v4578 = vpack.c.b16 %v4506, %v4502
    %v4579 = vpack.c.b16 %v4507, %v4503
    %v4580 = vpack.c.b16 %v4508, %v4504
    %v4581 = vpack.c.b16 %v4509, %v4505
    %v4582 = vpack.c.b16 %v4514, %v4510
    %v4583 = vpack.c.b16 %v4515, %v4511
    %v4584 = vpack.c.b16 %v4516, %v4512
    %v4585 = vpack.c.b16 %v4517, %v4513
    %v4586 = vpack.c.b16 %v4522, %v4518
    %v4587 = vpack.c.b16 %v4523, %v4519
    %v4588 = vpack.c.b16 %v4524, %v4520
    %v4589 = vpack.c.b16 %v4525, %v4521
    %4654 = vmatpush.bf16.msra.mxu0 %v4554
    %4655 = vmatpush.bf16.msra.mxu0 %v4550
    %4656 = vmatpush.bf16.msra.mxu0 %v4546
    %4657 = vmatpush.bf16.msra.mxu0 %v4542
    %4658 = vmatpush.bf16.msra.mxu0 %v4538
    %4659 = vmatpush.bf16.msra.mxu0 %v4534
    %4660 = vmatpush.bf16.msra.mxu0 %v4530
    %4661 = vmatpush.bf16.msra.mxu0 %v4526
    %4662 = vmatmul.bf16.gmra.mxu0 %v3508
    %v4663 = vpop.f32.mrf.mxu0
    %v4664 = vadd.f32 %v4141, %v4663
    %v4665 = vpop.f32.mrf.mxu0
    %v4666 = vadd.f32 %v4143, %v4665
    %4667 = vmatmul.bf16.gmra.mxu0 %v3510
    %v4668 = vpop.f32.mrf.mxu0
    %v4669 = vadd.f32 %v4146, %v4668
    %v4670 = vpop.f32.mrf.mxu0
    %v4671 = vadd.f32 %v4148, %v4670
    %4672 = vmatmul.bf16.gmra.mxu0 %v3512
    %v4673 = vpop.f32.mrf.mxu0
    %v4674 = vadd.f32 %v4151, %v4673
    %v4675 = vpop.f32.mrf.mxu0
    %v4676 = vadd.f32 %v4153, %v4675
    %4677 = vmatmul.bf16.gmra.mxu0 %v3514
    %v4678 = vpop.f32.mrf.mxu0
    %v4679 = vadd.f32 %v4156, %v4678
    %v4680 = vpop.f32.mrf.mxu0
    %v4681 = vadd.f32 %v4158, %v4680
    %4682 = vdwg.mxu0
    %4683 = vmatpush.bf16.msra.mxu0 %v4586
    %4684 = vmatpush.bf16.msra.mxu0 %v4582
    %4685 = vmatpush.bf16.msra.mxu0 %v4578
    %4686 = vmatpush.bf16.msra.mxu0 %v4574
    %4687 = vmatpush.bf16.msra.mxu0 %v4570
    %4688 = vmatpush.bf16.msra.mxu0 %v4566
    %4689 = vmatpush.bf16.msra.mxu0 %v4562
    %4690 = vmatpush.bf16.msra.mxu0 %v4558
    %4691 = vmatmul.bf16.gmra.mxu0 %v3509
    %v4692 = vpop.f32.mrf.mxu0
    %v4693 = vadd.f32 %v4664, %v4692
    %v4694 = vpop.f32.mrf.mxu0
    %v4695 = vadd.f32 %v4666, %v4694
    %4696 = vmatmul.bf16.gmra.mxu0 %v3511
    %v4697 = vpop.f32.mrf.mxu0
    %v4698 = vadd.f32 %v4669, %v4697
    %v4699 = vpop.f32.mrf.mxu0
    %v4700 = vadd.f32 %v4671, %v4699
    %4701 = vmatmul.bf16.gmra.mxu0 %v3513
    %v4702 = vpop.f32.mrf.mxu0
    %v4703 = vadd.f32 %v4674, %v4702
    %v4704 = vpop.f32.mrf.mxu0
    %v4705 = vadd.f32 %v4676, %v4704
    %4706 = vmatmul.bf16.gmra.mxu0 %v3515
    %v4707 = vpop.f32.mrf.mxu0
    %v4708 = vadd.f32 %v4679, %v4707
    %v4709 = vpop.f32.mrf.mxu0
    %v4710 = vadd.f32 %v4681, %v4709
    %4711 = vdwg.mxu0
    %4712 = vmatpush.bf16.msra.mxu0 %v4555
    %4713 = vmatpush.bf16.msra.mxu0 %v4551
    %4714 = vmatpush.bf16.msra.mxu0 %v4547
    %4715 = vmatpush.bf16.msra.mxu0 %v4543
    %4716 = vmatpush.bf16.msra.mxu0 %v4539
    %4717 = vmatpush.bf16.msra.mxu0 %v4535
    %4718 = vmatpush.bf16.msra.mxu0 %v4531
    %4719 = vmatpush.bf16.msra.mxu0 %v4527
    %4720 = vmatmul.bf16.gmra.mxu0 %v3508
    %v4721 = vpop.f32.mrf.mxu0
    %v4722 = vadd.f32 %v4199, %v4721
    %v4723 = vpop.f32.mrf.mxu0
    %v4724 = vadd.f32 %v4201, %v4723
    %4725 = vmatmul.bf16.gmra.mxu0 %v3510
    %v4726 = vpop.f32.mrf.mxu0
    %v4727 = vadd.f32 %v4204, %v4726
    %v4728 = vpop.f32.mrf.mxu0
    %v4729 = vadd.f32 %v4206, %v4728
    %4730 = vmatmul.bf16.gmra.mxu0 %v3512
    %v4731 = vpop.f32.mrf.mxu0
    %v4732 = vadd.f32 %v4209, %v4731
    %v4733 = vpop.f32.mrf.mxu0
    %v4734 = vadd.f32 %v4211, %v4733
    %4735 = vmatmul.bf16.gmra.mxu0 %v3514
    %v4736 = vpop.f32.mrf.mxu0
    %v4737 = vadd.f32 %v4214, %v4736
    %v4738 = vpop.f32.mrf.mxu0
    %v4739 = vadd.f32 %v4216, %v4738
    %4740 = vdwg.mxu0
    %4741 = vmatpush.bf16.msra.mxu0 %v4587
    %4742 = vmatpush.bf16.msra.mxu0 %v4583
    %4743 = vmatpush.bf16.msra.mxu0 %v4579
    %4744 = vmatpush.bf16.msra.mxu0 %v4575
    %4745 = vmatpush.bf16.msra.mxu0 %v4571
    %4746 = vmatpush.bf16.msra.mxu0 %v4567
    %4747 = vmatpush.bf16.msra.mxu0 %v4563
    %4748 = vmatpush.bf16.msra.mxu0 %v4559
    %4749 = vmatmul.bf16.gmra.mxu0 %v3509
    %v4750 = vpop.f32.mrf.mxu0
    %v4751 = vadd.f32 %v4722, %v4750
    %v4752 = vpop.f32.mrf.mxu0
    %v4753 = vadd.f32 %v4724, %v4752
    %4754 = vmatmul.bf16.gmra.mxu0 %v3511
    %v4755 = vpop.f32.mrf.mxu0
    %v4756 = vadd.f32 %v4727, %v4755
    %v4757 = vpop.f32.mrf.mxu0
    %v4758 = vadd.f32 %v4729, %v4757
    %4759 = vmatmul.bf16.gmra.mxu0 %v3513
    %v4760 = vpop.f32.mrf.mxu0
    %v4761 = vadd.f32 %v4732, %v4760
    %v4762 = vpop.f32.mrf.mxu0
    %v4763 = vadd.f32 %v4734, %v4762
    %4764 = vmatmul.bf16.gmra.mxu0 %v3515
    %v4765 = vpop.f32.mrf.mxu0
    %v4766 = vadd.f32 %v4737, %v4765
    %v4767 = vpop.f32.mrf.mxu0
    %v4768 = vadd.f32 %v4739, %v4767
    %4769 = vdwg.mxu0
    %4770 = vmatpush.bf16.msra.mxu0 %v4556
    %4771 = vmatpush.bf16.msra.mxu0 %v4552
    %4772 = vmatpush.bf16.msra.mxu0 %v4548
    %4773 = vmatpush.bf16.msra.mxu0 %v4544
    %4774 = vmatpush.bf16.msra.mxu0 %v4540
    %4775 = vmatpush.bf16.msra.mxu0 %v4536
    %4776 = vmatpush.bf16.msra.mxu0 %v4532
    %4777 = vmatpush.bf16.msra.mxu0 %v4528
    %4778 = vmatmul.bf16.gmra.mxu0 %v3508
    %v4779 = vpop.f32.mrf.mxu0
    %v4780 = vadd.f32 %v4257, %v4779
    %v4781 = vpop.f32.mrf.mxu0
    %v4782 = vadd.f32 %v4259, %v4781
    %4783 = vmatmul.bf16.gmra.mxu0 %v3510
    %v4784 = vpop.f32.mrf.mxu0
    %v4785 = vadd.f32 %v4262, %v4784
    %v4786 = vpop.f32.mrf.mxu0
    %v4787 = vadd.f32 %v4264, %v4786
    %4788 = vmatmul.bf16.gmra.mxu0 %v3512
    %v4789 = vpop.f32.mrf.mxu0
    %v4790 = vadd.f32 %v4267, %v4789
    %v4791 = vpop.f32.mrf.mxu0
    %v4792 = vadd.f32 %v4269, %v4791
    %4793 = vmatmul.bf16.gmra.mxu0 %v3514
    %v4794 = vpop.f32.mrf.mxu0
    %v4795 = vadd.f32 %v4272, %v4794
    %v4796 = vpop.f32.mrf.mxu0
    %v4797 = vadd.f32 %v4274, %v4796
    %4798 = vdwg.mxu0
    %4799 = vmatpush.bf16.msra.mxu0 %v4588
    %4800 = vmatpush.bf16.msra.mxu0 %v4584
    %4801 = vmatpush.bf16.msra.mxu0 %v4580
    %4802 = vmatpush.bf16.msra.mxu0 %v4576
    %4803 = vmatpush.bf16.msra.mxu0 %v4572
    %4804 = vmatpush.bf16.msra.mxu0 %v4568
    %4805 = vmatpush.bf16.msra.mxu0 %v4564
    %4806 = vmatpush.bf16.msra.mxu0 %v4560
    %4807 = vmatmul.bf16.gmra.mxu0 %v3509
    %v4808 = vpop.f32.mrf.mxu0
    %v4809 = vadd.f32 %v4780, %v4808
    %v4810 = vpop.f32.mrf.mxu0
    %v4811 = vadd.f32 %v4782, %v4810
    %4812 = vmatmul.bf16.gmra.mxu0 %v3511
    %v4813 = vpop.f32.mrf.mxu0
    %v4814 = vadd.f32 %v4785, %v4813
    %v4815 = vpop.f32.mrf.mxu0
    %v4816 = vadd.f32 %v4787, %v4815
    %4817 = vmatmul.bf16.gmra.mxu0 %v3513
    %v4818 = vpop.f32.mrf.mxu0
    %v4819 = vadd.f32 %v4790, %v4818
    %v4820 = vpop.f32.mrf.mxu0
    %v4821 = vadd.f32 %v4792, %v4820
    %4822 = vmatmul.bf16.gmra.mxu0 %v3515
    %v4823 = vpop.f32.mrf.mxu0
    %v4824 = vadd.f32 %v4795, %v4823
    %v4825 = vpop.f32.mrf.mxu0
    %v4826 = vadd.f32 %v4797, %v4825
    %4827 = vdwg.mxu0
    %4828 = vmatpush.bf16.msra.mxu0 %v4557
    %4829 = vmatpush.bf16.msra.mxu0 %v4553
    %4830 = vmatpush.bf16.msra.mxu0 %v4549
    %4831 = vmatpush.bf16.msra.mxu0 %v4545
    %4832 = vmatpush.bf16.msra.mxu0 %v4541
    %4833 = vmatpush.bf16.msra.mxu0 %v4537
    %4834 = vmatpush.bf16.msra.mxu0 %v4533
    %4835 = vmatpush.bf16.msra.mxu0 %v4529
    %4836 = vmatmul.bf16.gmra.mxu0 %v3508
    %v4837 = vpop.f32.mrf.mxu0
    %v4838 = vadd.f32 %v4315, %v4837
    %v4839 = vpop.f32.mrf.mxu0
    %v4840 = vadd.f32 %v4317, %v4839
    %4841 = vmatmul.bf16.gmra.mxu0 %v3510
    %v4842 = vpop.f32.mrf.mxu0
    %v4843 = vadd.f32 %v4320, %v4842
    %v4844 = vpop.f32.mrf.mxu0
    %v4845 = vadd.f32 %v4322, %v4844
    %4846 = vmatmul.bf16.gmra.mxu0 %v3512
    %v4847 = vpop.f32.mrf.mxu0
    %v4848 = vadd.f32 %v4325, %v4847
    %v4849 = vpop.f32.mrf.mxu0
    %v4850 = vadd.f32 %v4327, %v4849
    %4851 = vmatmul.bf16.gmra.mxu0 %v3514
    %v4852 = vpop.f32.mrf.mxu0
    %v4853 = vadd.f32 %v4330, %v4852
    %v4854 = vpop.f32.mrf.mxu0
    %v4855 = vadd.f32 %v4332, %v4854
    %4856 = vdwg.mxu0
    %4857 = vmatpush.bf16.msra.mxu0 %v4589
    %4858 = vmatpush.bf16.msra.mxu0 %v4585
    %4859 = vmatpush.bf16.msra.mxu0 %v4581
    %4860 = vmatpush.bf16.msra.mxu0 %v4577
    %4861 = vmatpush.bf16.msra.mxu0 %v4573
    %4862 = vmatpush.bf16.msra.mxu0 %v4569
    %4863 = vmatpush.bf16.msra.mxu0 %v4565
    %4864 = vmatpush.bf16.msra.mxu0 %v4561
    %4865 = vmatmul.bf16.gmra.mxu0 %v3509
    %v4866 = vpop.f32.mrf.mxu0
    %v4867 = vadd.f32 %v4838, %v4866
    %v4868 = vpop.f32.mrf.mxu0
    %v4869 = vadd.f32 %v4840, %v4868
    %4870 = vmatmul.bf16.gmra.mxu0 %v3511
    %v4871 = vpop.f32.mrf.mxu0
    %v4872 = vadd.f32 %v4843, %v4871
    %v4873 = vpop.f32.mrf.mxu0
    %v4874 = vadd.f32 %v4845, %v4873
    %4875 = vmatmul.bf16.gmra.mxu0 %v3513
    %v4876 = vpop.f32.mrf.mxu0
    %v4877 = vadd.f32 %v4848, %v4876
    %v4878 = vpop.f32.mrf.mxu0
    %v4879 = vadd.f32 %v4850, %v4878
    %4880 = vmatmul.bf16.gmra.mxu0 %v3515
    %v4881 = vpop.f32.mrf.mxu0
    %v4882 = vadd.f32 %v4853, %v4881
    %v4883 = vpop.f32.mrf.mxu0
    %v4884 = vadd.f32 %v4855, %v4883
    %4885 = vdwg.mxu0
    %v4886 = vld [vmem:[#allocation3] sm:$0xfc]
    %v4887 = vld [vmem:[#allocation3 + $0x8] sm:$0xfc]
    %v4888 = vld [vmem:[#allocation3 + $0x10] sm:$0x3]
    %v4889 = vld [vmem:[#allocation3 + $0x18] sm:$0x3]
    %v4890 = vld [vmem:[#allocation3 + $0x20] sm:$0xfc]
    %v4891 = vld [vmem:[#allocation3 + $0x28] sm:$0xfc]
    %v4892 = vld [vmem:[#allocation3 + $0x30] sm:$0x3]
    %v4893 = vld [vmem:[#allocation3 + $0x38] sm:$0x3]
    %v4894 = vld [vmem:[#allocation3 + $0x40] sm:$0xfc]
    %v4895 = vld [vmem:[#allocation3 + $0x48] sm:$0xfc]
    %v4896 = vld [vmem:[#allocation3 + $0x50] sm:$0x3]
    %v4897 = vld [vmem:[#allocation3 + $0x58] sm:$0x3]
    %v4898 = vld [vmem:[#allocation3 + $0x60] sm:$0xfc]
    %v4899 = vld [vmem:[#allocation3 + $0x68] sm:$0xfc]
    %v4900 = vld [vmem:[#allocation3 + $0x70] sm:$0x3]
    %v4901 = vld [vmem:[#allocation3 + $0x78] sm:$0x3]
    %v4902 = vld [vmem:[#allocation3 + $0x80] sm:$0xfc]
    %v4903 = vld [vmem:[#allocation3 + $0x88] sm:$0xfc]
    %v4904 = vld [vmem:[#allocation3 + $0x90] sm:$0x3]
    %v4905 = vld [vmem:[#allocation3 + $0x98] sm:$0x3]
    %v4906 = vld [vmem:[#allocation3 + $0xa0] sm:$0xfc]
    %v4907 = vld [vmem:[#allocation3 + $0xa8] sm:$0xfc]
    %v4908 = vld [vmem:[#allocation3 + $0xb0] sm:$0x3]
    %v4909 = vld [vmem:[#allocation3 + $0xb8] sm:$0x3]
    %v4910 = vld [vmem:[#allocation3 + $0xc0] sm:$0xfc]
    %v4911 = vld [vmem:[#allocation3 + $0xc8] sm:$0xfc]
    %v4912 = vld [vmem:[#allocation3 + $0xd0] sm:$0x3]
    %v4913 = vld [vmem:[#allocation3 + $0xd8] sm:$0x3]
    %v4914 = vld [vmem:[#allocation3 + $0xe0] sm:$0xfc]
    %v4915 = vld [vmem:[#allocation3 + $0xe8] sm:$0xfc]
    %v4916 = vld [vmem:[#allocation3 + $0xf0] sm:$0x3]
    %v4917 = vld [vmem:[#allocation3 + $0xf8] sm:$0x3]
    %vm4950 = vcmask 1045504
    %v4951 = vrot.slane %v4886, 2
    %v4952 = vrot.slane %v4888, 2
    %v4953 = vsel %vm4950, %v4951, %v4952
    %v4954 = vrot.slane %v4887, 2
    %v4955 = vrot.slane %v4889, 2
    %v4956 = vsel %vm4950, %v4954, %v4955
    %v4957 = vrot.slane %v4890, 2
    %v4958 = vrot.slane %v4892, 2
    %v4959 = vsel %vm4950, %v4957, %v4958
    %v4960 = vrot.slane %v4891, 2
    %v4961 = vrot.slane %v4893, 2
    %v4962 = vsel %vm4950, %v4960, %v4961
    %v4963 = vrot.slane %v4894, 2
    %v4964 = vrot.slane %v4896, 2
    %v4965 = vsel %vm4950, %v4963, %v4964
    %v4966 = vrot.slane %v4895, 2
    %v4967 = vrot.slane %v4897, 2
    %v4968 = vsel %vm4950, %v4966, %v4967
    %v4969 = vrot.slane %v4898, 2
    %v4970 = vrot.slane %v4900, 2
    %v4971 = vsel %vm4950, %v4969, %v4970
    %v4972 = vrot.slane %v4899, 2
    %v4973 = vrot.slane %v4901, 2
    %v4974 = vsel %vm4950, %v4972, %v4973
    %v4975 = vrot.slane %v4902, 2
    %v4976 = vrot.slane %v4904, 2
    %v4977 = vsel %vm4950, %v4975, %v4976
    %v4978 = vrot.slane %v4903, 2
    %v4979 = vrot.slane %v4905, 2
    %v4980 = vsel %vm4950, %v4978, %v4979
    %v4981 = vrot.slane %v4906, 2
    %v4982 = vrot.slane %v4908, 2
    %v4983 = vsel %vm4950, %v4981, %v4982
    %v4984 = vrot.slane %v4907, 2
    %v4985 = vrot.slane %v4909, 2
    %v4986 = vsel %vm4950, %v4984, %v4985
    %v4987 = vrot.slane %v4910, 2
    %v4988 = vrot.slane %v4912, 2
    %v4989 = vsel %vm4950, %v4987, %v4988
    %v4990 = vrot.slane %v4911, 2
    %v4991 = vrot.slane %v4913, 2
    %v4992 = vsel %vm4950, %v4990, %v4991
    %v4993 = vrot.slane %v4914, 2
    %v4994 = vrot.slane %v4916, 2
    %v4995 = vsel %vm4950, %v4993, %v4994
    %v4996 = vrot.slane %v4915, 2
    %v4997 = vrot.slane %v4917, 2
    %v4998 = vsel %vm4950, %v4996, %v4997
    %v5015 = vpack.c.bf16 %v4959, %v4953
    %v5016 = vpack.c.bf16 %v4962, %v4956
    %v5017 = vpack.c.bf16 %v4971, %v4965
    %v5018 = vpack.c.bf16 %v4974, %v4968
    %v5019 = vpack.c.bf16 %v4983, %v4977
    %v5020 = vpack.c.bf16 %v4986, %v4980
    %v5021 = vpack.c.bf16 %v4995, %v4989
    %v5022 = vpack.c.bf16 %v4998, %v4992
    %s5023 = scalar_lea.vmem [#allocation10], 1024
    %v5024 = vld [vmem:[%s5023] sm:$0xff]
    %v5025 = vld [vmem:[%s5023 + $0x8] sm:$0xff]
    %v5026 = vld [vmem:[%s5023 + $0x10] sm:$0xff]
    %v5027 = vld [vmem:[%s5023 + $0x18] sm:$0xff]
    %v5028 = vld [vmem:[%s5023 + $0x20] sm:$0xff]
    %v5029 = vld [vmem:[%s5023 + $0x28] sm:$0xff]
    %v5030 = vld [vmem:[%s5023 + $0x30] sm:$0xff]
    %v5031 = vld [vmem:[%s5023 + $0x38] sm:$0xff]
    %v5032 = vld [vmem:[%s5023 + $0x40] sm:$0xff]
    %v5033 = vld [vmem:[%s5023 + $0x48] sm:$0xff]
    %v5034 = vld [vmem:[%s5023 + $0x50] sm:$0xff]
    %v5035 = vld [vmem:[%s5023 + $0x58] sm:$0xff]
    %v5036 = vld [vmem:[%s5023 + $0x60] sm:$0xff]
    %v5037 = vld [vmem:[%s5023 + $0x68] sm:$0xff]
    %v5038 = vld [vmem:[%s5023 + $0x70] sm:$0xff]
    %v5039 = vld [vmem:[%s5023 + $0x78] sm:$0xff]
    %v5040 = vld [vmem:[%s5023 + $0x80] sm:$0xff]
    %v5041 = vld [vmem:[%s5023 + $0x88] sm:$0xff]
    %v5042 = vld [vmem:[%s5023 + $0x90] sm:$0xff]
    %v5043 = vld [vmem:[%s5023 + $0x98] sm:$0xff]
    %v5044 = vld [vmem:[%s5023 + $0xa0] sm:$0xff]
    %v5045 = vld [vmem:[%s5023 + $0xa8] sm:$0xff]
    %v5046 = vld [vmem:[%s5023 + $0xb0] sm:$0xff]
    %v5047 = vld [vmem:[%s5023 + $0xb8] sm:$0xff]
    %v5048 = vld [vmem:[%s5023 + $0xc0] sm:$0xff]
    %v5049 = vld [vmem:[%s5023 + $0xc8] sm:$0xff]
    %v5050 = vld [vmem:[%s5023 + $0xd0] sm:$0xff]
    %v5051 = vld [vmem:[%s5023 + $0xd8] sm:$0xff]
    %v5052 = vld [vmem:[%s5023 + $0xe0] sm:$0xff]
    %v5053 = vld [vmem:[%s5023 + $0xe8] sm:$0xff]
    %v5054 = vld [vmem:[%s5023 + $0xf0] sm:$0xff]
    %v5055 = vld [vmem:[%s5023 + $0xf8] sm:$0xff]
    %v5056 = vld [vmem:[%s5023 + $0x100] sm:$0xff]
    %v5057 = vld [vmem:[%s5023 + $0x108] sm:$0xff]
    %v5058 = vld [vmem:[%s5023 + $0x110] sm:$0xff]
    %v5059 = vld [vmem:[%s5023 + $0x118] sm:$0xff]
    %v5060 = vld [vmem:[%s5023 + $0x120] sm:$0xff]
    %v5061 = vld [vmem:[%s5023 + $0x128] sm:$0xff]
    %v5062 = vld [vmem:[%s5023 + $0x130] sm:$0xff]
    %v5063 = vld [vmem:[%s5023 + $0x138] sm:$0xff]
    %v5064 = vld [vmem:[%s5023 + $0x140] sm:$0xff]
    %v5065 = vld [vmem:[%s5023 + $0x148] sm:$0xff]
    %v5066 = vld [vmem:[%s5023 + $0x150] sm:$0xff]
    %v5067 = vld [vmem:[%s5023 + $0x158] sm:$0xff]
    %v5068 = vld [vmem:[%s5023 + $0x160] sm:$0xff]
    %v5069 = vld [vmem:[%s5023 + $0x168] sm:$0xff]
    %v5070 = vld [vmem:[%s5023 + $0x170] sm:$0xff]
    %v5071 = vld [vmem:[%s5023 + $0x178] sm:$0xff]
    %v5072 = vld [vmem:[%s5023 + $0x180] sm:$0xff]
    %v5073 = vld [vmem:[%s5023 + $0x188] sm:$0xff]
    %v5074 = vld [vmem:[%s5023 + $0x190] sm:$0xff]
    %v5075 = vld [vmem:[%s5023 + $0x198] sm:$0xff]
    %v5076 = vld [vmem:[%s5023 + $0x1a0] sm:$0xff]
    %v5077 = vld [vmem:[%s5023 + $0x1a8] sm:$0xff]
    %v5078 = vld [vmem:[%s5023 + $0x1b0] sm:$0xff]
    %v5079 = vld [vmem:[%s5023 + $0x1b8] sm:$0xff]
    %v5080 = vld [vmem:[%s5023 + $0x1c0] sm:$0xff]
    %v5081 = vld [vmem:[%s5023 + $0x1c8] sm:$0xff]
    %v5082 = vld [vmem:[%s5023 + $0x1d0] sm:$0xff]
    %v5083 = vld [vmem:[%s5023 + $0x1d8] sm:$0xff]
    %v5084 = vld [vmem:[%s5023 + $0x1e0] sm:$0xff]
    %v5085 = vld [vmem:[%s5023 + $0x1e8] sm:$0xff]
    %v5086 = vld [vmem:[%s5023 + $0x1f0] sm:$0xff]
    %v5087 = vld [vmem:[%s5023 + $0x1f8] sm:$0xff]
    %v5152 = vunpack.c.l.b16 %v5024
    %v5153 = vunpack.c.h.b16 %v5024
    %v5154 = vunpack.c.l.b16 %v5025
    %v5155 = vunpack.c.h.b16 %v5025
    %v5156 = vunpack.c.l.b16 %v5026
    %v5157 = vunpack.c.h.b16 %v5026
    %v5158 = vunpack.c.l.b16 %v5027
    %v5159 = vunpack.c.h.b16 %v5027
    %v5160 = vunpack.c.l.b16 %v5028
    %v5161 = vunpack.c.h.b16 %v5028
    %v5162 = vunpack.c.l.b16 %v5029
    %v5163 = vunpack.c.h.b16 %v5029
    %v5164 = vunpack.c.l.b16 %v5030
    %v5165 = vunpack.c.h.b16 %v5030
    %v5166 = vunpack.c.l.b16 %v5031
    %v5167 = vunpack.c.h.b16 %v5031
    %v5168 = vunpack.c.l.b16 %v5032
    %v5169 = vunpack.c.h.b16 %v5032
    %v5170 = vunpack.c.l.b16 %v5033
    %v5171 = vunpack.c.h.b16 %v5033
    %v5172 = vunpack.c.l.b16 %v5034
    %v5173 = vunpack.c.h.b16 %v5034
    %v5174 = vunpack.c.l.b16 %v5035
    %v5175 = vunpack.c.h.b16 %v5035
    %v5176 = vunpack.c.l.b16 %v5036
    %v5177 = vunpack.c.h.b16 %v5036
    %v5178 = vunpack.c.l.b16 %v5037
    %v5179 = vunpack.c.h.b16 %v5037
    %v5180 = vunpack.c.l.b16 %v5038
    %v5181 = vunpack.c.h.b16 %v5038
    %v5182 = vunpack.c.l.b16 %v5039
    %v5183 = vunpack.c.h.b16 %v5039
    %v5184 = vunpack.c.l.b16 %v5040
    %v5185 = vunpack.c.h.b16 %v5040
    %v5186 = vunpack.c.l.b16 %v5041
    %v5187 = vunpack.c.h.b16 %v5041
    %v5188 = vunpack.c.l.b16 %v5042
    %v5189 = vunpack.c.h.b16 %v5042
    %v5190 = vunpack.c.l.b16 %v5043
    %v5191 = vunpack.c.h.b16 %v5043
    %v5192 = vunpack.c.l.b16 %v5044
    %v5193 = vunpack.c.h.b16 %v5044
    %v5194 = vunpack.c.l.b16 %v5045
    %v5195 = vunpack.c.h.b16 %v5045
    %v5196 = vunpack.c.l.b16 %v5046
    %v5197 = vunpack.c.h.b16 %v5046
    %v5198 = vunpack.c.l.b16 %v5047
    %v5199 = vunpack.c.h.b16 %v5047
    %v5200 = vunpack.c.l.b16 %v5048
    %v5201 = vunpack.c.h.b16 %v5048
    %v5202 = vunpack.c.l.b16 %v5049
    %v5203 = vunpack.c.h.b16 %v5049
    %v5204 = vunpack.c.l.b16 %v5050
    %v5205 = vunpack.c.h.b16 %v5050
    %v5206 = vunpack.c.l.b16 %v5051
    %v5207 = vunpack.c.h.b16 %v5051
    %v5208 = vunpack.c.l.b16 %v5052
    %v5209 = vunpack.c.h.b16 %v5052
    %v5210 = vunpack.c.l.b16 %v5053
    %v5211 = vunpack.c.h.b16 %v5053
    %v5212 = vunpack.c.l.b16 %v5054
    %v5213 = vunpack.c.h.b16 %v5054
    %v5214 = vunpack.c.l.b16 %v5055
    %v5215 = vunpack.c.h.b16 %v5055
    %v5216 = vunpack.c.l.b16 %v5056
    %v5217 = vunpack.c.h.b16 %v5056
    %v5218 = vunpack.c.l.b16 %v5057
    %v5219 = vunpack.c.h.b16 %v5057
    %v5220 = vunpack.c.l.b16 %v5058
    %v5221 = vunpack.c.h.b16 %v5058
    %v5222 = vunpack.c.l.b16 %v5059
    %v5223 = vunpack.c.h.b16 %v5059
    %v5224 = vunpack.c.l.b16 %v5060
    %v5225 = vunpack.c.h.b16 %v5060
    %v5226 = vunpack.c.l.b16 %v5061
    %v5227 = vunpack.c.h.b16 %v5061
    %v5228 = vunpack.c.l.b16 %v5062
    %v5229 = vunpack.c.h.b16 %v5062
    %v5230 = vunpack.c.l.b16 %v5063
    %v5231 = vunpack.c.h.b16 %v5063
    %v5232 = vunpack.c.l.b16 %v5064
    %v5233 = vunpack.c.h.b16 %v5064
    %v5234 = vunpack.c.l.b16 %v5065
    %v5235 = vunpack.c.h.b16 %v5065
    %v5236 = vunpack.c.l.b16 %v5066
    %v5237 = vunpack.c.h.b16 %v5066
    %v5238 = vunpack.c.l.b16 %v5067
    %v5239 = vunpack.c.h.b16 %v5067
    %v5240 = vunpack.c.l.b16 %v5068
    %v5241 = vunpack.c.h.b16 %v5068
    %v5242 = vunpack.c.l.b16 %v5069
    %v5243 = vunpack.c.h.b16 %v5069
    %v5244 = vunpack.c.l.b16 %v5070
    %v5245 = vunpack.c.h.b16 %v5070
    %v5246 = vunpack.c.l.b16 %v5071
    %v5247 = vunpack.c.h.b16 %v5071
    %v5248 = vunpack.c.l.b16 %v5072
    %v5249 = vunpack.c.h.b16 %v5072
    %v5250 = vunpack.c.l.b16 %v5073
    %v5251 = vunpack.c.h.b16 %v5073
    %v5252 = vunpack.c.l.b16 %v5074
    %v5253 = vunpack.c.h.b16 %v5074
    %v5254 = vunpack.c.l.b16 %v5075
    %v5255 = vunpack.c.h.b16 %v5075
    %v5256 = vunpack.c.l.b16 %v5076
    %v5257 = vunpack.c.h.b16 %v5076
    %v5258 = vunpack.c.l.b16 %v5077
    %v5259 = vunpack.c.h.b16 %v5077
    %v5260 = vunpack.c.l.b16 %v5078
    %v5261 = vunpack.c.h.b16 %v5078
    %v5262 = vunpack.c.l.b16 %v5079
    %v5263 = vunpack.c.h.b16 %v5079
    %v5264 = vunpack.c.l.b16 %v5080
    %v5265 = vunpack.c.h.b16 %v5080
    %v5266 = vunpack.c.l.b16 %v5081
    %v5267 = vunpack.c.h.b16 %v5081
    %v5268 = vunpack.c.l.b16 %v5082
    %v5269 = vunpack.c.h.b16 %v5082
    %v5270 = vunpack.c.l.b16 %v5083
    %v5271 = vunpack.c.h.b16 %v5083
    %v5272 = vunpack.c.l.b16 %v5084
    %v5273 = vunpack.c.h.b16 %v5084
    %v5274 = vunpack.c.l.b16 %v5085
    %v5275 = vunpack.c.h.b16 %v5085
    %v5276 = vunpack.c.l.b16 %v5086
    %v5277 = vunpack.c.h.b16 %v5086
    %v5278 = vunpack.c.l.b16 %v5087
    %v5279 = vunpack.c.h.b16 %v5087
    %v5280 = vpack.c.b16 %v5156, %v5152
    %v5281 = vpack.c.b16 %v5157, %v5153
    %v5282 = vpack.c.b16 %v5158, %v5154
    %v5283 = vpack.c.b16 %v5159, %v5155
    %v5284 = vpack.c.b16 %v5164, %v5160
    %v5285 = vpack.c.b16 %v5165, %v5161
    %v5286 = vpack.c.b16 %v5166, %v5162
    %v5287 = vpack.c.b16 %v5167, %v5163
    %v5288 = vpack.c.b16 %v5172, %v5168
    %v5289 = vpack.c.b16 %v5173, %v5169
    %v5290 = vpack.c.b16 %v5174, %v5170
    %v5291 = vpack.c.b16 %v5175, %v5171
    %v5292 = vpack.c.b16 %v5180, %v5176
    %v5293 = vpack.c.b16 %v5181, %v5177
    %v5294 = vpack.c.b16 %v5182, %v5178
    %v5295 = vpack.c.b16 %v5183, %v5179
    %v5296 = vpack.c.b16 %v5188, %v5184
    %v5297 = vpack.c.b16 %v5189, %v5185
    %v5298 = vpack.c.b16 %v5190, %v5186
    %v5299 = vpack.c.b16 %v5191, %v5187
    %v5300 = vpack.c.b16 %v5196, %v5192
    %v5301 = vpack.c.b16 %v5197, %v5193
    %v5302 = vpack.c.b16 %v5198, %v5194
    %v5303 = vpack.c.b16 %v5199, %v5195
    %v5304 = vpack.c.b16 %v5204, %v5200
    %v5305 = vpack.c.b16 %v5205, %v5201
    %v5306 = vpack.c.b16 %v5206, %v5202
    %v5307 = vpack.c.b16 %v5207, %v5203
    %v5308 = vpack.c.b16 %v5212, %v5208
    %v5309 = vpack.c.b16 %v5213, %v5209
    %v5310 = vpack.c.b16 %v5214, %v5210
    %v5311 = vpack.c.b16 %v5215, %v5211
    %v5312 = vpack.c.b16 %v5220, %v5216
    %v5313 = vpack.c.b16 %v5221, %v5217
    %v5314 = vpack.c.b16 %v5222, %v5218
    %v5315 = vpack.c.b16 %v5223, %v5219
    %v5316 = vpack.c.b16 %v5228, %v5224
    %v5317 = vpack.c.b16 %v5229, %v5225
    %v5318 = vpack.c.b16 %v5230, %v5226
    %v5319 = vpack.c.b16 %v5231, %v5227
    %v5320 = vpack.c.b16 %v5236, %v5232
    %v5321 = vpack.c.b16 %v5237, %v5233
    %v5322 = vpack.c.b16 %v5238, %v5234
    %v5323 = vpack.c.b16 %v5239, %v5235
    %v5324 = vpack.c.b16 %v5244, %v5240
    %v5325 = vpack.c.b16 %v5245, %v5241
    %v5326 = vpack.c.b16 %v5246, %v5242
    %v5327 = vpack.c.b16 %v5247, %v5243
    %v5328 = vpack.c.b16 %v5252, %v5248
    %v5329 = vpack.c.b16 %v5253, %v5249
    %v5330 = vpack.c.b16 %v5254, %v5250
    %v5331 = vpack.c.b16 %v5255, %v5251
    %v5332 = vpack.c.b16 %v5260, %v5256
    %v5333 = vpack.c.b16 %v5261, %v5257
    %v5334 = vpack.c.b16 %v5262, %v5258
    %v5335 = vpack.c.b16 %v5263, %v5259
    %v5336 = vpack.c.b16 %v5268, %v5264
    %v5337 = vpack.c.b16 %v5269, %v5265
    %v5338 = vpack.c.b16 %v5270, %v5266
    %v5339 = vpack.c.b16 %v5271, %v5267
    %v5340 = vpack.c.b16 %v5276, %v5272
    %v5341 = vpack.c.b16 %v5277, %v5273
    %v5342 = vpack.c.b16 %v5278, %v5274
    %v5343 = vpack.c.b16 %v5279, %v5275
    %5408 = vmatpush.bf16.msra.mxu0 %v5308
    %5409 = vmatpush.bf16.msra.mxu0 %v5304
    %5410 = vmatpush.bf16.msra.mxu0 %v5300
    %5411 = vmatpush.bf16.msra.mxu0 %v5296
    %5412 = vmatpush.bf16.msra.mxu0 %v5292
    %5413 = vmatpush.bf16.msra.mxu0 %v5288
    %5414 = vmatpush.bf16.msra.mxu0 %v5284
    %5415 = vmatpush.bf16.msra.mxu0 %v5280
    %5416 = vmatmul.bf16.gmra.mxu0 %v5015
    %v5417 = vpop.f32.mrf.mxu0
    %v5418 = vadd.f32 0.0, %v5417
    %v5419 = vpop.f32.mrf.mxu0
    %v5420 = vadd.f32 0.0, %v5419
    %5421 = vmatmul.bf16.gmra.mxu0 %v5017
    %v5422 = vpop.f32.mrf.mxu0
    %v5423 = vadd.f32 0.0, %v5422
    %v5424 = vpop.f32.mrf.mxu0
    %v5425 = vadd.f32 0.0, %v5424
    %5426 = vmatmul.bf16.gmra.mxu0 %v5019
    %v5427 = vpop.f32.mrf.mxu0
    %v5428 = vadd.f32 0.0, %v5427
    %v5429 = vpop.f32.mrf.mxu0
    %v5430 = vadd.f32 0.0, %v5429
    %5431 = vmatmul.bf16.gmra.mxu0 %v5021
    %v5432 = vpop.f32.mrf.mxu0
    %v5433 = vadd.f32 0.0, %v5432
    %v5434 = vpop.f32.mrf.mxu0
    %v5435 = vadd.f32 0.0, %v5434
    %5436 = vdwg.mxu0
    %5437 = vmatpush.bf16.msra.mxu0 %v5340
    %5438 = vmatpush.bf16.msra.mxu0 %v5336
    %5439 = vmatpush.bf16.msra.mxu0 %v5332
    %5440 = vmatpush.bf16.msra.mxu0 %v5328
    %5441 = vmatpush.bf16.msra.mxu0 %v5324
    %5442 = vmatpush.bf16.msra.mxu0 %v5320
    %5443 = vmatpush.bf16.msra.mxu0 %v5316
    %5444 = vmatpush.bf16.msra.mxu0 %v5312
    %5445 = vmatmul.bf16.gmra.mxu0 %v5016
    %v5446 = vpop.f32.mrf.mxu0
    %v5447 = vadd.f32 %v5418, %v5446
    %v5448 = vpop.f32.mrf.mxu0
    %v5449 = vadd.f32 %v5420, %v5448
    %5450 = vmatmul.bf16.gmra.mxu0 %v5018
    %v5451 = vpop.f32.mrf.mxu0
    %v5452 = vadd.f32 %v5423, %v5451
    %v5453 = vpop.f32.mrf.mxu0
    %v5454 = vadd.f32 %v5425, %v5453
    %5455 = vmatmul.bf16.gmra.mxu0 %v5020
    %v5456 = vpop.f32.mrf.mxu0
    %v5457 = vadd.f32 %v5428, %v5456
    %v5458 = vpop.f32.mrf.mxu0
    %v5459 = vadd.f32 %v5430, %v5458
    %5460 = vmatmul.bf16.gmra.mxu0 %v5022
    %v5461 = vpop.f32.mrf.mxu0
    %v5462 = vadd.f32 %v5433, %v5461
    %v5463 = vpop.f32.mrf.mxu0
    %v5464 = vadd.f32 %v5435, %v5463
    %5465 = vdwg.mxu0
    %5466 = vmatpush.bf16.msra.mxu0 %v5309
    %5467 = vmatpush.bf16.msra.mxu0 %v5305
    %5468 = vmatpush.bf16.msra.mxu0 %v5301
    %5469 = vmatpush.bf16.msra.mxu0 %v5297
    %5470 = vmatpush.bf16.msra.mxu0 %v5293
    %5471 = vmatpush.bf16.msra.mxu0 %v5289
    %5472 = vmatpush.bf16.msra.mxu0 %v5285
    %5473 = vmatpush.bf16.msra.mxu0 %v5281
    %5474 = vmatmul.bf16.gmra.mxu0 %v5015
    %v5475 = vpop.f32.mrf.mxu0
    %v5476 = vadd.f32 0.0, %v5475
    %v5477 = vpop.f32.mrf.mxu0
    %v5478 = vadd.f32 0.0, %v5477
    %5479 = vmatmul.bf16.gmra.mxu0 %v5017
    %v5480 = vpop.f32.mrf.mxu0
    %v5481 = vadd.f32 0.0, %v5480
    %v5482 = vpop.f32.mrf.mxu0
    %v5483 = vadd.f32 0.0, %v5482
    %5484 = vmatmul.bf16.gmra.mxu0 %v5019
    %v5485 = vpop.f32.mrf.mxu0
    %v5486 = vadd.f32 0.0, %v5485
    %v5487 = vpop.f32.mrf.mxu0
    %v5488 = vadd.f32 0.0, %v5487
    %5489 = vmatmul.bf16.gmra.mxu0 %v5021
    %v5490 = vpop.f32.mrf.mxu0
    %v5491 = vadd.f32 0.0, %v5490
    %v5492 = vpop.f32.mrf.mxu0
    %v5493 = vadd.f32 0.0, %v5492
    %5494 = vdwg.mxu0
    %5495 = vmatpush.bf16.msra.mxu0 %v5341
    %5496 = vmatpush.bf16.msra.mxu0 %v5337
    %5497 = vmatpush.bf16.msra.mxu0 %v5333
    %5498 = vmatpush.bf16.msra.mxu0 %v5329
    %5499 = vmatpush.bf16.msra.mxu0 %v5325
    %5500 = vmatpush.bf16.msra.mxu0 %v5321
    %5501 = vmatpush.bf16.msra.mxu0 %v5317
    %5502 = vmatpush.bf16.msra.mxu0 %v5313
    %5503 = vmatmul.bf16.gmra.mxu0 %v5016
    %v5504 = vpop.f32.mrf.mxu0
    %v5505 = vadd.f32 %v5476, %v5504
    %v5506 = vpop.f32.mrf.mxu0
    %v5507 = vadd.f32 %v5478, %v5506
    %5508 = vmatmul.bf16.gmra.mxu0 %v5018
    %v5509 = vpop.f32.mrf.mxu0
    %v5510 = vadd.f32 %v5481, %v5509
    %v5511 = vpop.f32.mrf.mxu0
    %v5512 = vadd.f32 %v5483, %v5511
    %5513 = vmatmul.bf16.gmra.mxu0 %v5020
    %v5514 = vpop.f32.mrf.mxu0
    %v5515 = vadd.f32 %v5486, %v5514
    %v5516 = vpop.f32.mrf.mxu0
    %v5517 = vadd.f32 %v5488, %v5516
    %5518 = vmatmul.bf16.gmra.mxu0 %v5022
    %v5519 = vpop.f32.mrf.mxu0
    %v5520 = vadd.f32 %v5491, %v5519
    %v5521 = vpop.f32.mrf.mxu0
    %v5522 = vadd.f32 %v5493, %v5521
    %5523 = vdwg.mxu0
    %5524 = vmatpush.bf16.msra.mxu0 %v5310
    %5525 = vmatpush.bf16.msra.mxu0 %v5306
    %5526 = vmatpush.bf16.msra.mxu0 %v5302
    %5527 = vmatpush.bf16.msra.mxu0 %v5298
    %5528 = vmatpush.bf16.msra.mxu0 %v5294
    %5529 = vmatpush.bf16.msra.mxu0 %v5290
    %5530 = vmatpush.bf16.msra.mxu0 %v5286
    %5531 = vmatpush.bf16.msra.mxu0 %v5282
    %5532 = vmatmul.bf16.gmra.mxu0 %v5015
    %v5533 = vpop.f32.mrf.mxu0
    %v5534 = vadd.f32 0.0, %v5533
    %v5535 = vpop.f32.mrf.mxu0
    %v5536 = vadd.f32 0.0, %v5535
    %5537 = vmatmul.bf16.gmra.mxu0 %v5017
    %v5538 = vpop.f32.mrf.mxu0
    %v5539 = vadd.f32 0.0, %v5538
    %v5540 = vpop.f32.mrf.mxu0
    %v5541 = vadd.f32 0.0, %v5540
    %5542 = vmatmul.bf16.gmra.mxu0 %v5019
    %v5543 = vpop.f32.mrf.mxu0
    %v5544 = vadd.f32 0.0, %v5543
    %v5545 = vpop.f32.mrf.mxu0
    %v5546 = vadd.f32 0.0, %v5545
    %5547 = vmatmul.bf16.gmra.mxu0 %v5021
    %v5548 = vpop.f32.mrf.mxu0
    %v5549 = vadd.f32 0.0, %v5548
    %v5550 = vpop.f32.mrf.mxu0
    %v5551 = vadd.f32 0.0, %v5550
    %5552 = vdwg.mxu0
    %5553 = vmatpush.bf16.msra.mxu0 %v5342
    %5554 = vmatpush.bf16.msra.mxu0 %v5338
    %5555 = vmatpush.bf16.msra.mxu0 %v5334
    %5556 = vmatpush.bf16.msra.mxu0 %v5330
    %5557 = vmatpush.bf16.msra.mxu0 %v5326
    %5558 = vmatpush.bf16.msra.mxu0 %v5322
    %5559 = vmatpush.bf16.msra.mxu0 %v5318
    %5560 = vmatpush.bf16.msra.mxu0 %v5314
    %5561 = vmatmul.bf16.gmra.mxu0 %v5016
    %v5562 = vpop.f32.mrf.mxu0
    %v5563 = vadd.f32 %v5534, %v5562
    %v5564 = vpop.f32.mrf.mxu0
    %v5565 = vadd.f32 %v5536, %v5564
    %5566 = vmatmul.bf16.gmra.mxu0 %v5018
    %v5567 = vpop.f32.mrf.mxu0
    %v5568 = vadd.f32 %v5539, %v5567
    %v5569 = vpop.f32.mrf.mxu0
    %v5570 = vadd.f32 %v5541, %v5569
    %5571 = vmatmul.bf16.gmra.mxu0 %v5020
    %v5572 = vpop.f32.mrf.mxu0
    %v5573 = vadd.f32 %v5544, %v5572
    %v5574 = vpop.f32.mrf.mxu0
    %v5575 = vadd.f32 %v5546, %v5574
    %5576 = vmatmul.bf16.gmra.mxu0 %v5022
    %v5577 = vpop.f32.mrf.mxu0
    %v5578 = vadd.f32 %v5549, %v5577
    %v5579 = vpop.f32.mrf.mxu0
    %v5580 = vadd.f32 %v5551, %v5579
    %5581 = vdwg.mxu0
    %5582 = vmatpush.bf16.msra.mxu0 %v5311
    %5583 = vmatpush.bf16.msra.mxu0 %v5307
    %5584 = vmatpush.bf16.msra.mxu0 %v5303
    %5585 = vmatpush.bf16.msra.mxu0 %v5299
    %5586 = vmatpush.bf16.msra.mxu0 %v5295
    %5587 = vmatpush.bf16.msra.mxu0 %v5291
    %5588 = vmatpush.bf16.msra.mxu0 %v5287
    %5589 = vmatpush.bf16.msra.mxu0 %v5283
    %5590 = vmatmul.bf16.gmra.mxu0 %v5015
    %v5591 = vpop.f32.mrf.mxu0
    %v5592 = vadd.f32 0.0, %v5591
    %v5593 = vpop.f32.mrf.mxu0
    %v5594 = vadd.f32 0.0, %v5593
    %5595 = vmatmul.bf16.gmra.mxu0 %v5017
    %v5596 = vpop.f32.mrf.mxu0
    %v5597 = vadd.f32 0.0, %v5596
    %v5598 = vpop.f32.mrf.mxu0
    %v5599 = vadd.f32 0.0, %v5598
    %5600 = vmatmul.bf16.gmra.mxu0 %v5019
    %v5601 = vpop.f32.mrf.mxu0
    %v5602 = vadd.f32 0.0, %v5601
    %v5603 = vpop.f32.mrf.mxu0
    %v5604 = vadd.f32 0.0, %v5603
    %5605 = vmatmul.bf16.gmra.mxu0 %v5021
    %v5606 = vpop.f32.mrf.mxu0
    %v5607 = vadd.f32 0.0, %v5606
    %v5608 = vpop.f32.mrf.mxu0
    %v5609 = vadd.f32 0.0, %v5608
    %5610 = vdwg.mxu0
    %5611 = vmatpush.bf16.msra.mxu0 %v5343
    %5612 = vmatpush.bf16.msra.mxu0 %v5339
    %5613 = vmatpush.bf16.msra.mxu0 %v5335
    %5614 = vmatpush.bf16.msra.mxu0 %v5331
    %5615 = vmatpush.bf16.msra.mxu0 %v5327
    %5616 = vmatpush.bf16.msra.mxu0 %v5323
    %5617 = vmatpush.bf16.msra.mxu0 %v5319
    %5618 = vmatpush.bf16.msra.mxu0 %v5315
    %5619 = vmatmul.bf16.gmra.mxu0 %v5016
    %v5620 = vpop.f32.mrf.mxu0
    %v5621 = vadd.f32 %v5592, %v5620
    %v5622 = vpop.f32.mrf.mxu0
    %v5623 = vadd.f32 %v5594, %v5622
    %5624 = vmatmul.bf16.gmra.mxu0 %v5018
    %v5625 = vpop.f32.mrf.mxu0
    %v5626 = vadd.f32 %v5597, %v5625
    %v5627 = vpop.f32.mrf.mxu0
    %v5628 = vadd.f32 %v5599, %v5627
    %5629 = vmatmul.bf16.gmra.mxu0 %v5020
    %v5630 = vpop.f32.mrf.mxu0
    %v5631 = vadd.f32 %v5602, %v5630
    %v5632 = vpop.f32.mrf.mxu0
    %v5633 = vadd.f32 %v5604, %v5632
    %5634 = vmatmul.bf16.gmra.mxu0 %v5022
    %v5635 = vpop.f32.mrf.mxu0
    %v5636 = vadd.f32 %v5607, %v5635
    %v5637 = vpop.f32.mrf.mxu0
    %v5638 = vadd.f32 %v5609, %v5637
    %5639 = vdwg.mxu0
    %v5640 = vadd.f32 %v4693, %v5447
    %v5641 = vadd.f32 %v4751, %v5505
    %v5642 = vadd.f32 %v4809, %v5563
    %v5643 = vadd.f32 %v4867, %v5621
    %v5644 = vadd.f32 %v4695, %v5449
    %v5645 = vadd.f32 %v4753, %v5507
    %v5646 = vadd.f32 %v4811, %v5565
    %v5647 = vadd.f32 %v4869, %v5623
    %v5648 = vadd.f32 %v4698, %v5452
    %v5649 = vadd.f32 %v4756, %v5510
    %v5650 = vadd.f32 %v4814, %v5568
    %v5651 = vadd.f32 %v4872, %v5626
    %v5652 = vadd.f32 %v4700, %v5454
    %v5653 = vadd.f32 %v4758, %v5512
    %v5654 = vadd.f32 %v4816, %v5570
    %v5655 = vadd.f32 %v4874, %v5628
    %v5656 = vadd.f32 %v4703, %v5457
    %v5657 = vadd.f32 %v4761, %v5515
    %v5658 = vadd.f32 %v4819, %v5573
    %v5659 = vadd.f32 %v4877, %v5631
    %v5660 = vadd.f32 %v4705, %v5459
    %v5661 = vadd.f32 %v4763, %v5517
    %v5662 = vadd.f32 %v4821, %v5575
    %v5663 = vadd.f32 %v4879, %v5633
    %v5664 = vadd.f32 %v4708, %v5462
    %v5665 = vadd.f32 %v4766, %v5520
    %v5666 = vadd.f32 %v4824, %v5578
    %v5667 = vadd.f32 %v4882, %v5636
    %v5668 = vadd.f32 %v4710, %v5464
    %v5669 = vadd.f32 %v4768, %v5522
    %v5670 = vadd.f32 %v4826, %v5580
    %v5671 = vadd.f32 %v4884, %v5638
    %v5672 = vld [vmem:[#allocation3] sm:$0xf8]
    %v5673 = vld [vmem:[#allocation3 + $0x8] sm:$0xf8]
    %v5674 = vld [vmem:[#allocation3 + $0x10] sm:$0x7]
    %v5675 = vld [vmem:[#allocation3 + $0x18] sm:$0x7]
    %v5676 = vld [vmem:[#allocation3 + $0x20] sm:$0xf8]
    %v5677 = vld [vmem:[#allocation3 + $0x28] sm:$0xf8]
    %v5678 = vld [vmem:[#allocation3 + $0x30] sm:$0x7]
    %v5679 = vld [vmem:[#allocation3 + $0x38] sm:$0x7]
    %v5680 = vld [vmem:[#allocation3 + $0x40] sm:$0xf8]
    %v5681 = vld [vmem:[#allocation3 + $0x48] sm:$0xf8]
    %v5682 = vld [vmem:[#allocation3 + $0x50] sm:$0x7]
    %v5683 = vld [vmem:[#allocation3 + $0x58] sm:$0x7]
    %v5684 = vld [vmem:[#allocation3 + $0x60] sm:$0xf8]
    %v5685 = vld [vmem:[#allocation3 + $0x68] sm:$0xf8]
    %v5686 = vld [vmem:[#allocation3 + $0x70] sm:$0x7]
    %v5687 = vld [vmem:[#allocation3 + $0x78] sm:$0x7]
    %v5688 = vld [vmem:[#allocation3 + $0x80] sm:$0xf8]
    %v5689 = vld [vmem:[#allocation3 + $0x88] sm:$0xf8]
    %v5690 = vld [vmem:[#allocation3 + $0x90] sm:$0x7]
    %v5691 = vld [vmem:[#allocation3 + $0x98] sm:$0x7]
    %v5692 = vld [vmem:[#allocation3 + $0xa0] sm:$0xf8]
    %v5693 = vld [vmem:[#allocation3 + $0xa8] sm:$0xf8]
    %v5694 = vld [vmem:[#allocation3 + $0xb0] sm:$0x7]
    %v5695 = vld [vmem:[#allocation3 + $0xb8] sm:$0x7]
    %v5696 = vld [vmem:[#allocation3 + $0xc0] sm:$0xf8]
    %v5697 = vld [vmem:[#allocation3 + $0xc8] sm:$0xf8]
    %v5698 = vld [vmem:[#allocation3 + $0xd0] sm:$0x7]
    %v5699 = vld [vmem:[#allocation3 + $0xd8] sm:$0x7]
    %v5700 = vld [vmem:[#allocation3 + $0xe0] sm:$0xf8]
    %v5701 = vld [vmem:[#allocation3 + $0xe8] sm:$0xf8]
    %v5702 = vld [vmem:[#allocation3 + $0xf0] sm:$0x7]
    %v5703 = vld [vmem:[#allocation3 + $0xf8] sm:$0x7]
    %vm5736 = vcmask 1044480
    %v5737 = vrot.slane %v5672, 3
    %v5738 = vrot.slane %v5674, 3
    %v5739 = vsel %vm5736, %v5737, %v5738
    %v5740 = vrot.slane %v5673, 3
    %v5741 = vrot.slane %v5675, 3
    %v5742 = vsel %vm5736, %v5740, %v5741
    %v5743 = vrot.slane %v5676, 3
    %v5744 = vrot.slane %v5678, 3
    %v5745 = vsel %vm5736, %v5743, %v5744
    %v5746 = vrot.slane %v5677, 3
    %v5747 = vrot.slane %v5679, 3
    %v5748 = vsel %vm5736, %v5746, %v5747
    %v5749 = vrot.slane %v5680, 3
    %v5750 = vrot.slane %v5682, 3
    %v5751 = vsel %vm5736, %v5749, %v5750
    %v5752 = vrot.slane %v5681, 3
    %v5753 = vrot.slane %v5683, 3
    %v5754 = vsel %vm5736, %v5752, %v5753
    %v5755 = vrot.slane %v5684, 3
    %v5756 = vrot.slane %v5686, 3
    %v5757 = vsel %vm5736, %v5755, %v5756
    %v5758 = vrot.slane %v5685, 3
    %v5759 = vrot.slane %v5687, 3
    %v5760 = vsel %vm5736, %v5758, %v5759
    %v5761 = vrot.slane %v5688, 3
    %v5762 = vrot.slane %v5690, 3
    %v5763 = vsel %vm5736, %v5761, %v5762
    %v5764 = vrot.slane %v5689, 3
    %v5765 = vrot.slane %v5691, 3
    %v5766 = vsel %vm5736, %v5764, %v5765
    %v5767 = vrot.slane %v5692, 3
    %v5768 = vrot.slane %v5694, 3
    %v5769 = vsel %vm5736, %v5767, %v5768
    %v5770 = vrot.slane %v5693, 3
    %v5771 = vrot.slane %v5695, 3
    %v5772 = vsel %vm5736, %v5770, %v5771
    %v5773 = vrot.slane %v5696, 3
    %v5774 = vrot.slane %v5698, 3
    %v5775 = vsel %vm5736, %v5773, %v5774
    %v5776 = vrot.slane %v5697, 3
    %v5777 = vrot.slane %v5699, 3
    %v5778 = vsel %vm5736, %v5776, %v5777
    %v5779 = vrot.slane %v5700, 3
    %v5780 = vrot.slane %v5702, 3
    %v5781 = vsel %vm5736, %v5779, %v5780
    %v5782 = vrot.slane %v5701, 3
    %v5783 = vrot.slane %v5703, 3
    %v5784 = vsel %vm5736, %v5782, %v5783
    %v5801 = vpack.c.bf16 %v5745, %v5739
    %v5802 = vpack.c.bf16 %v5748, %v5742
    %v5803 = vpack.c.bf16 %v5757, %v5751
    %v5804 = vpack.c.bf16 %v5760, %v5754
    %v5805 = vpack.c.bf16 %v5769, %v5763
    %v5806 = vpack.c.bf16 %v5772, %v5766
    %v5807 = vpack.c.bf16 %v5781, %v5775
    %v5808 = vpack.c.bf16 %v5784, %v5778
    %s5809 = scalar_lea.vmem [#allocation10], 1536
    %v5810 = vld [vmem:[%s5809] sm:$0xff]
    %v5811 = vld [vmem:[%s5809 + $0x8] sm:$0xff]
    %v5812 = vld [vmem:[%s5809 + $0x10] sm:$0xff]
    %v5813 = vld [vmem:[%s5809 + $0x18] sm:$0xff]
    %v5814 = vld [vmem:[%s5809 + $0x20] sm:$0xff]
    %v5815 = vld [vmem:[%s5809 + $0x28] sm:$0xff]
    %v5816 = vld [vmem:[%s5809 + $0x30] sm:$0xff]
    %v5817 = vld [vmem:[%s5809 + $0x38] sm:$0xff]
    %v5818 = vld [vmem:[%s5809 + $0x40] sm:$0xff]
    %v5819 = vld [vmem:[%s5809 + $0x48] sm:$0xff]
    %v5820 = vld [vmem:[%s5809 + $0x50] sm:$0xff]
    %v5821 = vld [vmem:[%s5809 + $0x58] sm:$0xff]
    %v5822 = vld [vmem:[%s5809 + $0x60] sm:$0xff]
    %v5823 = vld [vmem:[%s5809 + $0x68] sm:$0xff]
    %v5824 = vld [vmem:[%s5809 + $0x70] sm:$0xff]
    %v5825 = vld [vmem:[%s5809 + $0x78] sm:$0xff]
    %v5826 = vld [vmem:[%s5809 + $0x80] sm:$0xff]
    %v5827 = vld [vmem:[%s5809 + $0x88] sm:$0xff]
    %v5828 = vld [vmem:[%s5809 + $0x90] sm:$0xff]
    %v5829 = vld [vmem:[%s5809 + $0x98] sm:$0xff]
    %v5830 = vld [vmem:[%s5809 + $0xa0] sm:$0xff]
    %v5831 = vld [vmem:[%s5809 + $0xa8] sm:$0xff]
    %v5832 = vld [vmem:[%s5809 + $0xb0] sm:$0xff]
    %v5833 = vld [vmem:[%s5809 + $0xb8] sm:$0xff]
    %v5834 = vld [vmem:[%s5809 + $0xc0] sm:$0xff]
    %v5835 = vld [vmem:[%s5809 + $0xc8] sm:$0xff]
    %v5836 = vld [vmem:[%s5809 + $0xd0] sm:$0xff]
    %v5837 = vld [vmem:[%s5809 + $0xd8] sm:$0xff]
    %v5838 = vld [vmem:[%s5809 + $0xe0] sm:$0xff]
    %v5839 = vld [vmem:[%s5809 + $0xe8] sm:$0xff]
    %v5840 = vld [vmem:[%s5809 + $0xf0] sm:$0xff]
    %v5841 = vld [vmem:[%s5809 + $0xf8] sm:$0xff]
    %v5842 = vld [vmem:[%s5809 + $0x100] sm:$0xff]
    %v5843 = vld [vmem:[%s5809 + $0x108] sm:$0xff]
    %v5844 = vld [vmem:[%s5809 + $0x110] sm:$0xff]
    %v5845 = vld [vmem:[%s5809 + $0x118] sm:$0xff]
    %v5846 = vld [vmem:[%s5809 + $0x120] sm:$0xff]
    %v5847 = vld [vmem:[%s5809 + $0x128] sm:$0xff]
    %v5848 = vld [vmem:[%s5809 + $0x130] sm:$0xff]
    %v5849 = vld [vmem:[%s5809 + $0x138] sm:$0xff]
    %v5850 = vld [vmem:[%s5809 + $0x140] sm:$0xff]
    %v5851 = vld [vmem:[%s5809 + $0x148] sm:$0xff]
    %v5852 = vld [vmem:[%s5809 + $0x150] sm:$0xff]
    %v5853 = vld [vmem:[%s5809 + $0x158] sm:$0xff]
    %v5854 = vld [vmem:[%s5809 + $0x160] sm:$0xff]
    %v5855 = vld [vmem:[%s5809 + $0x168] sm:$0xff]
    %v5856 = vld [vmem:[%s5809 + $0x170] sm:$0xff]
    %v5857 = vld [vmem:[%s5809 + $0x178] sm:$0xff]
    %v5858 = vld [vmem:[%s5809 + $0x180] sm:$0xff]
    %v5859 = vld [vmem:[%s5809 + $0x188] sm:$0xff]
    %v5860 = vld [vmem:[%s5809 + $0x190] sm:$0xff]
    %v5861 = vld [vmem:[%s5809 + $0x198] sm:$0xff]
    %v5862 = vld [vmem:[%s5809 + $0x1a0] sm:$0xff]
    %v5863 = vld [vmem:[%s5809 + $0x1a8] sm:$0xff]
    %v5864 = vld [vmem:[%s5809 + $0x1b0] sm:$0xff]
    %v5865 = vld [vmem:[%s5809 + $0x1b8] sm:$0xff]
    %v5866 = vld [vmem:[%s5809 + $0x1c0] sm:$0xff]
    %v5867 = vld [vmem:[%s5809 + $0x1c8] sm:$0xff]
    %v5868 = vld [vmem:[%s5809 + $0x1d0] sm:$0xff]
    %v5869 = vld [vmem:[%s5809 + $0x1d8] sm:$0xff]
    %v5870 = vld [vmem:[%s5809 + $0x1e0] sm:$0xff]
    %v5871 = vld [vmem:[%s5809 + $0x1e8] sm:$0xff]
    %v5872 = vld [vmem:[%s5809 + $0x1f0] sm:$0xff]
    %v5873 = vld [vmem:[%s5809 + $0x1f8] sm:$0xff]
    %v5938 = vunpack.c.l.b16 %v5810
    %v5939 = vunpack.c.h.b16 %v5810
    %v5940 = vunpack.c.l.b16 %v5811
    %v5941 = vunpack.c.h.b16 %v5811
    %v5942 = vunpack.c.l.b16 %v5812
    %v5943 = vunpack.c.h.b16 %v5812
    %v5944 = vunpack.c.l.b16 %v5813
    %v5945 = vunpack.c.h.b16 %v5813
    %v5946 = vunpack.c.l.b16 %v5814
    %v5947 = vunpack.c.h.b16 %v5814
    %v5948 = vunpack.c.l.b16 %v5815
    %v5949 = vunpack.c.h.b16 %v5815
    %v5950 = vunpack.c.l.b16 %v5816
    %v5951 = vunpack.c.h.b16 %v5816
    %v5952 = vunpack.c.l.b16 %v5817
    %v5953 = vunpack.c.h.b16 %v5817
    %v5954 = vunpack.c.l.b16 %v5818
    %v5955 = vunpack.c.h.b16 %v5818
    %v5956 = vunpack.c.l.b16 %v5819
    %v5957 = vunpack.c.h.b16 %v5819
    %v5958 = vunpack.c.l.b16 %v5820
    %v5959 = vunpack.c.h.b16 %v5820
    %v5960 = vunpack.c.l.b16 %v5821
    %v5961 = vunpack.c.h.b16 %v5821
    %v5962 = vunpack.c.l.b16 %v5822
    %v5963 = vunpack.c.h.b16 %v5822
    %v5964 = vunpack.c.l.b16 %v5823
    %v5965 = vunpack.c.h.b16 %v5823
    %v5966 = vunpack.c.l.b16 %v5824
    %v5967 = vunpack.c.h.b16 %v5824
    %v5968 = vunpack.c.l.b16 %v5825
    %v5969 = vunpack.c.h.b16 %v5825
    %v5970 = vunpack.c.l.b16 %v5826
    %v5971 = vunpack.c.h.b16 %v5826
    %v5972 = vunpack.c.l.b16 %v5827
    %v5973 = vunpack.c.h.b16 %v5827
    %v5974 = vunpack.c.l.b16 %v5828
    %v5975 = vunpack.c.h.b16 %v5828
    %v5976 = vunpack.c.l.b16 %v5829
    %v5977 = vunpack.c.h.b16 %v5829
    %v5978 = vunpack.c.l.b16 %v5830
    %v5979 = vunpack.c.h.b16 %v5830
    %v5980 = vunpack.c.l.b16 %v5831
    %v5981 = vunpack.c.h.b16 %v5831
    %v5982 = vunpack.c.l.b16 %v5832
    %v5983 = vunpack.c.h.b16 %v5832
    %v5984 = vunpack.c.l.b16 %v5833
    %v5985 = vunpack.c.h.b16 %v5833
    %v5986 = vunpack.c.l.b16 %v5834
    %v5987 = vunpack.c.h.b16 %v5834
    %v5988 = vunpack.c.l.b16 %v5835
    %v5989 = vunpack.c.h.b16 %v5835
    %v5990 = vunpack.c.l.b16 %v5836
    %v5991 = vunpack.c.h.b16 %v5836
    %v5992 = vunpack.c.l.b16 %v5837
    %v5993 = vunpack.c.h.b16 %v5837
    %v5994 = vunpack.c.l.b16 %v5838
    %v5995 = vunpack.c.h.b16 %v5838
    %v5996 = vunpack.c.l.b16 %v5839
    %v5997 = vunpack.c.h.b16 %v5839
    %v5998 = vunpack.c.l.b16 %v5840
    %v5999 = vunpack.c.h.b16 %v5840
    %v6000 = vunpack.c.l.b16 %v5841
    %v6001 = vunpack.c.h.b16 %v5841
    %v6002 = vunpack.c.l.b16 %v5842
    %v6003 = vunpack.c.h.b16 %v5842
    %v6004 = vunpack.c.l.b16 %v5843
    %v6005 = vunpack.c.h.b16 %v5843
    %v6006 = vunpack.c.l.b16 %v5844
    %v6007 = vunpack.c.h.b16 %v5844
    %v6008 = vunpack.c.l.b16 %v5845
    %v6009 = vunpack.c.h.b16 %v5845
    %v6010 = vunpack.c.l.b16 %v5846
    %v6011 = vunpack.c.h.b16 %v5846
    %v6012 = vunpack.c.l.b16 %v5847
    %v6013 = vunpack.c.h.b16 %v5847
    %v6014 = vunpack.c.l.b16 %v5848
    %v6015 = vunpack.c.h.b16 %v5848
    %v6016 = vunpack.c.l.b16 %v5849
    %v6017 = vunpack.c.h.b16 %v5849
    %v6018 = vunpack.c.l.b16 %v5850
    %v6019 = vunpack.c.h.b16 %v5850
    %v6020 = vunpack.c.l.b16 %v5851
    %v6021 = vunpack.c.h.b16 %v5851
    %v6022 = vunpack.c.l.b16 %v5852
    %v6023 = vunpack.c.h.b16 %v5852
    %v6024 = vunpack.c.l.b16 %v5853
    %v6025 = vunpack.c.h.b16 %v5853
    %v6026 = vunpack.c.l.b16 %v5854
    %v6027 = vunpack.c.h.b16 %v5854
    %v6028 = vunpack.c.l.b16 %v5855
    %v6029 = vunpack.c.h.b16 %v5855
    %v6030 = vunpack.c.l.b16 %v5856
    %v6031 = vunpack.c.h.b16 %v5856
    %v6032 = vunpack.c.l.b16 %v5857
    %v6033 = vunpack.c.h.b16 %v5857
    %v6034 = vunpack.c.l.b16 %v5858
    %v6035 = vunpack.c.h.b16 %v5858
    %v6036 = vunpack.c.l.b16 %v5859
    %v6037 = vunpack.c.h.b16 %v5859
    %v6038 = vunpack.c.l.b16 %v5860
    %v6039 = vunpack.c.h.b16 %v5860
    %v6040 = vunpack.c.l.b16 %v5861
    %v6041 = vunpack.c.h.b16 %v5861
    %v6042 = vunpack.c.l.b16 %v5862
    %v6043 = vunpack.c.h.b16 %v5862
    %v6044 = vunpack.c.l.b16 %v5863
    %v6045 = vunpack.c.h.b16 %v5863
    %v6046 = vunpack.c.l.b16 %v5864
    %v6047 = vunpack.c.h.b16 %v5864
    %v6048 = vunpack.c.l.b16 %v5865
    %v6049 = vunpack.c.h.b16 %v5865
    %v6050 = vunpack.c.l.b16 %v5866
    %v6051 = vunpack.c.h.b16 %v5866
    %v6052 = vunpack.c.l.b16 %v5867
    %v6053 = vunpack.c.h.b16 %v5867
    %v6054 = vunpack.c.l.b16 %v5868
    %v6055 = vunpack.c.h.b16 %v5868
    %v6056 = vunpack.c.l.b16 %v5869
    %v6057 = vunpack.c.h.b16 %v5869
    %v6058 = vunpack.c.l.b16 %v5870
    %v6059 = vunpack.c.h.b16 %v5870
    %v6060 = vunpack.c.l.b16 %v5871
    %v6061 = vunpack.c.h.b16 %v5871
    %v6062 = vunpack.c.l.b16 %v5872
    %v6063 = vunpack.c.h.b16 %v5872
    %v6064 = vunpack.c.l.b16 %v5873
    %v6065 = vunpack.c.h.b16 %v5873
    %v6066 = vpack.c.b16 %v5942, %v5938
    %v6067 = vpack.c.b16 %v5943, %v5939
    %v6068 = vpack.c.b16 %v5944, %v5940
    %v6069 = vpack.c.b16 %v5945, %v5941
    %v6070 = vpack.c.b16 %v5950, %v5946
    %v6071 = vpack.c.b16 %v5951, %v5947
    %v6072 = vpack.c.b16 %v5952, %v5948
    %v6073 = vpack.c.b16 %v5953, %v5949
    %v6074 = vpack.c.b16 %v5958, %v5954
    %v6075 = vpack.c.b16 %v5959, %v5955
    %v6076 = vpack.c.b16 %v5960, %v5956
    %v6077 = vpack.c.b16 %v5961, %v5957
    %v6078 = vpack.c.b16 %v5966, %v5962
    %v6079 = vpack.c.b16 %v5967, %v5963
    %v6080 = vpack.c.b16 %v5968, %v5964
    %v6081 = vpack.c.b16 %v5969, %v5965
    %v6082 = vpack.c.b16 %v5974, %v5970
    %v6083 = vpack.c.b16 %v5975, %v5971
    %v6084 = vpack.c.b16 %v5976, %v5972
    %v6085 = vpack.c.b16 %v5977, %v5973
    %v6086 = vpack.c.b16 %v5982, %v5978
    %v6087 = vpack.c.b16 %v5983, %v5979
    %v6088 = vpack.c.b16 %v5984, %v5980
    %v6089 = vpack.c.b16 %v5985, %v5981
    %v6090 = vpack.c.b16 %v5990, %v5986
    %v6091 = vpack.c.b16 %v5991, %v5987
    %v6092 = vpack.c.b16 %v5992, %v5988
    %v6093 = vpack.c.b16 %v5993, %v5989
    %v6094 = vpack.c.b16 %v5998, %v5994
    %v6095 = vpack.c.b16 %v5999, %v5995
    %v6096 = vpack.c.b16 %v6000, %v5996
    %v6097 = vpack.c.b16 %v6001, %v5997
    %v6098 = vpack.c.b16 %v6006, %v6002
    %v6099 = vpack.c.b16 %v6007, %v6003
    %v6100 = vpack.c.b16 %v6008, %v6004
    %v6101 = vpack.c.b16 %v6009, %v6005
    %v6102 = vpack.c.b16 %v6014, %v6010
    %v6103 = vpack.c.b16 %v6015, %v6011
    %v6104 = vpack.c.b16 %v6016, %v6012
    %v6105 = vpack.c.b16 %v6017, %v6013
    %v6106 = vpack.c.b16 %v6022, %v6018
    %v6107 = vpack.c.b16 %v6023, %v6019
    %v6108 = vpack.c.b16 %v6024, %v6020
    %v6109 = vpack.c.b16 %v6025, %v6021
    %v6110 = vpack.c.b16 %v6030, %v6026
    %v6111 = vpack.c.b16 %v6031, %v6027
    %v6112 = vpack.c.b16 %v6032, %v6028
    %v6113 = vpack.c.b16 %v6033, %v6029
    %v6114 = vpack.c.b16 %v6038, %v6034
    %v6115 = vpack.c.b16 %v6039, %v6035
    %v6116 = vpack.c.b16 %v6040, %v6036
    %v6117 = vpack.c.b16 %v6041, %v6037
    %v6118 = vpack.c.b16 %v6046, %v6042
    %v6119 = vpack.c.b16 %v6047, %v6043
    %v6120 = vpack.c.b16 %v6048, %v6044
    %v6121 = vpack.c.b16 %v6049, %v6045
    %v6122 = vpack.c.b16 %v6054, %v6050
    %v6123 = vpack.c.b16 %v6055, %v6051
    %v6124 = vpack.c.b16 %v6056, %v6052
    %v6125 = vpack.c.b16 %v6057, %v6053
    %v6126 = vpack.c.b16 %v6062, %v6058
    %v6127 = vpack.c.b16 %v6063, %v6059
    %v6128 = vpack.c.b16 %v6064, %v6060
    %v6129 = vpack.c.b16 %v6065, %v6061
    %6194 = vmatpush.bf16.msra.mxu0 %v6094
    %6195 = vmatpush.bf16.msra.mxu0 %v6090
    %6196 = vmatpush.bf16.msra.mxu0 %v6086
    %6197 = vmatpush.bf16.msra.mxu0 %v6082
    %6198 = vmatpush.bf16.msra.mxu0 %v6078
    %6199 = vmatpush.bf16.msra.mxu0 %v6074
    %6200 = vmatpush.bf16.msra.mxu0 %v6070
    %6201 = vmatpush.bf16.msra.mxu0 %v6066
    %6202 = vmatmul.bf16.gmra.mxu0 %v5801
    %v6203 = vpop.f32.mrf.mxu0
    %v6204 = vadd.f32 0.0, %v6203
    %v6205 = vpop.f32.mrf.mxu0
    %v6206 = vadd.f32 0.0, %v6205
    %6207 = vmatmul.bf16.gmra.mxu0 %v5803
    %v6208 = vpop.f32.mrf.mxu0
    %v6209 = vadd.f32 0.0, %v6208
    %v6210 = vpop.f32.mrf.mxu0
    %v6211 = vadd.f32 0.0, %v6210
    %6212 = vmatmul.bf16.gmra.mxu0 %v5805
    %v6213 = vpop.f32.mrf.mxu0
    %v6214 = vadd.f32 0.0, %v6213
    %v6215 = vpop.f32.mrf.mxu0
    %v6216 = vadd.f32 0.0, %v6215
    %6217 = vmatmul.bf16.gmra.mxu0 %v5807
    %v6218 = vpop.f32.mrf.mxu0
    %v6219 = vadd.f32 0.0, %v6218
    %v6220 = vpop.f32.mrf.mxu0
    %v6221 = vadd.f32 0.0, %v6220
    %6222 = vdwg.mxu0
    %6223 = vmatpush.bf16.msra.mxu0 %v6126
    %6224 = vmatpush.bf16.msra.mxu0 %v6122
    %6225 = vmatpush.bf16.msra.mxu0 %v6118
    %6226 = vmatpush.bf16.msra.mxu0 %v6114
    %6227 = vmatpush.bf16.msra.mxu0 %v6110
    %6228 = vmatpush.bf16.msra.mxu0 %v6106
    %6229 = vmatpush.bf16.msra.mxu0 %v6102
    %6230 = vmatpush.bf16.msra.mxu0 %v6098
    %6231 = vmatmul.bf16.gmra.mxu0 %v5802
    %v6232 = vpop.f32.mrf.mxu0
    %v6233 = vadd.f32 %v6204, %v6232
    %v6234 = vpop.f32.mrf.mxu0
    %v6235 = vadd.f32 %v6206, %v6234
    %6236 = vmatmul.bf16.gmra.mxu0 %v5804
    %v6237 = vpop.f32.mrf.mxu0
    %v6238 = vadd.f32 %v6209, %v6237
    %v6239 = vpop.f32.mrf.mxu0
    %v6240 = vadd.f32 %v6211, %v6239
    %6241 = vmatmul.bf16.gmra.mxu0 %v5806
    %v6242 = vpop.f32.mrf.mxu0
    %v6243 = vadd.f32 %v6214, %v6242
    %v6244 = vpop.f32.mrf.mxu0
    %v6245 = vadd.f32 %v6216, %v6244
    %6246 = vmatmul.bf16.gmra.mxu0 %v5808
    %v6247 = vpop.f32.mrf.mxu0
    %v6248 = vadd.f32 %v6219, %v6247
    %v6249 = vpop.f32.mrf.mxu0
    %v6250 = vadd.f32 %v6221, %v6249
    %6251 = vdwg.mxu0
    %6252 = vmatpush.bf16.msra.mxu0 %v6095
    %6253 = vmatpush.bf16.msra.mxu0 %v6091
    %6254 = vmatpush.bf16.msra.mxu0 %v6087
    %6255 = vmatpush.bf16.msra.mxu0 %v6083
    %6256 = vmatpush.bf16.msra.mxu0 %v6079
    %6257 = vmatpush.bf16.msra.mxu0 %v6075
    %6258 = vmatpush.bf16.msra.mxu0 %v6071
    %6259 = vmatpush.bf16.msra.mxu0 %v6067
    %6260 = vmatmul.bf16.gmra.mxu0 %v5801
    %v6261 = vpop.f32.mrf.mxu0
    %v6262 = vadd.f32 0.0, %v6261
    %v6263 = vpop.f32.mrf.mxu0
    %v6264 = vadd.f32 0.0, %v6263
    %6265 = vmatmul.bf16.gmra.mxu0 %v5803
    %v6266 = vpop.f32.mrf.mxu0
    %v6267 = vadd.f32 0.0, %v6266
    %v6268 = vpop.f32.mrf.mxu0
    %v6269 = vadd.f32 0.0, %v6268
    %6270 = vmatmul.bf16.gmra.mxu0 %v5805
    %v6271 = vpop.f32.mrf.mxu0
    %v6272 = vadd.f32 0.0, %v6271
    %v6273 = vpop.f32.mrf.mxu0
    %v6274 = vadd.f32 0.0, %v6273
    %6275 = vmatmul.bf16.gmra.mxu0 %v5807
    %v6276 = vpop.f32.mrf.mxu0
    %v6277 = vadd.f32 0.0, %v6276
    %v6278 = vpop.f32.mrf.mxu0
    %v6279 = vadd.f32 0.0, %v6278
    %6280 = vdwg.mxu0
    %6281 = vmatpush.bf16.msra.mxu0 %v6127
    %6282 = vmatpush.bf16.msra.mxu0 %v6123
    %6283 = vmatpush.bf16.msra.mxu0 %v6119
    %6284 = vmatpush.bf16.msra.mxu0 %v6115
    %6285 = vmatpush.bf16.msra.mxu0 %v6111
    %6286 = vmatpush.bf16.msra.mxu0 %v6107
    %6287 = vmatpush.bf16.msra.mxu0 %v6103
    %6288 = vmatpush.bf16.msra.mxu0 %v6099
    %6289 = vmatmul.bf16.gmra.mxu0 %v5802
    %v6290 = vpop.f32.mrf.mxu0
    %v6291 = vadd.f32 %v6262, %v6290
    %v6292 = vpop.f32.mrf.mxu0
    %v6293 = vadd.f32 %v6264, %v6292
    %6294 = vmatmul.bf16.gmra.mxu0 %v5804
    %v6295 = vpop.f32.mrf.mxu0
    %v6296 = vadd.f32 %v6267, %v6295
    %v6297 = vpop.f32.mrf.mxu0
    %v6298 = vadd.f32 %v6269, %v6297
    %6299 = vmatmul.bf16.gmra.mxu0 %v5806
    %v6300 = vpop.f32.mrf.mxu0
    %v6301 = vadd.f32 %v6272, %v6300
    %v6302 = vpop.f32.mrf.mxu0
    %v6303 = vadd.f32 %v6274, %v6302
    %6304 = vmatmul.bf16.gmra.mxu0 %v5808
    %v6305 = vpop.f32.mrf.mxu0
    %v6306 = vadd.f32 %v6277, %v6305
    %v6307 = vpop.f32.mrf.mxu0
    %v6308 = vadd.f32 %v6279, %v6307
    %6309 = vdwg.mxu0
    %6310 = vmatpush.bf16.msra.mxu0 %v6096
    %6311 = vmatpush.bf16.msra.mxu0 %v6092
    %6312 = vmatpush.bf16.msra.mxu0 %v6088
    %6313 = vmatpush.bf16.msra.mxu0 %v6084
    %6314 = vmatpush.bf16.msra.mxu0 %v6080
    %6315 = vmatpush.bf16.msra.mxu0 %v6076
    %6316 = vmatpush.bf16.msra.mxu0 %v6072
    %6317 = vmatpush.bf16.msra.mxu0 %v6068
    %6318 = vmatmul.bf16.gmra.mxu0 %v5801
    %v6319 = vpop.f32.mrf.mxu0
    %v6320 = vadd.f32 0.0, %v6319
    %v6321 = vpop.f32.mrf.mxu0
    %v6322 = vadd.f32 0.0, %v6321
    %6323 = vmatmul.bf16.gmra.mxu0 %v5803
    %v6324 = vpop.f32.mrf.mxu0
    %v6325 = vadd.f32 0.0, %v6324
    %v6326 = vpop.f32.mrf.mxu0
    %v6327 = vadd.f32 0.0, %v6326
    %6328 = vmatmul.bf16.gmra.mxu0 %v5805
    %v6329 = vpop.f32.mrf.mxu0
    %v6330 = vadd.f32 0.0, %v6329
    %v6331 = vpop.f32.mrf.mxu0
    %v6332 = vadd.f32 0.0, %v6331
    %6333 = vmatmul.bf16.gmra.mxu0 %v5807
    %v6334 = vpop.f32.mrf.mxu0
    %v6335 = vadd.f32 0.0, %v6334
    %v6336 = vpop.f32.mrf.mxu0
    %v6337 = vadd.f32 0.0, %v6336
    %6338 = vdwg.mxu0
    %6339 = vmatpush.bf16.msra.mxu0 %v6128
    %6340 = vmatpush.bf16.msra.mxu0 %v6124
    %6341 = vmatpush.bf16.msra.mxu0 %v6120
    %6342 = vmatpush.bf16.msra.mxu0 %v6116
    %6343 = vmatpush.bf16.msra.mxu0 %v6112
    %6344 = vmatpush.bf16.msra.mxu0 %v6108
    %6345 = vmatpush.bf16.msra.mxu0 %v6104
    %6346 = vmatpush.bf16.msra.mxu0 %v6100
    %6347 = vmatmul.bf16.gmra.mxu0 %v5802
    %v6348 = vpop.f32.mrf.mxu0
    %v6349 = vadd.f32 %v6320, %v6348
    %v6350 = vpop.f32.mrf.mxu0
    %v6351 = vadd.f32 %v6322, %v6350
    %6352 = vmatmul.bf16.gmra.mxu0 %v5804
    %v6353 = vpop.f32.mrf.mxu0
    %v6354 = vadd.f32 %v6325, %v6353
    %v6355 = vpop.f32.mrf.mxu0
    %v6356 = vadd.f32 %v6327, %v6355
    %6357 = vmatmul.bf16.gmra.mxu0 %v5806
    %v6358 = vpop.f32.mrf.mxu0
    %v6359 = vadd.f32 %v6330, %v6358
    %v6360 = vpop.f32.mrf.mxu0
    %v6361 = vadd.f32 %v6332, %v6360
    %6362 = vmatmul.bf16.gmra.mxu0 %v5808
    %v6363 = vpop.f32.mrf.mxu0
    %v6364 = vadd.f32 %v6335, %v6363
    %v6365 = vpop.f32.mrf.mxu0
    %v6366 = vadd.f32 %v6337, %v6365
    %6367 = vdwg.mxu0
    %6368 = vmatpush.bf16.msra.mxu0 %v6097
    %6369 = vmatpush.bf16.msra.mxu0 %v6093
    %6370 = vmatpush.bf16.msra.mxu0 %v6089
    %6371 = vmatpush.bf16.msra.mxu0 %v6085
    %6372 = vmatpush.bf16.msra.mxu0 %v6081
    %6373 = vmatpush.bf16.msra.mxu0 %v6077
    %6374 = vmatpush.bf16.msra.mxu0 %v6073
    %6375 = vmatpush.bf16.msra.mxu0 %v6069
    %6376 = vmatmul.bf16.gmra.mxu0 %v5801
    %v6377 = vpop.f32.mrf.mxu0
    %v6378 = vadd.f32 0.0, %v6377
    %v6379 = vpop.f32.mrf.mxu0
    %v6380 = vadd.f32 0.0, %v6379
    %6381 = vmatmul.bf16.gmra.mxu0 %v5803
    %v6382 = vpop.f32.mrf.mxu0
    %v6383 = vadd.f32 0.0, %v6382
    %v6384 = vpop.f32.mrf.mxu0
    %v6385 = vadd.f32 0.0, %v6384
    %6386 = vmatmul.bf16.gmra.mxu0 %v5805
    %v6387 = vpop.f32.mrf.mxu0
    %v6388 = vadd.f32 0.0, %v6387
    %v6389 = vpop.f32.mrf.mxu0
    %v6390 = vadd.f32 0.0, %v6389
    %6391 = vmatmul.bf16.gmra.mxu0 %v5807
    %v6392 = vpop.f32.mrf.mxu0
    %v6393 = vadd.f32 0.0, %v6392
    %v6394 = vpop.f32.mrf.mxu0
    %v6395 = vadd.f32 0.0, %v6394
    %6396 = vdwg.mxu0
    %6397 = vmatpush.bf16.msra.mxu0 %v6129
    %6398 = vmatpush.bf16.msra.mxu0 %v6125
    %6399 = vmatpush.bf16.msra.mxu0 %v6121
    %6400 = vmatpush.bf16.msra.mxu0 %v6117
    %6401 = vmatpush.bf16.msra.mxu0 %v6113
    %6402 = vmatpush.bf16.msra.mxu0 %v6109
    %6403 = vmatpush.bf16.msra.mxu0 %v6105
    %6404 = vmatpush.bf16.msra.mxu0 %v6101
    %6405 = vmatmul.bf16.gmra.mxu0 %v5802
    %v6406 = vpop.f32.mrf.mxu0
    %v6407 = vadd.f32 %v6378, %v6406
    %v6408 = vpop.f32.mrf.mxu0
    %v6409 = vadd.f32 %v6380, %v6408
    %6410 = vmatmul.bf16.gmra.mxu0 %v5804
    %v6411 = vpop.f32.mrf.mxu0
    %v6412 = vadd.f32 %v6383, %v6411
    %v6413 = vpop.f32.mrf.mxu0
    %v6414 = vadd.f32 %v6385, %v6413
    %6415 = vmatmul.bf16.gmra.mxu0 %v5806
    %v6416 = vpop.f32.mrf.mxu0
    %v6417 = vadd.f32 %v6388, %v6416
    %v6418 = vpop.f32.mrf.mxu0
    %v6419 = vadd.f32 %v6390, %v6418
    %6420 = vmatmul.bf16.gmra.mxu0 %v5808
    %v6421 = vpop.f32.mrf.mxu0
    %v6422 = vadd.f32 %v6393, %v6421
    %v6423 = vpop.f32.mrf.mxu0
    %v6424 = vadd.f32 %v6395, %v6423
    %6425 = vdwg.mxu0
    %v6426 = vadd.f32 %v5640, %v6233
    %v6427 = vadd.f32 %v5641, %v6291
    %v6428 = vadd.f32 %v5642, %v6349
    %v6429 = vadd.f32 %v5643, %v6407
    %v6430 = vadd.f32 %v5644, %v6235
    %v6431 = vadd.f32 %v5645, %v6293
    %v6432 = vadd.f32 %v5646, %v6351
    %v6433 = vadd.f32 %v5647, %v6409
    %v6434 = vadd.f32 %v5648, %v6238
    %v6435 = vadd.f32 %v5649, %v6296
    %v6436 = vadd.f32 %v5650, %v6354
    %v6437 = vadd.f32 %v5651, %v6412
    %v6438 = vadd.f32 %v5652, %v6240
    %v6439 = vadd.f32 %v5653, %v6298
    %v6440 = vadd.f32 %v5654, %v6356
    %v6441 = vadd.f32 %v5655, %v6414
    %v6442 = vadd.f32 %v5656, %v6243
    %v6443 = vadd.f32 %v5657, %v6301
    %v6444 = vadd.f32 %v5658, %v6359
    %v6445 = vadd.f32 %v5659, %v6417
    %v6446 = vadd.f32 %v5660, %v6245
    %v6447 = vadd.f32 %v5661, %v6303
    %v6448 = vadd.f32 %v5662, %v6361
    %v6449 = vadd.f32 %v5663, %v6419
    %v6450 = vadd.f32 %v5664, %v6248
    %v6451 = vadd.f32 %v5665, %v6306
    %v6452 = vadd.f32 %v5666, %v6364
    %v6453 = vadd.f32 %v5667, %v6422
    %v6454 = vadd.f32 %v5668, %v6250
    %v6455 = vadd.f32 %v5669, %v6308
    %v6456 = vadd.f32 %v5670, %v6366
    %v6457 = vadd.f32 %v5671, %v6424
    %v6458 = vld [vmem:[#allocation3] sm:$0xf0]
    %v6459 = vld [vmem:[#allocation3 + $0x8] sm:$0xf0]
    %v6460 = vld [vmem:[#allocation3 + $0x10] sm:$0xf]
    %v6461 = vld [vmem:[#allocation3 + $0x18] sm:$0xf]
    %v6462 = vld [vmem:[#allocation3 + $0x20] sm:$0xf0]
    %v6463 = vld [vmem:[#allocation3 + $0x28] sm:$0xf0]
    %v6464 = vld [vmem:[#allocation3 + $0x30] sm:$0xf]
    %v6465 = vld [vmem:[#allocation3 + $0x38] sm:$0xf]
    %v6466 = vld [vmem:[#allocation3 + $0x40] sm:$0xf0]
    %v6467 = vld [vmem:[#allocation3 + $0x48] sm:$0xf0]
    %v6468 = vld [vmem:[#allocation3 + $0x50] sm:$0xf]
    %v6469 = vld [vmem:[#allocation3 + $0x58] sm:$0xf]
    %v6470 = vld [vmem:[#allocation3 + $0x60] sm:$0xf0]
    %v6471 = vld [vmem:[#allocation3 + $0x68] sm:$0xf0]
    %v6472 = vld [vmem:[#allocation3 + $0x70] sm:$0xf]
    %v6473 = vld [vmem:[#allocation3 + $0x78] sm:$0xf]
    %v6474 = vld [vmem:[#allocation3 + $0x80] sm:$0xf0]
    %v6475 = vld [vmem:[#allocation3 + $0x88] sm:$0xf0]
    %v6476 = vld [vmem:[#allocation3 + $0x90] sm:$0xf]
    %v6477 = vld [vmem:[#allocation3 + $0x98] sm:$0xf]
    %v6478 = vld [vmem:[#allocation3 + $0xa0] sm:$0xf0]
    %v6479 = vld [vmem:[#allocation3 + $0xa8] sm:$0xf0]
    %v6480 = vld [vmem:[#allocation3 + $0xb0] sm:$0xf]
    %v6481 = vld [vmem:[#allocation3 + $0xb8] sm:$0xf]
    %v6482 = vld [vmem:[#allocation3 + $0xc0] sm:$0xf0]
    %v6483 = vld [vmem:[#allocation3 + $0xc8] sm:$0xf0]
    %v6484 = vld [vmem:[#allocation3 + $0xd0] sm:$0xf]
    %v6485 = vld [vmem:[#allocation3 + $0xd8] sm:$0xf]
    %v6486 = vld [vmem:[#allocation3 + $0xe0] sm:$0xf0]
    %v6487 = vld [vmem:[#allocation3 + $0xe8] sm:$0xf0]
    %v6488 = vld [vmem:[#allocation3 + $0xf0] sm:$0xf]
    %v6489 = vld [vmem:[#allocation3 + $0xf8] sm:$0xf]
    %vm6522 = vcmask 1043456
    %v6523 = vrot.slane %v6458, 4
    %v6524 = vrot.slane %v6460, 4
    %v6525 = vsel %vm6522, %v6523, %v6524
    %v6526 = vrot.slane %v6459, 4
    %v6527 = vrot.slane %v6461, 4
    %v6528 = vsel %vm6522, %v6526, %v6527
    %v6529 = vrot.slane %v6462, 4
    %v6530 = vrot.slane %v6464, 4
    %v6531 = vsel %vm6522, %v6529, %v6530
    %v6532 = vrot.slane %v6463, 4
    %v6533 = vrot.slane %v6465, 4
    %v6534 = vsel %vm6522, %v6532, %v6533
    %v6535 = vrot.slane %v6466, 4
    %v6536 = vrot.slane %v6468, 4
    %v6537 = vsel %vm6522, %v6535, %v6536
    %v6538 = vrot.slane %v6467, 4
    %v6539 = vrot.slane %v6469, 4
    %v6540 = vsel %vm6522, %v6538, %v6539
    %v6541 = vrot.slane %v6470, 4
    %v6542 = vrot.slane %v6472, 4
    %v6543 = vsel %vm6522, %v6541, %v6542
    %v6544 = vrot.slane %v6471, 4
    %v6545 = vrot.slane %v6473, 4
    %v6546 = vsel %vm6522, %v6544, %v6545
    %v6547 = vrot.slane %v6474, 4
    %v6548 = vrot.slane %v6476, 4
    %v6549 = vsel %vm6522, %v6547, %v6548
    %v6550 = vrot.slane %v6475, 4
    %v6551 = vrot.slane %v6477, 4
    %v6552 = vsel %vm6522, %v6550, %v6551
    %v6553 = vrot.slane %v6478, 4
    %v6554 = vrot.slane %v6480, 4
    %v6555 = vsel %vm6522, %v6553, %v6554
    %v6556 = vrot.slane %v6479, 4
    %v6557 = vrot.slane %v6481, 4
    %v6558 = vsel %vm6522, %v6556, %v6557
    %v6559 = vrot.slane %v6482, 4
    %v6560 = vrot.slane %v6484, 4
    %v6561 = vsel %vm6522, %v6559, %v6560
    %v6562 = vrot.slane %v6483, 4
    %v6563 = vrot.slane %v6485, 4
    %v6564 = vsel %vm6522, %v6562, %v6563
    %v6565 = vrot.slane %v6486, 4
    %v6566 = vrot.slane %v6488, 4
    %v6567 = vsel %vm6522, %v6565, %v6566
    %v6568 = vrot.slane %v6487, 4
    %v6569 = vrot.slane %v6489, 4
    %v6570 = vsel %vm6522, %v6568, %v6569
    %v6587 = vpack.c.bf16 %v6531, %v6525
    %v6588 = vpack.c.bf16 %v6534, %v6528
    %v6589 = vpack.c.bf16 %v6543, %v6537
    %v6590 = vpack.c.bf16 %v6546, %v6540
    %v6591 = vpack.c.bf16 %v6555, %v6549
    %v6592 = vpack.c.bf16 %v6558, %v6552
    %v6593 = vpack.c.bf16 %v6567, %v6561
    %v6594 = vpack.c.bf16 %v6570, %v6564
    %s6595 = scalar_lea.vmem [#allocation10], 2048
    %v6596 = vld [vmem:[%s6595] sm:$0xff]
    %v6597 = vld [vmem:[%s6595 + $0x8] sm:$0xff]
    %v6598 = vld [vmem:[%s6595 + $0x10] sm:$0xff]
    %v6599 = vld [vmem:[%s6595 + $0x18] sm:$0xff]
    %v6600 = vld [vmem:[%s6595 + $0x20] sm:$0xff]
    %v6601 = vld [vmem:[%s6595 + $0x28] sm:$0xff]
    %v6602 = vld [vmem:[%s6595 + $0x30] sm:$0xff]
    %v6603 = vld [vmem:[%s6595 + $0x38] sm:$0xff]
    %v6604 = vld [vmem:[%s6595 + $0x40] sm:$0xff]
    %v6605 = vld [vmem:[%s6595 + $0x48] sm:$0xff]
    %v6606 = vld [vmem:[%s6595 + $0x50] sm:$0xff]
    %v6607 = vld [vmem:[%s6595 + $0x58] sm:$0xff]
    %v6608 = vld [vmem:[%s6595 + $0x60] sm:$0xff]
    %v6609 = vld [vmem:[%s6595 + $0x68] sm:$0xff]
    %v6610 = vld [vmem:[%s6595 + $0x70] sm:$0xff]
    %v6611 = vld [vmem:[%s6595 + $0x78] sm:$0xff]
    %v6612 = vld [vmem:[%s6595 + $0x80] sm:$0xff]
    %v6613 = vld [vmem:[%s6595 + $0x88] sm:$0xff]
    %v6614 = vld [vmem:[%s6595 + $0x90] sm:$0xff]
    %v6615 = vld [vmem:[%s6595 + $0x98] sm:$0xff]
    %v6616 = vld [vmem:[%s6595 + $0xa0] sm:$0xff]
    %v6617 = vld [vmem:[%s6595 + $0xa8] sm:$0xff]
    %v6618 = vld [vmem:[%s6595 + $0xb0] sm:$0xff]
    %v6619 = vld [vmem:[%s6595 + $0xb8] sm:$0xff]
    %v6620 = vld [vmem:[%s6595 + $0xc0] sm:$0xff]
    %v6621 = vld [vmem:[%s6595 + $0xc8] sm:$0xff]
    %v6622 = vld [vmem:[%s6595 + $0xd0] sm:$0xff]
    %v6623 = vld [vmem:[%s6595 + $0xd8] sm:$0xff]
    %v6624 = vld [vmem:[%s6595 + $0xe0] sm:$0xff]
    %v6625 = vld [vmem:[%s6595 + $0xe8] sm:$0xff]
    %v6626 = vld [vmem:[%s6595 + $0xf0] sm:$0xff]
    %v6627 = vld [vmem:[%s6595 + $0xf8] sm:$0xff]
    %v6628 = vld [vmem:[%s6595 + $0x100] sm:$0xff]
    %v6629 = vld [vmem:[%s6595 + $0x108] sm:$0xff]
    %v6630 = vld [vmem:[%s6595 + $0x110] sm:$0xff]
    %v6631 = vld [vmem:[%s6595 + $0x118] sm:$0xff]
    %v6632 = vld [vmem:[%s6595 + $0x120] sm:$0xff]
    %v6633 = vld [vmem:[%s6595 + $0x128] sm:$0xff]
    %v6634 = vld [vmem:[%s6595 + $0x130] sm:$0xff]
    %v6635 = vld [vmem:[%s6595 + $0x138] sm:$0xff]
    %v6636 = vld [vmem:[%s6595 + $0x140] sm:$0xff]
    %v6637 = vld [vmem:[%s6595 + $0x148] sm:$0xff]
    %v6638 = vld [vmem:[%s6595 + $0x150] sm:$0xff]
    %v6639 = vld [vmem:[%s6595 + $0x158] sm:$0xff]
    %v6640 = vld [vmem:[%s6595 + $0x160] sm:$0xff]
    %v6641 = vld [vmem:[%s6595 + $0x168] sm:$0xff]
    %v6642 = vld [vmem:[%s6595 + $0x170] sm:$0xff]
    %v6643 = vld [vmem:[%s6595 + $0x178] sm:$0xff]
    %v6644 = vld [vmem:[%s6595 + $0x180] sm:$0xff]
    %v6645 = vld [vmem:[%s6595 + $0x188] sm:$0xff]
    %v6646 = vld [vmem:[%s6595 + $0x190] sm:$0xff]
    %v6647 = vld [vmem:[%s6595 + $0x198] sm:$0xff]
    %v6648 = vld [vmem:[%s6595 + $0x1a0] sm:$0xff]
    %v6649 = vld [vmem:[%s6595 + $0x1a8] sm:$0xff]
    %v6650 = vld [vmem:[%s6595 + $0x1b0] sm:$0xff]
    %v6651 = vld [vmem:[%s6595 + $0x1b8] sm:$0xff]
    %v6652 = vld [vmem:[%s6595 + $0x1c0] sm:$0xff]
    %v6653 = vld [vmem:[%s6595 + $0x1c8] sm:$0xff]
    %v6654 = vld [vmem:[%s6595 + $0x1d0] sm:$0xff]
    %v6655 = vld [vmem:[%s6595 + $0x1d8] sm:$0xff]
    %v6656 = vld [vmem:[%s6595 + $0x1e0] sm:$0xff]
    %v6657 = vld [vmem:[%s6595 + $0x1e8] sm:$0xff]
    %v6658 = vld [vmem:[%s6595 + $0x1f0] sm:$0xff]
    %v6659 = vld [vmem:[%s6595 + $0x1f8] sm:$0xff]
    %v6724 = vunpack.c.l.b16 %v6596
    %v6725 = vunpack.c.h.b16 %v6596
    %v6726 = vunpack.c.l.b16 %v6597
    %v6727 = vunpack.c.h.b16 %v6597
    %v6728 = vunpack.c.l.b16 %v6598
    %v6729 = vunpack.c.h.b16 %v6598
    %v6730 = vunpack.c.l.b16 %v6599
    %v6731 = vunpack.c.h.b16 %v6599
    %v6732 = vunpack.c.l.b16 %v6600
    %v6733 = vunpack.c.h.b16 %v6600
    %v6734 = vunpack.c.l.b16 %v6601
    %v6735 = vunpack.c.h.b16 %v6601
    %v6736 = vunpack.c.l.b16 %v6602
    %v6737 = vunpack.c.h.b16 %v6602
    %v6738 = vunpack.c.l.b16 %v6603
    %v6739 = vunpack.c.h.b16 %v6603
    %v6740 = vunpack.c.l.b16 %v6604
    %v6741 = vunpack.c.h.b16 %v6604
    %v6742 = vunpack.c.l.b16 %v6605
    %v6743 = vunpack.c.h.b16 %v6605
    %v6744 = vunpack.c.l.b16 %v6606
    %v6745 = vunpack.c.h.b16 %v6606
    %v6746 = vunpack.c.l.b16 %v6607
    %v6747 = vunpack.c.h.b16 %v6607
    %v6748 = vunpack.c.l.b16 %v6608
    %v6749 = vunpack.c.h.b16 %v6608
    %v6750 = vunpack.c.l.b16 %v6609
    %v6751 = vunpack.c.h.b16 %v6609
    %v6752 = vunpack.c.l.b16 %v6610
    %v6753 = vunpack.c.h.b16 %v6610
    %v6754 = vunpack.c.l.b16 %v6611
    %v6755 = vunpack.c.h.b16 %v6611
    %v6756 = vunpack.c.l.b16 %v6612
    %v6757 = vunpack.c.h.b16 %v6612
    %v6758 = vunpack.c.l.b16 %v6613
    %v6759 = vunpack.c.h.b16 %v6613
    %v6760 = vunpack.c.l.b16 %v6614
    %v6761 = vunpack.c.h.b16 %v6614
    %v6762 = vunpack.c.l.b16 %v6615
    %v6763 = vunpack.c.h.b16 %v6615
    %v6764 = vunpack.c.l.b16 %v6616
    %v6765 = vunpack.c.h.b16 %v6616
    %v6766 = vunpack.c.l.b16 %v6617
    %v6767 = vunpack.c.h.b16 %v6617
    %v6768 = vunpack.c.l.b16 %v6618
    %v6769 = vunpack.c.h.b16 %v6618
    %v6770 = vunpack.c.l.b16 %v6619
    %v6771 = vunpack.c.h.b16 %v6619
    %v6772 = vunpack.c.l.b16 %v6620
    %v6773 = vunpack.c.h.b16 %v6620
    %v6774 = vunpack.c.l.b16 %v6621
    %v6775 = vunpack.c.h.b16 %v6621
    %v6776 = vunpack.c.l.b16 %v6622
    %v6777 = vunpack.c.h.b16 %v6622
    %v6778 = vunpack.c.l.b16 %v6623
    %v6779 = vunpack.c.h.b16 %v6623
    %v6780 = vunpack.c.l.b16 %v6624
    %v6781 = vunpack.c.h.b16 %v6624
    %v6782 = vunpack.c.l.b16 %v6625
    %v6783 = vunpack.c.h.b16 %v6625
    %v6784 = vunpack.c.l.b16 %v6626
    %v6785 = vunpack.c.h.b16 %v6626
    %v6786 = vunpack.c.l.b16 %v6627
    %v6787 = vunpack.c.h.b16 %v6627
    %v6788 = vunpack.c.l.b16 %v6628
    %v6789 = vunpack.c.h.b16 %v6628
    %v6790 = vunpack.c.l.b16 %v6629
    %v6791 = vunpack.c.h.b16 %v6629
    %v6792 = vunpack.c.l.b16 %v6630
    %v6793 = vunpack.c.h.b16 %v6630
    %v6794 = vunpack.c.l.b16 %v6631
    %v6795 = vunpack.c.h.b16 %v6631
    %v6796 = vunpack.c.l.b16 %v6632
    %v6797 = vunpack.c.h.b16 %v6632
    %v6798 = vunpack.c.l.b16 %v6633
    %v6799 = vunpack.c.h.b16 %v6633
    %v6800 = vunpack.c.l.b16 %v6634
    %v6801 = vunpack.c.h.b16 %v6634
    %v6802 = vunpack.c.l.b16 %v6635
    %v6803 = vunpack.c.h.b16 %v6635
    %v6804 = vunpack.c.l.b16 %v6636
    %v6805 = vunpack.c.h.b16 %v6636
    %v6806 = vunpack.c.l.b16 %v6637
    %v6807 = vunpack.c.h.b16 %v6637
    %v6808 = vunpack.c.l.b16 %v6638
    %v6809 = vunpack.c.h.b16 %v6638
    %v6810 = vunpack.c.l.b16 %v6639
    %v6811 = vunpack.c.h.b16 %v6639
    %v6812 = vunpack.c.l.b16 %v6640
    %v6813 = vunpack.c.h.b16 %v6640
    %v6814 = vunpack.c.l.b16 %v6641
    %v6815 = vunpack.c.h.b16 %v6641
    %v6816 = vunpack.c.l.b16 %v6642
    %v6817 = vunpack.c.h.b16 %v6642
    %v6818 = vunpack.c.l.b16 %v6643
    %v6819 = vunpack.c.h.b16 %v6643
    %v6820 = vunpack.c.l.b16 %v6644
    %v6821 = vunpack.c.h.b16 %v6644
    %v6822 = vunpack.c.l.b16 %v6645
    %v6823 = vunpack.c.h.b16 %v6645
    %v6824 = vunpack.c.l.b16 %v6646
    %v6825 = vunpack.c.h.b16 %v6646
    %v6826 = vunpack.c.l.b16 %v6647
    %v6827 = vunpack.c.h.b16 %v6647
    %v6828 = vunpack.c.l.b16 %v6648
    %v6829 = vunpack.c.h.b16 %v6648
    %v6830 = vunpack.c.l.b16 %v6649
    %v6831 = vunpack.c.h.b16 %v6649
    %v6832 = vunpack.c.l.b16 %v6650
    %v6833 = vunpack.c.h.b16 %v6650
    %v6834 = vunpack.c.l.b16 %v6651
    %v6835 = vunpack.c.h.b16 %v6651
    %v6836 = vunpack.c.l.b16 %v6652
    %v6837 = vunpack.c.h.b16 %v6652
    %v6838 = vunpack.c.l.b16 %v6653
    %v6839 = vunpack.c.h.b16 %v6653
    %v6840 = vunpack.c.l.b16 %v6654
    %v6841 = vunpack.c.h.b16 %v6654
    %v6842 = vunpack.c.l.b16 %v6655
    %v6843 = vunpack.c.h.b16 %v6655
    %v6844 = vunpack.c.l.b16 %v6656
    %v6845 = vunpack.c.h.b16 %v6656
    %v6846 = vunpack.c.l.b16 %v6657
    %v6847 = vunpack.c.h.b16 %v6657
    %v6848 = vunpack.c.l.b16 %v6658
    %v6849 = vunpack.c.h.b16 %v6658
    %v6850 = vunpack.c.l.b16 %v6659
    %v6851 = vunpack.c.h.b16 %v6659
    %v6852 = vpack.c.b16 %v6728, %v6724
    %v6853 = vpack.c.b16 %v6729, %v6725
    %v6854 = vpack.c.b16 %v6730, %v6726
    %v6855 = vpack.c.b16 %v6731, %v6727
    %v6856 = vpack.c.b16 %v6736, %v6732
    %v6857 = vpack.c.b16 %v6737, %v6733
    %v6858 = vpack.c.b16 %v6738, %v6734
    %v6859 = vpack.c.b16 %v6739, %v6735
    %v6860 = vpack.c.b16 %v6744, %v6740
    %v6861 = vpack.c.b16 %v6745, %v6741
    %v6862 = vpack.c.b16 %v6746, %v6742
    %v6863 = vpack.c.b16 %v6747, %v6743
    %v6864 = vpack.c.b16 %v6752, %v6748
    %v6865 = vpack.c.b16 %v6753, %v6749
    %v6866 = vpack.c.b16 %v6754, %v6750
    %v6867 = vpack.c.b16 %v6755, %v6751
    %v6868 = vpack.c.b16 %v6760, %v6756
    %v6869 = vpack.c.b16 %v6761, %v6757
    %v6870 = vpack.c.b16 %v6762, %v6758
    %v6871 = vpack.c.b16 %v6763, %v6759
    %v6872 = vpack.c.b16 %v6768, %v6764
    %v6873 = vpack.c.b16 %v6769, %v6765
    %v6874 = vpack.c.b16 %v6770, %v6766
    %v6875 = vpack.c.b16 %v6771, %v6767
    %v6876 = vpack.c.b16 %v6776, %v6772
    %v6877 = vpack.c.b16 %v6777, %v6773
    %v6878 = vpack.c.b16 %v6778, %v6774
    %v6879 = vpack.c.b16 %v6779, %v6775
    %v6880 = vpack.c.b16 %v6784, %v6780
    %v6881 = vpack.c.b16 %v6785, %v6781
    %v6882 = vpack.c.b16 %v6786, %v6782
    %v6883 = vpack.c.b16 %v6787, %v6783
    %v6884 = vpack.c.b16 %v6792, %v6788
    %v6885 = vpack.c.b16 %v6793, %v6789
    %v6886 = vpack.c.b16 %v6794, %v6790
    %v6887 = vpack.c.b16 %v6795, %v6791
    %v6888 = vpack.c.b16 %v6800, %v6796
    %v6889 = vpack.c.b16 %v6801, %v6797
    %v6890 = vpack.c.b16 %v6802, %v6798
    %v6891 = vpack.c.b16 %v6803, %v6799
    %v6892 = vpack.c.b16 %v6808, %v6804
    %v6893 = vpack.c.b16 %v6809, %v6805
    %v6894 = vpack.c.b16 %v6810, %v6806
    %v6895 = vpack.c.b16 %v6811, %v6807
    %v6896 = vpack.c.b16 %v6816, %v6812
    %v6897 = vpack.c.b16 %v6817, %v6813
    %v6898 = vpack.c.b16 %v6818, %v6814
    %v6899 = vpack.c.b16 %v6819, %v6815
    %v6900 = vpack.c.b16 %v6824, %v6820
    %v6901 = vpack.c.b16 %v6825, %v6821
    %v6902 = vpack.c.b16 %v6826, %v6822
    %v6903 = vpack.c.b16 %v6827, %v6823
    %v6904 = vpack.c.b16 %v6832, %v6828
    %v6905 = vpack.c.b16 %v6833, %v6829
    %v6906 = vpack.c.b16 %v6834, %v6830
    %v6907 = vpack.c.b16 %v6835, %v6831
    %v6908 = vpack.c.b16 %v6840, %v6836
    %v6909 = vpack.c.b16 %v6841, %v6837
    %v6910 = vpack.c.b16 %v6842, %v6838
    %v6911 = vpack.c.b16 %v6843, %v6839
    %v6912 = vpack.c.b16 %v6848, %v6844
    %v6913 = vpack.c.b16 %v6849, %v6845
    %v6914 = vpack.c.b16 %v6850, %v6846
    %v6915 = vpack.c.b16 %v6851, %v6847
    %6980 = vmatpush.bf16.msra.mxu0 %v6880
    %6981 = vmatpush.bf16.msra.mxu0 %v6876
    %6982 = vmatpush.bf16.msra.mxu0 %v6872
    %6983 = vmatpush.bf16.msra.mxu0 %v6868
    %6984 = vmatpush.bf16.msra.mxu0 %v6864
    %6985 = vmatpush.bf16.msra.mxu0 %v6860
    %6986 = vmatpush.bf16.msra.mxu0 %v6856
    %6987 = vmatpush.bf16.msra.mxu0 %v6852
    %6988 = vmatmul.bf16.gmra.mxu0 %v6587
    %v6989 = vpop.f32.mrf.mxu0
    %v6990 = vadd.f32 0.0, %v6989
    %v6991 = vpop.f32.mrf.mxu0
    %v6992 = vadd.f32 0.0, %v6991
    %6993 = vmatmul.bf16.gmra.mxu0 %v6589
    %v6994 = vpop.f32.mrf.mxu0
    %v6995 = vadd.f32 0.0, %v6994
    %v6996 = vpop.f32.mrf.mxu0
    %v6997 = vadd.f32 0.0, %v6996
    %6998 = vmatmul.bf16.gmra.mxu0 %v6591
    %v6999 = vpop.f32.mrf.mxu0
    %v7000 = vadd.f32 0.0, %v6999
    %v7001 = vpop.f32.mrf.mxu0
    %v7002 = vadd.f32 0.0, %v7001
    %7003 = vmatmul.bf16.gmra.mxu0 %v6593
    %v7004 = vpop.f32.mrf.mxu0
    %v7005 = vadd.f32 0.0, %v7004
    %v7006 = vpop.f32.mrf.mxu0
    %v7007 = vadd.f32 0.0, %v7006
    %7008 = vdwg.mxu0
    %7009 = vmatpush.bf16.msra.mxu0 %v6912
    %7010 = vmatpush.bf16.msra.mxu0 %v6908
    %7011 = vmatpush.bf16.msra.mxu0 %v6904
    %7012 = vmatpush.bf16.msra.mxu0 %v6900
    %7013 = vmatpush.bf16.msra.mxu0 %v6896
    %7014 = vmatpush.bf16.msra.mxu0 %v6892
    %7015 = vmatpush.bf16.msra.mxu0 %v6888
    %7016 = vmatpush.bf16.msra.mxu0 %v6884
    %7017 = vmatmul.bf16.gmra.mxu0 %v6588
    %v7018 = vpop.f32.mrf.mxu0
    %v7019 = vadd.f32 %v6990, %v7018
    %v7020 = vpop.f32.mrf.mxu0
    %v7021 = vadd.f32 %v6992, %v7020
    %7022 = vmatmul.bf16.gmra.mxu0 %v6590
    %v7023 = vpop.f32.mrf.mxu0
    %v7024 = vadd.f32 %v6995, %v7023
    %v7025 = vpop.f32.mrf.mxu0
    %v7026 = vadd.f32 %v6997, %v7025
    %7027 = vmatmul.bf16.gmra.mxu0 %v6592
    %v7028 = vpop.f32.mrf.mxu0
    %v7029 = vadd.f32 %v7000, %v7028
    %v7030 = vpop.f32.mrf.mxu0
    %v7031 = vadd.f32 %v7002, %v7030
    %7032 = vmatmul.bf16.gmra.mxu0 %v6594
    %v7033 = vpop.f32.mrf.mxu0
    %v7034 = vadd.f32 %v7005, %v7033
    %v7035 = vpop.f32.mrf.mxu0
    %v7036 = vadd.f32 %v7007, %v7035
    %7037 = vdwg.mxu0
    %7038 = vmatpush.bf16.msra.mxu0 %v6881
    %7039 = vmatpush.bf16.msra.mxu0 %v6877
    %7040 = vmatpush.bf16.msra.mxu0 %v6873
    %7041 = vmatpush.bf16.msra.mxu0 %v6869
    %7042 = vmatpush.bf16.msra.mxu0 %v6865
    %7043 = vmatpush.bf16.msra.mxu0 %v6861
    %7044 = vmatpush.bf16.msra.mxu0 %v6857
    %7045 = vmatpush.bf16.msra.mxu0 %v6853
    %7046 = vmatmul.bf16.gmra.mxu0 %v6587
    %v7047 = vpop.f32.mrf.mxu0
    %v7048 = vadd.f32 0.0, %v7047
    %v7049 = vpop.f32.mrf.mxu0
    %v7050 = vadd.f32 0.0, %v7049
    %7051 = vmatmul.bf16.gmra.mxu0 %v6589
    %v7052 = vpop.f32.mrf.mxu0
    %v7053 = vadd.f32 0.0, %v7052
    %v7054 = vpop.f32.mrf.mxu0
    %v7055 = vadd.f32 0.0, %v7054
    %7056 = vmatmul.bf16.gmra.mxu0 %v6591
    %v7057 = vpop.f32.mrf.mxu0
    %v7058 = vadd.f32 0.0, %v7057
    %v7059 = vpop.f32.mrf.mxu0
    %v7060 = vadd.f32 0.0, %v7059
    %7061 = vmatmul.bf16.gmra.mxu0 %v6593
    %v7062 = vpop.f32.mrf.mxu0
    %v7063 = vadd.f32 0.0, %v7062
    %v7064 = vpop.f32.mrf.mxu0
    %v7065 = vadd.f32 0.0, %v7064
    %7066 = vdwg.mxu0
    %7067 = vmatpush.bf16.msra.mxu0 %v6913
    %7068 = vmatpush.bf16.msra.mxu0 %v6909
    %7069 = vmatpush.bf16.msra.mxu0 %v6905
    %7070 = vmatpush.bf16.msra.mxu0 %v6901
    %7071 = vmatpush.bf16.msra.mxu0 %v6897
    %7072 = vmatpush.bf16.msra.mxu0 %v6893
    %7073 = vmatpush.bf16.msra.mxu0 %v6889
    %7074 = vmatpush.bf16.msra.mxu0 %v6885
    %7075 = vmatmul.bf16.gmra.mxu0 %v6588
    %v7076 = vpop.f32.mrf.mxu0
    %v7077 = vadd.f32 %v7048, %v7076
    %v7078 = vpop.f32.mrf.mxu0
    %v7079 = vadd.f32 %v7050, %v7078
    %7080 = vmatmul.bf16.gmra.mxu0 %v6590
    %v7081 = vpop.f32.mrf.mxu0
    %v7082 = vadd.f32 %v7053, %v7081
    %v7083 = vpop.f32.mrf.mxu0
    %v7084 = vadd.f32 %v7055, %v7083
    %7085 = vmatmul.bf16.gmra.mxu0 %v6592
    %v7086 = vpop.f32.mrf.mxu0
    %v7087 = vadd.f32 %v7058, %v7086
    %v7088 = vpop.f32.mrf.mxu0
    %v7089 = vadd.f32 %v7060, %v7088
    %7090 = vmatmul.bf16.gmra.mxu0 %v6594
    %v7091 = vpop.f32.mrf.mxu0
    %v7092 = vadd.f32 %v7063, %v7091
    %v7093 = vpop.f32.mrf.mxu0
    %v7094 = vadd.f32 %v7065, %v7093
    %7095 = vdwg.mxu0
    %7096 = vmatpush.bf16.msra.mxu0 %v6882
    %7097 = vmatpush.bf16.msra.mxu0 %v6878
    %7098 = vmatpush.bf16.msra.mxu0 %v6874
    %7099 = vmatpush.bf16.msra.mxu0 %v6870
    %7100 = vmatpush.bf16.msra.mxu0 %v6866
    %7101 = vmatpush.bf16.msra.mxu0 %v6862
    %7102 = vmatpush.bf16.msra.mxu0 %v6858
    %7103 = vmatpush.bf16.msra.mxu0 %v6854
    %7104 = vmatmul.bf16.gmra.mxu0 %v6587
    %v7105 = vpop.f32.mrf.mxu0
    %v7106 = vadd.f32 0.0, %v7105
    %v7107 = vpop.f32.mrf.mxu0
    %v7108 = vadd.f32 0.0, %v7107
    %7109 = vmatmul.bf16.gmra.mxu0 %v6589
    %v7110 = vpop.f32.mrf.mxu0
    %v7111 = vadd.f32 0.0, %v7110
    %v7112 = vpop.f32.mrf.mxu0
    %v7113 = vadd.f32 0.0, %v7112
    %7114 = vmatmul.bf16.gmra.mxu0 %v6591
    %v7115 = vpop.f32.mrf.mxu0
    %v7116 = vadd.f32 0.0, %v7115
    %v7117 = vpop.f32.mrf.mxu0
    %v7118 = vadd.f32 0.0, %v7117
    %7119 = vmatmul.bf16.gmra.mxu0 %v6593
    %v7120 = vpop.f32.mrf.mxu0
    %v7121 = vadd.f32 0.0, %v7120
    %v7122 = vpop.f32.mrf.mxu0
    %v7123 = vadd.f32 0.0, %v7122
    %7124 = vdwg.mxu0
    %7125 = vmatpush.bf16.msra.mxu0 %v6914
    %7126 = vmatpush.bf16.msra.mxu0 %v6910
    %7127 = vmatpush.bf16.msra.mxu0 %v6906
    %7128 = vmatpush.bf16.msra.mxu0 %v6902
    %7129 = vmatpush.bf16.msra.mxu0 %v6898
    %7130 = vmatpush.bf16.msra.mxu0 %v6894
    %7131 = vmatpush.bf16.msra.mxu0 %v6890
    %7132 = vmatpush.bf16.msra.mxu0 %v6886
    %7133 = vmatmul.bf16.gmra.mxu0 %v6588
    %v7134 = vpop.f32.mrf.mxu0
    %v7135 = vadd.f32 %v7106, %v7134
    %v7136 = vpop.f32.mrf.mxu0
    %v7137 = vadd.f32 %v7108, %v7136
    %7138 = vmatmul.bf16.gmra.mxu0 %v6590
    %v7139 = vpop.f32.mrf.mxu0
    %v7140 = vadd.f32 %v7111, %v7139
    %v7141 = vpop.f32.mrf.mxu0
    %v7142 = vadd.f32 %v7113, %v7141
    %7143 = vmatmul.bf16.gmra.mxu0 %v6592
    %v7144 = vpop.f32.mrf.mxu0
    %v7145 = vadd.f32 %v7116, %v7144
    %v7146 = vpop.f32.mrf.mxu0
    %v7147 = vadd.f32 %v7118, %v7146
    %7148 = vmatmul.bf16.gmra.mxu0 %v6594
    %v7149 = vpop.f32.mrf.mxu0
    %v7150 = vadd.f32 %v7121, %v7149
    %v7151 = vpop.f32.mrf.mxu0
    %v7152 = vadd.f32 %v7123, %v7151
    %7153 = vdwg.mxu0
    %7154 = vmatpush.bf16.msra.mxu0 %v6883
    %7155 = vmatpush.bf16.msra.mxu0 %v6879
    %7156 = vmatpush.bf16.msra.mxu0 %v6875
    %7157 = vmatpush.bf16.msra.mxu0 %v6871
    %7158 = vmatpush.bf16.msra.mxu0 %v6867
    %7159 = vmatpush.bf16.msra.mxu0 %v6863
    %7160 = vmatpush.bf16.msra.mxu0 %v6859
    %7161 = vmatpush.bf16.msra.mxu0 %v6855
    %7162 = vmatmul.bf16.gmra.mxu0 %v6587
    %v7163 = vpop.f32.mrf.mxu0
    %v7164 = vadd.f32 0.0, %v7163
    %v7165 = vpop.f32.mrf.mxu0
    %v7166 = vadd.f32 0.0, %v7165
    %7167 = vmatmul.bf16.gmra.mxu0 %v6589
    %v7168 = vpop.f32.mrf.mxu0
    %v7169 = vadd.f32 0.0, %v7168
    %v7170 = vpop.f32.mrf.mxu0
    %v7171 = vadd.f32 0.0, %v7170
    %7172 = vmatmul.bf16.gmra.mxu0 %v6591
    %v7173 = vpop.f32.mrf.mxu0
    %v7174 = vadd.f32 0.0, %v7173
    %v7175 = vpop.f32.mrf.mxu0
    %v7176 = vadd.f32 0.0, %v7175
    %7177 = vmatmul.bf16.gmra.mxu0 %v6593
    %v7178 = vpop.f32.mrf.mxu0
    %v7179 = vadd.f32 0.0, %v7178
    %v7180 = vpop.f32.mrf.mxu0
    %v7181 = vadd.f32 0.0, %v7180
    %7182 = vdwg.mxu0
    %7183 = vmatpush.bf16.msra.mxu0 %v6915
    %7184 = vmatpush.bf16.msra.mxu0 %v6911
    %7185 = vmatpush.bf16.msra.mxu0 %v6907
    %7186 = vmatpush.bf16.msra.mxu0 %v6903
    %7187 = vmatpush.bf16.msra.mxu0 %v6899
    %7188 = vmatpush.bf16.msra.mxu0 %v6895
    %7189 = vmatpush.bf16.msra.mxu0 %v6891
    %7190 = vmatpush.bf16.msra.mxu0 %v6887
    %7191 = vmatmul.bf16.gmra.mxu0 %v6588
    %v7192 = vpop.f32.mrf.mxu0
    %v7193 = vadd.f32 %v7164, %v7192
    %v7194 = vpop.f32.mrf.mxu0
    %v7195 = vadd.f32 %v7166, %v7194
    %7196 = vmatmul.bf16.gmra.mxu0 %v6590
    %v7197 = vpop.f32.mrf.mxu0
    %v7198 = vadd.f32 %v7169, %v7197
    %v7199 = vpop.f32.mrf.mxu0
    %v7200 = vadd.f32 %v7171, %v7199
    %7201 = vmatmul.bf16.gmra.mxu0 %v6592
    %v7202 = vpop.f32.mrf.mxu0
    %v7203 = vadd.f32 %v7174, %v7202
    %v7204 = vpop.f32.mrf.mxu0
    %v7205 = vadd.f32 %v7176, %v7204
    %7206 = vmatmul.bf16.gmra.mxu0 %v6594
    %v7207 = vpop.f32.mrf.mxu0
    %v7208 = vadd.f32 %v7179, %v7207
    %v7209 = vpop.f32.mrf.mxu0
    %v7210 = vadd.f32 %v7181, %v7209
    %7211 = vdwg.mxu0
    %v7212 = vadd.f32 %v6426, %v7019
    %v7213 = vadd.f32 %v6427, %v7077
    %v7214 = vadd.f32 %v6428, %v7135
    %v7215 = vadd.f32 %v6429, %v7193
    %v7216 = vadd.f32 %v6430, %v7021
    %v7217 = vadd.f32 %v6431, %v7079
    %v7218 = vadd.f32 %v6432, %v7137
    %v7219 = vadd.f32 %v6433, %v7195
    %v7220 = vadd.f32 %v6434, %v7024
    %v7221 = vadd.f32 %v6435, %v7082
    %v7222 = vadd.f32 %v6436, %v7140
    %v7223 = vadd.f32 %v6437, %v7198
    %v7224 = vadd.f32 %v6438, %v7026
    %v7225 = vadd.f32 %v6439, %v7084
    %v7226 = vadd.f32 %v6440, %v7142
    %v7227 = vadd.f32 %v6441, %v7200
    %v7228 = vadd.f32 %v6442, %v7029
    %v7229 = vadd.f32 %v6443, %v7087
    %v7230 = vadd.f32 %v6444, %v7145
    %v7231 = vadd.f32 %v6445, %v7203
    %v7232 = vadd.f32 %v6446, %v7031
    %v7233 = vadd.f32 %v6447, %v7089
    %v7234 = vadd.f32 %v6448, %v7147
    %v7235 = vadd.f32 %v6449, %v7205
    %v7236 = vadd.f32 %v6450, %v7034
    %v7237 = vadd.f32 %v6451, %v7092
    %v7238 = vadd.f32 %v6452, %v7150
    %v7239 = vadd.f32 %v6453, %v7208
    %v7240 = vadd.f32 %v6454, %v7036
    %v7241 = vadd.f32 %v6455, %v7094
    %v7242 = vadd.f32 %v6456, %v7152
    %v7243 = vadd.f32 %v6457, %v7210
    %v7244 = vld [vmem:[#allocation11] sm:$0xf]
    %v7246 = vperm.slane %v7244, 0
    %v7247 = vperm.slane %v7244, 1
    %v7248 = vperm.slane %v7244, 2
    %v7249 = vperm.slane %v7244, 3
    %v7254 = vadd.f32 %v7212, %v7246
    %v7255 = vadd.f32 %v7213, %v7247
    %v7256 = vadd.f32 %v7214, %v7248
    %v7257 = vadd.f32 %v7215, %v7249
    %v7258 = vadd.f32 %v7216, %v7246
    %v7259 = vadd.f32 %v7217, %v7247
    %v7260 = vadd.f32 %v7218, %v7248
    %v7261 = vadd.f32 %v7219, %v7249
    %v7262 = vadd.f32 %v7220, %v7246
    %v7263 = vadd.f32 %v7221, %v7247
    %v7264 = vadd.f32 %v7222, %v7248
    %v7265 = vadd.f32 %v7223, %v7249
    %v7266 = vadd.f32 %v7224, %v7246
    %v7267 = vadd.f32 %v7225, %v7247
    %v7268 = vadd.f32 %v7226, %v7248
    %v7269 = vadd.f32 %v7227, %v7249
    %v7270 = vadd.f32 %v7228, %v7246
    %v7271 = vadd.f32 %v7229, %v7247
    %v7272 = vadd.f32 %v7230, %v7248
    %v7273 = vadd.f32 %v7231, %v7249
    %v7274 = vadd.f32 %v7232, %v7246
    %v7275 = vadd.f32 %v7233, %v7247
    %v7276 = vadd.f32 %v7234, %v7248
    %v7277 = vadd.f32 %v7235, %v7249
    %v7278 = vadd.f32 %v7236, %v7246
    %v7279 = vadd.f32 %v7237, %v7247
    %v7280 = vadd.f32 %v7238, %v7248
    %v7281 = vadd.f32 %v7239, %v7249
    %v7282 = vadd.f32 %v7240, %v7246
    %v7283 = vadd.f32 %v7241, %v7247
    %v7284 = vadd.f32 %v7242, %v7248
    %v7285 = vadd.f32 %v7243, %v7249
    %v7286 = vmax.f32 %v7254, 0.0
    %v7287 = vmax.f32 %v7255, 0.0
    %v7288 = vmax.f32 %v7256, 0.0
    %v7289 = vmax.f32 %v7257, 0.0
    %v7290 = vmax.f32 %v7258, 0.0
    %v7291 = vmax.f32 %v7259, 0.0
    %v7292 = vmax.f32 %v7260, 0.0
    %v7293 = vmax.f32 %v7261, 0.0
    %v7294 = vmax.f32 %v7262, 0.0
    %v7295 = vmax.f32 %v7263, 0.0
    %v7296 = vmax.f32 %v7264, 0.0
    %v7297 = vmax.f32 %v7265, 0.0
    %v7298 = vmax.f32 %v7266, 0.0
    %v7299 = vmax.f32 %v7267, 0.0
    %v7300 = vmax.f32 %v7268, 0.0
    %v7301 = vmax.f32 %v7269, 0.0
    %v7302 = vmax.f32 %v7270, 0.0
    %v7303 = vmax.f32 %v7271, 0.0
    %v7304 = vmax.f32 %v7272, 0.0
    %v7305 = vmax.f32 %v7273, 0.0
    %v7306 = vmax.f32 %v7274, 0.0
    %v7307 = vmax.f32 %v7275, 0.0
    %v7308 = vmax.f32 %v7276, 0.0
    %v7309 = vmax.f32 %v7277, 0.0
    %v7310 = vmax.f32 %v7278, 0.0
    %v7311 = vmax.f32 %v7279, 0.0
    %v7312 = vmax.f32 %v7280, 0.0
    %v7313 = vmax.f32 %v7281, 0.0
    %v7314 = vmax.f32 %v7282, 0.0
    %v7315 = vmax.f32 %v7283, 0.0
    %v7316 = vmax.f32 %v7284, 0.0
    %v7317 = vmax.f32 %v7285, 0.0
    %v7318 = vmax.f32 %v7286, %v7288
    %v7319 = vmax.f32 %v7287, %v7289
    %v7320 = vmax.f32 %v7290, %v7292
    %v7321 = vmax.f32 %v7291, %v7293
    %v7322 = vmax.f32 %v7294, %v7296
    %v7323 = vmax.f32 %v7295, %v7297
    %v7324 = vmax.f32 %v7298, %v7300
    %v7325 = vmax.f32 %v7299, %v7301
    %v7326 = vmax.f32 %v7302, %v7304
    %v7327 = vmax.f32 %v7303, %v7305
    %v7328 = vmax.f32 %v7306, %v7308
    %v7329 = vmax.f32 %v7307, %v7309
    %v7330 = vmax.f32 %v7310, %v7312
    %v7331 = vmax.f32 %v7311, %v7313
    %v7332 = vmax.f32 %v7314, %v7316
    %v7333 = vmax.f32 %v7315, %v7317
    %7334 = vst [vmem:[#allocation4] sm:$0xff] %v7318
    %7335 = vst [vmem:[#allocation4 + $0x8] sm:$0xff] %v7319
    %7336 = vst [vmem:[#allocation4 + $0x10] sm:$0xff] %v7320
    %7337 = vst [vmem:[#allocation4 + $0x18] sm:$0xff] %v7321
    %7338 = vst [vmem:[#allocation4 + $0x20] sm:$0xff] %v7322
    %7339 = vst [vmem:[#allocation4 + $0x28] sm:$0xff] %v7323
    %7340 = vst [vmem:[#allocation4 + $0x30] sm:$0xff] %v7324
    %7341 = vst [vmem:[#allocation4 + $0x38] sm:$0xff] %v7325
    %7342 = vst [vmem:[#allocation4 + $0x40] sm:$0xff] %v7326
    %7343 = vst [vmem:[#allocation4 + $0x48] sm:$0xff] %v7327
    %7344 = vst [vmem:[#allocation4 + $0x50] sm:$0xff] %v7328
    %7345 = vst [vmem:[#allocation4 + $0x58] sm:$0xff] %v7329
    %7346 = vst [vmem:[#allocation4 + $0x60] sm:$0xff] %v7330
    %7347 = vst [vmem:[#allocation4 + $0x68] sm:$0xff] %v7331
    %7348 = vst [vmem:[#allocation4 + $0x70] sm:$0xff] %v7332
    %7349 = vst [vmem:[#allocation4 + $0x78] sm:$0xff] %v7333
    %v7350 = vld [vmem:[#allocation4] ss:$8 sm:$0x3]
    %s7351 = scalar_lea.vmem [#allocation4], 16
    %v7352 = vld [vmem:[%s7351] ss:$8 sm:$0x3]
    %s7353 = scalar_lea.vmem [#allocation4], 32
    %v7354 = vld [vmem:[%s7353] ss:$8 sm:$0x3]
    %s7355 = scalar_lea.vmem [#allocation4], 48
    %v7356 = vld [vmem:[%s7355] ss:$8 sm:$0x3]
    %s7357 = scalar_lea.vmem [#allocation4], 64
    %v7358 = vld [vmem:[%s7357] ss:$8 sm:$0x3]
    %s7359 = scalar_lea.vmem [#allocation4], 80
    %v7360 = vld [vmem:[%s7359] ss:$8 sm:$0x3]
    %s7361 = scalar_lea.vmem [#allocation4], 96
    %v7362 = vld [vmem:[%s7361] ss:$8 sm:$0x3]
    %s7363 = scalar_lea.vmem [#allocation4], 112
    %v7364 = vld [vmem:[%s7363] ss:$8 sm:$0x3]
    %s7365 = scalar_lea.vmem [#allocation4], 1
    %v7366 = vld [vmem:[%s7365] ss:$8 sm:$0x3]
    %s7367 = scalar_lea.vmem [#allocation4], 17
    %v7368 = vld [vmem:[%s7367] ss:$8 sm:$0x3]
    %s7369 = scalar_lea.vmem [#allocation4], 33
    %v7370 = vld [vmem:[%s7369] ss:$8 sm:$0x3]
    %s7371 = scalar_lea.vmem [#allocation4], 49
    %v7372 = vld [vmem:[%s7371] ss:$8 sm:$0x3]
    %s7373 = scalar_lea.vmem [#allocation4], 65
    %v7374 = vld [vmem:[%s7373] ss:$8 sm:$0x3]
    %s7375 = scalar_lea.vmem [#allocation4], 81
    %v7376 = vld [vmem:[%s7375] ss:$8 sm:$0x3]
    %s7377 = scalar_lea.vmem [#allocation4], 97
    %v7378 = vld [vmem:[%s7377] ss:$8 sm:$0x3]
    %s7379 = scalar_lea.vmem [#allocation4], 113
    %v7380 = vld [vmem:[%s7379] ss:$8 sm:$0x3]
    %v7381 = vmax.f32 %v7350, %v7366
    %v7382 = vmax.f32 %v7352, %v7368
    %v7383 = vmax.f32 %v7354, %v7370
    %v7384 = vmax.f32 %v7356, %v7372
    %v7385 = vmax.f32 %v7358, %v7374
    %v7386 = vmax.f32 %v7360, %v7376
    %v7387 = vmax.f32 %v7362, %v7378
    %v7388 = vmax.f32 %v7364, %v7380
    %v7397 = vperm.slane %v7381, 0
    %v7398 = vperm.slane %v7381, 1
    %v7399 = vperm.slane %v7382, 0
    %v7400 = vperm.slane %v7382, 1
    %v7401 = vperm.slane %v7383, 0
    %v7402 = vperm.slane %v7383, 1
    %v7403 = vperm.slane %v7384, 0
    %v7404 = vperm.slane %v7384, 1
    %v7405 = vperm.slane %v7385, 0
    %v7406 = vperm.slane %v7385, 1
    %v7407 = vperm.slane %v7386, 0
    %v7408 = vperm.slane %v7386, 1
    %v7409 = vperm.slane %v7387, 0
    %v7410 = vperm.slane %v7387, 1
    %v7411 = vperm.slane %v7388, 0
    %v7412 = vperm.slane %v7388, 1
    %v7429 = vpack.c.bf16 %v7397, %v7397
    %v7430 = vpack.c.bf16 %v7398, %v7398
    %v7431 = vpack.c.bf16 %v7399, %v7399
    %v7432 = vpack.c.bf16 %v7400, %v7400
    %v7433 = vpack.c.bf16 %v7401, %v7401
    %v7434 = vpack.c.bf16 %v7402, %v7402
    %v7435 = vpack.c.bf16 %v7403, %v7403
    %v7436 = vpack.c.bf16 %v7404, %v7404
    %v7437 = vpack.c.bf16 %v7405, %v7405
    %v7438 = vpack.c.bf16 %v7406, %v7406
    %v7439 = vpack.c.bf16 %v7407, %v7407
    %v7440 = vpack.c.bf16 %v7408, %v7408
    %v7441 = vpack.c.bf16 %v7409, %v7409
    %v7442 = vpack.c.bf16 %v7410, %v7410
    %v7443 = vpack.c.bf16 %v7411, %v7411
    %v7444 = vpack.c.bf16 %v7412, %v7412
    %v7445 = vld [vmem:[#allocation13] sm:$0xff]
    %v7446 = vld [vmem:[#allocation13 + $0x8] sm:$0xff]
    %v7447 = vld [vmem:[#allocation13 + $0x10] sm:$0xff]
    %v7448 = vld [vmem:[#allocation13 + $0x18] sm:$0xff]
    %v7449 = vld [vmem:[#allocation13 + $0x20] sm:$0xff]
    %v7450 = vld [vmem:[#allocation13 + $0x28] sm:$0xff]
    %v7451 = vld [vmem:[#allocation13 + $0x30] sm:$0xff]
    %v7452 = vld [vmem:[#allocation13 + $0x38] sm:$0xff]
    %v7453 = vld [vmem:[#allocation13 + $0x40] sm:$0xff]
    %v7454 = vld [vmem:[#allocation13 + $0x48] sm:$0xff]
    %v7455 = vld [vmem:[#allocation13 + $0x50] sm:$0xff]
    %v7456 = vld [vmem:[#allocation13 + $0x58] sm:$0xff]
    %v7457 = vld [vmem:[#allocation13 + $0x60] sm:$0xff]
    %v7458 = vld [vmem:[#allocation13 + $0x68] sm:$0xff]
    %v7459 = vld [vmem:[#allocation13 + $0x70] sm:$0xff]
    %v7460 = vld [vmem:[#allocation13 + $0x78] sm:$0xff]
    %v7461 = vld [vmem:[#allocation13 + $0x80] sm:$0xff]
    %v7462 = vld [vmem:[#allocation13 + $0x88] sm:$0xff]
    %v7463 = vld [vmem:[#allocation13 + $0x90] sm:$0xff]
    %v7464 = vld [vmem:[#allocation13 + $0x98] sm:$0xff]
    %v7465 = vld [vmem:[#allocation13 + $0xa0] sm:$0xff]
    %v7466 = vld [vmem:[#allocation13 + $0xa8] sm:$0xff]
    %v7467 = vld [vmem:[#allocation13 + $0xb0] sm:$0xff]
    %v7468 = vld [vmem:[#allocation13 + $0xb8] sm:$0xff]
    %v7469 = vld [vmem:[#allocation13 + $0xc0] sm:$0xff]
    %v7470 = vld [vmem:[#allocation13 + $0xc8] sm:$0xff]
    %v7471 = vld [vmem:[#allocation13 + $0xd0] sm:$0xff]
    %v7472 = vld [vmem:[#allocation13 + $0xd8] sm:$0xff]
    %v7473 = vld [vmem:[#allocation13 + $0xe0] sm:$0xff]
    %v7474 = vld [vmem:[#allocation13 + $0xe8] sm:$0xff]
    %v7475 = vld [vmem:[#allocation13 + $0xf0] sm:$0xff]
    %v7476 = vld [vmem:[#allocation13 + $0xf8] sm:$0xff]
    %v7477 = vld [vmem:[#allocation13 + $0x100] sm:$0xff]
    %v7478 = vld [vmem:[#allocation13 + $0x108] sm:$0xff]
    %v7479 = vld [vmem:[#allocation13 + $0x110] sm:$0xff]
    %v7480 = vld [vmem:[#allocation13 + $0x118] sm:$0xff]
    %v7481 = vld [vmem:[#allocation13 + $0x120] sm:$0xff]
    %v7482 = vld [vmem:[#allocation13 + $0x128] sm:$0xff]
    %v7483 = vld [vmem:[#allocation13 + $0x130] sm:$0xff]
    %v7484 = vld [vmem:[#allocation13 + $0x138] sm:$0xff]
    %v7485 = vld [vmem:[#allocation13 + $0x140] sm:$0xff]
    %v7486 = vld [vmem:[#allocation13 + $0x148] sm:$0xff]
    %v7487 = vld [vmem:[#allocation13 + $0x150] sm:$0xff]
    %v7488 = vld [vmem:[#allocation13 + $0x158] sm:$0xff]
    %v7489 = vld [vmem:[#allocation13 + $0x160] sm:$0xff]
    %v7490 = vld [vmem:[#allocation13 + $0x168] sm:$0xff]
    %v7491 = vld [vmem:[#allocation13 + $0x170] sm:$0xff]
    %v7492 = vld [vmem:[#allocation13 + $0x178] sm:$0xff]
    %v7493 = vld [vmem:[#allocation13 + $0x180] sm:$0xff]
    %v7494 = vld [vmem:[#allocation13 + $0x188] sm:$0xff]
    %v7495 = vld [vmem:[#allocation13 + $0x190] sm:$0xff]
    %v7496 = vld [vmem:[#allocation13 + $0x198] sm:$0xff]
    %v7497 = vld [vmem:[#allocation13 + $0x1a0] sm:$0xff]
    %v7498 = vld [vmem:[#allocation13 + $0x1a8] sm:$0xff]
    %v7499 = vld [vmem:[#allocation13 + $0x1b0] sm:$0xff]
    %v7500 = vld [vmem:[#allocation13 + $0x1b8] sm:$0xff]
    %v7501 = vld [vmem:[#allocation13 + $0x1c0] sm:$0xff]
    %v7502 = vld [vmem:[#allocation13 + $0x1c8] sm:$0xff]
    %v7503 = vld [vmem:[#allocation13 + $0x1d0] sm:$0xff]
    %v7504 = vld [vmem:[#allocation13 + $0x1d8] sm:$0xff]
    %v7505 = vld [vmem:[#allocation13 + $0x1e0] sm:$0xff]
    %v7506 = vld [vmem:[#allocation13 + $0x1e8] sm:$0xff]
    %v7507 = vld [vmem:[#allocation13 + $0x1f0] sm:$0xff]
    %v7508 = vld [vmem:[#allocation13 + $0x1f8] sm:$0xff]
    %s7509 = scalar_lea.vmem [#allocation4], 2
    %v7510 = vld [vmem:[%s7509] ss:$8 sm:$0x3]
    %s7511 = scalar_lea.vmem [#allocation4], 18
    %v7512 = vld [vmem:[%s7511] ss:$8 sm:$0x3]
    %s7513 = scalar_lea.vmem [#allocation4], 34
    %v7514 = vld [vmem:[%s7513] ss:$8 sm:$0x3]
    %s7515 = scalar_lea.vmem [#allocation4], 50
    %v7516 = vld [vmem:[%s7515] ss:$8 sm:$0x3]
    %s7517 = scalar_lea.vmem [#allocation4], 66
    %v7518 = vld [vmem:[%s7517] ss:$8 sm:$0x3]
    %s7519 = scalar_lea.vmem [#allocation4], 82
    %v7520 = vld [vmem:[%s7519] ss:$8 sm:$0x3]
    %s7521 = scalar_lea.vmem [#allocation4], 98
    %v7522 = vld [vmem:[%s7521] ss:$8 sm:$0x3]
    %s7523 = scalar_lea.vmem [#allocation4], 114
    %v7524 = vld [vmem:[%s7523] ss:$8 sm:$0x3]
    %s7525 = scalar_lea.vmem [#allocation4], 3
    %v7526 = vld [vmem:[%s7525] ss:$8 sm:$0x3]
    %s7527 = scalar_lea.vmem [#allocation4], 19
    %v7528 = vld [vmem:[%s7527] ss:$8 sm:$0x3]
    %s7529 = scalar_lea.vmem [#allocation4], 35
    %v7530 = vld [vmem:[%s7529] ss:$8 sm:$0x3]
    %s7531 = scalar_lea.vmem [#allocation4], 51
    %v7532 = vld [vmem:[%s7531] ss:$8 sm:$0x3]
    %s7533 = scalar_lea.vmem [#allocation4], 67
    %v7534 = vld [vmem:[%s7533] ss:$8 sm:$0x3]
    %s7535 = scalar_lea.vmem [#allocation4], 83
    %v7536 = vld [vmem:[%s7535] ss:$8 sm:$0x3]
    %s7537 = scalar_lea.vmem [#allocation4], 99
    %v7538 = vld [vmem:[%s7537] ss:$8 sm:$0x3]
    %s7539 = scalar_lea.vmem [#allocation4], 115
    %v7540 = vld [vmem:[%s7539] ss:$8 sm:$0x3]
    %v7541 = vmax.f32 %v7510, %v7526
    %v7542 = vmax.f32 %v7512, %v7528
    %v7543 = vmax.f32 %v7514, %v7530
    %v7544 = vmax.f32 %v7516, %v7532
    %v7545 = vmax.f32 %v7518, %v7534
    %v7546 = vmax.f32 %v7520, %v7536
    %v7547 = vmax.f32 %v7522, %v7538
    %v7548 = vmax.f32 %v7524, %v7540
    %v7557 = vperm.slane %v7541, 0
    %v7558 = vperm.slane %v7541, 1
    %v7559 = vperm.slane %v7542, 0
    %v7560 = vperm.slane %v7542, 1
    %v7561 = vperm.slane %v7543, 0
    %v7562 = vperm.slane %v7543, 1
    %v7563 = vperm.slane %v7544, 0
    %v7564 = vperm.slane %v7544, 1
    %v7565 = vperm.slane %v7545, 0
    %v7566 = vperm.slane %v7545, 1
    %v7567 = vperm.slane %v7546, 0
    %v7568 = vperm.slane %v7546, 1
    %v7569 = vperm.slane %v7547, 0
    %v7570 = vperm.slane %v7547, 1
    %v7571 = vperm.slane %v7548, 0
    %v7572 = vperm.slane %v7548, 1
    %v7589 = vpack.c.bf16 %v7557, %v7557
    %v7590 = vpack.c.bf16 %v7558, %v7558
    %v7591 = vpack.c.bf16 %v7559, %v7559
    %v7592 = vpack.c.bf16 %v7560, %v7560
    %v7593 = vpack.c.bf16 %v7561, %v7561
    %v7594 = vpack.c.bf16 %v7562, %v7562
    %v7595 = vpack.c.bf16 %v7563, %v7563
    %v7596 = vpack.c.bf16 %v7564, %v7564
    %v7597 = vpack.c.bf16 %v7565, %v7565
    %v7598 = vpack.c.bf16 %v7566, %v7566
    %v7599 = vpack.c.bf16 %v7567, %v7567
    %v7600 = vpack.c.bf16 %v7568, %v7568
    %v7601 = vpack.c.bf16 %v7569, %v7569
    %v7602 = vpack.c.bf16 %v7570, %v7570
    %v7603 = vpack.c.bf16 %v7571, %v7571
    %v7604 = vpack.c.bf16 %v7572, %v7572
    %s7605 = scalar_lea.vmem [#allocation13], 512
    %v7606 = vld [vmem:[%s7605] sm:$0xff]
    %v7607 = vld [vmem:[%s7605 + $0x8] sm:$0xff]
    %v7608 = vld [vmem:[%s7605 + $0x10] sm:$0xff]
    %v7609 = vld [vmem:[%s7605 + $0x18] sm:$0xff]
    %v7610 = vld [vmem:[%s7605 + $0x20] sm:$0xff]
    %v7611 = vld [vmem:[%s7605 + $0x28] sm:$0xff]
    %v7612 = vld [vmem:[%s7605 + $0x30] sm:$0xff]
    %v7613 = vld [vmem:[%s7605 + $0x38] sm:$0xff]
    %v7614 = vld [vmem:[%s7605 + $0x40] sm:$0xff]
    %v7615 = vld [vmem:[%s7605 + $0x48] sm:$0xff]
    %v7616 = vld [vmem:[%s7605 + $0x50] sm:$0xff]
    %v7617 = vld [vmem:[%s7605 + $0x58] sm:$0xff]
    %v7618 = vld [vmem:[%s7605 + $0x60] sm:$0xff]
    %v7619 = vld [vmem:[%s7605 + $0x68] sm:$0xff]
    %v7620 = vld [vmem:[%s7605 + $0x70] sm:$0xff]
    %v7621 = vld [vmem:[%s7605 + $0x78] sm:$0xff]
    %v7622 = vld [vmem:[%s7605 + $0x80] sm:$0xff]
    %v7623 = vld [vmem:[%s7605 + $0x88] sm:$0xff]
    %v7624 = vld [vmem:[%s7605 + $0x90] sm:$0xff]
    %v7625 = vld [vmem:[%s7605 + $0x98] sm:$0xff]
    %v7626 = vld [vmem:[%s7605 + $0xa0] sm:$0xff]
    %v7627 = vld [vmem:[%s7605 + $0xa8] sm:$0xff]
    %v7628 = vld [vmem:[%s7605 + $0xb0] sm:$0xff]
    %v7629 = vld [vmem:[%s7605 + $0xb8] sm:$0xff]
    %v7630 = vld [vmem:[%s7605 + $0xc0] sm:$0xff]
    %v7631 = vld [vmem:[%s7605 + $0xc8] sm:$0xff]
    %v7632 = vld [vmem:[%s7605 + $0xd0] sm:$0xff]
    %v7633 = vld [vmem:[%s7605 + $0xd8] sm:$0xff]
    %v7634 = vld [vmem:[%s7605 + $0xe0] sm:$0xff]
    %v7635 = vld [vmem:[%s7605 + $0xe8] sm:$0xff]
    %v7636 = vld [vmem:[%s7605 + $0xf0] sm:$0xff]
    %v7637 = vld [vmem:[%s7605 + $0xf8] sm:$0xff]
    %v7638 = vld [vmem:[%s7605 + $0x100] sm:$0xff]
    %v7639 = vld [vmem:[%s7605 + $0x108] sm:$0xff]
    %v7640 = vld [vmem:[%s7605 + $0x110] sm:$0xff]
    %v7641 = vld [vmem:[%s7605 + $0x118] sm:$0xff]
    %v7642 = vld [vmem:[%s7605 + $0x120] sm:$0xff]
    %v7643 = vld [vmem:[%s7605 + $0x128] sm:$0xff]
    %v7644 = vld [vmem:[%s7605 + $0x130] sm:$0xff]
    %v7645 = vld [vmem:[%s7605 + $0x138] sm:$0xff]
    %v7646 = vld [vmem:[%s7605 + $0x140] sm:$0xff]
    %v7647 = vld [vmem:[%s7605 + $0x148] sm:$0xff]
    %v7648 = vld [vmem:[%s7605 + $0x150] sm:$0xff]
    %v7649 = vld [vmem:[%s7605 + $0x158] sm:$0xff]
    %v7650 = vld [vmem:[%s7605 + $0x160] sm:$0xff]
    %v7651 = vld [vmem:[%s7605 + $0x168] sm:$0xff]
    %v7652 = vld [vmem:[%s7605 + $0x170] sm:$0xff]
    %v7653 = vld [vmem:[%s7605 + $0x178] sm:$0xff]
    %v7654 = vld [vmem:[%s7605 + $0x180] sm:$0xff]
    %v7655 = vld [vmem:[%s7605 + $0x188] sm:$0xff]
    %v7656 = vld [vmem:[%s7605 + $0x190] sm:$0xff]
    %v7657 = vld [vmem:[%s7605 + $0x198] sm:$0xff]
    %v7658 = vld [vmem:[%s7605 + $0x1a0] sm:$0xff]
    %v7659 = vld [vmem:[%s7605 + $0x1a8] sm:$0xff]
    %v7660 = vld [vmem:[%s7605 + $0x1b0] sm:$0xff]
    %v7661 = vld [vmem:[%s7605 + $0x1b8] sm:$0xff]
    %v7662 = vld [vmem:[%s7605 + $0x1c0] sm:$0xff]
    %v7663 = vld [vmem:[%s7605 + $0x1c8] sm:$0xff]
    %v7664 = vld [vmem:[%s7605 + $0x1d0] sm:$0xff]
    %v7665 = vld [vmem:[%s7605 + $0x1d8] sm:$0xff]
    %v7666 = vld [vmem:[%s7605 + $0x1e0] sm:$0xff]
    %v7667 = vld [vmem:[%s7605 + $0x1e8] sm:$0xff]
    %v7668 = vld [vmem:[%s7605 + $0x1f0] sm:$0xff]
    %v7669 = vld [vmem:[%s7605 + $0x1f8] sm:$0xff]
    %v7686 = vunpack.c.l.b16 %v7589
    %v7687 = vunpack.c.l.b16 %v7590
    %v7688 = vunpack.c.l.b16 %v7591
    %v7689 = vunpack.c.l.b16 %v7592
    %v7690 = vunpack.c.l.b16 %v7593
    %v7691 = vunpack.c.l.b16 %v7594
    %v7692 = vunpack.c.l.b16 %v7595
    %v7693 = vunpack.c.l.b16 %v7596
    %v7694 = vunpack.c.l.b16 %v7597
    %v7695 = vunpack.c.l.b16 %v7598
    %v7696 = vunpack.c.l.b16 %v7599
    %v7697 = vunpack.c.l.b16 %v7600
    %v7698 = vunpack.c.l.b16 %v7601
    %v7699 = vunpack.c.l.b16 %v7602
    %v7700 = vunpack.c.l.b16 %v7603
    %v7701 = vunpack.c.l.b16 %v7604
    %v7702 = vrot.slane %v7688, 7
    %vm7703 = vcmask 1041409
    %v7704 = vsel %vm7703, %v7702, %v7686
    %v7705 = vrot.slane %v7690, 6
    %vm7706 = vcmask 1042434
    %v7707 = vsel %vm7706, %v7705, %v7704
    %v7708 = vrot.slane %v7692, 5
    %vm7709 = vcmask 1043459
    %v7710 = vsel %vm7709, %v7708, %v7707
    %v7711 = vrot.slane %v7694, 4
    %vm7712 = vcmask 1044484
    %v7713 = vsel %vm7712, %v7711, %v7710
    %v7714 = vrot.slane %v7696, 3
    %vm7715 = vcmask 1045509
    %v7716 = vsel %vm7715, %v7714, %v7713
    %v7717 = vrot.slane %v7698, 2
    %vm7718 = vcmask 1046534
    %v7719 = vsel %vm7718, %v7717, %v7716
    %v7720 = vrot.slane %v7700, 1
    %vm7721 = vcmask 1047559
    %v7722 = vsel %vm7721, %v7720, %v7719
    %v7723 = vrot.slane %v7689, 7
    %v7724 = vsel %vm7703, %v7723, %v7687
    %v7725 = vrot.slane %v7691, 6
    %v7726 = vsel %vm7706, %v7725, %v7724
    %v7727 = vrot.slane %v7693, 5
    %v7728 = vsel %vm7709, %v7727, %v7726
    %v7729 = vrot.slane %v7695, 4
    %v7730 = vsel %vm7712, %v7729, %v7728
    %v7731 = vrot.slane %v7697, 3
    %v7732 = vsel %vm7715, %v7731, %v7730
    %v7733 = vrot.slane %v7699, 2
    %v7734 = vsel %vm7718, %v7733, %v7732
    %v7735 = vrot.slane %v7701, 1
    %v7736 = vsel %vm7721, %v7735, %v7734
    %v7737 = vpack.c.b16 %v7722, %v7722
    %v7738 = vpack.c.b16 %v7736, %v7736
    %v7805 = vunpack.c.l.b16 %v7606
    %v7806 = vunpack.c.h.b16 %v7606
    %v7807 = vunpack.c.l.b16 %v7607
    %v7808 = vunpack.c.h.b16 %v7607
    %v7809 = vunpack.c.l.b16 %v7608
    %v7810 = vunpack.c.h.b16 %v7608
    %v7811 = vunpack.c.l.b16 %v7609
    %v7812 = vunpack.c.h.b16 %v7609
    %v7813 = vunpack.c.l.b16 %v7610
    %v7814 = vunpack.c.h.b16 %v7610
    %v7815 = vunpack.c.l.b16 %v7611
    %v7816 = vunpack.c.h.b16 %v7611
    %v7817 = vunpack.c.l.b16 %v7612
    %v7818 = vunpack.c.h.b16 %v7612
    %v7819 = vunpack.c.l.b16 %v7613
    %v7820 = vunpack.c.h.b16 %v7613
    %v7821 = vunpack.c.l.b16 %v7614
    %v7822 = vunpack.c.h.b16 %v7614
    %v7823 = vunpack.c.l.b16 %v7615
    %v7824 = vunpack.c.h.b16 %v7615
    %v7825 = vunpack.c.l.b16 %v7616
    %v7826 = vunpack.c.h.b16 %v7616
    %v7827 = vunpack.c.l.b16 %v7617
    %v7828 = vunpack.c.h.b16 %v7617
    %v7829 = vunpack.c.l.b16 %v7618
    %v7830 = vunpack.c.h.b16 %v7618
    %v7831 = vunpack.c.l.b16 %v7619
    %v7832 = vunpack.c.h.b16 %v7619
    %v7833 = vunpack.c.l.b16 %v7620
    %v7834 = vunpack.c.h.b16 %v7620
    %v7835 = vunpack.c.l.b16 %v7621
    %v7836 = vunpack.c.h.b16 %v7621
    %v7837 = vunpack.c.l.b16 %v7622
    %v7838 = vunpack.c.h.b16 %v7622
    %v7839 = vunpack.c.l.b16 %v7623
    %v7840 = vunpack.c.h.b16 %v7623
    %v7841 = vunpack.c.l.b16 %v7624
    %v7842 = vunpack.c.h.b16 %v7624
    %v7843 = vunpack.c.l.b16 %v7625
    %v7844 = vunpack.c.h.b16 %v7625
    %v7845 = vunpack.c.l.b16 %v7626
    %v7846 = vunpack.c.h.b16 %v7626
    %v7847 = vunpack.c.l.b16 %v7627
    %v7848 = vunpack.c.h.b16 %v7627
    %v7849 = vunpack.c.l.b16 %v7628
    %v7850 = vunpack.c.h.b16 %v7628
    %v7851 = vunpack.c.l.b16 %v7629
    %v7852 = vunpack.c.h.b16 %v7629
    %v7853 = vunpack.c.l.b16 %v7630
    %v7854 = vunpack.c.h.b16 %v7630
    %v7855 = vunpack.c.l.b16 %v7631
    %v7856 = vunpack.c.h.b16 %v7631
    %v7857 = vunpack.c.l.b16 %v7632
    %v7858 = vunpack.c.h.b16 %v7632
    %v7859 = vunpack.c.l.b16 %v7633
    %v7860 = vunpack.c.h.b16 %v7633
    %v7861 = vunpack.c.l.b16 %v7634
    %v7862 = vunpack.c.h.b16 %v7634
    %v7863 = vunpack.c.l.b16 %v7635
    %v7864 = vunpack.c.h.b16 %v7635
    %v7865 = vunpack.c.l.b16 %v7636
    %v7866 = vunpack.c.h.b16 %v7636
    %v7867 = vunpack.c.l.b16 %v7637
    %v7868 = vunpack.c.h.b16 %v7637
    %v7869 = vunpack.c.l.b16 %v7638
    %v7870 = vunpack.c.h.b16 %v7638
    %v7871 = vunpack.c.l.b16 %v7639
    %v7872 = vunpack.c.h.b16 %v7639
    %v7873 = vunpack.c.l.b16 %v7640
    %v7874 = vunpack.c.h.b16 %v7640
    %v7875 = vunpack.c.l.b16 %v7641
    %v7876 = vunpack.c.h.b16 %v7641
    %v7877 = vunpack.c.l.b16 %v7642
    %v7878 = vunpack.c.h.b16 %v7642
    %v7879 = vunpack.c.l.b16 %v7643
    %v7880 = vunpack.c.h.b16 %v7643
    %v7881 = vunpack.c.l.b16 %v7644
    %v7882 = vunpack.c.h.b16 %v7644
    %v7883 = vunpack.c.l.b16 %v7645
    %v7884 = vunpack.c.h.b16 %v7645
    %v7885 = vunpack.c.l.b16 %v7646
    %v7886 = vunpack.c.h.b16 %v7646
    %v7887 = vunpack.c.l.b16 %v7647
    %v7888 = vunpack.c.h.b16 %v7647
    %v7889 = vunpack.c.l.b16 %v7648
    %v7890 = vunpack.c.h.b16 %v7648
    %v7891 = vunpack.c.l.b16 %v7649
    %v7892 = vunpack.c.h.b16 %v7649
    %v7893 = vunpack.c.l.b16 %v7650
    %v7894 = vunpack.c.h.b16 %v7650
    %v7895 = vunpack.c.l.b16 %v7651
    %v7896 = vunpack.c.h.b16 %v7651
    %v7897 = vunpack.c.l.b16 %v7652
    %v7898 = vunpack.c.h.b16 %v7652
    %v7899 = vunpack.c.l.b16 %v7653
    %v7900 = vunpack.c.h.b16 %v7653
    %v7901 = vunpack.c.l.b16 %v7654
    %v7902 = vunpack.c.h.b16 %v7654
    %v7903 = vunpack.c.l.b16 %v7655
    %v7904 = vunpack.c.h.b16 %v7655
    %v7905 = vunpack.c.l.b16 %v7656
    %v7906 = vunpack.c.h.b16 %v7656
    %v7907 = vunpack.c.l.b16 %v7657
    %v7908 = vunpack.c.h.b16 %v7657
    %v7909 = vunpack.c.l.b16 %v7658
    %v7910 = vunpack.c.h.b16 %v7658
    %v7911 = vunpack.c.l.b16 %v7659
    %v7912 = vunpack.c.h.b16 %v7659
    %v7913 = vunpack.c.l.b16 %v7660
    %v7914 = vunpack.c.h.b16 %v7660
    %v7915 = vunpack.c.l.b16 %v7661
    %v7916 = vunpack.c.h.b16 %v7661
    %v7917 = vunpack.c.l.b16 %v7662
    %v7918 = vunpack.c.h.b16 %v7662
    %v7919 = vunpack.c.l.b16 %v7663
    %v7920 = vunpack.c.h.b16 %v7663
    %v7921 = vunpack.c.l.b16 %v7664
    %v7922 = vunpack.c.h.b16 %v7664
    %v7923 = vunpack.c.l.b16 %v7665
    %v7924 = vunpack.c.h.b16 %v7665
    %v7925 = vunpack.c.l.b16 %v7666
    %v7926 = vunpack.c.h.b16 %v7666
    %v7927 = vunpack.c.l.b16 %v7667
    %v7928 = vunpack.c.h.b16 %v7667
    %v7929 = vunpack.c.l.b16 %v7668
    %v7930 = vunpack.c.h.b16 %v7668
    %v7931 = vunpack.c.l.b16 %v7669
    %v7932 = vunpack.c.h.b16 %v7669
    %v7933 = vpack.c.b16 %v7809, %v7805
    %v7934 = vpack.c.b16 %v7810, %v7806
    %v7935 = vpack.c.b16 %v7811, %v7807
    %v7936 = vpack.c.b16 %v7812, %v7808
    %v7937 = vpack.c.b16 %v7817, %v7813
    %v7938 = vpack.c.b16 %v7818, %v7814
    %v7939 = vpack.c.b16 %v7819, %v7815
    %v7940 = vpack.c.b16 %v7820, %v7816
    %v7941 = vpack.c.b16 %v7825, %v7821
    %v7942 = vpack.c.b16 %v7826, %v7822
    %v7943 = vpack.c.b16 %v7827, %v7823
    %v7944 = vpack.c.b16 %v7828, %v7824
    %v7945 = vpack.c.b16 %v7833, %v7829
    %v7946 = vpack.c.b16 %v7834, %v7830
    %v7947 = vpack.c.b16 %v7835, %v7831
    %v7948 = vpack.c.b16 %v7836, %v7832
    %v7949 = vpack.c.b16 %v7841, %v7837
    %v7950 = vpack.c.b16 %v7842, %v7838
    %v7951 = vpack.c.b16 %v7843, %v7839
    %v7952 = vpack.c.b16 %v7844, %v7840
    %v7953 = vpack.c.b16 %v7849, %v7845
    %v7954 = vpack.c.b16 %v7850, %v7846
    %v7955 = vpack.c.b16 %v7851, %v7847
    %v7956 = vpack.c.b16 %v7852, %v7848
    %v7957 = vpack.c.b16 %v7857, %v7853
    %v7958 = vpack.c.b16 %v7858, %v7854
    %v7959 = vpack.c.b16 %v7859, %v7855
    %v7960 = vpack.c.b16 %v7860, %v7856
    %v7961 = vpack.c.b16 %v7865, %v7861
    %v7962 = vpack.c.b16 %v7866, %v7862
    %v7963 = vpack.c.b16 %v7867, %v7863
    %v7964 = vpack.c.b16 %v7868, %v7864
    %v7965 = vpack.c.b16 %v7873, %v7869
    %v7966 = vpack.c.b16 %v7874, %v7870
    %v7967 = vpack.c.b16 %v7875, %v7871
    %v7968 = vpack.c.b16 %v7876, %v7872
    %v7969 = vpack.c.b16 %v7881, %v7877
    %v7970 = vpack.c.b16 %v7882, %v7878
    %v7971 = vpack.c.b16 %v7883, %v7879
    %v7972 = vpack.c.b16 %v7884, %v7880
    %v7973 = vpack.c.b16 %v7889, %v7885
    %v7974 = vpack.c.b16 %v7890, %v7886
    %v7975 = vpack.c.b16 %v7891, %v7887
    %v7976 = vpack.c.b16 %v7892, %v7888
    %v7977 = vpack.c.b16 %v7897, %v7893
    %v7978 = vpack.c.b16 %v7898, %v7894
    %v7979 = vpack.c.b16 %v7899, %v7895
    %v7980 = vpack.c.b16 %v7900, %v7896
    %v7981 = vpack.c.b16 %v7905, %v7901
    %v7982 = vpack.c.b16 %v7906, %v7902
    %v7983 = vpack.c.b16 %v7907, %v7903
    %v7984 = vpack.c.b16 %v7908, %v7904
    %v7985 = vpack.c.b16 %v7913, %v7909
    %v7986 = vpack.c.b16 %v7914, %v7910
    %v7987 = vpack.c.b16 %v7915, %v7911
    %v7988 = vpack.c.b16 %v7916, %v7912
    %v7989 = vpack.c.b16 %v7921, %v7917
    %v7990 = vpack.c.b16 %v7922, %v7918
    %v7991 = vpack.c.b16 %v7923, %v7919
    %v7992 = vpack.c.b16 %v7924, %v7920
    %v7993 = vpack.c.b16 %v7929, %v7925
    %v7994 = vpack.c.b16 %v7930, %v7926
    %v7995 = vpack.c.b16 %v7931, %v7927
    %v7996 = vpack.c.b16 %v7932, %v7928
    %8061 = vmatpush.bf16.msra.mxu0 %v7961
    %8062 = vmatpush.bf16.msra.mxu0 %v7957
    %8063 = vmatpush.bf16.msra.mxu0 %v7953
    %8064 = vmatpush.bf16.msra.mxu0 %v7949
    %8065 = vmatpush.bf16.msra.mxu0 %v7945
    %8066 = vmatpush.bf16.msra.mxu0 %v7941
    %8067 = vmatpush.bf16.msra.mxu0 %v7937
    %8068 = vmatpush.bf16.msra.mxu0 %v7933
    %8069 = vmatmul.bf16.gmra.mxu0 %v7737
    %v8070 = vpop.f32.mrf.mxu0
    %v8071 = vadd.f32 0.0, %v8070
    %v8072 = vpop.f32.mrf.mxu0
    %8073 = vdwg.mxu0
    %8074 = vmatpush.bf16.msra.mxu0 %v7993
    %8075 = vmatpush.bf16.msra.mxu0 %v7989
    %8076 = vmatpush.bf16.msra.mxu0 %v7985
    %8077 = vmatpush.bf16.msra.mxu0 %v7981
    %8078 = vmatpush.bf16.msra.mxu0 %v7977
    %8079 = vmatpush.bf16.msra.mxu0 %v7973
    %8080 = vmatpush.bf16.msra.mxu0 %v7969
    %8081 = vmatpush.bf16.msra.mxu0 %v7965
    %8082 = vmatmul.bf16.gmra.mxu0 %v7738
    %v8083 = vpop.f32.mrf.mxu0
    %v8084 = vadd.f32 %v8071, %v8083
    %v8085 = vpop.f32.mrf.mxu0
    %8086 = vdwg.mxu0
    %8087 = vmatpush.bf16.msra.mxu0 %v7962
    %8088 = vmatpush.bf16.msra.mxu0 %v7958
    %8089 = vmatpush.bf16.msra.mxu0 %v7954
    %8090 = vmatpush.bf16.msra.mxu0 %v7950
    %8091 = vmatpush.bf16.msra.mxu0 %v7946
    %8092 = vmatpush.bf16.msra.mxu0 %v7942
    %8093 = vmatpush.bf16.msra.mxu0 %v7938
    %8094 = vmatpush.bf16.msra.mxu0 %v7934
    %8095 = vmatmul.bf16.gmra.mxu0 %v7737
    %v8096 = vpop.f32.mrf.mxu0
    %v8097 = vadd.f32 0.0, %v8096
    %v8098 = vpop.f32.mrf.mxu0
    %8099 = vdwg.mxu0
    %8100 = vmatpush.bf16.msra.mxu0 %v7994
    %8101 = vmatpush.bf16.msra.mxu0 %v7990
    %8102 = vmatpush.bf16.msra.mxu0 %v7986
    %8103 = vmatpush.bf16.msra.mxu0 %v7982
    %8104 = vmatpush.bf16.msra.mxu0 %v7978
    %8105 = vmatpush.bf16.msra.mxu0 %v7974
    %8106 = vmatpush.bf16.msra.mxu0 %v7970
    %8107 = vmatpush.bf16.msra.mxu0 %v7966
    %8108 = vmatmul.bf16.gmra.mxu0 %v7738
    %v8109 = vpop.f32.mrf.mxu0
    %v8110 = vadd.f32 %v8097, %v8109
    %v8111 = vpop.f32.mrf.mxu0
    %8112 = vdwg.mxu0
    %8113 = vmatpush.bf16.msra.mxu0 %v7963
    %8114 = vmatpush.bf16.msra.mxu0 %v7959
    %8115 = vmatpush.bf16.msra.mxu0 %v7955
    %8116 = vmatpush.bf16.msra.mxu0 %v7951
    %8117 = vmatpush.bf16.msra.mxu0 %v7947
    %8118 = vmatpush.bf16.msra.mxu0 %v7943
    %8119 = vmatpush.bf16.msra.mxu0 %v7939
    %8120 = vmatpush.bf16.msra.mxu0 %v7935
    %8121 = vmatmul.bf16.gmra.mxu0 %v7737
    %v8122 = vpop.f32.mrf.mxu0
    %v8123 = vadd.f32 0.0, %v8122
    %v8124 = vpop.f32.mrf.mxu0
    %8125 = vdwg.mxu0
    %8126 = vmatpush.bf16.msra.mxu0 %v7995
    %8127 = vmatpush.bf16.msra.mxu0 %v7991
    %8128 = vmatpush.bf16.msra.mxu0 %v7987
    %8129 = vmatpush.bf16.msra.mxu0 %v7983
    %8130 = vmatpush.bf16.msra.mxu0 %v7979
    %8131 = vmatpush.bf16.msra.mxu0 %v7975
    %8132 = vmatpush.bf16.msra.mxu0 %v7971
    %8133 = vmatpush.bf16.msra.mxu0 %v7967
    %8134 = vmatmul.bf16.gmra.mxu0 %v7738
    %v8135 = vpop.f32.mrf.mxu0
    %v8136 = vadd.f32 %v8123, %v8135
    %v8137 = vpop.f32.mrf.mxu0
    %8138 = vdwg.mxu0
    %8139 = vmatpush.bf16.msra.mxu0 %v7964
    %8140 = vmatpush.bf16.msra.mxu0 %v7960
    %8141 = vmatpush.bf16.msra.mxu0 %v7956
    %8142 = vmatpush.bf16.msra.mxu0 %v7952
    %8143 = vmatpush.bf16.msra.mxu0 %v7948
    %8144 = vmatpush.bf16.msra.mxu0 %v7944
    %8145 = vmatpush.bf16.msra.mxu0 %v7940
    %8146 = vmatpush.bf16.msra.mxu0 %v7936
    %8147 = vmatmul.bf16.gmra.mxu0 %v7737
    %v8148 = vpop.f32.mrf.mxu0
    %v8149 = vadd.f32 0.0, %v8148
    %v8150 = vpop.f32.mrf.mxu0
    %8151 = vdwg.mxu0
    %8152 = vmatpush.bf16.msra.mxu0 %v7996
    %8153 = vmatpush.bf16.msra.mxu0 %v7992
    %8154 = vmatpush.bf16.msra.mxu0 %v7988
    %8155 = vmatpush.bf16.msra.mxu0 %v7984
    %8156 = vmatpush.bf16.msra.mxu0 %v7980
    %8157 = vmatpush.bf16.msra.mxu0 %v7976
    %8158 = vmatpush.bf16.msra.mxu0 %v7972
    %8159 = vmatpush.bf16.msra.mxu0 %v7968
    %8160 = vmatmul.bf16.gmra.mxu0 %v7738
    %v8161 = vpop.f32.mrf.mxu0
    %v8162 = vadd.f32 %v8149, %v8161
    %v8163 = vpop.f32.mrf.mxu0
    %8164 = vdwg.mxu0
    %v8181 = vunpack.c.l.b16 %v7429
    %v8182 = vunpack.c.l.b16 %v7430
    %v8183 = vunpack.c.l.b16 %v7431
    %v8184 = vunpack.c.l.b16 %v7432
    %v8185 = vunpack.c.l.b16 %v7433
    %v8186 = vunpack.c.l.b16 %v7434
    %v8187 = vunpack.c.l.b16 %v7435
    %v8188 = vunpack.c.l.b16 %v7436
    %v8189 = vunpack.c.l.b16 %v7437
    %v8190 = vunpack.c.l.b16 %v7438
    %v8191 = vunpack.c.l.b16 %v7439
    %v8192 = vunpack.c.l.b16 %v7440
    %v8193 = vunpack.c.l.b16 %v7441
    %v8194 = vunpack.c.l.b16 %v7442
    %v8195 = vunpack.c.l.b16 %v7443
    %v8196 = vunpack.c.l.b16 %v7444
    %v8197 = vrot.slane %v8183, 7
    %v8198 = vsel %vm7703, %v8197, %v8181
    %v8199 = vrot.slane %v8185, 6
    %v8200 = vsel %vm7706, %v8199, %v8198
    %v8201 = vrot.slane %v8187, 5
    %v8202 = vsel %vm7709, %v8201, %v8200
    %v8203 = vrot.slane %v8189, 4
    %v8204 = vsel %vm7712, %v8203, %v8202
    %v8205 = vrot.slane %v8191, 3
    %v8206 = vsel %vm7715, %v8205, %v8204
    %v8207 = vrot.slane %v8193, 2
    %v8208 = vsel %vm7718, %v8207, %v8206
    %v8209 = vrot.slane %v8195, 1
    %v8210 = vsel %vm7721, %v8209, %v8208
    %v8211 = vrot.slane %v8184, 7
    %v8212 = vsel %vm7703, %v8211, %v8182
    %v8213 = vrot.slane %v8186, 6
    %v8214 = vsel %vm7706, %v8213, %v8212
    %v8215 = vrot.slane %v8188, 5
    %v8216 = vsel %vm7709, %v8215, %v8214
    %v8217 = vrot.slane %v8190, 4
    %v8218 = vsel %vm7712, %v8217, %v8216
    %v8219 = vrot.slane %v8192, 3
    %v8220 = vsel %vm7715, %v8219, %v8218
    %v8221 = vrot.slane %v8194, 2
    %v8222 = vsel %vm7718, %v8221, %v8220
    %v8223 = vrot.slane %v8196, 1
    %v8224 = vsel %vm7721, %v8223, %v8222
    %v8225 = vpack.c.b16 %v8210, %v8210
    %v8226 = vpack.c.b16 %v8224, %v8224
    %v8293 = vunpack.c.l.b16 %v7445
    %v8294 = vunpack.c.h.b16 %v7445
    %v8295 = vunpack.c.l.b16 %v7446
    %v8296 = vunpack.c.h.b16 %v7446
    %v8297 = vunpack.c.l.b16 %v7447
    %v8298 = vunpack.c.h.b16 %v7447
    %v8299 = vunpack.c.l.b16 %v7448
    %v8300 = vunpack.c.h.b16 %v7448
    %v8301 = vunpack.c.l.b16 %v7449
    %v8302 = vunpack.c.h.b16 %v7449
    %v8303 = vunpack.c.l.b16 %v7450
    %v8304 = vunpack.c.h.b16 %v7450
    %v8305 = vunpack.c.l.b16 %v7451
    %v8306 = vunpack.c.h.b16 %v7451
    %v8307 = vunpack.c.l.b16 %v7452
    %v8308 = vunpack.c.h.b16 %v7452
    %v8309 = vunpack.c.l.b16 %v7453
    %v8310 = vunpack.c.h.b16 %v7453
    %v8311 = vunpack.c.l.b16 %v7454
    %v8312 = vunpack.c.h.b16 %v7454
    %v8313 = vunpack.c.l.b16 %v7455
    %v8314 = vunpack.c.h.b16 %v7455
    %v8315 = vunpack.c.l.b16 %v7456
    %v8316 = vunpack.c.h.b16 %v7456
    %v8317 = vunpack.c.l.b16 %v7457
    %v8318 = vunpack.c.h.b16 %v7457
    %v8319 = vunpack.c.l.b16 %v7458
    %v8320 = vunpack.c.h.b16 %v7458
    %v8321 = vunpack.c.l.b16 %v7459
    %v8322 = vunpack.c.h.b16 %v7459
    %v8323 = vunpack.c.l.b16 %v7460
    %v8324 = vunpack.c.h.b16 %v7460
    %v8325 = vunpack.c.l.b16 %v7461
    %v8326 = vunpack.c.h.b16 %v7461
    %v8327 = vunpack.c.l.b16 %v7462
    %v8328 = vunpack.c.h.b16 %v7462
    %v8329 = vunpack.c.l.b16 %v7463
    %v8330 = vunpack.c.h.b16 %v7463
    %v8331 = vunpack.c.l.b16 %v7464
    %v8332 = vunpack.c.h.b16 %v7464
    %v8333 = vunpack.c.l.b16 %v7465
    %v8334 = vunpack.c.h.b16 %v7465
    %v8335 = vunpack.c.l.b16 %v7466
    %v8336 = vunpack.c.h.b16 %v7466
    %v8337 = vunpack.c.l.b16 %v7467
    %v8338 = vunpack.c.h.b16 %v7467
    %v8339 = vunpack.c.l.b16 %v7468
    %v8340 = vunpack.c.h.b16 %v7468
    %v8341 = vunpack.c.l.b16 %v7469
    %v8342 = vunpack.c.h.b16 %v7469
    %v8343 = vunpack.c.l.b16 %v7470
    %v8344 = vunpack.c.h.b16 %v7470
    %v8345 = vunpack.c.l.b16 %v7471
    %v8346 = vunpack.c.h.b16 %v7471
    %v8347 = vunpack.c.l.b16 %v7472
    %v8348 = vunpack.c.h.b16 %v7472
    %v8349 = vunpack.c.l.b16 %v7473
    %v8350 = vunpack.c.h.b16 %v7473
    %v8351 = vunpack.c.l.b16 %v7474
    %v8352 = vunpack.c.h.b16 %v7474
    %v8353 = vunpack.c.l.b16 %v7475
    %v8354 = vunpack.c.h.b16 %v7475
    %v8355 = vunpack.c.l.b16 %v7476
    %v8356 = vunpack.c.h.b16 %v7476
    %v8357 = vunpack.c.l.b16 %v7477
    %v8358 = vunpack.c.h.b16 %v7477
    %v8359 = vunpack.c.l.b16 %v7478
    %v8360 = vunpack.c.h.b16 %v7478
    %v8361 = vunpack.c.l.b16 %v7479
    %v8362 = vunpack.c.h.b16 %v7479
    %v8363 = vunpack.c.l.b16 %v7480
    %v8364 = vunpack.c.h.b16 %v7480
    %v8365 = vunpack.c.l.b16 %v7481
    %v8366 = vunpack.c.h.b16 %v7481
    %v8367 = vunpack.c.l.b16 %v7482
    %v8368 = vunpack.c.h.b16 %v7482
    %v8369 = vunpack.c.l.b16 %v7483
    %v8370 = vunpack.c.h.b16 %v7483
    %v8371 = vunpack.c.l.b16 %v7484
    %v8372 = vunpack.c.h.b16 %v7484
    %v8373 = vunpack.c.l.b16 %v7485
    %v8374 = vunpack.c.h.b16 %v7485
    %v8375 = vunpack.c.l.b16 %v7486
    %v8376 = vunpack.c.h.b16 %v7486
    %v8377 = vunpack.c.l.b16 %v7487
    %v8378 = vunpack.c.h.b16 %v7487
    %v8379 = vunpack.c.l.b16 %v7488
    %v8380 = vunpack.c.h.b16 %v7488
    %v8381 = vunpack.c.l.b16 %v7489
    %v8382 = vunpack.c.h.b16 %v7489
    %v8383 = vunpack.c.l.b16 %v7490
    %v8384 = vunpack.c.h.b16 %v7490
    %v8385 = vunpack.c.l.b16 %v7491
    %v8386 = vunpack.c.h.b16 %v7491
    %v8387 = vunpack.c.l.b16 %v7492
    %v8388 = vunpack.c.h.b16 %v7492
    %v8389 = vunpack.c.l.b16 %v7493
    %v8390 = vunpack.c.h.b16 %v7493
    %v8391 = vunpack.c.l.b16 %v7494
    %v8392 = vunpack.c.h.b16 %v7494
    %v8393 = vunpack.c.l.b16 %v7495
    %v8394 = vunpack.c.h.b16 %v7495
    %v8395 = vunpack.c.l.b16 %v7496
    %v8396 = vunpack.c.h.b16 %v7496
    %v8397 = vunpack.c.l.b16 %v7497
    %v8398 = vunpack.c.h.b16 %v7497
    %v8399 = vunpack.c.l.b16 %v7498
    %v8400 = vunpack.c.h.b16 %v7498
    %v8401 = vunpack.c.l.b16 %v7499
    %v8402 = vunpack.c.h.b16 %v7499
    %v8403 = vunpack.c.l.b16 %v7500
    %v8404 = vunpack.c.h.b16 %v7500
    %v8405 = vunpack.c.l.b16 %v7501
    %v8406 = vunpack.c.h.b16 %v7501
    %v8407 = vunpack.c.l.b16 %v7502
    %v8408 = vunpack.c.h.b16 %v7502
    %v8409 = vunpack.c.l.b16 %v7503
    %v8410 = vunpack.c.h.b16 %v7503
    %v8411 = vunpack.c.l.b16 %v7504
    %v8412 = vunpack.c.h.b16 %v7504
    %v8413 = vunpack.c.l.b16 %v7505
    %v8414 = vunpack.c.h.b16 %v7505
    %v8415 = vunpack.c.l.b16 %v7506
    %v8416 = vunpack.c.h.b16 %v7506
    %v8417 = vunpack.c.l.b16 %v7507
    %v8418 = vunpack.c.h.b16 %v7507
    %v8419 = vunpack.c.l.b16 %v7508
    %v8420 = vunpack.c.h.b16 %v7508
    %v8421 = vpack.c.b16 %v8297, %v8293
    %v8422 = vpack.c.b16 %v8298, %v8294
    %v8423 = vpack.c.b16 %v8299, %v8295
    %v8424 = vpack.c.b16 %v8300, %v8296
    %v8425 = vpack.c.b16 %v8305, %v8301
    %v8426 = vpack.c.b16 %v8306, %v8302
    %v8427 = vpack.c.b16 %v8307, %v8303
    %v8428 = vpack.c.b16 %v8308, %v8304
    %v8429 = vpack.c.b16 %v8313, %v8309
    %v8430 = vpack.c.b16 %v8314, %v8310
    %v8431 = vpack.c.b16 %v8315, %v8311
    %v8432 = vpack.c.b16 %v8316, %v8312
    %v8433 = vpack.c.b16 %v8321, %v8317
    %v8434 = vpack.c.b16 %v8322, %v8318
    %v8435 = vpack.c.b16 %v8323, %v8319
    %v8436 = vpack.c.b16 %v8324, %v8320
    %v8437 = vpack.c.b16 %v8329, %v8325
    %v8438 = vpack.c.b16 %v8330, %v8326
    %v8439 = vpack.c.b16 %v8331, %v8327
    %v8440 = vpack.c.b16 %v8332, %v8328
    %v8441 = vpack.c.b16 %v8337, %v8333
    %v8442 = vpack.c.b16 %v8338, %v8334
    %v8443 = vpack.c.b16 %v8339, %v8335
    %v8444 = vpack.c.b16 %v8340, %v8336
    %v8445 = vpack.c.b16 %v8345, %v8341
    %v8446 = vpack.c.b16 %v8346, %v8342
    %v8447 = vpack.c.b16 %v8347, %v8343
    %v8448 = vpack.c.b16 %v8348, %v8344
    %v8449 = vpack.c.b16 %v8353, %v8349
    %v8450 = vpack.c.b16 %v8354, %v8350
    %v8451 = vpack.c.b16 %v8355, %v8351
    %v8452 = vpack.c.b16 %v8356, %v8352
    %v8453 = vpack.c.b16 %v8361, %v8357
    %v8454 = vpack.c.b16 %v8362, %v8358
    %v8455 = vpack.c.b16 %v8363, %v8359
    %v8456 = vpack.c.b16 %v8364, %v8360
    %v8457 = vpack.c.b16 %v8369, %v8365
    %v8458 = vpack.c.b16 %v8370, %v8366
    %v8459 = vpack.c.b16 %v8371, %v8367
    %v8460 = vpack.c.b16 %v8372, %v8368
    %v8461 = vpack.c.b16 %v8377, %v8373
    %v8462 = vpack.c.b16 %v8378, %v8374
    %v8463 = vpack.c.b16 %v8379, %v8375
    %v8464 = vpack.c.b16 %v8380, %v8376
    %v8465 = vpack.c.b16 %v8385, %v8381
    %v8466 = vpack.c.b16 %v8386, %v8382
    %v8467 = vpack.c.b16 %v8387, %v8383
    %v8468 = vpack.c.b16 %v8388, %v8384
    %v8469 = vpack.c.b16 %v8393, %v8389
    %v8470 = vpack.c.b16 %v8394, %v8390
    %v8471 = vpack.c.b16 %v8395, %v8391
    %v8472 = vpack.c.b16 %v8396, %v8392
    %v8473 = vpack.c.b16 %v8401, %v8397
    %v8474 = vpack.c.b16 %v8402, %v8398
    %v8475 = vpack.c.b16 %v8403, %v8399
    %v8476 = vpack.c.b16 %v8404, %v8400
    %v8477 = vpack.c.b16 %v8409, %v8405
    %v8478 = vpack.c.b16 %v8410, %v8406
    %v8479 = vpack.c.b16 %v8411, %v8407
    %v8480 = vpack.c.b16 %v8412, %v8408
    %v8481 = vpack.c.b16 %v8417, %v8413
    %v8482 = vpack.c.b16 %v8418, %v8414
    %v8483 = vpack.c.b16 %v8419, %v8415
    %v8484 = vpack.c.b16 %v8420, %v8416
    %8549 = vmatpush.bf16.msra.mxu0 %v8449
    %8550 = vmatpush.bf16.msra.mxu0 %v8445
    %8551 = vmatpush.bf16.msra.mxu0 %v8441
    %8552 = vmatpush.bf16.msra.mxu0 %v8437
    %8553 = vmatpush.bf16.msra.mxu0 %v8433
    %8554 = vmatpush.bf16.msra.mxu0 %v8429
    %8555 = vmatpush.bf16.msra.mxu0 %v8425
    %8556 = vmatpush.bf16.msra.mxu0 %v8421
    %8557 = vmatmul.bf16.gmra.mxu0 %v8225
    %v8558 = vpop.f32.mrf.mxu0
    %v8559 = vadd.f32 %v8084, %v8558
    %v8560 = vpop.f32.mrf.mxu0
    %8561 = vdwg.mxu0
    %8562 = vmatpush.bf16.msra.mxu0 %v8481
    %8563 = vmatpush.bf16.msra.mxu0 %v8477
    %8564 = vmatpush.bf16.msra.mxu0 %v8473
    %8565 = vmatpush.bf16.msra.mxu0 %v8469
    %8566 = vmatpush.bf16.msra.mxu0 %v8465
    %8567 = vmatpush.bf16.msra.mxu0 %v8461
    %8568 = vmatpush.bf16.msra.mxu0 %v8457
    %8569 = vmatpush.bf16.msra.mxu0 %v8453
    %8570 = vmatmul.bf16.gmra.mxu0 %v8226
    %v8571 = vpop.f32.mrf.mxu0
    %v8572 = vadd.f32 %v8559, %v8571
    %v8573 = vpop.f32.mrf.mxu0
    %8574 = vdwg.mxu0
    %8575 = vmatpush.bf16.msra.mxu0 %v8450
    %8576 = vmatpush.bf16.msra.mxu0 %v8446
    %8577 = vmatpush.bf16.msra.mxu0 %v8442
    %8578 = vmatpush.bf16.msra.mxu0 %v8438
    %8579 = vmatpush.bf16.msra.mxu0 %v8434
    %8580 = vmatpush.bf16.msra.mxu0 %v8430
    %8581 = vmatpush.bf16.msra.mxu0 %v8426
    %8582 = vmatpush.bf16.msra.mxu0 %v8422
    %8583 = vmatmul.bf16.gmra.mxu0 %v8225
    %v8584 = vpop.f32.mrf.mxu0
    %v8585 = vadd.f32 %v8110, %v8584
    %v8586 = vpop.f32.mrf.mxu0
    %8587 = vdwg.mxu0
    %8588 = vmatpush.bf16.msra.mxu0 %v8482
    %8589 = vmatpush.bf16.msra.mxu0 %v8478
    %8590 = vmatpush.bf16.msra.mxu0 %v8474
    %8591 = vmatpush.bf16.msra.mxu0 %v8470
    %8592 = vmatpush.bf16.msra.mxu0 %v8466
    %8593 = vmatpush.bf16.msra.mxu0 %v8462
    %8594 = vmatpush.bf16.msra.mxu0 %v8458
    %8595 = vmatpush.bf16.msra.mxu0 %v8454
    %8596 = vmatmul.bf16.gmra.mxu0 %v8226
    %v8597 = vpop.f32.mrf.mxu0
    %v8598 = vadd.f32 %v8585, %v8597
    %v8599 = vpop.f32.mrf.mxu0
    %8600 = vdwg.mxu0
    %8601 = vmatpush.bf16.msra.mxu0 %v8451
    %8602 = vmatpush.bf16.msra.mxu0 %v8447
    %8603 = vmatpush.bf16.msra.mxu0 %v8443
    %8604 = vmatpush.bf16.msra.mxu0 %v8439
    %8605 = vmatpush.bf16.msra.mxu0 %v8435
    %8606 = vmatpush.bf16.msra.mxu0 %v8431
    %8607 = vmatpush.bf16.msra.mxu0 %v8427
    %8608 = vmatpush.bf16.msra.mxu0 %v8423
    %8609 = vmatmul.bf16.gmra.mxu0 %v8225
    %v8610 = vpop.f32.mrf.mxu0
    %v8611 = vadd.f32 %v8136, %v8610
    %v8612 = vpop.f32.mrf.mxu0
    %8613 = vdwg.mxu0
    %8614 = vmatpush.bf16.msra.mxu0 %v8483
    %8615 = vmatpush.bf16.msra.mxu0 %v8479
    %8616 = vmatpush.bf16.msra.mxu0 %v8475
    %8617 = vmatpush.bf16.msra.mxu0 %v8471
    %8618 = vmatpush.bf16.msra.mxu0 %v8467
    %8619 = vmatpush.bf16.msra.mxu0 %v8463
    %8620 = vmatpush.bf16.msra.mxu0 %v8459
    %8621 = vmatpush.bf16.msra.mxu0 %v8455
    %8622 = vmatmul.bf16.gmra.mxu0 %v8226
    %v8623 = vpop.f32.mrf.mxu0
    %v8624 = vadd.f32 %v8611, %v8623
    %v8625 = vpop.f32.mrf.mxu0
    %8626 = vdwg.mxu0
    %8627 = vmatpush.bf16.msra.mxu0 %v8452
    %8628 = vmatpush.bf16.msra.mxu0 %v8448
    %8629 = vmatpush.bf16.msra.mxu0 %v8444
    %8630 = vmatpush.bf16.msra.mxu0 %v8440
    %8631 = vmatpush.bf16.msra.mxu0 %v8436
    %8632 = vmatpush.bf16.msra.mxu0 %v8432
    %8633 = vmatpush.bf16.msra.mxu0 %v8428
    %8634 = vmatpush.bf16.msra.mxu0 %v8424
    %8635 = vmatmul.bf16.gmra.mxu0 %v8225
    %v8636 = vpop.f32.mrf.mxu0
    %v8637 = vadd.f32 %v8162, %v8636
    %v8638 = vpop.f32.mrf.mxu0
    %8639 = vdwg.mxu0
    %8640 = vmatpush.bf16.msra.mxu0 %v8484
    %8641 = vmatpush.bf16.msra.mxu0 %v8480
    %8642 = vmatpush.bf16.msra.mxu0 %v8476
    %8643 = vmatpush.bf16.msra.mxu0 %v8472
    %8644 = vmatpush.bf16.msra.mxu0 %v8468
    %8645 = vmatpush.bf16.msra.mxu0 %v8464
    %8646 = vmatpush.bf16.msra.mxu0 %v8460
    %8647 = vmatpush.bf16.msra.mxu0 %v8456
    %8648 = vmatmul.bf16.gmra.mxu0 %v8226
    %v8649 = vpop.f32.mrf.mxu0
    %v8650 = vadd.f32 %v8637, %v8649
    %v8651 = vpop.f32.mrf.mxu0
    %8652 = vdwg.mxu0
    %s8653 = scalar_lea.vmem [#allocation4], 4
    %v8654 = vld [vmem:[%s8653] ss:$8 sm:$0x3]
    %s8655 = scalar_lea.vmem [#allocation4], 20
    %v8656 = vld [vmem:[%s8655] ss:$8 sm:$0x3]
    %s8657 = scalar_lea.vmem [#allocation4], 36
    %v8658 = vld [vmem:[%s8657] ss:$8 sm:$0x3]
    %s8659 = scalar_lea.vmem [#allocation4], 52
    %v8660 = vld [vmem:[%s8659] ss:$8 sm:$0x3]
    %s8661 = scalar_lea.vmem [#allocation4], 68
    %v8662 = vld [vmem:[%s8661] ss:$8 sm:$0x3]
    %s8663 = scalar_lea.vmem [#allocation4], 84
    %v8664 = vld [vmem:[%s8663] ss:$8 sm:$0x3]
    %s8665 = scalar_lea.vmem [#allocation4], 100
    %v8666 = vld [vmem:[%s8665] ss:$8 sm:$0x3]
    %s8667 = scalar_lea.vmem [#allocation4], 116
    %v8668 = vld [vmem:[%s8667] ss:$8 sm:$0x3]
    %s8669 = scalar_lea.vmem [#allocation4], 5
    %v8670 = vld [vmem:[%s8669] ss:$8 sm:$0x3]
    %s8671 = scalar_lea.vmem [#allocation4], 21
    %v8672 = vld [vmem:[%s8671] ss:$8 sm:$0x3]
    %s8673 = scalar_lea.vmem [#allocation4], 37
    %v8674 = vld [vmem:[%s8673] ss:$8 sm:$0x3]
    %s8675 = scalar_lea.vmem [#allocation4], 53
    %v8676 = vld [vmem:[%s8675] ss:$8 sm:$0x3]
    %s8677 = scalar_lea.vmem [#allocation4], 69
    %v8678 = vld [vmem:[%s8677] ss:$8 sm:$0x3]
    %s8679 = scalar_lea.vmem [#allocation4], 85
    %v8680 = vld [vmem:[%s8679] ss:$8 sm:$0x3]
    %s8681 = scalar_lea.vmem [#allocation4], 101
    %v8682 = vld [vmem:[%s8681] ss:$8 sm:$0x3]
    %s8683 = scalar_lea.vmem [#allocation4], 117
    %v8684 = vld [vmem:[%s8683] ss:$8 sm:$0x3]
    %v8685 = vmax.f32 %v8654, %v8670
    %v8686 = vmax.f32 %v8656, %v8672
    %v8687 = vmax.f32 %v8658, %v8674
    %v8688 = vmax.f32 %v8660, %v8676
    %v8689 = vmax.f32 %v8662, %v8678
    %v8690 = vmax.f32 %v8664, %v8680
    %v8691 = vmax.f32 %v8666, %v8682
    %v8692 = vmax.f32 %v8668, %v8684
    %v8701 = vperm.slane %v8685, 0
    %v8702 = vperm.slane %v8685, 1
    %v8703 = vperm.slane %v8686, 0
    %v8704 = vperm.slane %v8686, 1
    %v8705 = vperm.slane %v8687, 0
    %v8706 = vperm.slane %v8687, 1
    %v8707 = vperm.slane %v8688, 0
    %v8708 = vperm.slane %v8688, 1
    %v8709 = vperm.slane %v8689, 0
    %v8710 = vperm.slane %v8689, 1
    %v8711 = vperm.slane %v8690, 0
    %v8712 = vperm.slane %v8690, 1
    %v8713 = vperm.slane %v8691, 0
    %v8714 = vperm.slane %v8691, 1
    %v8715 = vperm.slane %v8692, 0
    %v8716 = vperm.slane %v8692, 1
    %v8733 = vpack.c.bf16 %v8701, %v8701
    %v8734 = vpack.c.bf16 %v8702, %v8702
    %v8735 = vpack.c.bf16 %v8703, %v8703
    %v8736 = vpack.c.bf16 %v8704, %v8704
    %v8737 = vpack.c.bf16 %v8705, %v8705
    %v8738 = vpack.c.bf16 %v8706, %v8706
    %v8739 = vpack.c.bf16 %v8707, %v8707
    %v8740 = vpack.c.bf16 %v8708, %v8708
    %v8741 = vpack.c.bf16 %v8709, %v8709
    %v8742 = vpack.c.bf16 %v8710, %v8710
    %v8743 = vpack.c.bf16 %v8711, %v8711
    %v8744 = vpack.c.bf16 %v8712, %v8712
    %v8745 = vpack.c.bf16 %v8713, %v8713
    %v8746 = vpack.c.bf16 %v8714, %v8714
    %v8747 = vpack.c.bf16 %v8715, %v8715
    %v8748 = vpack.c.bf16 %v8716, %v8716
    %s8749 = scalar_lea.vmem [#allocation13], 1024
    %v8750 = vld [vmem:[%s8749] sm:$0xff]
    %v8751 = vld [vmem:[%s8749 + $0x8] sm:$0xff]
    %v8752 = vld [vmem:[%s8749 + $0x10] sm:$0xff]
    %v8753 = vld [vmem:[%s8749 + $0x18] sm:$0xff]
    %v8754 = vld [vmem:[%s8749 + $0x20] sm:$0xff]
    %v8755 = vld [vmem:[%s8749 + $0x28] sm:$0xff]
    %v8756 = vld [vmem:[%s8749 + $0x30] sm:$0xff]
    %v8757 = vld [vmem:[%s8749 + $0x38] sm:$0xff]
    %v8758 = vld [vmem:[%s8749 + $0x40] sm:$0xff]
    %v8759 = vld [vmem:[%s8749 + $0x48] sm:$0xff]
    %v8760 = vld [vmem:[%s8749 + $0x50] sm:$0xff]
    %v8761 = vld [vmem:[%s8749 + $0x58] sm:$0xff]
    %v8762 = vld [vmem:[%s8749 + $0x60] sm:$0xff]
    %v8763 = vld [vmem:[%s8749 + $0x68] sm:$0xff]
    %v8764 = vld [vmem:[%s8749 + $0x70] sm:$0xff]
    %v8765 = vld [vmem:[%s8749 + $0x78] sm:$0xff]
    %v8766 = vld [vmem:[%s8749 + $0x80] sm:$0xff]
    %v8767 = vld [vmem:[%s8749 + $0x88] sm:$0xff]
    %v8768 = vld [vmem:[%s8749 + $0x90] sm:$0xff]
    %v8769 = vld [vmem:[%s8749 + $0x98] sm:$0xff]
    %v8770 = vld [vmem:[%s8749 + $0xa0] sm:$0xff]
    %v8771 = vld [vmem:[%s8749 + $0xa8] sm:$0xff]
    %v8772 = vld [vmem:[%s8749 + $0xb0] sm:$0xff]
    %v8773 = vld [vmem:[%s8749 + $0xb8] sm:$0xff]
    %v8774 = vld [vmem:[%s8749 + $0xc0] sm:$0xff]
    %v8775 = vld [vmem:[%s8749 + $0xc8] sm:$0xff]
    %v8776 = vld [vmem:[%s8749 + $0xd0] sm:$0xff]
    %v8777 = vld [vmem:[%s8749 + $0xd8] sm:$0xff]
    %v8778 = vld [vmem:[%s8749 + $0xe0] sm:$0xff]
    %v8779 = vld [vmem:[%s8749 + $0xe8] sm:$0xff]
    %v8780 = vld [vmem:[%s8749 + $0xf0] sm:$0xff]
    %v8781 = vld [vmem:[%s8749 + $0xf8] sm:$0xff]
    %v8782 = vld [vmem:[%s8749 + $0x100] sm:$0xff]
    %v8783 = vld [vmem:[%s8749 + $0x108] sm:$0xff]
    %v8784 = vld [vmem:[%s8749 + $0x110] sm:$0xff]
    %v8785 = vld [vmem:[%s8749 + $0x118] sm:$0xff]
    %v8786 = vld [vmem:[%s8749 + $0x120] sm:$0xff]
    %v8787 = vld [vmem:[%s8749 + $0x128] sm:$0xff]
    %v8788 = vld [vmem:[%s8749 + $0x130] sm:$0xff]
    %v8789 = vld [vmem:[%s8749 + $0x138] sm:$0xff]
    %v8790 = vld [vmem:[%s8749 + $0x140] sm:$0xff]
    %v8791 = vld [vmem:[%s8749 + $0x148] sm:$0xff]
    %v8792 = vld [vmem:[%s8749 + $0x150] sm:$0xff]
    %v8793 = vld [vmem:[%s8749 + $0x158] sm:$0xff]
    %v8794 = vld [vmem:[%s8749 + $0x160] sm:$0xff]
    %v8795 = vld [vmem:[%s8749 + $0x168] sm:$0xff]
    %v8796 = vld [vmem:[%s8749 + $0x170] sm:$0xff]
    %v8797 = vld [vmem:[%s8749 + $0x178] sm:$0xff]
    %v8798 = vld [vmem:[%s8749 + $0x180] sm:$0xff]
    %v8799 = vld [vmem:[%s8749 + $0x188] sm:$0xff]
    %v8800 = vld [vmem:[%s8749 + $0x190] sm:$0xff]
    %v8801 = vld [vmem:[%s8749 + $0x198] sm:$0xff]
    %v8802 = vld [vmem:[%s8749 + $0x1a0] sm:$0xff]
    %v8803 = vld [vmem:[%s8749 + $0x1a8] sm:$0xff]
    %v8804 = vld [vmem:[%s8749 + $0x1b0] sm:$0xff]
    %v8805 = vld [vmem:[%s8749 + $0x1b8] sm:$0xff]
    %v8806 = vld [vmem:[%s8749 + $0x1c0] sm:$0xff]
    %v8807 = vld [vmem:[%s8749 + $0x1c8] sm:$0xff]
    %v8808 = vld [vmem:[%s8749 + $0x1d0] sm:$0xff]
    %v8809 = vld [vmem:[%s8749 + $0x1d8] sm:$0xff]
    %v8810 = vld [vmem:[%s8749 + $0x1e0] sm:$0xff]
    %v8811 = vld [vmem:[%s8749 + $0x1e8] sm:$0xff]
    %v8812 = vld [vmem:[%s8749 + $0x1f0] sm:$0xff]
    %v8813 = vld [vmem:[%s8749 + $0x1f8] sm:$0xff]
    %v8830 = vunpack.c.l.b16 %v8733
    %v8831 = vunpack.c.l.b16 %v8734
    %v8832 = vunpack.c.l.b16 %v8735
    %v8833 = vunpack.c.l.b16 %v8736
    %v8834 = vunpack.c.l.b16 %v8737
    %v8835 = vunpack.c.l.b16 %v8738
    %v8836 = vunpack.c.l.b16 %v8739
    %v8837 = vunpack.c.l.b16 %v8740
    %v8838 = vunpack.c.l.b16 %v8741
    %v8839 = vunpack.c.l.b16 %v8742
    %v8840 = vunpack.c.l.b16 %v8743
    %v8841 = vunpack.c.l.b16 %v8744
    %v8842 = vunpack.c.l.b16 %v8745
    %v8843 = vunpack.c.l.b16 %v8746
    %v8844 = vunpack.c.l.b16 %v8747
    %v8845 = vunpack.c.l.b16 %v8748
    %v8846 = vrot.slane %v8832, 7
    %v8847 = vsel %vm7703, %v8846, %v8830
    %v8848 = vrot.slane %v8834, 6
    %v8849 = vsel %vm7706, %v8848, %v8847
    %v8850 = vrot.slane %v8836, 5
    %v8851 = vsel %vm7709, %v8850, %v8849
    %v8852 = vrot.slane %v8838, 4
    %v8853 = vsel %vm7712, %v8852, %v8851
    %v8854 = vrot.slane %v8840, 3
    %v8855 = vsel %vm7715, %v8854, %v8853
    %v8856 = vrot.slane %v8842, 2
    %v8857 = vsel %vm7718, %v8856, %v8855
    %v8858 = vrot.slane %v8844, 1
    %v8859 = vsel %vm7721, %v8858, %v8857
    %v8860 = vrot.slane %v8833, 7
    %v8861 = vsel %vm7703, %v8860, %v8831
    %v8862 = vrot.slane %v8835, 6
    %v8863 = vsel %vm7706, %v8862, %v8861
    %v8864 = vrot.slane %v8837, 5
    %v8865 = vsel %vm7709, %v8864, %v8863
    %v8866 = vrot.slane %v8839, 4
    %v8867 = vsel %vm7712, %v8866, %v8865
    %v8868 = vrot.slane %v8841, 3
    %v8869 = vsel %vm7715, %v8868, %v8867
    %v8870 = vrot.slane %v8843, 2
    %v8871 = vsel %vm7718, %v8870, %v8869
    %v8872 = vrot.slane %v8845, 1
    %v8873 = vsel %vm7721, %v8872, %v8871
    %v8874 = vpack.c.b16 %v8859, %v8859
    %v8875 = vpack.c.b16 %v8873, %v8873
    %v8942 = vunpack.c.l.b16 %v8750
    %v8943 = vunpack.c.h.b16 %v8750
    %v8944 = vunpack.c.l.b16 %v8751
    %v8945 = vunpack.c.h.b16 %v8751
    %v8946 = vunpack.c.l.b16 %v8752
    %v8947 = vunpack.c.h.b16 %v8752
    %v8948 = vunpack.c.l.b16 %v8753
    %v8949 = vunpack.c.h.b16 %v8753
    %v8950 = vunpack.c.l.b16 %v8754
    %v8951 = vunpack.c.h.b16 %v8754
    %v8952 = vunpack.c.l.b16 %v8755
    %v8953 = vunpack.c.h.b16 %v8755
    %v8954 = vunpack.c.l.b16 %v8756
    %v8955 = vunpack.c.h.b16 %v8756
    %v8956 = vunpack.c.l.b16 %v8757
    %v8957 = vunpack.c.h.b16 %v8757
    %v8958 = vunpack.c.l.b16 %v8758
    %v8959 = vunpack.c.h.b16 %v8758
    %v8960 = vunpack.c.l.b16 %v8759
    %v8961 = vunpack.c.h.b16 %v8759
    %v8962 = vunpack.c.l.b16 %v8760
    %v8963 = vunpack.c.h.b16 %v8760
    %v8964 = vunpack.c.l.b16 %v8761
    %v8965 = vunpack.c.h.b16 %v8761
    %v8966 = vunpack.c.l.b16 %v8762
    %v8967 = vunpack.c.h.b16 %v8762
    %v8968 = vunpack.c.l.b16 %v8763
    %v8969 = vunpack.c.h.b16 %v8763
    %v8970 = vunpack.c.l.b16 %v8764
    %v8971 = vunpack.c.h.b16 %v8764
    %v8972 = vunpack.c.l.b16 %v8765
    %v8973 = vunpack.c.h.b16 %v8765
    %v8974 = vunpack.c.l.b16 %v8766
    %v8975 = vunpack.c.h.b16 %v8766
    %v8976 = vunpack.c.l.b16 %v8767
    %v8977 = vunpack.c.h.b16 %v8767
    %v8978 = vunpack.c.l.b16 %v8768
    %v8979 = vunpack.c.h.b16 %v8768
    %v8980 = vunpack.c.l.b16 %v8769
    %v8981 = vunpack.c.h.b16 %v8769
    %v8982 = vunpack.c.l.b16 %v8770
    %v8983 = vunpack.c.h.b16 %v8770
    %v8984 = vunpack.c.l.b16 %v8771
    %v8985 = vunpack.c.h.b16 %v8771
    %v8986 = vunpack.c.l.b16 %v8772
    %v8987 = vunpack.c.h.b16 %v8772
    %v8988 = vunpack.c.l.b16 %v8773
    %v8989 = vunpack.c.h.b16 %v8773
    %v8990 = vunpack.c.l.b16 %v8774
    %v8991 = vunpack.c.h.b16 %v8774
    %v8992 = vunpack.c.l.b16 %v8775
    %v8993 = vunpack.c.h.b16 %v8775
    %v8994 = vunpack.c.l.b16 %v8776
    %v8995 = vunpack.c.h.b16 %v8776
    %v8996 = vunpack.c.l.b16 %v8777
    %v8997 = vunpack.c.h.b16 %v8777
    %v8998 = vunpack.c.l.b16 %v8778
    %v8999 = vunpack.c.h.b16 %v8778
    %v9000 = vunpack.c.l.b16 %v8779
    %v9001 = vunpack.c.h.b16 %v8779
    %v9002 = vunpack.c.l.b16 %v8780
    %v9003 = vunpack.c.h.b16 %v8780
    %v9004 = vunpack.c.l.b16 %v8781
    %v9005 = vunpack.c.h.b16 %v8781
    %v9006 = vunpack.c.l.b16 %v8782
    %v9007 = vunpack.c.h.b16 %v8782
    %v9008 = vunpack.c.l.b16 %v8783
    %v9009 = vunpack.c.h.b16 %v8783
    %v9010 = vunpack.c.l.b16 %v8784
    %v9011 = vunpack.c.h.b16 %v8784
    %v9012 = vunpack.c.l.b16 %v8785
    %v9013 = vunpack.c.h.b16 %v8785
    %v9014 = vunpack.c.l.b16 %v8786
    %v9015 = vunpack.c.h.b16 %v8786
    %v9016 = vunpack.c.l.b16 %v8787
    %v9017 = vunpack.c.h.b16 %v8787
    %v9018 = vunpack.c.l.b16 %v8788
    %v9019 = vunpack.c.h.b16 %v8788
    %v9020 = vunpack.c.l.b16 %v8789
    %v9021 = vunpack.c.h.b16 %v8789
    %v9022 = vunpack.c.l.b16 %v8790
    %v9023 = vunpack.c.h.b16 %v8790
    %v9024 = vunpack.c.l.b16 %v8791
    %v9025 = vunpack.c.h.b16 %v8791
    %v9026 = vunpack.c.l.b16 %v8792
    %v9027 = vunpack.c.h.b16 %v8792
    %v9028 = vunpack.c.l.b16 %v8793
    %v9029 = vunpack.c.h.b16 %v8793
    %v9030 = vunpack.c.l.b16 %v8794
    %v9031 = vunpack.c.h.b16 %v8794
    %v9032 = vunpack.c.l.b16 %v8795
    %v9033 = vunpack.c.h.b16 %v8795
    %v9034 = vunpack.c.l.b16 %v8796
    %v9035 = vunpack.c.h.b16 %v8796
    %v9036 = vunpack.c.l.b16 %v8797
    %v9037 = vunpack.c.h.b16 %v8797
    %v9038 = vunpack.c.l.b16 %v8798
    %v9039 = vunpack.c.h.b16 %v8798
    %v9040 = vunpack.c.l.b16 %v8799
    %v9041 = vunpack.c.h.b16 %v8799
    %v9042 = vunpack.c.l.b16 %v8800
    %v9043 = vunpack.c.h.b16 %v8800
    %v9044 = vunpack.c.l.b16 %v8801
    %v9045 = vunpack.c.h.b16 %v8801
    %v9046 = vunpack.c.l.b16 %v8802
    %v9047 = vunpack.c.h.b16 %v8802
    %v9048 = vunpack.c.l.b16 %v8803
    %v9049 = vunpack.c.h.b16 %v8803
    %v9050 = vunpack.c.l.b16 %v8804
    %v9051 = vunpack.c.h.b16 %v8804
    %v9052 = vunpack.c.l.b16 %v8805
    %v9053 = vunpack.c.h.b16 %v8805
    %v9054 = vunpack.c.l.b16 %v8806
    %v9055 = vunpack.c.h.b16 %v8806
    %v9056 = vunpack.c.l.b16 %v8807
    %v9057 = vunpack.c.h.b16 %v8807
    %v9058 = vunpack.c.l.b16 %v8808
    %v9059 = vunpack.c.h.b16 %v8808
    %v9060 = vunpack.c.l.b16 %v8809
    %v9061 = vunpack.c.h.b16 %v8809
    %v9062 = vunpack.c.l.b16 %v8810
    %v9063 = vunpack.c.h.b16 %v8810
    %v9064 = vunpack.c.l.b16 %v8811
    %v9065 = vunpack.c.h.b16 %v8811
    %v9066 = vunpack.c.l.b16 %v8812
    %v9067 = vunpack.c.h.b16 %v8812
    %v9068 = vunpack.c.l.b16 %v8813
    %v9069 = vunpack.c.h.b16 %v8813
    %v9070 = vpack.c.b16 %v8946, %v8942
    %v9071 = vpack.c.b16 %v8947, %v8943
    %v9072 = vpack.c.b16 %v8948, %v8944
    %v9073 = vpack.c.b16 %v8949, %v8945
    %v9074 = vpack.c.b16 %v8954, %v8950
    %v9075 = vpack.c.b16 %v8955, %v8951
    %v9076 = vpack.c.b16 %v8956, %v8952
    %v9077 = vpack.c.b16 %v8957, %v8953
    %v9078 = vpack.c.b16 %v8962, %v8958
    %v9079 = vpack.c.b16 %v8963, %v8959
    %v9080 = vpack.c.b16 %v8964, %v8960
    %v9081 = vpack.c.b16 %v8965, %v8961
    %v9082 = vpack.c.b16 %v8970, %v8966
    %v9083 = vpack.c.b16 %v8971, %v8967
    %v9084 = vpack.c.b16 %v8972, %v8968
    %v9085 = vpack.c.b16 %v8973, %v8969
    %v9086 = vpack.c.b16 %v8978, %v8974
    %v9087 = vpack.c.b16 %v8979, %v8975
    %v9088 = vpack.c.b16 %v8980, %v8976
    %v9089 = vpack.c.b16 %v8981, %v8977
    %v9090 = vpack.c.b16 %v8986, %v8982
    %v9091 = vpack.c.b16 %v8987, %v8983
    %v9092 = vpack.c.b16 %v8988, %v8984
    %v9093 = vpack.c.b16 %v8989, %v8985
    %v9094 = vpack.c.b16 %v8994, %v8990
    %v9095 = vpack.c.b16 %v8995, %v8991
    %v9096 = vpack.c.b16 %v8996, %v8992
    %v9097 = vpack.c.b16 %v8997, %v8993
    %v9098 = vpack.c.b16 %v9002, %v8998
    %v9099 = vpack.c.b16 %v9003, %v8999
    %v9100 = vpack.c.b16 %v9004, %v9000
    %v9101 = vpack.c.b16 %v9005, %v9001
    %v9102 = vpack.c.b16 %v9010, %v9006
    %v9103 = vpack.c.b16 %v9011, %v9007
    %v9104 = vpack.c.b16 %v9012, %v9008
    %v9105 = vpack.c.b16 %v9013, %v9009
    %v9106 = vpack.c.b16 %v9018, %v9014
    %v9107 = vpack.c.b16 %v9019, %v9015
    %v9108 = vpack.c.b16 %v9020, %v9016
    %v9109 = vpack.c.b16 %v9021, %v9017
    %v9110 = vpack.c.b16 %v9026, %v9022
    %v9111 = vpack.c.b16 %v9027, %v9023
    %v9112 = vpack.c.b16 %v9028, %v9024
    %v9113 = vpack.c.b16 %v9029, %v9025
    %v9114 = vpack.c.b16 %v9034, %v9030
    %v9115 = vpack.c.b16 %v9035, %v9031
    %v9116 = vpack.c.b16 %v9036, %v9032
    %v9117 = vpack.c.b16 %v9037, %v9033
    %v9118 = vpack.c.b16 %v9042, %v9038
    %v9119 = vpack.c.b16 %v9043, %v9039
    %v9120 = vpack.c.b16 %v9044, %v9040
    %v9121 = vpack.c.b16 %v9045, %v9041
    %v9122 = vpack.c.b16 %v9050, %v9046
    %v9123 = vpack.c.b16 %v9051, %v9047
    %v9124 = vpack.c.b16 %v9052, %v9048
    %v9125 = vpack.c.b16 %v9053, %v9049
    %v9126 = vpack.c.b16 %v9058, %v9054
    %v9127 = vpack.c.b16 %v9059, %v9055
    %v9128 = vpack.c.b16 %v9060, %v9056
    %v9129 = vpack.c.b16 %v9061, %v9057
    %v9130 = vpack.c.b16 %v9066, %v9062
    %v9131 = vpack.c.b16 %v9067, %v9063
    %v9132 = vpack.c.b16 %v9068, %v9064
    %v9133 = vpack.c.b16 %v9069, %v9065
    %9198 = vmatpush.bf16.msra.mxu0 %v9098
    %9199 = vmatpush.bf16.msra.mxu0 %v9094
    %9200 = vmatpush.bf16.msra.mxu0 %v9090
    %9201 = vmatpush.bf16.msra.mxu0 %v9086
    %9202 = vmatpush.bf16.msra.mxu0 %v9082
    %9203 = vmatpush.bf16.msra.mxu0 %v9078
    %9204 = vmatpush.bf16.msra.mxu0 %v9074
    %9205 = vmatpush.bf16.msra.mxu0 %v9070
    %9206 = vmatmul.bf16.gmra.mxu0 %v8874
    %v9207 = vpop.f32.mrf.mxu0
    %v9208 = vadd.f32 0.0, %v9207
    %v9209 = vpop.f32.mrf.mxu0
    %9210 = vdwg.mxu0
    %9211 = vmatpush.bf16.msra.mxu0 %v9130
    %9212 = vmatpush.bf16.msra.mxu0 %v9126
    %9213 = vmatpush.bf16.msra.mxu0 %v9122
    %9214 = vmatpush.bf16.msra.mxu0 %v9118
    %9215 = vmatpush.bf16.msra.mxu0 %v9114
    %9216 = vmatpush.bf16.msra.mxu0 %v9110
    %9217 = vmatpush.bf16.msra.mxu0 %v9106
    %9218 = vmatpush.bf16.msra.mxu0 %v9102
    %9219 = vmatmul.bf16.gmra.mxu0 %v8875
    %v9220 = vpop.f32.mrf.mxu0
    %v9221 = vadd.f32 %v9208, %v9220
    %v9222 = vpop.f32.mrf.mxu0
    %9223 = vdwg.mxu0
    %9224 = vmatpush.bf16.msra.mxu0 %v9099
    %9225 = vmatpush.bf16.msra.mxu0 %v9095
    %9226 = vmatpush.bf16.msra.mxu0 %v9091
    %9227 = vmatpush.bf16.msra.mxu0 %v9087
    %9228 = vmatpush.bf16.msra.mxu0 %v9083
    %9229 = vmatpush.bf16.msra.mxu0 %v9079
    %9230 = vmatpush.bf16.msra.mxu0 %v9075
    %9231 = vmatpush.bf16.msra.mxu0 %v9071
    %9232 = vmatmul.bf16.gmra.mxu0 %v8874
    %v9233 = vpop.f32.mrf.mxu0
    %v9234 = vadd.f32 0.0, %v9233
    %v9235 = vpop.f32.mrf.mxu0
    %9236 = vdwg.mxu0
    %9237 = vmatpush.bf16.msra.mxu0 %v9131
    %9238 = vmatpush.bf16.msra.mxu0 %v9127
    %9239 = vmatpush.bf16.msra.mxu0 %v9123
    %9240 = vmatpush.bf16.msra.mxu0 %v9119
    %9241 = vmatpush.bf16.msra.mxu0 %v9115
    %9242 = vmatpush.bf16.msra.mxu0 %v9111
    %9243 = vmatpush.bf16.msra.mxu0 %v9107
    %9244 = vmatpush.bf16.msra.mxu0 %v9103
    %9245 = vmatmul.bf16.gmra.mxu0 %v8875
    %v9246 = vpop.f32.mrf.mxu0
    %v9247 = vadd.f32 %v9234, %v9246
    %v9248 = vpop.f32.mrf.mxu0
    %9249 = vdwg.mxu0
    %9250 = vmatpush.bf16.msra.mxu0 %v9100
    %9251 = vmatpush.bf16.msra.mxu0 %v9096
    %9252 = vmatpush.bf16.msra.mxu0 %v9092
    %9253 = vmatpush.bf16.msra.mxu0 %v9088
    %9254 = vmatpush.bf16.msra.mxu0 %v9084
    %9255 = vmatpush.bf16.msra.mxu0 %v9080
    %9256 = vmatpush.bf16.msra.mxu0 %v9076
    %9257 = vmatpush.bf16.msra.mxu0 %v9072
    %9258 = vmatmul.bf16.gmra.mxu0 %v8874
    %v9259 = vpop.f32.mrf.mxu0
    %v9260 = vadd.f32 0.0, %v9259
    %v9261 = vpop.f32.mrf.mxu0
    %9262 = vdwg.mxu0
    %9263 = vmatpush.bf16.msra.mxu0 %v9132
    %9264 = vmatpush.bf16.msra.mxu0 %v9128
    %9265 = vmatpush.bf16.msra.mxu0 %v9124
    %9266 = vmatpush.bf16.msra.mxu0 %v9120
    %9267 = vmatpush.bf16.msra.mxu0 %v9116
    %9268 = vmatpush.bf16.msra.mxu0 %v9112
    %9269 = vmatpush.bf16.msra.mxu0 %v9108
    %9270 = vmatpush.bf16.msra.mxu0 %v9104
    %9271 = vmatmul.bf16.gmra.mxu0 %v8875
    %v9272 = vpop.f32.mrf.mxu0
    %v9273 = vadd.f32 %v9260, %v9272
    %v9274 = vpop.f32.mrf.mxu0
    %9275 = vdwg.mxu0
    %9276 = vmatpush.bf16.msra.mxu0 %v9101
    %9277 = vmatpush.bf16.msra.mxu0 %v9097
    %9278 = vmatpush.bf16.msra.mxu0 %v9093
    %9279 = vmatpush.bf16.msra.mxu0 %v9089
    %9280 = vmatpush.bf16.msra.mxu0 %v9085
    %9281 = vmatpush.bf16.msra.mxu0 %v9081
    %9282 = vmatpush.bf16.msra.mxu0 %v9077
    %9283 = vmatpush.bf16.msra.mxu0 %v9073
    %9284 = vmatmul.bf16.gmra.mxu0 %v8874
    %v9285 = vpop.f32.mrf.mxu0
    %v9286 = vadd.f32 0.0, %v9285
    %v9287 = vpop.f32.mrf.mxu0
    %9288 = vdwg.mxu0
    %9289 = vmatpush.bf16.msra.mxu0 %v9133
    %9290 = vmatpush.bf16.msra.mxu0 %v9129
    %9291 = vmatpush.bf16.msra.mxu0 %v9125
    %9292 = vmatpush.bf16.msra.mxu0 %v9121
    %9293 = vmatpush.bf16.msra.mxu0 %v9117
    %9294 = vmatpush.bf16.msra.mxu0 %v9113
    %9295 = vmatpush.bf16.msra.mxu0 %v9109
    %9296 = vmatpush.bf16.msra.mxu0 %v9105
    %9297 = vmatmul.bf16.gmra.mxu0 %v8875
    %v9298 = vpop.f32.mrf.mxu0
    %v9299 = vadd.f32 %v9286, %v9298
    %v9300 = vpop.f32.mrf.mxu0
    %9301 = vdwg.mxu0
    %v9302 = vadd.f32 %v8572, %v9221
    %v9303 = vadd.f32 %v8598, %v9247
    %v9304 = vadd.f32 %v8624, %v9273
    %v9305 = vadd.f32 %v8650, %v9299
    %s9306 = scalar_lea.vmem [#allocation4], 6
    %v9307 = vld [vmem:[%s9306] ss:$8 sm:$0x3]
    %s9308 = scalar_lea.vmem [#allocation4], 22
    %v9309 = vld [vmem:[%s9308] ss:$8 sm:$0x3]
    %s9310 = scalar_lea.vmem [#allocation4], 38
    %v9311 = vld [vmem:[%s9310] ss:$8 sm:$0x3]
    %s9312 = scalar_lea.vmem [#allocation4], 54
    %v9313 = vld [vmem:[%s9312] ss:$8 sm:$0x3]
    %s9314 = scalar_lea.vmem [#allocation4], 70
    %v9315 = vld [vmem:[%s9314] ss:$8 sm:$0x3]
    %s9316 = scalar_lea.vmem [#allocation4], 86
    %v9317 = vld [vmem:[%s9316] ss:$8 sm:$0x3]
    %s9318 = scalar_lea.vmem [#allocation4], 102
    %v9319 = vld [vmem:[%s9318] ss:$8 sm:$0x3]
    %s9320 = scalar_lea.vmem [#allocation4], 118
    %v9321 = vld [vmem:[%s9320] ss:$8 sm:$0x3]
    %s9322 = scalar_lea.vmem [#allocation4], 7
    %v9323 = vld [vmem:[%s9322] ss:$8 sm:$0x3]
    %s9324 = scalar_lea.vmem [#allocation4], 23
    %v9325 = vld [vmem:[%s9324] ss:$8 sm:$0x3]
    %s9326 = scalar_lea.vmem [#allocation4], 39
    %v9327 = vld [vmem:[%s9326] ss:$8 sm:$0x3]
    %s9328 = scalar_lea.vmem [#allocation4], 55
    %v9329 = vld [vmem:[%s9328] ss:$8 sm:$0x3]
    %s9330 = scalar_lea.vmem [#allocation4], 71
    %v9331 = vld [vmem:[%s9330] ss:$8 sm:$0x3]
    %s9332 = scalar_lea.vmem [#allocation4], 87
    %v9333 = vld [vmem:[%s9332] ss:$8 sm:$0x3]
    %s9334 = scalar_lea.vmem [#allocation4], 103
    %v9335 = vld [vmem:[%s9334] ss:$8 sm:$0x3]
    %s9336 = scalar_lea.vmem [#allocation4], 119
    %v9337 = vld [vmem:[%s9336] ss:$8 sm:$0x3]
    %v9338 = vmax.f32 %v9307, %v9323
    %v9339 = vmax.f32 %v9309, %v9325
    %v9340 = vmax.f32 %v9311, %v9327
    %v9341 = vmax.f32 %v9313, %v9329
    %v9342 = vmax.f32 %v9315, %v9331
    %v9343 = vmax.f32 %v9317, %v9333
    %v9344 = vmax.f32 %v9319, %v9335
    %v9345 = vmax.f32 %v9321, %v9337
    %v9354 = vperm.slane %v9338, 0
    %v9355 = vperm.slane %v9338, 1
    %v9356 = vperm.slane %v9339, 0
    %v9357 = vperm.slane %v9339, 1
    %v9358 = vperm.slane %v9340, 0
    %v9359 = vperm.slane %v9340, 1
    %v9360 = vperm.slane %v9341, 0
    %v9361 = vperm.slane %v9341, 1
    %v9362 = vperm.slane %v9342, 0
    %v9363 = vperm.slane %v9342, 1
    %v9364 = vperm.slane %v9343, 0
    %v9365 = vperm.slane %v9343, 1
    %v9366 = vperm.slane %v9344, 0
    %v9367 = vperm.slane %v9344, 1
    %v9368 = vperm.slane %v9345, 0
    %v9369 = vperm.slane %v9345, 1
    %v9386 = vpack.c.bf16 %v9354, %v9354
    %v9387 = vpack.c.bf16 %v9355, %v9355
    %v9388 = vpack.c.bf16 %v9356, %v9356
    %v9389 = vpack.c.bf16 %v9357, %v9357
    %v9390 = vpack.c.bf16 %v9358, %v9358
    %v9391 = vpack.c.bf16 %v9359, %v9359
    %v9392 = vpack.c.bf16 %v9360, %v9360
    %v9393 = vpack.c.bf16 %v9361, %v9361
    %v9394 = vpack.c.bf16 %v9362, %v9362
    %v9395 = vpack.c.bf16 %v9363, %v9363
    %v9396 = vpack.c.bf16 %v9364, %v9364
    %v9397 = vpack.c.bf16 %v9365, %v9365
    %v9398 = vpack.c.bf16 %v9366, %v9366
    %v9399 = vpack.c.bf16 %v9367, %v9367
    %v9400 = vpack.c.bf16 %v9368, %v9368
    %v9401 = vpack.c.bf16 %v9369, %v9369
    %s9402 = scalar_lea.vmem [#allocation13], 1536
    %v9403 = vld [vmem:[%s9402] sm:$0xff]
    %v9404 = vld [vmem:[%s9402 + $0x8] sm:$0xff]
    %v9405 = vld [vmem:[%s9402 + $0x10] sm:$0xff]
    %v9406 = vld [vmem:[%s9402 + $0x18] sm:$0xff]
    %v9407 = vld [vmem:[%s9402 + $0x20] sm:$0xff]
    %v9408 = vld [vmem:[%s9402 + $0x28] sm:$0xff]
    %v9409 = vld [vmem:[%s9402 + $0x30] sm:$0xff]
    %v9410 = vld [vmem:[%s9402 + $0x38] sm:$0xff]
    %v9411 = vld [vmem:[%s9402 + $0x40] sm:$0xff]
    %v9412 = vld [vmem:[%s9402 + $0x48] sm:$0xff]
    %v9413 = vld [vmem:[%s9402 + $0x50] sm:$0xff]
    %v9414 = vld [vmem:[%s9402 + $0x58] sm:$0xff]
    %v9415 = vld [vmem:[%s9402 + $0x60] sm:$0xff]
    %v9416 = vld [vmem:[%s9402 + $0x68] sm:$0xff]
    %v9417 = vld [vmem:[%s9402 + $0x70] sm:$0xff]
    %v9418 = vld [vmem:[%s9402 + $0x78] sm:$0xff]
    %v9419 = vld [vmem:[%s9402 + $0x80] sm:$0xff]
    %v9420 = vld [vmem:[%s9402 + $0x88] sm:$0xff]
    %v9421 = vld [vmem:[%s9402 + $0x90] sm:$0xff]
    %v9422 = vld [vmem:[%s9402 + $0x98] sm:$0xff]
    %v9423 = vld [vmem:[%s9402 + $0xa0] sm:$0xff]
    %v9424 = vld [vmem:[%s9402 + $0xa8] sm:$0xff]
    %v9425 = vld [vmem:[%s9402 + $0xb0] sm:$0xff]
    %v9426 = vld [vmem:[%s9402 + $0xb8] sm:$0xff]
    %v9427 = vld [vmem:[%s9402 + $0xc0] sm:$0xff]
    %v9428 = vld [vmem:[%s9402 + $0xc8] sm:$0xff]
    %v9429 = vld [vmem:[%s9402 + $0xd0] sm:$0xff]
    %v9430 = vld [vmem:[%s9402 + $0xd8] sm:$0xff]
    %v9431 = vld [vmem:[%s9402 + $0xe0] sm:$0xff]
    %v9432 = vld [vmem:[%s9402 + $0xe8] sm:$0xff]
    %v9433 = vld [vmem:[%s9402 + $0xf0] sm:$0xff]
    %v9434 = vld [vmem:[%s9402 + $0xf8] sm:$0xff]
    %v9435 = vld [vmem:[%s9402 + $0x100] sm:$0xff]
    %v9436 = vld [vmem:[%s9402 + $0x108] sm:$0xff]
    %v9437 = vld [vmem:[%s9402 + $0x110] sm:$0xff]
    %v9438 = vld [vmem:[%s9402 + $0x118] sm:$0xff]
    %v9439 = vld [vmem:[%s9402 + $0x120] sm:$0xff]
    %v9440 = vld [vmem:[%s9402 + $0x128] sm:$0xff]
    %v9441 = vld [vmem:[%s9402 + $0x130] sm:$0xff]
    %v9442 = vld [vmem:[%s9402 + $0x138] sm:$0xff]
    %v9443 = vld [vmem:[%s9402 + $0x140] sm:$0xff]
    %v9444 = vld [vmem:[%s9402 + $0x148] sm:$0xff]
    %v9445 = vld [vmem:[%s9402 + $0x150] sm:$0xff]
    %v9446 = vld [vmem:[%s9402 + $0x158] sm:$0xff]
    %v9447 = vld [vmem:[%s9402 + $0x160] sm:$0xff]
    %v9448 = vld [vmem:[%s9402 + $0x168] sm:$0xff]
    %v9449 = vld [vmem:[%s9402 + $0x170] sm:$0xff]
    %v9450 = vld [vmem:[%s9402 + $0x178] sm:$0xff]
    %v9451 = vld [vmem:[%s9402 + $0x180] sm:$0xff]
    %v9452 = vld [vmem:[%s9402 + $0x188] sm:$0xff]
    %v9453 = vld [vmem:[%s9402 + $0x190] sm:$0xff]
    %v9454 = vld [vmem:[%s9402 + $0x198] sm:$0xff]
    %v9455 = vld [vmem:[%s9402 + $0x1a0] sm:$0xff]
    %v9456 = vld [vmem:[%s9402 + $0x1a8] sm:$0xff]
    %v9457 = vld [vmem:[%s9402 + $0x1b0] sm:$0xff]
    %v9458 = vld [vmem:[%s9402 + $0x1b8] sm:$0xff]
    %v9459 = vld [vmem:[%s9402 + $0x1c0] sm:$0xff]
    %v9460 = vld [vmem:[%s9402 + $0x1c8] sm:$0xff]
    %v9461 = vld [vmem:[%s9402 + $0x1d0] sm:$0xff]
    %v9462 = vld [vmem:[%s9402 + $0x1d8] sm:$0xff]
    %v9463 = vld [vmem:[%s9402 + $0x1e0] sm:$0xff]
    %v9464 = vld [vmem:[%s9402 + $0x1e8] sm:$0xff]
    %v9465 = vld [vmem:[%s9402 + $0x1f0] sm:$0xff]
    %v9466 = vld [vmem:[%s9402 + $0x1f8] sm:$0xff]
    %v9483 = vunpack.c.l.b16 %v9386
    %v9484 = vunpack.c.l.b16 %v9387
    %v9485 = vunpack.c.l.b16 %v9388
    %v9486 = vunpack.c.l.b16 %v9389
    %v9487 = vunpack.c.l.b16 %v9390
    %v9488 = vunpack.c.l.b16 %v9391
    %v9489 = vunpack.c.l.b16 %v9392
    %v9490 = vunpack.c.l.b16 %v9393
    %v9491 = vunpack.c.l.b16 %v9394
    %v9492 = vunpack.c.l.b16 %v9395
    %v9493 = vunpack.c.l.b16 %v9396
    %v9494 = vunpack.c.l.b16 %v9397
    %v9495 = vunpack.c.l.b16 %v9398
    %v9496 = vunpack.c.l.b16 %v9399
    %v9497 = vunpack.c.l.b16 %v9400
    %v9498 = vunpack.c.l.b16 %v9401
    %v9499 = vrot.slane %v9485, 7
    %v9500 = vsel %vm7703, %v9499, %v9483
    %v9501 = vrot.slane %v9487, 6
    %v9502 = vsel %vm7706, %v9501, %v9500
    %v9503 = vrot.slane %v9489, 5
    %v9504 = vsel %vm7709, %v9503, %v9502
    %v9505 = vrot.slane %v9491, 4
    %v9506 = vsel %vm7712, %v9505, %v9504
    %v9507 = vrot.slane %v9493, 3
    %v9508 = vsel %vm7715, %v9507, %v9506
    %v9509 = vrot.slane %v9495, 2
    %v9510 = vsel %vm7718, %v9509, %v9508
    %v9511 = vrot.slane %v9497, 1
    %v9512 = vsel %vm7721, %v9511, %v9510
    %v9513 = vrot.slane %v9486, 7
    %v9514 = vsel %vm7703, %v9513, %v9484
    %v9515 = vrot.slane %v9488, 6
    %v9516 = vsel %vm7706, %v9515, %v9514
    %v9517 = vrot.slane %v9490, 5
    %v9518 = vsel %vm7709, %v9517, %v9516
    %v9519 = vrot.slane %v9492, 4
    %v9520 = vsel %vm7712, %v9519, %v9518
    %v9521 = vrot.slane %v9494, 3
    %v9522 = vsel %vm7715, %v9521, %v9520
    %v9523 = vrot.slane %v9496, 2
    %v9524 = vsel %vm7718, %v9523, %v9522
    %v9525 = vrot.slane %v9498, 1
    %v9526 = vsel %vm7721, %v9525, %v9524
    %v9527 = vpack.c.b16 %v9512, %v9512
    %v9528 = vpack.c.b16 %v9526, %v9526
    %v9595 = vunpack.c.l.b16 %v9403
    %v9596 = vunpack.c.h.b16 %v9403
    %v9597 = vunpack.c.l.b16 %v9404
    %v9598 = vunpack.c.h.b16 %v9404
    %v9599 = vunpack.c.l.b16 %v9405
    %v9600 = vunpack.c.h.b16 %v9405
    %v9601 = vunpack.c.l.b16 %v9406
    %v9602 = vunpack.c.h.b16 %v9406
    %v9603 = vunpack.c.l.b16 %v9407
    %v9604 = vunpack.c.h.b16 %v9407
    %v9605 = vunpack.c.l.b16 %v9408
    %v9606 = vunpack.c.h.b16 %v9408
    %v9607 = vunpack.c.l.b16 %v9409
    %v9608 = vunpack.c.h.b16 %v9409
    %v9609 = vunpack.c.l.b16 %v9410
    %v9610 = vunpack.c.h.b16 %v9410
    %v9611 = vunpack.c.l.b16 %v9411
    %v9612 = vunpack.c.h.b16 %v9411
    %v9613 = vunpack.c.l.b16 %v9412
    %v9614 = vunpack.c.h.b16 %v9412
    %v9615 = vunpack.c.l.b16 %v9413
    %v9616 = vunpack.c.h.b16 %v9413
    %v9617 = vunpack.c.l.b16 %v9414
    %v9618 = vunpack.c.h.b16 %v9414
    %v9619 = vunpack.c.l.b16 %v9415
    %v9620 = vunpack.c.h.b16 %v9415
    %v9621 = vunpack.c.l.b16 %v9416
    %v9622 = vunpack.c.h.b16 %v9416
    %v9623 = vunpack.c.l.b16 %v9417
    %v9624 = vunpack.c.h.b16 %v9417
    %v9625 = vunpack.c.l.b16 %v9418
    %v9626 = vunpack.c.h.b16 %v9418
    %v9627 = vunpack.c.l.b16 %v9419
    %v9628 = vunpack.c.h.b16 %v9419
    %v9629 = vunpack.c.l.b16 %v9420
    %v9630 = vunpack.c.h.b16 %v9420
    %v9631 = vunpack.c.l.b16 %v9421
    %v9632 = vunpack.c.h.b16 %v9421
    %v9633 = vunpack.c.l.b16 %v9422
    %v9634 = vunpack.c.h.b16 %v9422
    %v9635 = vunpack.c.l.b16 %v9423
    %v9636 = vunpack.c.h.b16 %v9423
    %v9637 = vunpack.c.l.b16 %v9424
    %v9638 = vunpack.c.h.b16 %v9424
    %v9639 = vunpack.c.l.b16 %v9425
    %v9640 = vunpack.c.h.b16 %v9425
    %v9641 = vunpack.c.l.b16 %v9426
    %v9642 = vunpack.c.h.b16 %v9426
    %v9643 = vunpack.c.l.b16 %v9427
    %v9644 = vunpack.c.h.b16 %v9427
    %v9645 = vunpack.c.l.b16 %v9428
    %v9646 = vunpack.c.h.b16 %v9428
    %v9647 = vunpack.c.l.b16 %v9429
    %v9648 = vunpack.c.h.b16 %v9429
    %v9649 = vunpack.c.l.b16 %v9430
    %v9650 = vunpack.c.h.b16 %v9430
    %v9651 = vunpack.c.l.b16 %v9431
    %v9652 = vunpack.c.h.b16 %v9431
    %v9653 = vunpack.c.l.b16 %v9432
    %v9654 = vunpack.c.h.b16 %v9432
    %v9655 = vunpack.c.l.b16 %v9433
    %v9656 = vunpack.c.h.b16 %v9433
    %v9657 = vunpack.c.l.b16 %v9434
    %v9658 = vunpack.c.h.b16 %v9434
    %v9659 = vunpack.c.l.b16 %v9435
    %v9660 = vunpack.c.h.b16 %v9435
    %v9661 = vunpack.c.l.b16 %v9436
    %v9662 = vunpack.c.h.b16 %v9436
    %v9663 = vunpack.c.l.b16 %v9437
    %v9664 = vunpack.c.h.b16 %v9437
    %v9665 = vunpack.c.l.b16 %v9438
    %v9666 = vunpack.c.h.b16 %v9438
    %v9667 = vunpack.c.l.b16 %v9439
    %v9668 = vunpack.c.h.b16 %v9439
    %v9669 = vunpack.c.l.b16 %v9440
    %v9670 = vunpack.c.h.b16 %v9440
    %v9671 = vunpack.c.l.b16 %v9441
    %v9672 = vunpack.c.h.b16 %v9441
    %v9673 = vunpack.c.l.b16 %v9442
    %v9674 = vunpack.c.h.b16 %v9442
    %v9675 = vunpack.c.l.b16 %v9443
    %v9676 = vunpack.c.h.b16 %v9443
    %v9677 = vunpack.c.l.b16 %v9444
    %v9678 = vunpack.c.h.b16 %v9444
    %v9679 = vunpack.c.l.b16 %v9445
    %v9680 = vunpack.c.h.b16 %v9445
    %v9681 = vunpack.c.l.b16 %v9446
    %v9682 = vunpack.c.h.b16 %v9446
    %v9683 = vunpack.c.l.b16 %v9447
    %v9684 = vunpack.c.h.b16 %v9447
    %v9685 = vunpack.c.l.b16 %v9448
    %v9686 = vunpack.c.h.b16 %v9448
    %v9687 = vunpack.c.l.b16 %v9449
    %v9688 = vunpack.c.h.b16 %v9449
    %v9689 = vunpack.c.l.b16 %v9450
    %v9690 = vunpack.c.h.b16 %v9450
    %v9691 = vunpack.c.l.b16 %v9451
    %v9692 = vunpack.c.h.b16 %v9451
    %v9693 = vunpack.c.l.b16 %v9452
    %v9694 = vunpack.c.h.b16 %v9452
    %v9695 = vunpack.c.l.b16 %v9453
    %v9696 = vunpack.c.h.b16 %v9453
    %v9697 = vunpack.c.l.b16 %v9454
    %v9698 = vunpack.c.h.b16 %v9454
    %v9699 = vunpack.c.l.b16 %v9455
    %v9700 = vunpack.c.h.b16 %v9455
    %v9701 = vunpack.c.l.b16 %v9456
    %v9702 = vunpack.c.h.b16 %v9456
    %v9703 = vunpack.c.l.b16 %v9457
    %v9704 = vunpack.c.h.b16 %v9457
    %v9705 = vunpack.c.l.b16 %v9458
    %v9706 = vunpack.c.h.b16 %v9458
    %v9707 = vunpack.c.l.b16 %v9459
    %v9708 = vunpack.c.h.b16 %v9459
    %v9709 = vunpack.c.l.b16 %v9460
    %v9710 = vunpack.c.h.b16 %v9460
    %v9711 = vunpack.c.l.b16 %v9461
    %v9712 = vunpack.c.h.b16 %v9461
    %v9713 = vunpack.c.l.b16 %v9462
    %v9714 = vunpack.c.h.b16 %v9462
    %v9715 = vunpack.c.l.b16 %v9463
    %v9716 = vunpack.c.h.b16 %v9463
    %v9717 = vunpack.c.l.b16 %v9464
    %v9718 = vunpack.c.h.b16 %v9464
    %v9719 = vunpack.c.l.b16 %v9465
    %v9720 = vunpack.c.h.b16 %v9465
    %v9721 = vunpack.c.l.b16 %v9466
    %v9722 = vunpack.c.h.b16 %v9466
    %v9723 = vpack.c.b16 %v9599, %v9595
    %v9724 = vpack.c.b16 %v9600, %v9596
    %v9725 = vpack.c.b16 %v9601, %v9597
    %v9726 = vpack.c.b16 %v9602, %v9598
    %v9727 = vpack.c.b16 %v9607, %v9603
    %v9728 = vpack.c.b16 %v9608, %v9604
    %v9729 = vpack.c.b16 %v9609, %v9605
    %v9730 = vpack.c.b16 %v9610, %v9606
    %v9731 = vpack.c.b16 %v9615, %v9611
    %v9732 = vpack.c.b16 %v9616, %v9612
    %v9733 = vpack.c.b16 %v9617, %v9613
    %v9734 = vpack.c.b16 %v9618, %v9614
    %v9735 = vpack.c.b16 %v9623, %v9619
    %v9736 = vpack.c.b16 %v9624, %v9620
    %v9737 = vpack.c.b16 %v9625, %v9621
    %v9738 = vpack.c.b16 %v9626, %v9622
    %v9739 = vpack.c.b16 %v9631, %v9627
    %v9740 = vpack.c.b16 %v9632, %v9628
    %v9741 = vpack.c.b16 %v9633, %v9629
    %v9742 = vpack.c.b16 %v9634, %v9630
    %v9743 = vpack.c.b16 %v9639, %v9635
    %v9744 = vpack.c.b16 %v9640, %v9636
    %v9745 = vpack.c.b16 %v9641, %v9637
    %v9746 = vpack.c.b16 %v9642, %v9638
    %v9747 = vpack.c.b16 %v9647, %v9643
    %v9748 = vpack.c.b16 %v9648, %v9644
    %v9749 = vpack.c.b16 %v9649, %v9645
    %v9750 = vpack.c.b16 %v9650, %v9646
    %v9751 = vpack.c.b16 %v9655, %v9651
    %v9752 = vpack.c.b16 %v9656, %v9652
    %v9753 = vpack.c.b16 %v9657, %v9653
    %v9754 = vpack.c.b16 %v9658, %v9654
    %v9755 = vpack.c.b16 %v9663, %v9659
    %v9756 = vpack.c.b16 %v9664, %v9660
    %v9757 = vpack.c.b16 %v9665, %v9661
    %v9758 = vpack.c.b16 %v9666, %v9662
    %v9759 = vpack.c.b16 %v9671, %v9667
    %v9760 = vpack.c.b16 %v9672, %v9668
    %v9761 = vpack.c.b16 %v9673, %v9669
    %v9762 = vpack.c.b16 %v9674, %v9670
    %v9763 = vpack.c.b16 %v9679, %v9675
    %v9764 = vpack.c.b16 %v9680, %v9676
    %v9765 = vpack.c.b16 %v9681, %v9677
    %v9766 = vpack.c.b16 %v9682, %v9678
    %v9767 = vpack.c.b16 %v9687, %v9683
    %v9768 = vpack.c.b16 %v9688, %v9684
    %v9769 = vpack.c.b16 %v9689, %v9685
    %v9770 = vpack.c.b16 %v9690, %v9686
    %v9771 = vpack.c.b16 %v9695, %v9691
    %v9772 = vpack.c.b16 %v9696, %v9692
    %v9773 = vpack.c.b16 %v9697, %v9693
    %v9774 = vpack.c.b16 %v9698, %v9694
    %v9775 = vpack.c.b16 %v9703, %v9699
    %v9776 = vpack.c.b16 %v9704, %v9700
    %v9777 = vpack.c.b16 %v9705, %v9701
    %v9778 = vpack.c.b16 %v9706, %v9702
    %v9779 = vpack.c.b16 %v9711, %v9707
    %v9780 = vpack.c.b16 %v9712, %v9708
    %v9781 = vpack.c.b16 %v9713, %v9709
    %v9782 = vpack.c.b16 %v9714, %v9710
    %v9783 = vpack.c.b16 %v9719, %v9715
    %v9784 = vpack.c.b16 %v9720, %v9716
    %v9785 = vpack.c.b16 %v9721, %v9717
    %v9786 = vpack.c.b16 %v9722, %v9718
    %9851 = vmatpush.bf16.msra.mxu0 %v9751
    %9852 = vmatpush.bf16.msra.mxu0 %v9747
    %9853 = vmatpush.bf16.msra.mxu0 %v9743
    %9854 = vmatpush.bf16.msra.mxu0 %v9739
    %9855 = vmatpush.bf16.msra.mxu0 %v9735
    %9856 = vmatpush.bf16.msra.mxu0 %v9731
    %9857 = vmatpush.bf16.msra.mxu0 %v9727
    %9858 = vmatpush.bf16.msra.mxu0 %v9723
    %9859 = vmatmul.bf16.gmra.mxu0 %v9527
    %v9860 = vpop.f32.mrf.mxu0
    %v9861 = vadd.f32 0.0, %v9860
    %v9862 = vpop.f32.mrf.mxu0
    %9863 = vdwg.mxu0
    %9864 = vmatpush.bf16.msra.mxu0 %v9783
    %9865 = vmatpush.bf16.msra.mxu0 %v9779
    %9866 = vmatpush.bf16.msra.mxu0 %v9775
    %9867 = vmatpush.bf16.msra.mxu0 %v9771
    %9868 = vmatpush.bf16.msra.mxu0 %v9767
    %9869 = vmatpush.bf16.msra.mxu0 %v9763
    %9870 = vmatpush.bf16.msra.mxu0 %v9759
    %9871 = vmatpush.bf16.msra.mxu0 %v9755
    %9872 = vmatmul.bf16.gmra.mxu0 %v9528
    %v9873 = vpop.f32.mrf.mxu0
    %v9874 = vadd.f32 %v9861, %v9873
    %v9875 = vpop.f32.mrf.mxu0
    %9876 = vdwg.mxu0
    %9877 = vmatpush.bf16.msra.mxu0 %v9752
    %9878 = vmatpush.bf16.msra.mxu0 %v9748
    %9879 = vmatpush.bf16.msra.mxu0 %v9744
    %9880 = vmatpush.bf16.msra.mxu0 %v9740
    %9881 = vmatpush.bf16.msra.mxu0 %v9736
    %9882 = vmatpush.bf16.msra.mxu0 %v9732
    %9883 = vmatpush.bf16.msra.mxu0 %v9728
    %9884 = vmatpush.bf16.msra.mxu0 %v9724
    %9885 = vmatmul.bf16.gmra.mxu0 %v9527
    %v9886 = vpop.f32.mrf.mxu0
    %v9887 = vadd.f32 0.0, %v9886
    %v9888 = vpop.f32.mrf.mxu0
    %9889 = vdwg.mxu0
    %9890 = vmatpush.bf16.msra.mxu0 %v9784
    %9891 = vmatpush.bf16.msra.mxu0 %v9780
    %9892 = vmatpush.bf16.msra.mxu0 %v9776
    %9893 = vmatpush.bf16.msra.mxu0 %v9772
    %9894 = vmatpush.bf16.msra.mxu0 %v9768
    %9895 = vmatpush.bf16.msra.mxu0 %v9764
    %9896 = vmatpush.bf16.msra.mxu0 %v9760
    %9897 = vmatpush.bf16.msra.mxu0 %v9756
    %9898 = vmatmul.bf16.gmra.mxu0 %v9528
    %v9899 = vpop.f32.mrf.mxu0
    %v9900 = vadd.f32 %v9887, %v9899
    %v9901 = vpop.f32.mrf.mxu0
    %9902 = vdwg.mxu0
    %9903 = vmatpush.bf16.msra.mxu0 %v9753
    %9904 = vmatpush.bf16.msra.mxu0 %v9749
    %9905 = vmatpush.bf16.msra.mxu0 %v9745
    %9906 = vmatpush.bf16.msra.mxu0 %v9741
    %9907 = vmatpush.bf16.msra.mxu0 %v9737
    %9908 = vmatpush.bf16.msra.mxu0 %v9733
    %9909 = vmatpush.bf16.msra.mxu0 %v9729
    %9910 = vmatpush.bf16.msra.mxu0 %v9725
    %9911 = vmatmul.bf16.gmra.mxu0 %v9527
    %v9912 = vpop.f32.mrf.mxu0
    %v9913 = vadd.f32 0.0, %v9912
    %v9914 = vpop.f32.mrf.mxu0
    %9915 = vdwg.mxu0
    %9916 = vmatpush.bf16.msra.mxu0 %v9785
    %9917 = vmatpush.bf16.msra.mxu0 %v9781
    %9918 = vmatpush.bf16.msra.mxu0 %v9777
    %9919 = vmatpush.bf16.msra.mxu0 %v9773
    %9920 = vmatpush.bf16.msra.mxu0 %v9769
    %9921 = vmatpush.bf16.msra.mxu0 %v9765
    %9922 = vmatpush.bf16.msra.mxu0 %v9761
    %9923 = vmatpush.bf16.msra.mxu0 %v9757
    %9924 = vmatmul.bf16.gmra.mxu0 %v9528
    %v9925 = vpop.f32.mrf.mxu0
    %v9926 = vadd.f32 %v9913, %v9925
    %v9927 = vpop.f32.mrf.mxu0
    %9928 = vdwg.mxu0
    %9929 = vmatpush.bf16.msra.mxu0 %v9754
    %9930 = vmatpush.bf16.msra.mxu0 %v9750
    %9931 = vmatpush.bf16.msra.mxu0 %v9746
    %9932 = vmatpush.bf16.msra.mxu0 %v9742
    %9933 = vmatpush.bf16.msra.mxu0 %v9738
    %9934 = vmatpush.bf16.msra.mxu0 %v9734
    %9935 = vmatpush.bf16.msra.mxu0 %v9730
    %9936 = vmatpush.bf16.msra.mxu0 %v9726
    %9937 = vmatmul.bf16.gmra.mxu0 %v9527
    %v9938 = vpop.f32.mrf.mxu0
    %v9939 = vadd.f32 0.0, %v9938
    %v9940 = vpop.f32.mrf.mxu0
    %9941 = vdwg.mxu0
    %9942 = vmatpush.bf16.msra.mxu0 %v9786
    %9943 = vmatpush.bf16.msra.mxu0 %v9782
    %9944 = vmatpush.bf16.msra.mxu0 %v9778
    %9945 = vmatpush.bf16.msra.mxu0 %v9774
    %9946 = vmatpush.bf16.msra.mxu0 %v9770
    %9947 = vmatpush.bf16.msra.mxu0 %v9766
    %9948 = vmatpush.bf16.msra.mxu0 %v9762
    %9949 = vmatpush.bf16.msra.mxu0 %v9758
    %9950 = vmatmul.bf16.gmra.mxu0 %v9528
    %v9951 = vpop.f32.mrf.mxu0
    %v9952 = vadd.f32 %v9939, %v9951
    %v9953 = vpop.f32.mrf.mxu0
    %9954 = vdwg.mxu0
    %v9955 = vadd.f32 %v9302, %v9874
    %v9956 = vadd.f32 %v9303, %v9900
    %v9957 = vadd.f32 %v9304, %v9926
    %v9958 = vadd.f32 %v9305, %v9952
    %v9959 = vld [vmem:[#allocation14] sm:$0xf]
    %v9961 = vperm.slane %v9959, 0
    %v9962 = vperm.slane %v9959, 1
    %v9963 = vperm.slane %v9959, 2
    %v9964 = vperm.slane %v9959, 3
    %v9969 = vadd.f32 %v9955, %v9961
    %v9970 = vadd.f32 %v9956, %v9962
    %v9971 = vadd.f32 %v9957, %v9963
    %v9972 = vadd.f32 %v9958, %v9964
    %v9973 = vmax.f32 %v9969, 0.0
    %v9974 = vmax.f32 %v9970, 0.0
    %v9975 = vmax.f32 %v9971, 0.0
    %v9976 = vmax.f32 %v9972, 0.0
    %v9977 = vpack.c.bf16 %v9973, %v9973
    %v9978 = vpack.c.bf16 %v9974, %v9974
    %v9979 = vpack.c.bf16 %v9975, %v9975
    %v9980 = vpack.c.bf16 %v9976, %v9976
    %v9981 = vld [vmem:[#allocation16] sm:$0xf]
    %v9982 = vld [vmem:[#allocation16 + $0x4] sm:$0xf]
    %v9983 = vld [vmem:[#allocation16 + $0x8] sm:$0xf]
    %v9984 = vld [vmem:[#allocation16 + $0xc] sm:$0xf]
    %v9985 = vld [vmem:[#allocation16 + $0x10] sm:$0xf]
    %v9986 = vld [vmem:[#allocation16 + $0x14] sm:$0xf]
    %v9987 = vld [vmem:[#allocation16 + $0x18] sm:$0xf]
    %v9988 = vld [vmem:[#allocation16 + $0x1c] sm:$0xf]
    %v9989 = vld [vmem:[#allocation16 + $0x20] sm:$0xf]
    %v9990 = vld [vmem:[#allocation16 + $0x24] sm:$0xf]
    %v9991 = vld [vmem:[#allocation16 + $0x28] sm:$0xf]
    %v9992 = vld [vmem:[#allocation16 + $0x2c] sm:$0xf]
    %v9993 = vld [vmem:[#allocation16 + $0x30] sm:$0xf]
    %v9994 = vld [vmem:[#allocation16 + $0x34] sm:$0xf]
    %v9995 = vld [vmem:[#allocation16 + $0x38] sm:$0xf]
    %v9996 = vld [vmem:[#allocation16 + $0x3c] sm:$0xf]
    %v9997 = vld [vmem:[#allocation16 + $0x40] sm:$0xf]
    %v9998 = vld [vmem:[#allocation16 + $0x44] sm:$0xf]
    %v9999 = vld [vmem:[#allocation16 + $0x48] sm:$0xf]
    %v10000 = vld [vmem:[#allocation16 + $0x4c] sm:$0xf]
    %v10001 = vld [vmem:[#allocation16 + $0x50] sm:$0xf]
    %v10002 = vld [vmem:[#allocation16 + $0x54] sm:$0xf]
    %v10003 = vld [vmem:[#allocation16 + $0x58] sm:$0xf]
    %v10004 = vld [vmem:[#allocation16 + $0x5c] sm:$0xf]
    %v10005 = vld [vmem:[#allocation16 + $0x60] sm:$0xf]
    %v10006 = vld [vmem:[#allocation16 + $0x64] sm:$0xf]
    %v10007 = vld [vmem:[#allocation16 + $0x68] sm:$0xf]
    %v10008 = vld [vmem:[#allocation16 + $0x6c] sm:$0xf]
    %v10009 = vld [vmem:[#allocation16 + $0x70] sm:$0xf]
    %v10010 = vld [vmem:[#allocation16 + $0x74] sm:$0xf]
    %v10011 = vld [vmem:[#allocation16 + $0x78] sm:$0xf]
    %v10012 = vld [vmem:[#allocation16 + $0x7c] sm:$0xf]
    %v10013 = vld [vmem:[#allocation16 + $0x80] sm:$0xf]
    %v10014 = vld [vmem:[#allocation16 + $0x84] sm:$0xf]
    %v10015 = vld [vmem:[#allocation16 + $0x88] sm:$0xf]
    %v10016 = vld [vmem:[#allocation16 + $0x8c] sm:$0xf]
    %v10017 = vld [vmem:[#allocation16 + $0x90] sm:$0xf]
    %v10018 = vld [vmem:[#allocation16 + $0x94] sm:$0xf]
    %v10019 = vld [vmem:[#allocation16 + $0x98] sm:$0xf]
    %v10020 = vld [vmem:[#allocation16 + $0x9c] sm:$0xf]
    %v10021 = vld [vmem:[#allocation16 + $0xa0] sm:$0xf]
    %v10022 = vld [vmem:[#allocation16 + $0xa4] sm:$0xf]
    %v10023 = vld [vmem:[#allocation16 + $0xa8] sm:$0xf]
    %v10024 = vld [vmem:[#allocation16 + $0xac] sm:$0xf]
    %v10025 = vld [vmem:[#allocation16 + $0xb0] sm:$0xf]
    %v10026 = vld [vmem:[#allocation16 + $0xb4] sm:$0xf]
    %v10027 = vld [vmem:[#allocation16 + $0xb8] sm:$0xf]
    %v10028 = vld [vmem:[#allocation16 + $0xbc] sm:$0xf]
    %v10029 = vld [vmem:[#allocation16 + $0xc0] sm:$0xf]
    %v10030 = vld [vmem:[#allocation16 + $0xc4] sm:$0xf]
    %v10031 = vld [vmem:[#allocation16 + $0xc8] sm:$0xf]
    %v10032 = vld [vmem:[#allocation16 + $0xcc] sm:$0xf]
    %v10033 = vld [vmem:[#allocation16 + $0xd0] sm:$0xf]
    %v10034 = vld [vmem:[#allocation16 + $0xd4] sm:$0xf]
    %v10035 = vld [vmem:[#allocation16 + $0xd8] sm:$0xf]
    %v10036 = vld [vmem:[#allocation16 + $0xdc] sm:$0xf]
    %v10037 = vld [vmem:[#allocation16 + $0xe0] sm:$0xf]
    %v10038 = vld [vmem:[#allocation16 + $0xe4] sm:$0xf]
    %v10039 = vld [vmem:[#allocation16 + $0xe8] sm:$0xf]
    %v10040 = vld [vmem:[#allocation16 + $0xec] sm:$0xf]
    %v10041 = vld [vmem:[#allocation16 + $0xf0] sm:$0xf]
    %v10042 = vld [vmem:[#allocation16 + $0xf4] sm:$0xf]
    %v10043 = vld [vmem:[#allocation16 + $0xf8] sm:$0xf]
    %v10044 = vld [vmem:[#allocation16 + $0xfc] sm:$0xf]
    %v10045 = vld [vmem:[#allocation17] sm:$0x1]
    %v10047 = vperm.slane %v10045, 0
    %v10113 = vunpack.c.l.b16 %v9981
    %v10114 = vunpack.c.l.b16 %v9982
    %v10115 = vunpack.c.l.b16 %v9983
    %v10116 = vunpack.c.l.b16 %v9984
    %v10117 = vunpack.c.l.b16 %v9985
    %v10118 = vunpack.c.l.b16 %v9986
    %v10119 = vunpack.c.l.b16 %v9987
    %v10120 = vunpack.c.l.b16 %v9988
    %v10121 = vunpack.c.l.b16 %v9989
    %v10122 = vunpack.c.l.b16 %v9990
    %v10123 = vunpack.c.l.b16 %v9991
    %v10124 = vunpack.c.l.b16 %v9992
    %v10125 = vunpack.c.l.b16 %v9993
    %v10126 = vunpack.c.l.b16 %v9994
    %v10127 = vunpack.c.l.b16 %v9995
    %v10128 = vunpack.c.l.b16 %v9996
    %v10129 = vunpack.c.l.b16 %v9997
    %v10130 = vunpack.c.l.b16 %v9998
    %v10131 = vunpack.c.l.b16 %v9999
    %v10132 = vunpack.c.l.b16 %v10000
    %v10133 = vunpack.c.l.b16 %v10001
    %v10134 = vunpack.c.l.b16 %v10002
    %v10135 = vunpack.c.l.b16 %v10003
    %v10136 = vunpack.c.l.b16 %v10004
    %v10137 = vunpack.c.l.b16 %v10005
    %v10138 = vunpack.c.l.b16 %v10006
    %v10139 = vunpack.c.l.b16 %v10007
    %v10140 = vunpack.c.l.b16 %v10008
    %v10141 = vunpack.c.l.b16 %v10009
    %v10142 = vunpack.c.l.b16 %v10010
    %v10143 = vunpack.c.l.b16 %v10011
    %v10144 = vunpack.c.l.b16 %v10012
    %v10145 = vunpack.c.l.b16 %v10013
    %v10146 = vunpack.c.l.b16 %v10014
    %v10147 = vunpack.c.l.b16 %v10015
    %v10148 = vunpack.c.l.b16 %v10016
    %v10149 = vunpack.c.l.b16 %v10017
    %v10150 = vunpack.c.l.b16 %v10018
    %v10151 = vunpack.c.l.b16 %v10019
    %v10152 = vunpack.c.l.b16 %v10020
    %v10153 = vunpack.c.l.b16 %v10021
    %v10154 = vunpack.c.l.b16 %v10022
    %v10155 = vunpack.c.l.b16 %v10023
    %v10156 = vunpack.c.l.b16 %v10024
    %v10157 = vunpack.c.l.b16 %v10025
    %v10158 = vunpack.c.l.b16 %v10026
    %v10159 = vunpack.c.l.b16 %v10027
    %v10160 = vunpack.c.l.b16 %v10028
    %v10161 = vunpack.c.l.b16 %v10029
    %v10162 = vunpack.c.l.b16 %v10030
    %v10163 = vunpack.c.l.b16 %v10031
    %v10164 = vunpack.c.l.b16 %v10032
    %v10165 = vunpack.c.l.b16 %v10033
    %v10166 = vunpack.c.l.b16 %v10034
    %v10167 = vunpack.c.l.b16 %v10035
    %v10168 = vunpack.c.l.b16 %v10036
    %v10169 = vunpack.c.l.b16 %v10037
    %v10170 = vunpack.c.l.b16 %v10038
    %v10171 = vunpack.c.l.b16 %v10039
    %v10172 = vunpack.c.l.b16 %v10040
    %v10173 = vunpack.c.l.b16 %v10041
    %v10174 = vunpack.c.l.b16 %v10042
    %v10175 = vunpack.c.l.b16 %v10043
    %v10176 = vunpack.c.l.b16 %v10044
    %v10177 = vpack.c.b16 %v10114, %v10113
    %v10178 = vpack.c.b16 %v10116, %v10115
    %v10179 = vpack.c.b16 %v10118, %v10117
    %v10180 = vpack.c.b16 %v10120, %v10119
    %v10181 = vpack.c.b16 %v10122, %v10121
    %v10182 = vpack.c.b16 %v10124, %v10123
    %v10183 = vpack.c.b16 %v10126, %v10125
    %v10184 = vpack.c.b16 %v10128, %v10127
    %v10185 = vpack.c.b16 %v10130, %v10129
    %v10186 = vpack.c.b16 %v10132, %v10131
    %v10187 = vpack.c.b16 %v10134, %v10133
    %v10188 = vpack.c.b16 %v10136, %v10135
    %v10189 = vpack.c.b16 %v10138, %v10137
    %v10190 = vpack.c.b16 %v10140, %v10139
    %v10191 = vpack.c.b16 %v10142, %v10141
    %v10192 = vpack.c.b16 %v10144, %v10143
    %v10193 = vpack.c.b16 %v10146, %v10145
    %v10194 = vpack.c.b16 %v10148, %v10147
    %v10195 = vpack.c.b16 %v10150, %v10149
    %v10196 = vpack.c.b16 %v10152, %v10151
    %v10197 = vpack.c.b16 %v10154, %v10153
    %v10198 = vpack.c.b16 %v10156, %v10155
    %v10199 = vpack.c.b16 %v10158, %v10157
    %v10200 = vpack.c.b16 %v10160, %v10159
    %v10201 = vpack.c.b16 %v10162, %v10161
    %v10202 = vpack.c.b16 %v10164, %v10163
    %v10203 = vpack.c.b16 %v10166, %v10165
    %v10204 = vpack.c.b16 %v10168, %v10167
    %v10205 = vpack.c.b16 %v10170, %v10169
    %v10206 = vpack.c.b16 %v10172, %v10171
    %v10207 = vpack.c.b16 %v10174, %v10173
    %v10208 = vpack.c.b16 %v10176, %v10175
    %10241 = vmatpush.bf16.msra.mxu0 %v10184
    %10242 = vmatpush.bf16.msra.mxu0 %v10183
    %10243 = vmatpush.bf16.msra.mxu0 %v10182
    %10244 = vmatpush.bf16.msra.mxu0 %v10181
    %10245 = vmatpush.bf16.msra.mxu0 %v10180
    %10246 = vmatpush.bf16.msra.mxu0 %v10179
    %10247 = vmatpush.bf16.msra.mxu0 %v10178
    %10248 = vmatpush.bf16.msra.mxu0 %v10177
    %10249 = vmatmul.bf16.gmra.mxu0 %v9977
    %v10250 = vpop.f32.mrf.mxu0
    %v10251 = vadd.f32 %v10047, %v10250
    %v10252 = vpop.f32.mrf.mxu0
    %10253 = vdwg.mxu0
    %10254 = vmatpush.bf16.msra.mxu0 %v10192
    %10255 = vmatpush.bf16.msra.mxu0 %v10191
    %10256 = vmatpush.bf16.msra.mxu0 %v10190
    %10257 = vmatpush.bf16.msra.mxu0 %v10189
    %10258 = vmatpush.bf16.msra.mxu0 %v10188
    %10259 = vmatpush.bf16.msra.mxu0 %v10187
    %10260 = vmatpush.bf16.msra.mxu0 %v10186
    %10261 = vmatpush.bf16.msra.mxu0 %v10185
    %10262 = vmatmul.bf16.gmra.mxu0 %v9978
    %v10263 = vpop.f32.mrf.mxu0
    %v10264 = vadd.f32 %v10251, %v10263
    %v10265 = vpop.f32.mrf.mxu0
    %10266 = vdwg.mxu0
    %10267 = vmatpush.bf16.msra.mxu0 %v10200
    %10268 = vmatpush.bf16.msra.mxu0 %v10199
    %10269 = vmatpush.bf16.msra.mxu0 %v10198
    %10270 = vmatpush.bf16.msra.mxu0 %v10197
    %10271 = vmatpush.bf16.msra.mxu0 %v10196
    %10272 = vmatpush.bf16.msra.mxu0 %v10195
    %10273 = vmatpush.bf16.msra.mxu0 %v10194
    %10274 = vmatpush.bf16.msra.mxu0 %v10193
    %10275 = vmatmul.bf16.gmra.mxu0 %v9979
    %v10276 = vpop.f32.mrf.mxu0
    %v10277 = vadd.f32 %v10264, %v10276
    %v10278 = vpop.f32.mrf.mxu0
    %10279 = vdwg.mxu0
    %10280 = vmatpush.bf16.msra.mxu0 %v10208
    %10281 = vmatpush.bf16.msra.mxu0 %v10207
    %10282 = vmatpush.bf16.msra.mxu0 %v10206
    %10283 = vmatpush.bf16.msra.mxu0 %v10205
    %10284 = vmatpush.bf16.msra.mxu0 %v10204
    %10285 = vmatpush.bf16.msra.mxu0 %v10203
    %10286 = vmatpush.bf16.msra.mxu0 %v10202
    %10287 = vmatpush.bf16.msra.mxu0 %v10201
    %10288 = vmatmul.bf16.gmra.mxu0 %v9980
    %v10289 = vpop.f32.mrf.mxu0
    %v10290 = vadd.f32 %v10277, %v10289
    %v10291 = vpop.f32.mrf.mxu0
    %10292 = vdwg.mxu0
    %10293 = vmax.xlane.f32.xlu0 %v10290
    %v10294 = vpop.xlane.xlu0 %10293
    %v10295 = vsub.f32 %v10290, %v10294
    %v10296 = vmul.f32 %v10295, 1.442695
    %v10297 = vpow.pop %v10296
    %10298 = vadd.xlane.f32.xlu0 %v10297
    %v10299 = vpop.xlane.xlu0 %10298
    %v10300 = vlog2.pop %v10299
    %v10301 = vmul.f32 %v10300, 0.6931472
    %v10302 = vadd.f32 %v10294, %v10301
    %v10303 = vsub.f32 %v10290, %v10302
    %10304 = vst [vmem:[#allocation19] sm:$0xff] %v10303
    // Predicated region
    $region70: #{net_forward.1} parent=1 // pred_check
      _
    $region71: #{net_forward.1} parent=1 // pred_check_branch
      %10306 = sbr.rel (0) target = $region73
    $region72: #{net_forward.1} parent=1 // pred_region
      %10308 = vsyncadd [#allocation7], 0
      %s10310 = sshll.u32 [#allocation19], 4
      %s10311 = int_to_ptr.vmem [resolvable:$true] %s10310
      %s10312 = sshll.u32 %s9, 4
      %s10313 = int_to_ptr.hbm [resolvable:$true] %s10312
      %10315 = dma.vmem_to_hbm [thread:$0]  %s10311, 128, %s10313, [#allocation7]
    $region73: #{net_forward.1} parent=1 // pred_fallthru
      _
    // Predicated region
    $region74: #{net_forward.1} parent=1 // pred_check
      _
    $region75: #{net_forward.1} parent=1 // pred_check_branch
      %10317 = sbr.rel (0) target = $region77
    $region76: #{net_forward.1} parent=1 // pred_region
      %10319 = dma.done [#allocation7], 128
    $region77: #{net_forward.1} parent=1 // pred_fallthru
      _
    %10320 = vsyncpa [#allocation6], 1
    %10321 = vsyncpa [#allocation9], 1
    %10322 = vsyncpa [#allocation12], 1
    %10323 = vsyncpa [#allocation15], 1
    %10324 = vsyncpa [#allocation18], 1
    %10325 = vsyncpa [#allocation7], 1

</llo_original>
